<compile_context>
chip_gen: v7x
topology: tpu7x:2x2x1
jax: 0.10.0
libtpu: 0.0.40
codegen_flags: <defaults>
</compile_context>

<pallas_src>
import functools

import numpy as np
import jax
import jax.numpy as jnp
from jax.experimental import pallas as pl
from jax.experimental.pallas import tpu as pltpu

# ----------------------------------------------------------------------------
# Static problem sizes (from the reference module with 28x28 MNIST input).
# ----------------------------------------------------------------------------
BT = 8                    # batch tile (samples per grid step)
H1, W1, C1 = 28, 28, 4    # stage-1 spatial / conv1 output channels
H2, W2, C2 = 14, 14, 8    # stage-2 spatial / conv2 output channels
HF, WF = 7, 7             # spatial after pool2
L1 = BT * W1              # 224 fused lanes (batch x width), stage 1
L2 = BT * W2              # 112 fused lanes, stage 2
LF = BT * WF              # 56  fused lanes, pooled-2 features
NCLS = 10


def _dot(a, b):
    return jnp.dot(a, b, preferred_element_type=jnp.float32)


# ----------------------------------------------------------------------------
# Constant tables (built once with numpy, become jit constants):
#  - boundary masks for the horizontal window shifts in the fused-lane layout
#  - 0/1 selection matrices that implement the 2x2 max-pool decimation (and the
#    per-sample column gather for the folded FC) as MXU matmuls.
# ----------------------------------------------------------------------------
def _build_tables():
    mask1 = np.ones((2, L1), np.float32)            # [0]: dx=0 (left), [1]: dx=2 (right)
    mask1[0, np.arange(L1) % W1 == 0] = 0.0
    mask1[1, np.arange(L1) % W1 == W1 - 1] = 0.0
    mask2 = np.ones((2, L2), np.float32)
    mask2[0, np.arange(L2) % W2 == 0] = 0.0
    mask2[1, np.arange(L2) % W2 == W2 - 1] = 0.0

    # pool1 vertical:  rows c*28+2u / +1  ->  row c*16+1+u  (padded stage-2 row layout)
    sv1 = np.zeros((2, C1 * (H2 + 2), C1 * H1), np.float32)
    for c in range(C1):
        for u in range(H2):
            sv1[0, c * (H2 + 2) + 1 + u, c * H1 + 2 * u] = 1.0
            sv1[1, c * (H2 + 2) + 1 + u, c * H1 + 2 * u + 1] = 1.0
    # pool1 horizontal: lanes b*28+2j / +1 -> lane 1+b*14+j  (padded stage-2 lane layout)
    sh1 = np.zeros((2, L1, L2 + 2), np.float32)
    for b in range(BT):
        for j in range(W2):
            sh1[0, b * W1 + 2 * j, 1 + b * W2 + j] = 1.0
            sh1[1, b * W1 + 2 * j + 1, 1 + b * W2 + j] = 1.0

    # pool2 vertical / horizontal -> feature matrix F[c*7+y, b*7+x]
    sv2 = np.zeros((2, C2 * HF, C2 * H2), np.float32)
    for c in range(C2):
        for y in range(HF):
            sv2[0, c * HF + y, c * H2 + 2 * y] = 1.0
            sv2[1, c * HF + y, c * H2 + 2 * y + 1] = 1.0
    sh2 = np.zeros((2, L2, LF), np.float32)
    for b in range(BT):
        for xx in range(WF):
            sh2[0, b * W2 + 2 * xx, b * WF + xx] = 1.0
            sh2[1, b * W2 + 2 * xx + 1, b * WF + xx] = 1.0

    # FC per-x sample gather: S_x[b*7+x, b] = 1
    sx = np.zeros((WF, C2 * HF, BT), np.float32)
    for xx in range(WF):
        for b in range(BT):
            sx[xx, b * WF + xx, b] = 1.0

    return dict(mask1=mask1, mask2=mask2, sv1=sv1, sh1=sh1, sv2=sv2, sh2=sh2, sx=sx)


_TAB = _build_tables()


# ----------------------------------------------------------------------------
# The fused kernel: conv1+ReLU -> pool1 -> conv2+ReLU -> pool2 -> folded FC.
# One grid step processes a tile of BT samples entirely in VMEM.
# Activation layout: rows = H (per channel stacked), lanes = batch*W (lane dense).
# ----------------------------------------------------------------------------
def _cnn_fused_kernel(x_ref, w1_ref, b1_ref, w2_ref, b2_ref,
                      m1_ref, m2_ref, sv1_ref, sh1_ref, sv2_ref, sh2_ref,
                      sx_ref, wfc_ref, beff_ref,
                      out_ref,
                      pad1_ref, h1_ref, pad2_ref, h2_ref):
    f32 = jnp.float32

    # ---- stage 1: zero-pad the input in VMEM (no jnp.pad / HBM round trip) ----
    pad1_ref[...] = jnp.zeros((H1 + 2, L1 + 2), f32)
    pad1_ref[1:H1 + 1, 1:L1 + 1] = x_ref[0]

    m1 = m1_ref[...]
    # conv1 (1 -> 4), 3x3, pad 1: shifted-window MAC on ~full vregs (28 x 224 slabs)
    acc1 = [jnp.zeros((H1, L1), f32) for _ in range(C1)]
    for dy in range(3):
        for dx in range(3):
            win = pad1_ref[dy:dy + H1, dx:dx + L1]
            if dx == 0:
                win = win * m1[0:1, :]      # kill cross-sample wrap at x==0
            elif dx == 2:
                win = win * m1[1:2, :]      # kill cross-sample wrap at x==W-1
            for co in range(C1):
                acc1[co] = acc1[co] + win * w1_ref[(dy * 3 + dx) * C1 + co]
    for co in range(C1):
        h1_ref[co * H1:(co + 1) * H1, :] = jnp.maximum(acc1[co] + b1_ref[co], 0.0)

    # ---- pool1 (2x2 / 2) as selection matmuls; lands pre-padded for stage 2 ----
    h1 = h1_ref[...]                                          # (112, 224)
    v1 = jnp.maximum(_dot(sv1_ref[0], h1), _dot(sv1_ref[1], h1))          # (64, 224)
    pad2_ref[...] = jnp.maximum(_dot(v1, sh1_ref[0]), _dot(v1, sh1_ref[1]))  # (64, 114)

    # ---- stage 2: conv2 (4 -> 8), 3x3, pad 1 + ReLU ----
    m2 = m2_ref[...]
    acc2 = [jnp.zeros((H2, L2), f32) for _ in range(C2)]
    for ci in range(C1):
        rbase = ci * (H2 + 2)
        for dy in range(3):
            for dx in range(3):
                win = pad2_ref[rbase + dy:rbase + dy + H2, dx:dx + L2]
                if dx == 0:
                    win = win * m2[0:1, :]
                elif dx == 2:
                    win = win * m2[1:2, :]
                for co in range(C2):
                    acc2[co] = acc2[co] + win * w2_ref[((dy * 3 + dx) * C1 + ci) * C2 + co]
    for co in range(C2):
        h2_ref[co * H2:(co + 1) * H2, :] = jnp.maximum(acc2[co] + b2_ref[co], 0.0)

    # ---- pool2 -> feature matrix F[c*7+y, b*7+x] (PyTorch NCHW flatten order) ----
    h2 = h2_ref[...]                                          # (112, 112)
    v2 = jnp.maximum(_dot(sv2_ref[0], h2), _dot(sv2_ref[1], h2))          # (56, 112)
    feat = jnp.maximum(_dot(v2, sh2_ref[0]), _dot(v2, sh2_ref[1]))        # (56, 56)

    # ---- folded FC: Linear(392,32) o Linear(32,10) == one (392,10) matmul ----
    acc = jnp.zeros((NCLS, BT), f32)
    for xx in range(WF):
        samp = _dot(feat, sx_ref[xx])       # (56, BT): per-sample column x gather
        acc = acc + _dot(wfc_ref[xx], samp)  # (10, BT)
    out_ref[0] = acc + beff_ref[...]


# ----------------------------------------------------------------------------
# Wrapper: layout plumbing (cheap XLA ops on HBM) + the single pallas_call.
# ----------------------------------------------------------------------------
@jax.jit
def cnn_forward(x, params):
    N = x.shape[0]
    T = -(-N // BT)
    Np = T * BT

    # pack input as (T, H, BT*W): lane axis = batch*width (lane dense)
    xr = x.reshape(N, H1, W1)
    xr = jnp.pad(xr, ((0, Np - N), (0, 0), (0, 0)))
    xr = xr.reshape(T, BT, H1, W1).transpose(0, 2, 1, 3).reshape(T, H1, L1)

    w1 = params["conv1_w"].reshape(-1)
    b1 = params["conv1_b"]
    w2 = params["conv2_w"].reshape(-1)
    b2 = params["conv2_b"]

    # Fold the two linear layers (exact: no activation between them in the reference).
    w_eff = params["fc1_w"] @ params["fc2_w"]                       # (392, 10)
    b_eff = params["fc1_b"] @ params["fc2_w"] + params["fc2_b"]     # (1, 10)
    # re-index the folded weight to the kernel's feature layout: Wfc[x, o, c*7+y]
    wfc = w_eff.reshape(C2, HF, WF, NCLS).transpose(2, 3, 0, 1).reshape(WF, NCLS, C2 * HF)
    beff = b_eff.reshape(NCLS, 1)

    tabs = {k: jnp.asarray(v) for k, v in _TAB.items()}

    def vspec(shp):
        return pl.BlockSpec(shp, lambda t, _n=len(shp): (0,) * _n)

    smem = pl.BlockSpec(memory_space=pltpu.MemorySpace.SMEM)

    out = pl.pallas_call(
        _cnn_fused_kernel,
        out_shape=jax.ShapeDtypeStruct((T, NCLS, BT), jnp.float32),
        grid=(T,),
        in_specs=[
            pl.BlockSpec((1, H1, L1), lambda t: (t, 0, 0)),   # x tile
            smem, smem, smem, smem,                           # conv weights / biases
            vspec((2, L1)), vspec((2, L2)),                   # boundary masks
            vspec((2, C1 * (H2 + 2), C1 * H1)),               # pool1 vertical select
            vspec((2, L1, L2 + 2)),                           # pool1 horizontal select
            vspec((2, C2 * HF, C2 * H2)),                     # pool2 vertical select
            vspec((2, L2, LF)),                               # pool2 horizontal select
            vspec((WF, C2 * HF, BT)),                         # FC per-x sample gather
            vspec((WF, NCLS, C2 * HF)),                       # folded FC weights
            vspec((NCLS, 1)),                                 # folded FC bias
        ],
        out_specs=pl.BlockSpec((1, NCLS, BT), lambda t: (t, 0, 0)),
        scratch_shapes=[
            pltpu.VMEM((H1 + 2, L1 + 2), jnp.float32),        # padded stage-1 input
            pltpu.VMEM((C1 * H1, L1), jnp.float32),           # conv1 output (stacked)
            pltpu.VMEM((C1 * (H2 + 2), L2 + 2), jnp.float32), # padded stage-2 input
            pltpu.VMEM((C2 * H2, L2), jnp.float32),           # conv2 output (stacked)
        ],
        compiler_params=pltpu.CompilerParams(
            dimension_semantics=("parallel",)),
    )(xr, w1, b1, w2, b2,
      tabs["mask1"], tabs["mask2"], tabs["sv1"], tabs["sh1"],
      tabs["sv2"], tabs["sh2"], tabs["sx"], wfc, beff)

    return jnp.transpose(out, (0, 2, 1)).reshape(Np, NCLS)[:N]


# ----------------------------------------------------------------------------
# Deterministic parameter init (PyTorch-like uniform(-1/sqrt(fan_in), ...)).
# ----------------------------------------------------------------------------
def init_params(key):
    ks = jax.random.split(key, 8)

    def uni(k, shape, fan_in):
        bound = fan_in ** -0.5
        return jax.random.uniform(k, shape, jnp.float32, -bound, bound)

    return {
        "conv1_w": uni(ks[0], (3, 3, 1, C1), 1 * 9),
        "conv1_b": uni(ks[1], (C1,), 1 * 9),
        "conv2_w": uni(ks[2], (3, 3, C1, C2), C1 * 9),
        "conv2_b": uni(ks[3], (C2,), C1 * 9),
        "fc1_w":   uni(ks[4], (C2 * HF * WF, 32), C2 * HF * WF),
        "fc1_b":   uni(ks[5], (1, 32), C2 * HF * WF),
        "fc2_w":   uni(ks[6], (32, NCLS), 32),
        "fc2_b":   uni(ks[7], (1, NCLS), 32),
    }


# Pure-JAX reference of the same forward pass (for a numerical self-check).
@jax.jit
def _reference_forward(x, params):
    dn = ("NCHW", "HWIO", "NCHW")
    h = jax.lax.conv_general_dilated(x, params["conv1_w"], (1, 1), ((1, 1), (1, 1)),
                                     dimension_numbers=dn)
    h = jax.nn.relu(h + params["conv1_b"].reshape(1, -1, 1, 1))
    h = jax.lax.reduce_window(h, -jnp.inf, jax.lax.max, (1, 1, 2, 2), (1, 1, 2, 2), "VALID")
    h = jax.lax.conv_general_dilated(h, params["conv2_w"], (1, 1), ((1, 1), (1, 1)),
                                     dimension_numbers=dn)
    h = jax.nn.relu(h + params["conv2_b"].reshape(1, -1, 1, 1))
    h = jax.lax.reduce_window(h, -jnp.inf, jax.lax.max, (1, 1, 2, 2), (1, 1, 2, 2), "VALID")
    hf = h.reshape(h.shape[0], -1)
    hf = hf @ params["fc1_w"] + params["fc1_b"]
    return hf @ params["fc2_w"] + params["fc2_b"]


if __name__ == "__main__":
    key = jax.random.PRNGKey(0)
    k_x, k_p = jax.random.split(key)
    x = jax.random.normal(k_x, (2, 1, 28, 28), jnp.float32)   # NCHW, MNIST-sized
    params = init_params(k_p)

    out = jax.block_until_ready(cnn_forward(x, params))
    assert out.shape == (2, 10) and out.dtype == jnp.float32

    ref = jax.block_until_ready(_reference_forward(x, params))
    np.testing.assert_allclose(np.asarray(out), np.asarray(ref), rtol=1e-2, atol=1e-2)

    print("KERNEL_OK")
</pallas_src>

<mosaic_0001>
module attributes {stable_mosaic.version = 11 : i64} {
  func.func @_cnn_fused_kernel(%arg0: i32, %arg1: memref<1x28x224xf32, #tpu.memory_space<vmem>>, %arg2: memref<36xf32, #tpu.memory_space<smem>>, %arg3: memref<4xf32, #tpu.memory_space<smem>>, %arg4: memref<288xf32, #tpu.memory_space<smem>>, %arg5: memref<8xf32, #tpu.memory_space<smem>>, %arg6: memref<2x224xf32, #tpu.memory_space<vmem>>, %arg7: memref<2x112xf32, #tpu.memory_space<vmem>>, %arg8: memref<2x64x112xf32, #tpu.memory_space<vmem>>, %arg9: memref<2x224x114xf32, #tpu.memory_space<vmem>>, %arg10: memref<2x56x112xf32, #tpu.memory_space<vmem>>, %arg11: memref<2x112x56xf32, #tpu.memory_space<vmem>>, %arg12: memref<7x56x8xf32, #tpu.memory_space<vmem>>, %arg13: memref<7x10x56xf32, #tpu.memory_space<vmem>>, %arg14: memref<10x1xf32, #tpu.memory_space<vmem>>, %arg15: memref<1x10x8xf32, #tpu.memory_space<vmem>>, %arg16: memref<30x226xf32, #tpu.memory_space<vmem>>, %arg17: memref<112x224xf32, #tpu.memory_space<vmem>>, %arg18: memref<64x114xf32, #tpu.memory_space<vmem>>, %arg19: memref<112x112xf32, #tpu.memory_space<vmem>>) attributes {dimension_semantics = [#tpu.dimension_semantics<parallel>], iteration_bounds = array<i64: 1>, scalar_prefetch = 0 : i64, scratch_operands = 4 : i64, tpu.core_type = #tpu.core_type<tc>, window_params = [{transform_indices = @transform_0, window_bounds = array<i64: 1, 28, 224>}, {transform_indices = @transform_1, window_bounds = array<i64: 36>}, {transform_indices = @transform_2, window_bounds = array<i64: 4>}, {transform_indices = @transform_3, window_bounds = array<i64: 288>}, {transform_indices = @transform_4, window_bounds = array<i64: 8>}, {pipeline_mode = #tpu.pipeline_mode<synchronous>, transform_indices = @transform_5, window_bounds = array<i64: 2, 224>}, {pipeline_mode = #tpu.pipeline_mode<synchronous>, transform_indices = @transform_6, window_bounds = array<i64: 2, 112>}, {pipeline_mode = #tpu.pipeline_mode<synchronous>, transform_indices = @transform_7, window_bounds = array<i64: 2, 64, 112>}, {pipeline_mode = #tpu.pipeline_mode<synchronous>, transform_indices = @transform_8, window_bounds = array<i64: 2, 224, 114>}, {pipeline_mode = #tpu.pipeline_mode<synchronous>, transform_indices = @transform_9, window_bounds = array<i64: 2, 56, 112>}, {pipeline_mode = #tpu.pipeline_mode<synchronous>, transform_indices = @transform_10, window_bounds = array<i64: 2, 112, 56>}, {pipeline_mode = #tpu.pipeline_mode<synchronous>, transform_indices = @transform_11, window_bounds = array<i64: 7, 56, 8>}, {pipeline_mode = #tpu.pipeline_mode<synchronous>, transform_indices = @transform_12, window_bounds = array<i64: 7, 10, 56>}, {pipeline_mode = #tpu.pipeline_mode<synchronous>, transform_indices = @transform_13, window_bounds = array<i64: 10, 1>}, {transform_indices = @transform_14, window_bounds = array<i64: 1, 10, 8>}]} {
    %cst = arith.constant 0.000000e+00 : f32
    %0 = vector.broadcast %cst : f32 to vector<30x226xf32>
    %c0 = arith.constant 0 : index
    %c0_0 = arith.constant 0 : index
    %1 = vector.load %arg16[%c0, %c0_0] : memref<30x226xf32, #tpu.memory_space<vmem>>, vector<30x226xf32>
    tpu.vector_store %arg16[%c0, %c0_0], %0 {strides = array<i32>} : memref<30x226xf32, #tpu.memory_space<vmem>>, vector<30x226xf32>,
    %c0_1 = arith.constant 0 : index
    %c0_2 = arith.constant 0 : index
    %c0_3 = arith.constant 0 : index
    %2 = vector.load %arg1[%c0_1, %c0_2, %c0_3] : memref<1x28x224xf32, #tpu.memory_space<vmem>>, vector<1x28x224xf32>
    %3 = vector.shape_cast %2 : vector<1x28x224xf32> to vector<28x224xf32>
    %c1 = arith.constant 1 : index
    %c1_4 = arith.constant 1 : index
    %4 = vector.load %arg16[%c1, %c1_4] : memref<30x226xf32, #tpu.memory_space<vmem>>, vector<28x224xf32>
    tpu.vector_store %arg16[%c1, %c1_4], %3 {strides = array<i32>} : memref<30x226xf32, #tpu.memory_space<vmem>>, vector<28x224xf32>,
    %c0_5 = arith.constant 0 : index
    %c0_6 = arith.constant 0 : index
    %5 = vector.load %arg6[%c0_5, %c0_6] : memref<2x224xf32, #tpu.memory_space<vmem>>, vector<2x224xf32>
    %cst_7 = arith.constant 0.000000e+00 : f32
    %6 = vector.broadcast %cst_7 : f32 to vector<28x224xf32>
    %cst_8 = arith.constant 0.000000e+00 : f32
    %7 = vector.broadcast %cst_8 : f32 to vector<28x224xf32>
    %cst_9 = arith.constant 0.000000e+00 : f32
    %8 = vector.broadcast %cst_9 : f32 to vector<28x224xf32>
    %cst_10 = arith.constant 0.000000e+00 : f32
    %9 = vector.broadcast %cst_10 : f32 to vector<28x224xf32>
    %c0_11 = arith.constant 0 : index
    %c0_12 = arith.constant 0 : index
    %10 = vector.load %arg16[%c0_11, %c0_12] : memref<30x226xf32, #tpu.memory_space<vmem>>, vector<28x224xf32>
    %11 = vector.extract_strided_slice %5 {offsets = [0, 0], sizes = [1, 224], strides = [1, 1]} : vector<2x224xf32> to vector<1x224xf32>
    %12 = vector.broadcast %11 : vector<1x224xf32> to vector<28x224xf32>
    %13 = arith.mulf %10, %12 : vector<28x224xf32>
    %c0_13 = arith.constant 0 : index
    %14 = memref.load %arg2[%c0_13] : memref<36xf32, #tpu.memory_space<smem>>
    %15 = vector.broadcast %14 : f32 to vector<28x224xf32>
    %16 = arith.mulf %13, %15 : vector<28x224xf32>
    %17 = arith.addf %6, %16 : vector<28x224xf32>
    %c1_14 = arith.constant 1 : index
    %18 = memref.load %arg2[%c1_14] : memref<36xf32, #tpu.memory_space<smem>>
    %19 = vector.broadcast %18 : f32 to vector<28x224xf32>
    %20 = arith.mulf %13, %19 : vector<28x224xf32>
    %21 = arith.addf %7, %20 : vector<28x224xf32>
    %c2 = arith.constant 2 : index
    %22 = memref.load %arg2[%c2] : memref<36xf32, #tpu.memory_space<smem>>
    %23 = vector.broadcast %22 : f32 to vector<28x224xf32>
    %24 = arith.mulf %13, %23 : vector<28x224xf32>
    %25 = arith.addf %8, %24 : vector<28x224xf32>
    %c3 = arith.constant 3 : index
    %26 = memref.load %arg2[%c3] : memref<36xf32, #tpu.memory_space<smem>>
    %27 = vector.broadcast %26 : f32 to vector<28x224xf32>
    %28 = arith.mulf %13, %27 : vector<28x224xf32>
    %29 = arith.addf %9, %28 : vector<28x224xf32>
    %c0_15 = arith.constant 0 : index
    %c1_16 = arith.constant 1 : index
    %30 = vector.load %arg16[%c0_15, %c1_16] : memref<30x226xf32, #tpu.memory_space<vmem>>, vector<28x224xf32>
    %c4 = arith.constant 4 : index
    %31 = memref.load %arg2[%c4] : memref<36xf32, #tpu.memory_space<smem>>
    %32 = vector.broadcast %31 : f32 to vector<28x224xf32>
    %33 = arith.mulf %30, %32 : vector<28x224xf32>
    %34 = arith.addf %17, %33 : vector<28x224xf32>
    %c5 = arith.constant 5 : index
    %35 = memref.load %arg2[%c5] : memref<36xf32, #tpu.memory_space<smem>>
    %36 = vector.broadcast %35 : f32 to vector<28x224xf32>
    %37 = arith.mulf %30, %36 : vector<28x224xf32>
    %38 = arith.addf %21, %37 : vector<28x224xf32>
    %c6 = arith.constant 6 : index
    %39 = memref.load %arg2[%c6] : memref<36xf32, #tpu.memory_space<smem>>
    %40 = vector.broadcast %39 : f32 to vector<28x224xf32>
    %41 = arith.mulf %30, %40 : vector<28x224xf32>
    %42 = arith.addf %25, %41 : vector<28x224xf32>
    %c7 = arith.constant 7 : index
    %43 = memref.load %arg2[%c7] : memref<36xf32, #tpu.memory_space<smem>>
    %44 = vector.broadcast %43 : f32 to vector<28x224xf32>
    %45 = arith.mulf %30, %44 : vector<28x224xf32>
    %46 = arith.addf %29, %45 : vector<28x224xf32>
    %c0_17 = arith.constant 0 : index
    %c2_18 = arith.constant 2 : index
    %47 = vector.load %arg16[%c0_17, %c2_18] : memref<30x226xf32, #tpu.memory_space<vmem>>, vector<28x224xf32>
    %48 = vector.extract_strided_slice %5 {offsets = [1, 0], sizes = [1, 224], strides = [1, 1]} : vector<2x224xf32> to vector<1x224xf32>
    %49 = vector.broadcast %48 : vector<1x224xf32> to vector<28x224xf32>
    %50 = arith.mulf %47, %49 : vector<28x224xf32>
    %c8 = arith.constant 8 : index
    %51 = memref.load %arg2[%c8] : memref<36xf32, #tpu.memory_space<smem>>
    %52 = vector.broadcast %51 : f32 to vector<28x224xf32>
    %53 = arith.mulf %50, %52 : vector<28x224xf32>
    %54 = arith.addf %34, %53 : vector<28x224xf32>
    %c9 = arith.constant 9 : index
    %55 = memref.load %arg2[%c9] : memref<36xf32, #tpu.memory_space<smem>>
    %56 = vector.broadcast %55 : f32 to vector<28x224xf32>
    %57 = arith.mulf %50, %56 : vector<28x224xf32>
    %58 = arith.addf %38, %57 : vector<28x224xf32>
    %c10 = arith.constant 10 : index
    %59 = memref.load %arg2[%c10] : memref<36xf32, #tpu.memory_space<smem>>
    %60 = vector.broadcast %59 : f32 to vector<28x224xf32>
    %61 = arith.mulf %50, %60 : vector<28x224xf32>
    %62 = arith.addf %42, %61 : vector<28x224xf32>
    %c11 = arith.constant 11 : index
    %63 = memref.load %arg2[%c11] : memref<36xf32, #tpu.memory_space<smem>>
    %64 = vector.broadcast %63 : f32 to vector<28x224xf32>
    %65 = arith.mulf %50, %64 : vector<28x224xf32>
    %66 = arith.addf %46, %65 : vector<28x224xf32>
    %c1_19 = arith.constant 1 : index
    %c0_20 = arith.constant 0 : index
    %67 = vector.load %arg16[%c1_19, %c0_20] : memref<30x226xf32, #tpu.memory_space<vmem>>, vector<28x224xf32>
    %68 = vector.extract_strided_slice %5 {offsets = [0, 0], sizes = [1, 224], strides = [1, 1]} : vector<2x224xf32> to vector<1x224xf32>
    %69 = vector.broadcast %68 : vector<1x224xf32> to vector<28x224xf32>
    %70 = arith.mulf %67, %69 : vector<28x224xf32>
    %c12 = arith.constant 12 : index
    %71 = memref.load %arg2[%c12] : memref<36xf32, #tpu.memory_space<smem>>
    %72 = vector.broadcast %71 : f32 to vector<28x224xf32>
    %73 = arith.mulf %70, %72 : vector<28x224xf32>
    %74 = arith.addf %54, %73 : vector<28x224xf32>
    %c13 = arith.constant 13 : index
    %75 = memref.load %arg2[%c13] : memref<36xf32, #tpu.memory_space<smem>>
    %76 = vector.broadcast %75 : f32 to vector<28x224xf32>
    %77 = arith.mulf %70, %76 : vector<28x224xf32>
    %78 = arith.addf %58, %77 : vector<28x224xf32>
    %c14 = arith.constant 14 : index
    %79 = memref.load %arg2[%c14] : memref<36xf32, #tpu.memory_space<smem>>
    %80 = vector.broadcast %79 : f32 to vector<28x224xf32>
    %81 = arith.mulf %70, %80 : vector<28x224xf32>
    %82 = arith.addf %62, %81 : vector<28x224xf32>
    %c15 = arith.constant 15 : index
    %83 = memref.load %arg2[%c15] : memref<36xf32, #tpu.memory_space<smem>>
    %84 = vector.broadcast %83 : f32 to vector<28x224xf32>
    %85 = arith.mulf %70, %84 : vector<28x224xf32>
    %86 = arith.addf %66, %85 : vector<28x224xf32>
    %c1_21 = arith.constant 1 : index
    %c1_22 = arith.constant 1 : index
    %87 = vector.load %arg16[%c1_21, %c1_22] : memref<30x226xf32, #tpu.memory_space<vmem>>, vector<28x224xf32>
    %c16 = arith.constant 16 : index
    %88 = memref.load %arg2[%c16] : memref<36xf32, #tpu.memory_space<smem>>
    %89 = vector.broadcast %88 : f32 to vector<28x224xf32>
    %90 = arith.mulf %87, %89 : vector<28x224xf32>
    %91 = arith.addf %74, %90 : vector<28x224xf32>
    %c17 = arith.constant 17 : index
    %92 = memref.load %arg2[%c17] : memref<36xf32, #tpu.memory_space<smem>>
    %93 = vector.broadcast %92 : f32 to vector<28x224xf32>
    %94 = arith.mulf %87, %93 : vector<28x224xf32>
    %95 = arith.addf %78, %94 : vector<28x224xf32>
    %c18 = arith.constant 18 : index
    %96 = memref.load %arg2[%c18] : memref<36xf32, #tpu.memory_space<smem>>
    %97 = vector.broadcast %96 : f32 to vector<28x224xf32>
    %98 = arith.mulf %87, %97 : vector<28x224xf32>
    %99 = arith.addf %82, %98 : vector<28x224xf32>
    %c19 = arith.constant 19 : index
    %100 = memref.load %arg2[%c19] : memref<36xf32, #tpu.memory_space<smem>>
    %101 = vector.broadcast %100 : f32 to vector<28x224xf32>
    %102 = arith.mulf %87, %101 : vector<28x224xf32>
    %103 = arith.addf %86, %102 : vector<28x224xf32>
    %c1_23 = arith.constant 1 : index
    %c2_24 = arith.constant 2 : index
    %104 = vector.load %arg16[%c1_23, %c2_24] : memref<30x226xf32, #tpu.memory_space<vmem>>, vector<28x224xf32>
    %105 = vector.extract_strided_slice %5 {offsets = [1, 0], sizes = [1, 224], strides = [1, 1]} : vector<2x224xf32> to vector<1x224xf32>
    %106 = vector.broadcast %105 : vector<1x224xf32> to vector<28x224xf32>
    %107 = arith.mulf %104, %106 : vector<28x224xf32>
    %c20 = arith.constant 20 : index
    %108 = memref.load %arg2[%c20] : memref<36xf32, #tpu.memory_space<smem>>
    %109 = vector.broadcast %108 : f32 to vector<28x224xf32>
    %110 = arith.mulf %107, %109 : vector<28x224xf32>
    %111 = arith.addf %91, %110 : vector<28x224xf32>
    %c21 = arith.constant 21 : index
    %112 = memref.load %arg2[%c21] : memref<36xf32, #tpu.memory_space<smem>>
    %113 = vector.broadcast %112 : f32 to vector<28x224xf32>
    %114 = arith.mulf %107, %113 : vector<28x224xf32>
    %115 = arith.addf %95, %114 : vector<28x224xf32>
    %c22 = arith.constant 22 : index
    %116 = memref.load %arg2[%c22] : memref<36xf32, #tpu.memory_space<smem>>
    %117 = vector.broadcast %116 : f32 to vector<28x224xf32>
    %118 = arith.mulf %107, %117 : vector<28x224xf32>
    %119 = arith.addf %99, %118 : vector<28x224xf32>
    %c23 = arith.constant 23 : index
    %120 = memref.load %arg2[%c23] : memref<36xf32, #tpu.memory_space<smem>>
    %121 = vector.broadcast %120 : f32 to vector<28x224xf32>
    %122 = arith.mulf %107, %121 : vector<28x224xf32>
    %123 = arith.addf %103, %122 : vector<28x224xf32>
    %c2_25 = arith.constant 2 : index
    %c0_26 = arith.constant 0 : index
    %124 = vector.load %arg16[%c2_25, %c0_26] : memref<30x226xf32, #tpu.memory_space<vmem>>, vector<28x224xf32>
    %125 = vector.extract_strided_slice %5 {offsets = [0, 0], sizes = [1, 224], strides = [1, 1]} : vector<2x224xf32> to vector<1x224xf32>
    %126 = vector.broadcast %125 : vector<1x224xf32> to vector<28x224xf32>
    %127 = arith.mulf %124, %126 : vector<28x224xf32>
    %c24 = arith.constant 24 : index
    %128 = memref.load %arg2[%c24] : memref<36xf32, #tpu.memory_space<smem>>
    %129 = vector.broadcast %128 : f32 to vector<28x224xf32>
    %130 = arith.mulf %127, %129 : vector<28x224xf32>
    %131 = arith.addf %111, %130 : vector<28x224xf32>
    %c25 = arith.constant 25 : index
    %132 = memref.load %arg2[%c25] : memref<36xf32, #tpu.memory_space<smem>>
    %133 = vector.broadcast %132 : f32 to vector<28x224xf32>
    %134 = arith.mulf %127, %133 : vector<28x224xf32>
    %135 = arith.addf %115, %134 : vector<28x224xf32>
    %c26 = arith.constant 26 : index
    %136 = memref.load %arg2[%c26] : memref<36xf32, #tpu.memory_space<smem>>
    %137 = vector.broadcast %136 : f32 to vector<28x224xf32>
    %138 = arith.mulf %127, %137 : vector<28x224xf32>
    %139 = arith.addf %119, %138 : vector<28x224xf32>
    %c27 = arith.constant 27 : index
    %140 = memref.load %arg2[%c27] : memref<36xf32, #tpu.memory_space<smem>>
    %141 = vector.broadcast %140 : f32 to vector<28x224xf32>
    %142 = arith.mulf %127, %141 : vector<28x224xf32>
    %143 = arith.addf %123, %142 : vector<28x224xf32>
    %c2_27 = arith.constant 2 : index
    %c1_28 = arith.constant 1 : index
    %144 = vector.load %arg16[%c2_27, %c1_28] : memref<30x226xf32, #tpu.memory_space<vmem>>, vector<28x224xf32>
    %c28 = arith.constant 28 : index
    %145 = memref.load %arg2[%c28] : memref<36xf32, #tpu.memory_space<smem>>
    %146 = vector.broadcast %145 : f32 to vector<28x224xf32>
    %147 = arith.mulf %144, %146 : vector<28x224xf32>
    %148 = arith.addf %131, %147 : vector<28x224xf32>
    %c29 = arith.constant 29 : index
    %149 = memref.load %arg2[%c29] : memref<36xf32, #tpu.memory_space<smem>>
    %150 = vector.broadcast %149 : f32 to vector<28x224xf32>
    %151 = arith.mulf %144, %150 : vector<28x224xf32>
    %152 = arith.addf %135, %151 : vector<28x224xf32>
    %c30 = arith.constant 30 : index
    %153 = memref.load %arg2[%c30] : memref<36xf32, #tpu.memory_space<smem>>
    %154 = vector.broadcast %153 : f32 to vector<28x224xf32>
    %155 = arith.mulf %144, %154 : vector<28x224xf32>
    %156 = arith.addf %139, %155 : vector<28x224xf32>
    %c31 = arith.constant 31 : index
    %157 = memref.load %arg2[%c31] : memref<36xf32, #tpu.memory_space<smem>>
    %158 = vector.broadcast %157 : f32 to vector<28x224xf32>
    %159 = arith.mulf %144, %158 : vector<28x224xf32>
    %160 = arith.addf %143, %159 : vector<28x224xf32>
    %c2_29 = arith.constant 2 : index
    %c2_30 = arith.constant 2 : index
    %161 = vector.load %arg16[%c2_29, %c2_30] : memref<30x226xf32, #tpu.memory_space<vmem>>, vector<28x224xf32>
    %162 = vector.extract_strided_slice %5 {offsets = [1, 0], sizes = [1, 224], strides = [1, 1]} : vector<2x224xf32> to vector<1x224xf32>
    %163 = vector.broadcast %162 : vector<1x224xf32> to vector<28x224xf32>
    %164 = arith.mulf %161, %163 : vector<28x224xf32>
    %c32 = arith.constant 32 : index
    %165 = memref.load %arg2[%c32] : memref<36xf32, #tpu.memory_space<smem>>
    %166 = vector.broadcast %165 : f32 to vector<28x224xf32>
    %167 = arith.mulf %164, %166 : vector<28x224xf32>
    %168 = arith.addf %148, %167 : vector<28x224xf32>
    %c33 = arith.constant 33 : index
    %169 = memref.load %arg2[%c33] : memref<36xf32, #tpu.memory_space<smem>>
    %170 = vector.broadcast %169 : f32 to vector<28x224xf32>
    %171 = arith.mulf %164, %170 : vector<28x224xf32>
    %172 = arith.addf %152, %171 : vector<28x224xf32>
    %c34 = arith.constant 34 : index
    %173 = memref.load %arg2[%c34] : memref<36xf32, #tpu.memory_space<smem>>
    %174 = vector.broadcast %173 : f32 to vector<28x224xf32>
    %175 = arith.mulf %164, %174 : vector<28x224xf32>
    %176 = arith.addf %156, %175 : vector<28x224xf32>
    %c35 = arith.constant 35 : index
    %177 = memref.load %arg2[%c35] : memref<36xf32, #tpu.memory_space<smem>>
    %178 = vector.broadcast %177 : f32 to vector<28x224xf32>
    %179 = arith.mulf %164, %178 : vector<28x224xf32>
    %180 = arith.addf %160, %179 : vector<28x224xf32>
    %c0_31 = arith.constant 0 : index
    %181 = memref.load %arg3[%c0_31] : memref<4xf32, #tpu.memory_space<smem>>
    %182 = vector.broadcast %181 : f32 to vector<28x224xf32>
    %183 = arith.addf %168, %182 : vector<28x224xf32>
    %cst_32 = arith.constant 0.000000e+00 : f32
    %184 = vector.broadcast %cst_32 : f32 to vector<28x224xf32>
    %185 = arith.maximumf %183, %184 : vector<28x224xf32>
    %c0_33 = arith.constant 0 : index
    %c0_34 = arith.constant 0 : index
    %186 = vector.load %arg17[%c0_33, %c0_34] : memref<112x224xf32, #tpu.memory_space<vmem>>, vector<28x224xf32>
    tpu.vector_store %arg17[%c0_33, %c0_34], %185 {strides = array<i32>} : memref<112x224xf32, #tpu.memory_space<vmem>>, vector<28x224xf32>,
    %c1_35 = arith.constant 1 : index
    %187 = memref.load %arg3[%c1_35] : memref<4xf32, #tpu.memory_space<smem>>
    %188 = vector.broadcast %187 : f32 to vector<28x224xf32>
    %189 = arith.addf %172, %188 : vector<28x224xf32>
    %cst_36 = arith.constant 0.000000e+00 : f32
    %190 = vector.broadcast %cst_36 : f32 to vector<28x224xf32>
    %191 = arith.maximumf %189, %190 : vector<28x224xf32>
    %c28_37 = arith.constant 28 : index
    %c0_38 = arith.constant 0 : index
    %192 = vector.load %arg17[%c28_37, %c0_38] : memref<112x224xf32, #tpu.memory_space<vmem>>, vector<28x224xf32>
    tpu.vector_store %arg17[%c28_37, %c0_38], %191 {strides = array<i32>} : memref<112x224xf32, #tpu.memory_space<vmem>>, vector<28x224xf32>,
    %c2_39 = arith.constant 2 : index
    %193 = memref.load %arg3[%c2_39] : memref<4xf32, #tpu.memory_space<smem>>
    %194 = vector.broadcast %193 : f32 to vector<28x224xf32>
    %195 = arith.addf %176, %194 : vector<28x224xf32>
    %cst_40 = arith.constant 0.000000e+00 : f32
    %196 = vector.broadcast %cst_40 : f32 to vector<28x224xf32>
    %197 = arith.maximumf %195, %196 : vector<28x224xf32>
    %c56 = arith.constant 56 : index
    %c0_41 = arith.constant 0 : index
    %198 = vector.load %arg17[%c56, %c0_41] : memref<112x224xf32, #tpu.memory_space<vmem>>, vector<28x224xf32>
    tpu.vector_store %arg17[%c56, %c0_41], %197 {strides = array<i32>} : memref<112x224xf32, #tpu.memory_space<vmem>>, vector<28x224xf32>,
    %c3_42 = arith.constant 3 : index
    %199 = memref.load %arg3[%c3_42] : memref<4xf32, #tpu.memory_space<smem>>
    %200 = vector.broadcast %199 : f32 to vector<28x224xf32>
    %201 = arith.addf %180, %200 : vector<28x224xf32>
    %cst_43 = arith.constant 0.000000e+00 : f32
    %202 = vector.broadcast %cst_43 : f32 to vector<28x224xf32>
    %203 = arith.maximumf %201, %202 : vector<28x224xf32>
    %c84 = arith.constant 84 : index
    %c0_44 = arith.constant 0 : index
    %204 = vector.load %arg17[%c84, %c0_44] : memref<112x224xf32, #tpu.memory_space<vmem>>, vector<28x224xf32>
    tpu.vector_store %arg17[%c84, %c0_44], %203 {strides = array<i32>} : memref<112x224xf32, #tpu.memory_space<vmem>>, vector<28x224xf32>,
    %c0_45 = arith.constant 0 : index
    %c0_46 = arith.constant 0 : index
    %205 = vector.load %arg17[%c0_45, %c0_46] : memref<112x224xf32, #tpu.memory_space<vmem>>, vector<112x224xf32>
    %c0_47 = arith.constant 0 : index
    %c0_48 = arith.constant 0 : index
    %c0_49 = arith.constant 0 : index
    %206 = vector.load %arg8[%c0_47, %c0_48, %c0_49] : memref<2x64x112xf32, #tpu.memory_space<vmem>>, vector<1x64x112xf32>
    %207 = vector.shape_cast %206 : vector<1x64x112xf32> to vector<64x112xf32>
    %cst_50 = arith.constant dense<0.000000e+00> : vector<64x224xf32>
    %208 = tpu.matmul %207, %205, %cst_50 {dimension_numbers = #tpu.dot_dimension_numbers<[1], [0], [0], [1], [0, 0, 1, 1], [], []>} : vector<64x112xf32>, vector<112x224xf32>, vector<64x224xf32> -> vector<64x224xf32>
    %c1_51 = arith.constant 1 : index
    %c0_52 = arith.constant 0 : index
    %c0_53 = arith.constant 0 : index
    %209 = vector.load %arg8[%c1_51, %c0_52, %c0_53] : memref<2x64x112xf32, #tpu.memory_space<vmem>>, vector<1x64x112xf32>
    %210 = vector.shape_cast %209 : vector<1x64x112xf32> to vector<64x112xf32>
    %cst_54 = arith.constant dense<0.000000e+00> : vector<64x224xf32>
    %211 = tpu.matmul %210, %205, %cst_54 {dimension_numbers = #tpu.dot_dimension_numbers<[1], [0], [0], [1], [0, 0, 1, 1], [], []>} : vector<64x112xf32>, vector<112x224xf32>, vector<64x224xf32> -> vector<64x224xf32>
    %212 = arith.maximumf %208, %211 : vector<64x224xf32>
    %c0_55 = arith.constant 0 : index
    %c0_56 = arith.constant 0 : index
    %c0_57 = arith.constant 0 : index
    %213 = vector.load %arg9[%c0_55, %c0_56, %c0_57] : memref<2x224x114xf32, #tpu.memory_space<vmem>>, vector<1x224x114xf32>
    %214 = vector.shape_cast %213 : vector<1x224x114xf32> to vector<224x114xf32>
    %cst_58 = arith.constant dense<0.000000e+00> : vector<64x114xf32>
    %215 = tpu.matmul %212, %214, %cst_58 {dimension_numbers = #tpu.dot_dimension_numbers<[1], [0], [0], [1], [0, 0, 1, 1], [], []>} : vector<64x224xf32>, vector<224x114xf32>, vector<64x114xf32> -> vector<64x114xf32>
    %c1_59 = arith.constant 1 : index
    %c0_60 = arith.constant 0 : index
    %c0_61 = arith.constant 0 : index
    %216 = vector.load %arg9[%c1_59, %c0_60, %c0_61] : memref<2x224x114xf32, #tpu.memory_space<vmem>>, vector<1x224x114xf32>
    %217 = vector.shape_cast %216 : vector<1x224x114xf32> to vector<224x114xf32>
    %cst_62 = arith.constant dense<0.000000e+00> : vector<64x114xf32>
    %218 = tpu.matmul %212, %217, %cst_62 {dimension_numbers = #tpu.dot_dimension_numbers<[1], [0], [0], [1], [0, 0, 1, 1], [], []>} : vector<64x224xf32>, vector<224x114xf32>, vector<64x114xf32> -> vector<64x114xf32>
    %219 = arith.maximumf %215, %218 : vector<64x114xf32>
    %c0_63 = arith.constant 0 : index
    %c0_64 = arith.constant 0 : index
    %220 = vector.load %arg18[%c0_63, %c0_64] : memref<64x114xf32, #tpu.memory_space<vmem>>, vector<64x114xf32>
    tpu.vector_store %arg18[%c0_63, %c0_64], %219 {strides = array<i32>} : memref<64x114xf32, #tpu.memory_space<vmem>>, vector<64x114xf32>,
    %c0_65 = arith.constant 0 : index
    %c0_66 = arith.constant 0 : index
    %221 = vector.load %arg7[%c0_65, %c0_66] : memref<2x112xf32, #tpu.memory_space<vmem>>, vector<2x112xf32>
    %cst_67 = arith.constant 0.000000e+00 : f32
    %222 = vector.broadcast %cst_67 : f32 to vector<14x112xf32>
    %cst_68 = arith.constant 0.000000e+00 : f32
    %223 = vector.broadcast %cst_68 : f32 to vector<14x112xf32>
    %cst_69 = arith.constant 0.000000e+00 : f32
    %224 = vector.broadcast %cst_69 : f32 to vector<14x112xf32>
    %cst_70 = arith.constant 0.000000e+00 : f32
    %225 = vector.broadcast %cst_70 : f32 to vector<14x112xf32>
    %cst_71 = arith.constant 0.000000e+00 : f32
    %226 = vector.broadcast %cst_71 : f32 to vector<14x112xf32>
    %cst_72 = arith.constant 0.000000e+00 : f32
    %227 = vector.broadcast %cst_72 : f32 to vector<14x112xf32>
    %cst_73 = arith.constant 0.000000e+00 : f32
    %228 = vector.broadcast %cst_73 : f32 to vector<14x112xf32>
    %cst_74 = arith.constant 0.000000e+00 : f32
    %229 = vector.broadcast %cst_74 : f32 to vector<14x112xf32>
    %c0_75 = arith.constant 0 : index
    %c0_76 = arith.constant 0 : index
    %230 = vector.load %arg18[%c0_75, %c0_76] : memref<64x114xf32, #tpu.memory_space<vmem>>, vector<14x112xf32>
    %231 = vector.extract_strided_slice %221 {offsets = [0, 0], sizes = [1, 112], strides = [1, 1]} : vector<2x112xf32> to vector<1x112xf32>
    %232 = vector.broadcast %231 : vector<1x112xf32> to vector<14x112xf32>
    %233 = arith.mulf %230, %232 : vector<14x112xf32>
    %c0_77 = arith.constant 0 : index
    %234 = memref.load %arg4[%c0_77] : memref<288xf32, #tpu.memory_space<smem>>
    %235 = vector.broadcast %234 : f32 to vector<14x112xf32>
    %236 = arith.mulf %233, %235 : vector<14x112xf32>
    %237 = arith.addf %222, %236 : vector<14x112xf32>
    %c1_78 = arith.constant 1 : index
    %238 = memref.load %arg4[%c1_78] : memref<288xf32, #tpu.memory_space<smem>>
    %239 = vector.broadcast %238 : f32 to vector<14x112xf32>
    %240 = arith.mulf %233, %239 : vector<14x112xf32>
    %241 = arith.addf %223, %240 : vector<14x112xf32>
    %c2_79 = arith.constant 2 : index
    %242 = memref.load %arg4[%c2_79] : memref<288xf32, #tpu.memory_space<smem>>
    %243 = vector.broadcast %242 : f32 to vector<14x112xf32>
    %244 = arith.mulf %233, %243 : vector<14x112xf32>
    %245 = arith.addf %224, %244 : vector<14x112xf32>
    %c3_80 = arith.constant 3 : index
    %246 = memref.load %arg4[%c3_80] : memref<288xf32, #tpu.memory_space<smem>>
    %247 = vector.broadcast %246 : f32 to vector<14x112xf32>
    %248 = arith.mulf %233, %247 : vector<14x112xf32>
    %249 = arith.addf %225, %248 : vector<14x112xf32>
    %c4_81 = arith.constant 4 : index
    %250 = memref.load %arg4[%c4_81] : memref<288xf32, #tpu.memory_space<smem>>
    %251 = vector.broadcast %250 : f32 to vector<14x112xf32>
    %252 = arith.mulf %233, %251 : vector<14x112xf32>
    %253 = arith.addf %226, %252 : vector<14x112xf32>
    %c5_82 = arith.constant 5 : index
    %254 = memref.load %arg4[%c5_82] : memref<288xf32, #tpu.memory_space<smem>>
    %255 = vector.broadcast %254 : f32 to vector<14x112xf32>
    %256 = arith.mulf %233, %255 : vector<14x112xf32>
    %257 = arith.addf %227, %256 : vector<14x112xf32>
    %c6_83 = arith.constant 6 : index
    %258 = memref.load %arg4[%c6_83] : memref<288xf32, #tpu.memory_space<smem>>
    %259 = vector.broadcast %258 : f32 to vector<14x112xf32>
    %260 = arith.mulf %233, %259 : vector<14x112xf32>
    %261 = arith.addf %228, %260 : vector<14x112xf32>
    %c7_84 = arith.constant 7 : index
    %262 = memref.load %arg4[%c7_84] : memref<288xf32, #tpu.memory_space<smem>>
    %263 = vector.broadcast %262 : f32 to vector<14x112xf32>
    %264 = arith.mulf %233, %263 : vector<14x112xf32>
    %265 = arith.addf %229, %264 : vector<14x112xf32>
    %c0_85 = arith.constant 0 : index
    %c1_86 = arith.constant 1 : index
    %266 = vector.load %arg18[%c0_85, %c1_86] : memref<64x114xf32, #tpu.memory_space<vmem>>, vector<14x112xf32>
    %c32_87 = arith.constant 32 : index
    %267 = memref.load %arg4[%c32_87] : memref<288xf32, #tpu.memory_space<smem>>
    %268 = vector.broadcast %267 : f32 to vector<14x112xf32>
    %269 = arith.mulf %266, %268 : vector<14x112xf32>
    %270 = arith.addf %237, %269 : vector<14x112xf32>
    %c33_88 = arith.constant 33 : index
    %271 = memref.load %arg4[%c33_88] : memref<288xf32, #tpu.memory_space<smem>>
    %272 = vector.broadcast %271 : f32 to vector<14x112xf32>
    %273 = arith.mulf %266, %272 : vector<14x112xf32>
    %274 = arith.addf %241, %273 : vector<14x112xf32>
    %c34_89 = arith.constant 34 : index
    %275 = memref.load %arg4[%c34_89] : memref<288xf32, #tpu.memory_space<smem>>
    %276 = vector.broadcast %275 : f32 to vector<14x112xf32>
    %277 = arith.mulf %266, %276 : vector<14x112xf32>
    %278 = arith.addf %245, %277 : vector<14x112xf32>
    %c35_90 = arith.constant 35 : index
    %279 = memref.load %arg4[%c35_90] : memref<288xf32, #tpu.memory_space<smem>>
    %280 = vector.broadcast %279 : f32 to vector<14x112xf32>
    %281 = arith.mulf %266, %280 : vector<14x112xf32>
    %282 = arith.addf %249, %281 : vector<14x112xf32>
    %c36 = arith.constant 36 : index
    %283 = memref.load %arg4[%c36] : memref<288xf32, #tpu.memory_space<smem>>
    %284 = vector.broadcast %283 : f32 to vector<14x112xf32>
    %285 = arith.mulf %266, %284 : vector<14x112xf32>
    %286 = arith.addf %253, %285 : vector<14x112xf32>
    %c37 = arith.constant 37 : index
    %287 = memref.load %arg4[%c37] : memref<288xf32, #tpu.memory_space<smem>>
    %288 = vector.broadcast %287 : f32 to vector<14x112xf32>
    %289 = arith.mulf %266, %288 : vector<14x112xf32>
    %290 = arith.addf %257, %289 : vector<14x112xf32>
    %c38 = arith.constant 38 : index
    %291 = memref.load %arg4[%c38] : memref<288xf32, #tpu.memory_space<smem>>
    %292 = vector.broadcast %291 : f32 to vector<14x112xf32>
    %293 = arith.mulf %266, %292 : vector<14x112xf32>
    %294 = arith.addf %261, %293 : vector<14x112xf32>
    %c39 = arith.constant 39 : index
    %295 = memref.load %arg4[%c39] : memref<288xf32, #tpu.memory_space<smem>>
    %296 = vector.broadcast %295 : f32 to vector<14x112xf32>
    %297 = arith.mulf %266, %296 : vector<14x112xf32>
    %298 = arith.addf %265, %297 : vector<14x112xf32>
    %c0_91 = arith.constant 0 : index
    %c2_92 = arith.constant 2 : index
    %299 = vector.load %arg18[%c0_91, %c2_92] : memref<64x114xf32, #tpu.memory_space<vmem>>, vector<14x112xf32>
    %300 = vector.extract_strided_slice %221 {offsets = [1, 0], sizes = [1, 112], strides = [1, 1]} : vector<2x112xf32> to vector<1x112xf32>
    %301 = vector.broadcast %300 : vector<1x112xf32> to vector<14x112xf32>
    %302 = arith.mulf %299, %301 : vector<14x112xf32>
    %c64 = arith.constant 64 : index
    %303 = memref.load %arg4[%c64] : memref<288xf32, #tpu.memory_space<smem>>
    %304 = vector.broadcast %303 : f32 to vector<14x112xf32>
    %305 = arith.mulf %302, %304 : vector<14x112xf32>
    %306 = arith.addf %270, %305 : vector<14x112xf32>
    %c65 = arith.constant 65 : index
    %307 = memref.load %arg4[%c65] : memref<288xf32, #tpu.memory_space<smem>>
    %308 = vector.broadcast %307 : f32 to vector<14x112xf32>
    %309 = arith.mulf %302, %308 : vector<14x112xf32>
    %310 = arith.addf %274, %309 : vector<14x112xf32>
    %c66 = arith.constant 66 : index
    %311 = memref.load %arg4[%c66] : memref<288xf32, #tpu.memory_space<smem>>
    %312 = vector.broadcast %311 : f32 to vector<14x112xf32>
    %313 = arith.mulf %302, %312 : vector<14x112xf32>
    %314 = arith.addf %278, %313 : vector<14x112xf32>
    %c67 = arith.constant 67 : index
    %315 = memref.load %arg4[%c67] : memref<288xf32, #tpu.memory_space<smem>>
    %316 = vector.broadcast %315 : f32 to vector<14x112xf32>
    %317 = arith.mulf %302, %316 : vector<14x112xf32>
    %318 = arith.addf %282, %317 : vector<14x112xf32>
    %c68 = arith.constant 68 : index
    %319 = memref.load %arg4[%c68] : memref<288xf32, #tpu.memory_space<smem>>
    %320 = vector.broadcast %319 : f32 to vector<14x112xf32>
    %321 = arith.mulf %302, %320 : vector<14x112xf32>
    %322 = arith.addf %286, %321 : vector<14x112xf32>
    %c69 = arith.constant 69 : index
    %323 = memref.load %arg4[%c69] : memref<288xf32, #tpu.memory_space<smem>>
    %324 = vector.broadcast %323 : f32 to vector<14x112xf32>
    %325 = arith.mulf %302, %324 : vector<14x112xf32>
    %326 = arith.addf %290, %325 : vector<14x112xf32>
    %c70 = arith.constant 70 : index
    %327 = memref.load %arg4[%c70] : memref<288xf32, #tpu.memory_space<smem>>
    %328 = vector.broadcast %327 : f32 to vector<14x112xf32>
    %329 = arith.mulf %302, %328 : vector<14x112xf32>
    %330 = arith.addf %294, %329 : vector<14x112xf32>
    %c71 = arith.constant 71 : index
    %331 = memref.load %arg4[%c71] : memref<288xf32, #tpu.memory_space<smem>>
    %332 = vector.broadcast %331 : f32 to vector<14x112xf32>
    %333 = arith.mulf %302, %332 : vector<14x112xf32>
    %334 = arith.addf %298, %333 : vector<14x112xf32>
    %c1_93 = arith.constant 1 : index
    %c0_94 = arith.constant 0 : index
    %335 = vector.load %arg18[%c1_93, %c0_94] : memref<64x114xf32, #tpu.memory_space<vmem>>, vector<14x112xf32>
    %336 = vector.extract_strided_slice %221 {offsets = [0, 0], sizes = [1, 112], strides = [1, 1]} : vector<2x112xf32> to vector<1x112xf32>
    %337 = vector.broadcast %336 : vector<1x112xf32> to vector<14x112xf32>
    %338 = arith.mulf %335, %337 : vector<14x112xf32>
    %c96 = arith.constant 96 : index
    %339 = memref.load %arg4[%c96] : memref<288xf32, #tpu.memory_space<smem>>
    %340 = vector.broadcast %339 : f32 to vector<14x112xf32>
    %341 = arith.mulf %338, %340 : vector<14x112xf32>
    %342 = arith.addf %306, %341 : vector<14x112xf32>
    %c97 = arith.constant 97 : index
    %343 = memref.load %arg4[%c97] : memref<288xf32, #tpu.memory_space<smem>>
    %344 = vector.broadcast %343 : f32 to vector<14x112xf32>
    %345 = arith.mulf %338, %344 : vector<14x112xf32>
    %346 = arith.addf %310, %345 : vector<14x112xf32>
    %c98 = arith.constant 98 : index
    %347 = memref.load %arg4[%c98] : memref<288xf32, #tpu.memory_space<smem>>
    %348 = vector.broadcast %347 : f32 to vector<14x112xf32>
    %349 = arith.mulf %338, %348 : vector<14x112xf32>
    %350 = arith.addf %314, %349 : vector<14x112xf32>
    %c99 = arith.constant 99 : index
    %351 = memref.load %arg4[%c99] : memref<288xf32, #tpu.memory_space<smem>>
    %352 = vector.broadcast %351 : f32 to vector<14x112xf32>
    %353 = arith.mulf %338, %352 : vector<14x112xf32>
    %354 = arith.addf %318, %353 : vector<14x112xf32>
    %c100 = arith.constant 100 : index
    %355 = memref.load %arg4[%c100] : memref<288xf32, #tpu.memory_space<smem>>
    %356 = vector.broadcast %355 : f32 to vector<14x112xf32>
    %357 = arith.mulf %338, %356 : vector<14x112xf32>
    %358 = arith.addf %322, %357 : vector<14x112xf32>
    %c101 = arith.constant 101 : index
    %359 = memref.load %arg4[%c101] : memref<288xf32, #tpu.memory_space<smem>>
    %360 = vector.broadcast %359 : f32 to vector<14x112xf32>
    %361 = arith.mulf %338, %360 : vector<14x112xf32>
    %362 = arith.addf %326, %361 : vector<14x112xf32>
    %c102 = arith.constant 102 : index
    %363 = memref.load %arg4[%c102] : memref<288xf32, #tpu.memory_space<smem>>
    %364 = vector.broadcast %363 : f32 to vector<14x112xf32>
    %365 = arith.mulf %338, %364 : vector<14x112xf32>
    %366 = arith.addf %330, %365 : vector<14x112xf32>
    %c103 = arith.constant 103 : index
    %367 = memref.load %arg4[%c103] : memref<288xf32, #tpu.memory_space<smem>>
    %368 = vector.broadcast %367 : f32 to vector<14x112xf32>
    %369 = arith.mulf %338, %368 : vector<14x112xf32>
    %370 = arith.addf %334, %369 : vector<14x112xf32>
    %c1_95 = arith.constant 1 : index
    %c1_96 = arith.constant 1 : index
    %371 = vector.load %arg18[%c1_95, %c1_96] : memref<64x114xf32, #tpu.memory_space<vmem>>, vector<14x112xf32>
    %c128 = arith.constant 128 : index
    %372 = memref.load %arg4[%c128] : memref<288xf32, #tpu.memory_space<smem>>
    %373 = vector.broadcast %372 : f32 to vector<14x112xf32>
    %374 = arith.mulf %371, %373 : vector<14x112xf32>
    %375 = arith.addf %342, %374 : vector<14x112xf32>
    %c129 = arith.constant 129 : index
    %376 = memref.load %arg4[%c129] : memref<288xf32, #tpu.memory_space<smem>>
    %377 = vector.broadcast %376 : f32 to vector<14x112xf32>
    %378 = arith.mulf %371, %377 : vector<14x112xf32>
    %379 = arith.addf %346, %378 : vector<14x112xf32>
    %c130 = arith.constant 130 : index
    %380 = memref.load %arg4[%c130] : memref<288xf32, #tpu.memory_space<smem>>
    %381 = vector.broadcast %380 : f32 to vector<14x112xf32>
    %382 = arith.mulf %371, %381 : vector<14x112xf32>
    %383 = arith.addf %350, %382 : vector<14x112xf32>
    %c131 = arith.constant 131 : index
    %384 = memref.load %arg4[%c131] : memref<288xf32, #tpu.memory_space<smem>>
    %385 = vector.broadcast %384 : f32 to vector<14x112xf32>
    %386 = arith.mulf %371, %385 : vector<14x112xf32>
    %387 = arith.addf %354, %386 : vector<14x112xf32>
    %c132 = arith.constant 132 : index
    %388 = memref.load %arg4[%c132] : memref<288xf32, #tpu.memory_space<smem>>
    %389 = vector.broadcast %388 : f32 to vector<14x112xf32>
    %390 = arith.mulf %371, %389 : vector<14x112xf32>
    %391 = arith.addf %358, %390 : vector<14x112xf32>
    %c133 = arith.constant 133 : index
    %392 = memref.load %arg4[%c133] : memref<288xf32, #tpu.memory_space<smem>>
    %393 = vector.broadcast %392 : f32 to vector<14x112xf32>
    %394 = arith.mulf %371, %393 : vector<14x112xf32>
    %395 = arith.addf %362, %394 : vector<14x112xf32>
    %c134 = arith.constant 134 : index
    %396 = memref.load %arg4[%c134] : memref<288xf32, #tpu.memory_space<smem>>
    %397 = vector.broadcast %396 : f32 to vector<14x112xf32>
    %398 = arith.mulf %371, %397 : vector<14x112xf32>
    %399 = arith.addf %366, %398 : vector<14x112xf32>
    %c135 = arith.constant 135 : index
    %400 = memref.load %arg4[%c135] : memref<288xf32, #tpu.memory_space<smem>>
    %401 = vector.broadcast %400 : f32 to vector<14x112xf32>
    %402 = arith.mulf %371, %401 : vector<14x112xf32>
    %403 = arith.addf %370, %402 : vector<14x112xf32>
    %c1_97 = arith.constant 1 : index
    %c2_98 = arith.constant 2 : index
    %404 = vector.load %arg18[%c1_97, %c2_98] : memref<64x114xf32, #tpu.memory_space<vmem>>, vector<14x112xf32>
    %405 = vector.extract_strided_slice %221 {offsets = [1, 0], sizes = [1, 112], strides = [1, 1]} : vector<2x112xf32> to vector<1x112xf32>
    %406 = vector.broadcast %405 : vector<1x112xf32> to vector<14x112xf32>
    %407 = arith.mulf %404, %406 : vector<14x112xf32>
    %c160 = arith.constant 160 : index
    %408 = memref.load %arg4[%c160] : memref<288xf32, #tpu.memory_space<smem>>
    %409 = vector.broadcast %408 : f32 to vector<14x112xf32>
    %410 = arith.mulf %407, %409 : vector<14x112xf32>
    %411 = arith.addf %375, %410 : vector<14x112xf32>
    %c161 = arith.constant 161 : index
    %412 = memref.load %arg4[%c161] : memref<288xf32, #tpu.memory_space<smem>>
    %413 = vector.broadcast %412 : f32 to vector<14x112xf32>
    %414 = arith.mulf %407, %413 : vector<14x112xf32>
    %415 = arith.addf %379, %414 : vector<14x112xf32>
    %c162 = arith.constant 162 : index
    %416 = memref.load %arg4[%c162] : memref<288xf32, #tpu.memory_space<smem>>
    %417 = vector.broadcast %416 : f32 to vector<14x112xf32>
    %418 = arith.mulf %407, %417 : vector<14x112xf32>
    %419 = arith.addf %383, %418 : vector<14x112xf32>
    %c163 = arith.constant 163 : index
    %420 = memref.load %arg4[%c163] : memref<288xf32, #tpu.memory_space<smem>>
    %421 = vector.broadcast %420 : f32 to vector<14x112xf32>
    %422 = arith.mulf %407, %421 : vector<14x112xf32>
    %423 = arith.addf %387, %422 : vector<14x112xf32>
    %c164 = arith.constant 164 : index
    %424 = memref.load %arg4[%c164] : memref<288xf32, #tpu.memory_space<smem>>
    %425 = vector.broadcast %424 : f32 to vector<14x112xf32>
    %426 = arith.mulf %407, %425 : vector<14x112xf32>
    %427 = arith.addf %391, %426 : vector<14x112xf32>
    %c165 = arith.constant 165 : index
    %428 = memref.load %arg4[%c165] : memref<288xf32, #tpu.memory_space<smem>>
    %429 = vector.broadcast %428 : f32 to vector<14x112xf32>
    %430 = arith.mulf %407, %429 : vector<14x112xf32>
    %431 = arith.addf %395, %430 : vector<14x112xf32>
    %c166 = arith.constant 166 : index
    %432 = memref.load %arg4[%c166] : memref<288xf32, #tpu.memory_space<smem>>
    %433 = vector.broadcast %432 : f32 to vector<14x112xf32>
    %434 = arith.mulf %407, %433 : vector<14x112xf32>
    %435 = arith.addf %399, %434 : vector<14x112xf32>
    %c167 = arith.constant 167 : index
    %436 = memref.load %arg4[%c167] : memref<288xf32, #tpu.memory_space<smem>>
    %437 = vector.broadcast %436 : f32 to vector<14x112xf32>
    %438 = arith.mulf %407, %437 : vector<14x112xf32>
    %439 = arith.addf %403, %438 : vector<14x112xf32>
    %c2_99 = arith.constant 2 : index
    %c0_100 = arith.constant 0 : index
    %440 = vector.load %arg18[%c2_99, %c0_100] : memref<64x114xf32, #tpu.memory_space<vmem>>, vector<14x112xf32>
    %441 = vector.extract_strided_slice %221 {offsets = [0, 0], sizes = [1, 112], strides = [1, 1]} : vector<2x112xf32> to vector<1x112xf32>
    %442 = vector.broadcast %441 : vector<1x112xf32> to vector<14x112xf32>
    %443 = arith.mulf %440, %442 : vector<14x112xf32>
    %c192 = arith.constant 192 : index
    %444 = memref.load %arg4[%c192] : memref<288xf32, #tpu.memory_space<smem>>
    %445 = vector.broadcast %444 : f32 to vector<14x112xf32>
    %446 = arith.mulf %443, %445 : vector<14x112xf32>
    %447 = arith.addf %411, %446 : vector<14x112xf32>
    %c193 = arith.constant 193 : index
    %448 = memref.load %arg4[%c193] : memref<288xf32, #tpu.memory_space<smem>>
    %449 = vector.broadcast %448 : f32 to vector<14x112xf32>
    %450 = arith.mulf %443, %449 : vector<14x112xf32>
    %451 = arith.addf %415, %450 : vector<14x112xf32>
    %c194 = arith.constant 194 : index
    %452 = memref.load %arg4[%c194] : memref<288xf32, #tpu.memory_space<smem>>
    %453 = vector.broadcast %452 : f32 to vector<14x112xf32>
    %454 = arith.mulf %443, %453 : vector<14x112xf32>
    %455 = arith.addf %419, %454 : vector<14x112xf32>
    %c195 = arith.constant 195 : index
    %456 = memref.load %arg4[%c195] : memref<288xf32, #tpu.memory_space<smem>>
    %457 = vector.broadcast %456 : f32 to vector<14x112xf32>
    %458 = arith.mulf %443, %457 : vector<14x112xf32>
    %459 = arith.addf %423, %458 : vector<14x112xf32>
    %c196 = arith.constant 196 : index
    %460 = memref.load %arg4[%c196] : memref<288xf32, #tpu.memory_space<smem>>
    %461 = vector.broadcast %460 : f32 to vector<14x112xf32>
    %462 = arith.mulf %443, %461 : vector<14x112xf32>
    %463 = arith.addf %427, %462 : vector<14x112xf32>
    %c197 = arith.constant 197 : index
    %464 = memref.load %arg4[%c197] : memref<288xf32, #tpu.memory_space<smem>>
    %465 = vector.broadcast %464 : f32 to vector<14x112xf32>
    %466 = arith.mulf %443, %465 : vector<14x112xf32>
    %467 = arith.addf %431, %466 : vector<14x112xf32>
    %c198 = arith.constant 198 : index
    %468 = memref.load %arg4[%c198] : memref<288xf32, #tpu.memory_space<smem>>
    %469 = vector.broadcast %468 : f32 to vector<14x112xf32>
    %470 = arith.mulf %443, %469 : vector<14x112xf32>
    %471 = arith.addf %435, %470 : vector<14x112xf32>
    %c199 = arith.constant 199 : index
    %472 = memref.load %arg4[%c199] : memref<288xf32, #tpu.memory_space<smem>>
    %473 = vector.broadcast %472 : f32 to vector<14x112xf32>
    %474 = arith.mulf %443, %473 : vector<14x112xf32>
    %475 = arith.addf %439, %474 : vector<14x112xf32>
    %c2_101 = arith.constant 2 : index
    %c1_102 = arith.constant 1 : index
    %476 = vector.load %arg18[%c2_101, %c1_102] : memref<64x114xf32, #tpu.memory_space<vmem>>, vector<14x112xf32>
    %c224 = arith.constant 224 : index
    %477 = memref.load %arg4[%c224] : memref<288xf32, #tpu.memory_space<smem>>
    %478 = vector.broadcast %477 : f32 to vector<14x112xf32>
    %479 = arith.mulf %476, %478 : vector<14x112xf32>
    %480 = arith.addf %447, %479 : vector<14x112xf32>
    %c225 = arith.constant 225 : index
    %481 = memref.load %arg4[%c225] : memref<288xf32, #tpu.memory_space<smem>>
    %482 = vector.broadcast %481 : f32 to vector<14x112xf32>
    %483 = arith.mulf %476, %482 : vector<14x112xf32>
    %484 = arith.addf %451, %483 : vector<14x112xf32>
    %c226 = arith.constant 226 : index
    %485 = memref.load %arg4[%c226] : memref<288xf32, #tpu.memory_space<smem>>
    %486 = vector.broadcast %485 : f32 to vector<14x112xf32>
    %487 = arith.mulf %476, %486 : vector<14x112xf32>
    %488 = arith.addf %455, %487 : vector<14x112xf32>
    %c227 = arith.constant 227 : index
    %489 = memref.load %arg4[%c227] : memref<288xf32, #tpu.memory_space<smem>>
    %490 = vector.broadcast %489 : f32 to vector<14x112xf32>
    %491 = arith.mulf %476, %490 : vector<14x112xf32>
    %492 = arith.addf %459, %491 : vector<14x112xf32>
    %c228 = arith.constant 228 : index
    %493 = memref.load %arg4[%c228] : memref<288xf32, #tpu.memory_space<smem>>
    %494 = vector.broadcast %493 : f32 to vector<14x112xf32>
    %495 = arith.mulf %476, %494 : vector<14x112xf32>
    %496 = arith.addf %463, %495 : vector<14x112xf32>
    %c229 = arith.constant 229 : index
    %497 = memref.load %arg4[%c229] : memref<288xf32, #tpu.memory_space<smem>>
    %498 = vector.broadcast %497 : f32 to vector<14x112xf32>
    %499 = arith.mulf %476, %498 : vector<14x112xf32>
    %500 = arith.addf %467, %499 : vector<14x112xf32>
    %c230 = arith.constant 230 : index
    %501 = memref.load %arg4[%c230] : memref<288xf32, #tpu.memory_space<smem>>
    %502 = vector.broadcast %501 : f32 to vector<14x112xf32>
    %503 = arith.mulf %476, %502 : vector<14x112xf32>
    %504 = arith.addf %471, %503 : vector<14x112xf32>
    %c231 = arith.constant 231 : index
    %505 = memref.load %arg4[%c231] : memref<288xf32, #tpu.memory_space<smem>>
    %506 = vector.broadcast %505 : f32 to vector<14x112xf32>
    %507 = arith.mulf %476, %506 : vector<14x112xf32>
    %508 = arith.addf %475, %507 : vector<14x112xf32>
    %c2_103 = arith.constant 2 : index
    %c2_104 = arith.constant 2 : index
    %509 = vector.load %arg18[%c2_103, %c2_104] : memref<64x114xf32, #tpu.memory_space<vmem>>, vector<14x112xf32>
    %510 = vector.extract_strided_slice %221 {offsets = [1, 0], sizes = [1, 112], strides = [1, 1]} : vector<2x112xf32> to vector<1x112xf32>
    %511 = vector.broadcast %510 : vector<1x112xf32> to vector<14x112xf32>
    %512 = arith.mulf %509, %511 : vector<14x112xf32>
    %c256 = arith.constant 256 : index
    %513 = memref.load %arg4[%c256] : memref<288xf32, #tpu.memory_space<smem>>
    %514 = vector.broadcast %513 : f32 to vector<14x112xf32>
    %515 = arith.mulf %512, %514 : vector<14x112xf32>
    %516 = arith.addf %480, %515 : vector<14x112xf32>
    %c257 = arith.constant 257 : index
    %517 = memref.load %arg4[%c257] : memref<288xf32, #tpu.memory_space<smem>>
    %518 = vector.broadcast %517 : f32 to vector<14x112xf32>
    %519 = arith.mulf %512, %518 : vector<14x112xf32>
    %520 = arith.addf %484, %519 : vector<14x112xf32>
    %c258 = arith.constant 258 : index
    %521 = memref.load %arg4[%c258] : memref<288xf32, #tpu.memory_space<smem>>
    %522 = vector.broadcast %521 : f32 to vector<14x112xf32>
    %523 = arith.mulf %512, %522 : vector<14x112xf32>
    %524 = arith.addf %488, %523 : vector<14x112xf32>
    %c259 = arith.constant 259 : index
    %525 = memref.load %arg4[%c259] : memref<288xf32, #tpu.memory_space<smem>>
    %526 = vector.broadcast %525 : f32 to vector<14x112xf32>
    %527 = arith.mulf %512, %526 : vector<14x112xf32>
    %528 = arith.addf %492, %527 : vector<14x112xf32>
    %c260 = arith.constant 260 : index
    %529 = memref.load %arg4[%c260] : memref<288xf32, #tpu.memory_space<smem>>
    %530 = vector.broadcast %529 : f32 to vector<14x112xf32>
    %531 = arith.mulf %512, %530 : vector<14x112xf32>
    %532 = arith.addf %496, %531 : vector<14x112xf32>
    %c261 = arith.constant 261 : index
    %533 = memref.load %arg4[%c261] : memref<288xf32, #tpu.memory_space<smem>>
    %534 = vector.broadcast %533 : f32 to vector<14x112xf32>
    %535 = arith.mulf %512, %534 : vector<14x112xf32>
    %536 = arith.addf %500, %535 : vector<14x112xf32>
    %c262 = arith.constant 262 : index
    %537 = memref.load %arg4[%c262] : memref<288xf32, #tpu.memory_space<smem>>
    %538 = vector.broadcast %537 : f32 to vector<14x112xf32>
    %539 = arith.mulf %512, %538 : vector<14x112xf32>
    %540 = arith.addf %504, %539 : vector<14x112xf32>
    %c263 = arith.constant 263 : index
    %541 = memref.load %arg4[%c263] : memref<288xf32, #tpu.memory_space<smem>>
    %542 = vector.broadcast %541 : f32 to vector<14x112xf32>
    %543 = arith.mulf %512, %542 : vector<14x112xf32>
    %544 = arith.addf %508, %543 : vector<14x112xf32>
    %c16_105 = arith.constant 16 : index
    %c0_106 = arith.constant 0 : index
    %545 = vector.load %arg18[%c16_105, %c0_106] : memref<64x114xf32, #tpu.memory_space<vmem>>, vector<14x112xf32>
    %546 = vector.extract_strided_slice %221 {offsets = [0, 0], sizes = [1, 112], strides = [1, 1]} : vector<2x112xf32> to vector<1x112xf32>
    %547 = vector.broadcast %546 : vector<1x112xf32> to vector<14x112xf32>
    %548 = arith.mulf %545, %547 : vector<14x112xf32>
    %c8_107 = arith.constant 8 : index
    %549 = memref.load %arg4[%c8_107] : memref<288xf32, #tpu.memory_space<smem>>
    %550 = vector.broadcast %549 : f32 to vector<14x112xf32>
    %551 = arith.mulf %548, %550 : vector<14x112xf32>
    %552 = arith.addf %516, %551 : vector<14x112xf32>
    %c9_108 = arith.constant 9 : index
    %553 = memref.load %arg4[%c9_108] : memref<288xf32, #tpu.memory_space<smem>>
    %554 = vector.broadcast %553 : f32 to vector<14x112xf32>
    %555 = arith.mulf %548, %554 : vector<14x112xf32>
    %556 = arith.addf %520, %555 : vector<14x112xf32>
    %c10_109 = arith.constant 10 : index
    %557 = memref.load %arg4[%c10_109] : memref<288xf32, #tpu.memory_space<smem>>
    %558 = vector.broadcast %557 : f32 to vector<14x112xf32>
    %559 = arith.mulf %548, %558 : vector<14x112xf32>
    %560 = arith.addf %524, %559 : vector<14x112xf32>
    %c11_110 = arith.constant 11 : index
    %561 = memref.load %arg4[%c11_110] : memref<288xf32, #tpu.memory_space<smem>>
    %562 = vector.broadcast %561 : f32 to vector<14x112xf32>
    %563 = arith.mulf %548, %562 : vector<14x112xf32>
    %564 = arith.addf %528, %563 : vector<14x112xf32>
    %c12_111 = arith.constant 12 : index
    %565 = memref.load %arg4[%c12_111] : memref<288xf32, #tpu.memory_space<smem>>
    %566 = vector.broadcast %565 : f32 to vector<14x112xf32>
    %567 = arith.mulf %548, %566 : vector<14x112xf32>
    %568 = arith.addf %532, %567 : vector<14x112xf32>
    %c13_112 = arith.constant 13 : index
    %569 = memref.load %arg4[%c13_112] : memref<288xf32, #tpu.memory_space<smem>>
    %570 = vector.broadcast %569 : f32 to vector<14x112xf32>
    %571 = arith.mulf %548, %570 : vector<14x112xf32>
    %572 = arith.addf %536, %571 : vector<14x112xf32>
    %c14_113 = arith.constant 14 : index
    %573 = memref.load %arg4[%c14_113] : memref<288xf32, #tpu.memory_space<smem>>
    %574 = vector.broadcast %573 : f32 to vector<14x112xf32>
    %575 = arith.mulf %548, %574 : vector<14x112xf32>
    %576 = arith.addf %540, %575 : vector<14x112xf32>
    %c15_114 = arith.constant 15 : index
    %577 = memref.load %arg4[%c15_114] : memref<288xf32, #tpu.memory_space<smem>>
    %578 = vector.broadcast %577 : f32 to vector<14x112xf32>
    %579 = arith.mulf %548, %578 : vector<14x112xf32>
    %580 = arith.addf %544, %579 : vector<14x112xf32>
    %c16_115 = arith.constant 16 : index
    %c1_116 = arith.constant 1 : index
    %581 = vector.load %arg18[%c16_115, %c1_116] : memref<64x114xf32, #tpu.memory_space<vmem>>, vector<14x112xf32>
    %c40 = arith.constant 40 : index
    %582 = memref.load %arg4[%c40] : memref<288xf32, #tpu.memory_space<smem>>
    %583 = vector.broadcast %582 : f32 to vector<14x112xf32>
    %584 = arith.mulf %581, %583 : vector<14x112xf32>
    %585 = arith.addf %552, %584 : vector<14x112xf32>
    %c41 = arith.constant 41 : index
    %586 = memref.load %arg4[%c41] : memref<288xf32, #tpu.memory_space<smem>>
    %587 = vector.broadcast %586 : f32 to vector<14x112xf32>
    %588 = arith.mulf %581, %587 : vector<14x112xf32>
    %589 = arith.addf %556, %588 : vector<14x112xf32>
    %c42 = arith.constant 42 : index
    %590 = memref.load %arg4[%c42] : memref<288xf32, #tpu.memory_space<smem>>
    %591 = vector.broadcast %590 : f32 to vector<14x112xf32>
    %592 = arith.mulf %581, %591 : vector<14x112xf32>
    %593 = arith.addf %560, %592 : vector<14x112xf32>
    %c43 = arith.constant 43 : index
    %594 = memref.load %arg4[%c43] : memref<288xf32, #tpu.memory_space<smem>>
    %595 = vector.broadcast %594 : f32 to vector<14x112xf32>
    %596 = arith.mulf %581, %595 : vector<14x112xf32>
    %597 = arith.addf %564, %596 : vector<14x112xf32>
    %c44 = arith.constant 44 : index
    %598 = memref.load %arg4[%c44] : memref<288xf32, #tpu.memory_space<smem>>
    %599 = vector.broadcast %598 : f32 to vector<14x112xf32>
    %600 = arith.mulf %581, %599 : vector<14x112xf32>
    %601 = arith.addf %568, %600 : vector<14x112xf32>
    %c45 = arith.constant 45 : index
    %602 = memref.load %arg4[%c45] : memref<288xf32, #tpu.memory_space<smem>>
    %603 = vector.broadcast %602 : f32 to vector<14x112xf32>
    %604 = arith.mulf %581, %603 : vector<14x112xf32>
    %605 = arith.addf %572, %604 : vector<14x112xf32>
    %c46 = arith.constant 46 : index
    %606 = memref.load %arg4[%c46] : memref<288xf32, #tpu.memory_space<smem>>
    %607 = vector.broadcast %606 : f32 to vector<14x112xf32>
    %608 = arith.mulf %581, %607 : vector<14x112xf32>
    %609 = arith.addf %576, %608 : vector<14x112xf32>
    %c47 = arith.constant 47 : index
    %610 = memref.load %arg4[%c47] : memref<288xf32, #tpu.memory_space<smem>>
    %611 = vector.broadcast %610 : f32 to vector<14x112xf32>
    %612 = arith.mulf %581, %611 : vector<14x112xf32>
    %613 = arith.addf %580, %612 : vector<14x112xf32>
    %c16_117 = arith.constant 16 : index
    %c2_118 = arith.constant 2 : index
    %614 = vector.load %arg18[%c16_117, %c2_118] : memref<64x114xf32, #tpu.memory_space<vmem>>, vector<14x112xf32>
    %615 = vector.extract_strided_slice %221 {offsets = [1, 0], sizes = [1, 112], strides = [1, 1]} : vector<2x112xf32> to vector<1x112xf32>
    %616 = vector.broadcast %615 : vector<1x112xf32> to vector<14x112xf32>
    %617 = arith.mulf %614, %616 : vector<14x112xf32>
    %c72 = arith.constant 72 : index
    %618 = memref.load %arg4[%c72] : memref<288xf32, #tpu.memory_space<smem>>
    %619 = vector.broadcast %618 : f32 to vector<14x112xf32>
    %620 = arith.mulf %617, %619 : vector<14x112xf32>
    %621 = arith.addf %585, %620 : vector<14x112xf32>
    %c73 = arith.constant 73 : index
    %622 = memref.load %arg4[%c73] : memref<288xf32, #tpu.memory_space<smem>>
    %623 = vector.broadcast %622 : f32 to vector<14x112xf32>
    %624 = arith.mulf %617, %623 : vector<14x112xf32>
    %625 = arith.addf %589, %624 : vector<14x112xf32>
    %c74 = arith.constant 74 : index
    %626 = memref.load %arg4[%c74] : memref<288xf32, #tpu.memory_space<smem>>
    %627 = vector.broadcast %626 : f32 to vector<14x112xf32>
    %628 = arith.mulf %617, %627 : vector<14x112xf32>
    %629 = arith.addf %593, %628 : vector<14x112xf32>
    %c75 = arith.constant 75 : index
    %630 = memref.load %arg4[%c75] : memref<288xf32, #tpu.memory_space<smem>>
    %631 = vector.broadcast %630 : f32 to vector<14x112xf32>
    %632 = arith.mulf %617, %631 : vector<14x112xf32>
    %633 = arith.addf %597, %632 : vector<14x112xf32>
    %c76 = arith.constant 76 : index
    %634 = memref.load %arg4[%c76] : memref<288xf32, #tpu.memory_space<smem>>
    %635 = vector.broadcast %634 : f32 to vector<14x112xf32>
    %636 = arith.mulf %617, %635 : vector<14x112xf32>
    %637 = arith.addf %601, %636 : vector<14x112xf32>
    %c77 = arith.constant 77 : index
    %638 = memref.load %arg4[%c77] : memref<288xf32, #tpu.memory_space<smem>>
    %639 = vector.broadcast %638 : f32 to vector<14x112xf32>
    %640 = arith.mulf %617, %639 : vector<14x112xf32>
    %641 = arith.addf %605, %640 : vector<14x112xf32>
    %c78 = arith.constant 78 : index
    %642 = memref.load %arg4[%c78] : memref<288xf32, #tpu.memory_space<smem>>
    %643 = vector.broadcast %642 : f32 to vector<14x112xf32>
    %644 = arith.mulf %617, %643 : vector<14x112xf32>
    %645 = arith.addf %609, %644 : vector<14x112xf32>
    %c79 = arith.constant 79 : index
    %646 = memref.load %arg4[%c79] : memref<288xf32, #tpu.memory_space<smem>>
    %647 = vector.broadcast %646 : f32 to vector<14x112xf32>
    %648 = arith.mulf %617, %647 : vector<14x112xf32>
    %649 = arith.addf %613, %648 : vector<14x112xf32>
    %c17_119 = arith.constant 17 : index
    %c0_120 = arith.constant 0 : index
    %650 = vector.load %arg18[%c17_119, %c0_120] : memref<64x114xf32, #tpu.memory_space<vmem>>, vector<14x112xf32>
    %651 = vector.extract_strided_slice %221 {offsets = [0, 0], sizes = [1, 112], strides = [1, 1]} : vector<2x112xf32> to vector<1x112xf32>
    %652 = vector.broadcast %651 : vector<1x112xf32> to vector<14x112xf32>
    %653 = arith.mulf %650, %652 : vector<14x112xf32>
    %c104 = arith.constant 104 : index
    %654 = memref.load %arg4[%c104] : memref<288xf32, #tpu.memory_space<smem>>
    %655 = vector.broadcast %654 : f32 to vector<14x112xf32>
    %656 = arith.mulf %653, %655 : vector<14x112xf32>
    %657 = arith.addf %621, %656 : vector<14x112xf32>
    %c105 = arith.constant 105 : index
    %658 = memref.load %arg4[%c105] : memref<288xf32, #tpu.memory_space<smem>>
    %659 = vector.broadcast %658 : f32 to vector<14x112xf32>
    %660 = arith.mulf %653, %659 : vector<14x112xf32>
    %661 = arith.addf %625, %660 : vector<14x112xf32>
    %c106 = arith.constant 106 : index
    %662 = memref.load %arg4[%c106] : memref<288xf32, #tpu.memory_space<smem>>
    %663 = vector.broadcast %662 : f32 to vector<14x112xf32>
    %664 = arith.mulf %653, %663 : vector<14x112xf32>
    %665 = arith.addf %629, %664 : vector<14x112xf32>
    %c107 = arith.constant 107 : index
    %666 = memref.load %arg4[%c107] : memref<288xf32, #tpu.memory_space<smem>>
    %667 = vector.broadcast %666 : f32 to vector<14x112xf32>
    %668 = arith.mulf %653, %667 : vector<14x112xf32>
    %669 = arith.addf %633, %668 : vector<14x112xf32>
    %c108 = arith.constant 108 : index
    %670 = memref.load %arg4[%c108] : memref<288xf32, #tpu.memory_space<smem>>
    %671 = vector.broadcast %670 : f32 to vector<14x112xf32>
    %672 = arith.mulf %653, %671 : vector<14x112xf32>
    %673 = arith.addf %637, %672 : vector<14x112xf32>
    %c109 = arith.constant 109 : index
    %674 = memref.load %arg4[%c109] : memref<288xf32, #tpu.memory_space<smem>>
    %675 = vector.broadcast %674 : f32 to vector<14x112xf32>
    %676 = arith.mulf %653, %675 : vector<14x112xf32>
    %677 = arith.addf %641, %676 : vector<14x112xf32>
    %c110 = arith.constant 110 : index
    %678 = memref.load %arg4[%c110] : memref<288xf32, #tpu.memory_space<smem>>
    %679 = vector.broadcast %678 : f32 to vector<14x112xf32>
    %680 = arith.mulf %653, %679 : vector<14x112xf32>
    %681 = arith.addf %645, %680 : vector<14x112xf32>
    %c111 = arith.constant 111 : index
    %682 = memref.load %arg4[%c111] : memref<288xf32, #tpu.memory_space<smem>>
    %683 = vector.broadcast %682 : f32 to vector<14x112xf32>
    %684 = arith.mulf %653, %683 : vector<14x112xf32>
    %685 = arith.addf %649, %684 : vector<14x112xf32>
    %c17_121 = arith.constant 17 : index
    %c1_122 = arith.constant 1 : index
    %686 = vector.load %arg18[%c17_121, %c1_122] : memref<64x114xf32, #tpu.memory_space<vmem>>, vector<14x112xf32>
    %c136 = arith.constant 136 : index
    %687 = memref.load %arg4[%c136] : memref<288xf32, #tpu.memory_space<smem>>
    %688 = vector.broadcast %687 : f32 to vector<14x112xf32>
    %689 = arith.mulf %686, %688 : vector<14x112xf32>
    %690 = arith.addf %657, %689 : vector<14x112xf32>
    %c137 = arith.constant 137 : index
    %691 = memref.load %arg4[%c137] : memref<288xf32, #tpu.memory_space<smem>>
    %692 = vector.broadcast %691 : f32 to vector<14x112xf32>
    %693 = arith.mulf %686, %692 : vector<14x112xf32>
    %694 = arith.addf %661, %693 : vector<14x112xf32>
    %c138 = arith.constant 138 : index
    %695 = memref.load %arg4[%c138] : memref<288xf32, #tpu.memory_space<smem>>
    %696 = vector.broadcast %695 : f32 to vector<14x112xf32>
    %697 = arith.mulf %686, %696 : vector<14x112xf32>
    %698 = arith.addf %665, %697 : vector<14x112xf32>
    %c139 = arith.constant 139 : index
    %699 = memref.load %arg4[%c139] : memref<288xf32, #tpu.memory_space<smem>>
    %700 = vector.broadcast %699 : f32 to vector<14x112xf32>
    %701 = arith.mulf %686, %700 : vector<14x112xf32>
    %702 = arith.addf %669, %701 : vector<14x112xf32>
    %c140 = arith.constant 140 : index
    %703 = memref.load %arg4[%c140] : memref<288xf32, #tpu.memory_space<smem>>
    %704 = vector.broadcast %703 : f32 to vector<14x112xf32>
    %705 = arith.mulf %686, %704 : vector<14x112xf32>
    %706 = arith.addf %673, %705 : vector<14x112xf32>
    %c141 = arith.constant 141 : index
    %707 = memref.load %arg4[%c141] : memref<288xf32, #tpu.memory_space<smem>>
    %708 = vector.broadcast %707 : f32 to vector<14x112xf32>
    %709 = arith.mulf %686, %708 : vector<14x112xf32>
    %710 = arith.addf %677, %709 : vector<14x112xf32>
    %c142 = arith.constant 142 : index
    %711 = memref.load %arg4[%c142] : memref<288xf32, #tpu.memory_space<smem>>
    %712 = vector.broadcast %711 : f32 to vector<14x112xf32>
    %713 = arith.mulf %686, %712 : vector<14x112xf32>
    %714 = arith.addf %681, %713 : vector<14x112xf32>
    %c143 = arith.constant 143 : index
    %715 = memref.load %arg4[%c143] : memref<288xf32, #tpu.memory_space<smem>>
    %716 = vector.broadcast %715 : f32 to vector<14x112xf32>
    %717 = arith.mulf %686, %716 : vector<14x112xf32>
    %718 = arith.addf %685, %717 : vector<14x112xf32>
    %c17_123 = arith.constant 17 : index
    %c2_124 = arith.constant 2 : index
    %719 = vector.load %arg18[%c17_123, %c2_124] : memref<64x114xf32, #tpu.memory_space<vmem>>, vector<14x112xf32>
    %720 = vector.extract_strided_slice %221 {offsets = [1, 0], sizes = [1, 112], strides = [1, 1]} : vector<2x112xf32> to vector<1x112xf32>
    %721 = vector.broadcast %720 : vector<1x112xf32> to vector<14x112xf32>
    %722 = arith.mulf %719, %721 : vector<14x112xf32>
    %c168 = arith.constant 168 : index
    %723 = memref.load %arg4[%c168] : memref<288xf32, #tpu.memory_space<smem>>
    %724 = vector.broadcast %723 : f32 to vector<14x112xf32>
    %725 = arith.mulf %722, %724 : vector<14x112xf32>
    %726 = arith.addf %690, %725 : vector<14x112xf32>
    %c169 = arith.constant 169 : index
    %727 = memref.load %arg4[%c169] : memref<288xf32, #tpu.memory_space<smem>>
    %728 = vector.broadcast %727 : f32 to vector<14x112xf32>
    %729 = arith.mulf %722, %728 : vector<14x112xf32>
    %730 = arith.addf %694, %729 : vector<14x112xf32>
    %c170 = arith.constant 170 : index
    %731 = memref.load %arg4[%c170] : memref<288xf32, #tpu.memory_space<smem>>
    %732 = vector.broadcast %731 : f32 to vector<14x112xf32>
    %733 = arith.mulf %722, %732 : vector<14x112xf32>
    %734 = arith.addf %698, %733 : vector<14x112xf32>
    %c171 = arith.constant 171 : index
    %735 = memref.load %arg4[%c171] : memref<288xf32, #tpu.memory_space<smem>>
    %736 = vector.broadcast %735 : f32 to vector<14x112xf32>
    %737 = arith.mulf %722, %736 : vector<14x112xf32>
    %738 = arith.addf %702, %737 : vector<14x112xf32>
    %c172 = arith.constant 172 : index
    %739 = memref.load %arg4[%c172] : memref<288xf32, #tpu.memory_space<smem>>
    %740 = vector.broadcast %739 : f32 to vector<14x112xf32>
    %741 = arith.mulf %722, %740 : vector<14x112xf32>
    %742 = arith.addf %706, %741 : vector<14x112xf32>
    %c173 = arith.constant 173 : index
    %743 = memref.load %arg4[%c173] : memref<288xf32, #tpu.memory_space<smem>>
    %744 = vector.broadcast %743 : f32 to vector<14x112xf32>
    %745 = arith.mulf %722, %744 : vector<14x112xf32>
    %746 = arith.addf %710, %745 : vector<14x112xf32>
    %c174 = arith.constant 174 : index
    %747 = memref.load %arg4[%c174] : memref<288xf32, #tpu.memory_space<smem>>
    %748 = vector.broadcast %747 : f32 to vector<14x112xf32>
    %749 = arith.mulf %722, %748 : vector<14x112xf32>
    %750 = arith.addf %714, %749 : vector<14x112xf32>
    %c175 = arith.constant 175 : index
    %751 = memref.load %arg4[%c175] : memref<288xf32, #tpu.memory_space<smem>>
    %752 = vector.broadcast %751 : f32 to vector<14x112xf32>
    %753 = arith.mulf %722, %752 : vector<14x112xf32>
    %754 = arith.addf %718, %753 : vector<14x112xf32>
    %c18_125 = arith.constant 18 : index
    %c0_126 = arith.constant 0 : index
    %755 = vector.load %arg18[%c18_125, %c0_126] : memref<64x114xf32, #tpu.memory_space<vmem>>, vector<14x112xf32>
    %756 = vector.extract_strided_slice %221 {offsets = [0, 0], sizes = [1, 112], strides = [1, 1]} : vector<2x112xf32> to vector<1x112xf32>
    %757 = vector.broadcast %756 : vector<1x112xf32> to vector<14x112xf32>
    %758 = arith.mulf %755, %757 : vector<14x112xf32>
    %c200 = arith.constant 200 : index
    %759 = memref.load %arg4[%c200] : memref<288xf32, #tpu.memory_space<smem>>
    %760 = vector.broadcast %759 : f32 to vector<14x112xf32>
    %761 = arith.mulf %758, %760 : vector<14x112xf32>
    %762 = arith.addf %726, %761 : vector<14x112xf32>
    %c201 = arith.constant 201 : index
    %763 = memref.load %arg4[%c201] : memref<288xf32, #tpu.memory_space<smem>>
    %764 = vector.broadcast %763 : f32 to vector<14x112xf32>
    %765 = arith.mulf %758, %764 : vector<14x112xf32>
    %766 = arith.addf %730, %765 : vector<14x112xf32>
    %c202 = arith.constant 202 : index
    %767 = memref.load %arg4[%c202] : memref<288xf32, #tpu.memory_space<smem>>
    %768 = vector.broadcast %767 : f32 to vector<14x112xf32>
    %769 = arith.mulf %758, %768 : vector<14x112xf32>
    %770 = arith.addf %734, %769 : vector<14x112xf32>
    %c203 = arith.constant 203 : index
    %771 = memref.load %arg4[%c203] : memref<288xf32, #tpu.memory_space<smem>>
    %772 = vector.broadcast %771 : f32 to vector<14x112xf32>
    %773 = arith.mulf %758, %772 : vector<14x112xf32>
    %774 = arith.addf %738, %773 : vector<14x112xf32>
    %c204 = arith.constant 204 : index
    %775 = memref.load %arg4[%c204] : memref<288xf32, #tpu.memory_space<smem>>
    %776 = vector.broadcast %775 : f32 to vector<14x112xf32>
    %777 = arith.mulf %758, %776 : vector<14x112xf32>
    %778 = arith.addf %742, %777 : vector<14x112xf32>
    %c205 = arith.constant 205 : index
    %779 = memref.load %arg4[%c205] : memref<288xf32, #tpu.memory_space<smem>>
    %780 = vector.broadcast %779 : f32 to vector<14x112xf32>
    %781 = arith.mulf %758, %780 : vector<14x112xf32>
    %782 = arith.addf %746, %781 : vector<14x112xf32>
    %c206 = arith.constant 206 : index
    %783 = memref.load %arg4[%c206] : memref<288xf32, #tpu.memory_space<smem>>
    %784 = vector.broadcast %783 : f32 to vector<14x112xf32>
    %785 = arith.mulf %758, %784 : vector<14x112xf32>
    %786 = arith.addf %750, %785 : vector<14x112xf32>
    %c207 = arith.constant 207 : index
    %787 = memref.load %arg4[%c207] : memref<288xf32, #tpu.memory_space<smem>>
    %788 = vector.broadcast %787 : f32 to vector<14x112xf32>
    %789 = arith.mulf %758, %788 : vector<14x112xf32>
    %790 = arith.addf %754, %789 : vector<14x112xf32>
    %c18_127 = arith.constant 18 : index
    %c1_128 = arith.constant 1 : index
    %791 = vector.load %arg18[%c18_127, %c1_128] : memref<64x114xf32, #tpu.memory_space<vmem>>, vector<14x112xf32>
    %c232 = arith.constant 232 : index
    %792 = memref.load %arg4[%c232] : memref<288xf32, #tpu.memory_space<smem>>
    %793 = vector.broadcast %792 : f32 to vector<14x112xf32>
    %794 = arith.mulf %791, %793 : vector<14x112xf32>
    %795 = arith.addf %762, %794 : vector<14x112xf32>
    %c233 = arith.constant 233 : index
    %796 = memref.load %arg4[%c233] : memref<288xf32, #tpu.memory_space<smem>>
    %797 = vector.broadcast %796 : f32 to vector<14x112xf32>
    %798 = arith.mulf %791, %797 : vector<14x112xf32>
    %799 = arith.addf %766, %798 : vector<14x112xf32>
    %c234 = arith.constant 234 : index
    %800 = memref.load %arg4[%c234] : memref<288xf32, #tpu.memory_space<smem>>
    %801 = vector.broadcast %800 : f32 to vector<14x112xf32>
    %802 = arith.mulf %791, %801 : vector<14x112xf32>
    %803 = arith.addf %770, %802 : vector<14x112xf32>
    %c235 = arith.constant 235 : index
    %804 = memref.load %arg4[%c235] : memref<288xf32, #tpu.memory_space<smem>>
    %805 = vector.broadcast %804 : f32 to vector<14x112xf32>
    %806 = arith.mulf %791, %805 : vector<14x112xf32>
    %807 = arith.addf %774, %806 : vector<14x112xf32>
    %c236 = arith.constant 236 : index
    %808 = memref.load %arg4[%c236] : memref<288xf32, #tpu.memory_space<smem>>
    %809 = vector.broadcast %808 : f32 to vector<14x112xf32>
    %810 = arith.mulf %791, %809 : vector<14x112xf32>
    %811 = arith.addf %778, %810 : vector<14x112xf32>
    %c237 = arith.constant 237 : index
    %812 = memref.load %arg4[%c237] : memref<288xf32, #tpu.memory_space<smem>>
    %813 = vector.broadcast %812 : f32 to vector<14x112xf32>
    %814 = arith.mulf %791, %813 : vector<14x112xf32>
    %815 = arith.addf %782, %814 : vector<14x112xf32>
    %c238 = arith.constant 238 : index
    %816 = memref.load %arg4[%c238] : memref<288xf32, #tpu.memory_space<smem>>
    %817 = vector.broadcast %816 : f32 to vector<14x112xf32>
    %818 = arith.mulf %791, %817 : vector<14x112xf32>
    %819 = arith.addf %786, %818 : vector<14x112xf32>
    %c239 = arith.constant 239 : index
    %820 = memref.load %arg4[%c239] : memref<288xf32, #tpu.memory_space<smem>>
    %821 = vector.broadcast %820 : f32 to vector<14x112xf32>
    %822 = arith.mulf %791, %821 : vector<14x112xf32>
    %823 = arith.addf %790, %822 : vector<14x112xf32>
    %c18_129 = arith.constant 18 : index
    %c2_130 = arith.constant 2 : index
    %824 = vector.load %arg18[%c18_129, %c2_130] : memref<64x114xf32, #tpu.memory_space<vmem>>, vector<14x112xf32>
    %825 = vector.extract_strided_slice %221 {offsets = [1, 0], sizes = [1, 112], strides = [1, 1]} : vector<2x112xf32> to vector<1x112xf32>
    %826 = vector.broadcast %825 : vector<1x112xf32> to vector<14x112xf32>
    %827 = arith.mulf %824, %826 : vector<14x112xf32>
    %c264 = arith.constant 264 : index
    %828 = memref.load %arg4[%c264] : memref<288xf32, #tpu.memory_space<smem>>
    %829 = vector.broadcast %828 : f32 to vector<14x112xf32>
    %830 = arith.mulf %827, %829 : vector<14x112xf32>
    %831 = arith.addf %795, %830 : vector<14x112xf32>
    %c265 = arith.constant 265 : index
    %832 = memref.load %arg4[%c265] : memref<288xf32, #tpu.memory_space<smem>>
    %833 = vector.broadcast %832 : f32 to vector<14x112xf32>
    %834 = arith.mulf %827, %833 : vector<14x112xf32>
    %835 = arith.addf %799, %834 : vector<14x112xf32>
    %c266 = arith.constant 266 : index
    %836 = memref.load %arg4[%c266] : memref<288xf32, #tpu.memory_space<smem>>
    %837 = vector.broadcast %836 : f32 to vector<14x112xf32>
    %838 = arith.mulf %827, %837 : vector<14x112xf32>
    %839 = arith.addf %803, %838 : vector<14x112xf32>
    %c267 = arith.constant 267 : index
    %840 = memref.load %arg4[%c267] : memref<288xf32, #tpu.memory_space<smem>>
    %841 = vector.broadcast %840 : f32 to vector<14x112xf32>
    %842 = arith.mulf %827, %841 : vector<14x112xf32>
    %843 = arith.addf %807, %842 : vector<14x112xf32>
    %c268 = arith.constant 268 : index
    %844 = memref.load %arg4[%c268] : memref<288xf32, #tpu.memory_space<smem>>
    %845 = vector.broadcast %844 : f32 to vector<14x112xf32>
    %846 = arith.mulf %827, %845 : vector<14x112xf32>
    %847 = arith.addf %811, %846 : vector<14x112xf32>
    %c269 = arith.constant 269 : index
    %848 = memref.load %arg4[%c269] : memref<288xf32, #tpu.memory_space<smem>>
    %849 = vector.broadcast %848 : f32 to vector<14x112xf32>
    %850 = arith.mulf %827, %849 : vector<14x112xf32>
    %851 = arith.addf %815, %850 : vector<14x112xf32>
    %c270 = arith.constant 270 : index
    %852 = memref.load %arg4[%c270] : memref<288xf32, #tpu.memory_space<smem>>
    %853 = vector.broadcast %852 : f32 to vector<14x112xf32>
    %854 = arith.mulf %827, %853 : vector<14x112xf32>
    %855 = arith.addf %819, %854 : vector<14x112xf32>
    %c271 = arith.constant 271 : index
    %856 = memref.load %arg4[%c271] : memref<288xf32, #tpu.memory_space<smem>>
    %857 = vector.broadcast %856 : f32 to vector<14x112xf32>
    %858 = arith.mulf %827, %857 : vector<14x112xf32>
    %859 = arith.addf %823, %858 : vector<14x112xf32>
    %c32_131 = arith.constant 32 : index
    %c0_132 = arith.constant 0 : index
    %860 = vector.load %arg18[%c32_131, %c0_132] : memref<64x114xf32, #tpu.memory_space<vmem>>, vector<14x112xf32>
    %861 = vector.extract_strided_slice %221 {offsets = [0, 0], sizes = [1, 112], strides = [1, 1]} : vector<2x112xf32> to vector<1x112xf32>
    %862 = vector.broadcast %861 : vector<1x112xf32> to vector<14x112xf32>
    %863 = arith.mulf %860, %862 : vector<14x112xf32>
    %c16_133 = arith.constant 16 : index
    %864 = memref.load %arg4[%c16_133] : memref<288xf32, #tpu.memory_space<smem>>
    %865 = vector.broadcast %864 : f32 to vector<14x112xf32>
    %866 = arith.mulf %863, %865 : vector<14x112xf32>
    %867 = arith.addf %831, %866 : vector<14x112xf32>
    %c17_134 = arith.constant 17 : index
    %868 = memref.load %arg4[%c17_134] : memref<288xf32, #tpu.memory_space<smem>>
    %869 = vector.broadcast %868 : f32 to vector<14x112xf32>
    %870 = arith.mulf %863, %869 : vector<14x112xf32>
    %871 = arith.addf %835, %870 : vector<14x112xf32>
    %c18_135 = arith.constant 18 : index
    %872 = memref.load %arg4[%c18_135] : memref<288xf32, #tpu.memory_space<smem>>
    %873 = vector.broadcast %872 : f32 to vector<14x112xf32>
    %874 = arith.mulf %863, %873 : vector<14x112xf32>
    %875 = arith.addf %839, %874 : vector<14x112xf32>
    %c19_136 = arith.constant 19 : index
    %876 = memref.load %arg4[%c19_136] : memref<288xf32, #tpu.memory_space<smem>>
    %877 = vector.broadcast %876 : f32 to vector<14x112xf32>
    %878 = arith.mulf %863, %877 : vector<14x112xf32>
    %879 = arith.addf %843, %878 : vector<14x112xf32>
    %c20_137 = arith.constant 20 : index
    %880 = memref.load %arg4[%c20_137] : memref<288xf32, #tpu.memory_space<smem>>
    %881 = vector.broadcast %880 : f32 to vector<14x112xf32>
    %882 = arith.mulf %863, %881 : vector<14x112xf32>
    %883 = arith.addf %847, %882 : vector<14x112xf32>
    %c21_138 = arith.constant 21 : index
    %884 = memref.load %arg4[%c21_138] : memref<288xf32, #tpu.memory_space<smem>>
    %885 = vector.broadcast %884 : f32 to vector<14x112xf32>
    %886 = arith.mulf %863, %885 : vector<14x112xf32>
    %887 = arith.addf %851, %886 : vector<14x112xf32>
    %c22_139 = arith.constant 22 : index
    %888 = memref.load %arg4[%c22_139] : memref<288xf32, #tpu.memory_space<smem>>
    %889 = vector.broadcast %888 : f32 to vector<14x112xf32>
    %890 = arith.mulf %863, %889 : vector<14x112xf32>
    %891 = arith.addf %855, %890 : vector<14x112xf32>
    %c23_140 = arith.constant 23 : index
    %892 = memref.load %arg4[%c23_140] : memref<288xf32, #tpu.memory_space<smem>>
    %893 = vector.broadcast %892 : f32 to vector<14x112xf32>
    %894 = arith.mulf %863, %893 : vector<14x112xf32>
    %895 = arith.addf %859, %894 : vector<14x112xf32>
    %c32_141 = arith.constant 32 : index
    %c1_142 = arith.constant 1 : index
    %896 = vector.load %arg18[%c32_141, %c1_142] : memref<64x114xf32, #tpu.memory_space<vmem>>, vector<14x112xf32>
    %c48 = arith.constant 48 : index
    %897 = memref.load %arg4[%c48] : memref<288xf32, #tpu.memory_space<smem>>
    %898 = vector.broadcast %897 : f32 to vector<14x112xf32>
    %899 = arith.mulf %896, %898 : vector<14x112xf32>
    %900 = arith.addf %867, %899 : vector<14x112xf32>
    %c49 = arith.constant 49 : index
    %901 = memref.load %arg4[%c49] : memref<288xf32, #tpu.memory_space<smem>>
    %902 = vector.broadcast %901 : f32 to vector<14x112xf32>
    %903 = arith.mulf %896, %902 : vector<14x112xf32>
    %904 = arith.addf %871, %903 : vector<14x112xf32>
    %c50 = arith.constant 50 : index
    %905 = memref.load %arg4[%c50] : memref<288xf32, #tpu.memory_space<smem>>
    %906 = vector.broadcast %905 : f32 to vector<14x112xf32>
    %907 = arith.mulf %896, %906 : vector<14x112xf32>
    %908 = arith.addf %875, %907 : vector<14x112xf32>
    %c51 = arith.constant 51 : index
    %909 = memref.load %arg4[%c51] : memref<288xf32, #tpu.memory_space<smem>>
    %910 = vector.broadcast %909 : f32 to vector<14x112xf32>
    %911 = arith.mulf %896, %910 : vector<14x112xf32>
    %912 = arith.addf %879, %911 : vector<14x112xf32>
    %c52 = arith.constant 52 : index
    %913 = memref.load %arg4[%c52] : memref<288xf32, #tpu.memory_space<smem>>
    %914 = vector.broadcast %913 : f32 to vector<14x112xf32>
    %915 = arith.mulf %896, %914 : vector<14x112xf32>
    %916 = arith.addf %883, %915 : vector<14x112xf32>
    %c53 = arith.constant 53 : index
    %917 = memref.load %arg4[%c53] : memref<288xf32, #tpu.memory_space<smem>>
    %918 = vector.broadcast %917 : f32 to vector<14x112xf32>
    %919 = arith.mulf %896, %918 : vector<14x112xf32>
    %920 = arith.addf %887, %919 : vector<14x112xf32>
    %c54 = arith.constant 54 : index
    %921 = memref.load %arg4[%c54] : memref<288xf32, #tpu.memory_space<smem>>
    %922 = vector.broadcast %921 : f32 to vector<14x112xf32>
    %923 = arith.mulf %896, %922 : vector<14x112xf32>
    %924 = arith.addf %891, %923 : vector<14x112xf32>
    %c55 = arith.constant 55 : index
    %925 = memref.load %arg4[%c55] : memref<288xf32, #tpu.memory_space<smem>>
    %926 = vector.broadcast %925 : f32 to vector<14x112xf32>
    %927 = arith.mulf %896, %926 : vector<14x112xf32>
    %928 = arith.addf %895, %927 : vector<14x112xf32>
    %c32_143 = arith.constant 32 : index
    %c2_144 = arith.constant 2 : index
    %929 = vector.load %arg18[%c32_143, %c2_144] : memref<64x114xf32, #tpu.memory_space<vmem>>, vector<14x112xf32>
    %930 = vector.extract_strided_slice %221 {offsets = [1, 0], sizes = [1, 112], strides = [1, 1]} : vector<2x112xf32> to vector<1x112xf32>
    %931 = vector.broadcast %930 : vector<1x112xf32> to vector<14x112xf32>
    %932 = arith.mulf %929, %931 : vector<14x112xf32>
    %c80 = arith.constant 80 : index
    %933 = memref.load %arg4[%c80] : memref<288xf32, #tpu.memory_space<smem>>
    %934 = vector.broadcast %933 : f32 to vector<14x112xf32>
    %935 = arith.mulf %932, %934 : vector<14x112xf32>
    %936 = arith.addf %900, %935 : vector<14x112xf32>
    %c81 = arith.constant 81 : index
    %937 = memref.load %arg4[%c81] : memref<288xf32, #tpu.memory_space<smem>>
    %938 = vector.broadcast %937 : f32 to vector<14x112xf32>
    %939 = arith.mulf %932, %938 : vector<14x112xf32>
    %940 = arith.addf %904, %939 : vector<14x112xf32>
    %c82 = arith.constant 82 : index
    %941 = memref.load %arg4[%c82] : memref<288xf32, #tpu.memory_space<smem>>
    %942 = vector.broadcast %941 : f32 to vector<14x112xf32>
    %943 = arith.mulf %932, %942 : vector<14x112xf32>
    %944 = arith.addf %908, %943 : vector<14x112xf32>
    %c83 = arith.constant 83 : index
    %945 = memref.load %arg4[%c83] : memref<288xf32, #tpu.memory_space<smem>>
    %946 = vector.broadcast %945 : f32 to vector<14x112xf32>
    %947 = arith.mulf %932, %946 : vector<14x112xf32>
    %948 = arith.addf %912, %947 : vector<14x112xf32>
    %c84_145 = arith.constant 84 : index
    %949 = memref.load %arg4[%c84_145] : memref<288xf32, #tpu.memory_space<smem>>
    %950 = vector.broadcast %949 : f32 to vector<14x112xf32>
    %951 = arith.mulf %932, %950 : vector<14x112xf32>
    %952 = arith.addf %916, %951 : vector<14x112xf32>
    %c85 = arith.constant 85 : index
    %953 = memref.load %arg4[%c85] : memref<288xf32, #tpu.memory_space<smem>>
    %954 = vector.broadcast %953 : f32 to vector<14x112xf32>
    %955 = arith.mulf %932, %954 : vector<14x112xf32>
    %956 = arith.addf %920, %955 : vector<14x112xf32>
    %c86 = arith.constant 86 : index
    %957 = memref.load %arg4[%c86] : memref<288xf32, #tpu.memory_space<smem>>
    %958 = vector.broadcast %957 : f32 to vector<14x112xf32>
    %959 = arith.mulf %932, %958 : vector<14x112xf32>
    %960 = arith.addf %924, %959 : vector<14x112xf32>
    %c87 = arith.constant 87 : index
    %961 = memref.load %arg4[%c87] : memref<288xf32, #tpu.memory_space<smem>>
    %962 = vector.broadcast %961 : f32 to vector<14x112xf32>
    %963 = arith.mulf %932, %962 : vector<14x112xf32>
    %964 = arith.addf %928, %963 : vector<14x112xf32>
    %c33_146 = arith.constant 33 : index
    %c0_147 = arith.constant 0 : index
    %965 = vector.load %arg18[%c33_146, %c0_147] : memref<64x114xf32, #tpu.memory_space<vmem>>, vector<14x112xf32>
    %966 = vector.extract_strided_slice %221 {offsets = [0, 0], sizes = [1, 112], strides = [1, 1]} : vector<2x112xf32> to vector<1x112xf32>
    %967 = vector.broadcast %966 : vector<1x112xf32> to vector<14x112xf32>
    %968 = arith.mulf %965, %967 : vector<14x112xf32>
    %c112 = arith.constant 112 : index
    %969 = memref.load %arg4[%c112] : memref<288xf32, #tpu.memory_space<smem>>
    %970 = vector.broadcast %969 : f32 to vector<14x112xf32>
    %971 = arith.mulf %968, %970 : vector<14x112xf32>
    %972 = arith.addf %936, %971 : vector<14x112xf32>
    %c113 = arith.constant 113 : index
    %973 = memref.load %arg4[%c113] : memref<288xf32, #tpu.memory_space<smem>>
    %974 = vector.broadcast %973 : f32 to vector<14x112xf32>
    %975 = arith.mulf %968, %974 : vector<14x112xf32>
    %976 = arith.addf %940, %975 : vector<14x112xf32>
    %c114 = arith.constant 114 : index
    %977 = memref.load %arg4[%c114] : memref<288xf32, #tpu.memory_space<smem>>
    %978 = vector.broadcast %977 : f32 to vector<14x112xf32>
    %979 = arith.mulf %968, %978 : vector<14x112xf32>
    %980 = arith.addf %944, %979 : vector<14x112xf32>
    %c115 = arith.constant 115 : index
    %981 = memref.load %arg4[%c115] : memref<288xf32, #tpu.memory_space<smem>>
    %982 = vector.broadcast %981 : f32 to vector<14x112xf32>
    %983 = arith.mulf %968, %982 : vector<14x112xf32>
    %984 = arith.addf %948, %983 : vector<14x112xf32>
    %c116 = arith.constant 116 : index
    %985 = memref.load %arg4[%c116] : memref<288xf32, #tpu.memory_space<smem>>
    %986 = vector.broadcast %985 : f32 to vector<14x112xf32>
    %987 = arith.mulf %968, %986 : vector<14x112xf32>
    %988 = arith.addf %952, %987 : vector<14x112xf32>
    %c117 = arith.constant 117 : index
    %989 = memref.load %arg4[%c117] : memref<288xf32, #tpu.memory_space<smem>>
    %990 = vector.broadcast %989 : f32 to vector<14x112xf32>
    %991 = arith.mulf %968, %990 : vector<14x112xf32>
    %992 = arith.addf %956, %991 : vector<14x112xf32>
    %c118 = arith.constant 118 : index
    %993 = memref.load %arg4[%c118] : memref<288xf32, #tpu.memory_space<smem>>
    %994 = vector.broadcast %993 : f32 to vector<14x112xf32>
    %995 = arith.mulf %968, %994 : vector<14x112xf32>
    %996 = arith.addf %960, %995 : vector<14x112xf32>
    %c119 = arith.constant 119 : index
    %997 = memref.load %arg4[%c119] : memref<288xf32, #tpu.memory_space<smem>>
    %998 = vector.broadcast %997 : f32 to vector<14x112xf32>
    %999 = arith.mulf %968, %998 : vector<14x112xf32>
    %1000 = arith.addf %964, %999 : vector<14x112xf32>
    %c33_148 = arith.constant 33 : index
    %c1_149 = arith.constant 1 : index
    %1001 = vector.load %arg18[%c33_148, %c1_149] : memref<64x114xf32, #tpu.memory_space<vmem>>, vector<14x112xf32>
    %c144 = arith.constant 144 : index
    %1002 = memref.load %arg4[%c144] : memref<288xf32, #tpu.memory_space<smem>>
    %1003 = vector.broadcast %1002 : f32 to vector<14x112xf32>
    %1004 = arith.mulf %1001, %1003 : vector<14x112xf32>
    %1005 = arith.addf %972, %1004 : vector<14x112xf32>
    %c145 = arith.constant 145 : index
    %1006 = memref.load %arg4[%c145] : memref<288xf32, #tpu.memory_space<smem>>
    %1007 = vector.broadcast %1006 : f32 to vector<14x112xf32>
    %1008 = arith.mulf %1001, %1007 : vector<14x112xf32>
    %1009 = arith.addf %976, %1008 : vector<14x112xf32>
    %c146 = arith.constant 146 : index
    %1010 = memref.load %arg4[%c146] : memref<288xf32, #tpu.memory_space<smem>>
    %1011 = vector.broadcast %1010 : f32 to vector<14x112xf32>
    %1012 = arith.mulf %1001, %1011 : vector<14x112xf32>
    %1013 = arith.addf %980, %1012 : vector<14x112xf32>
    %c147 = arith.constant 147 : index
    %1014 = memref.load %arg4[%c147] : memref<288xf32, #tpu.memory_space<smem>>
    %1015 = vector.broadcast %1014 : f32 to vector<14x112xf32>
    %1016 = arith.mulf %1001, %1015 : vector<14x112xf32>
    %1017 = arith.addf %984, %1016 : vector<14x112xf32>
    %c148 = arith.constant 148 : index
    %1018 = memref.load %arg4[%c148] : memref<288xf32, #tpu.memory_space<smem>>
    %1019 = vector.broadcast %1018 : f32 to vector<14x112xf32>
    %1020 = arith.mulf %1001, %1019 : vector<14x112xf32>
    %1021 = arith.addf %988, %1020 : vector<14x112xf32>
    %c149 = arith.constant 149 : index
    %1022 = memref.load %arg4[%c149] : memref<288xf32, #tpu.memory_space<smem>>
    %1023 = vector.broadcast %1022 : f32 to vector<14x112xf32>
    %1024 = arith.mulf %1001, %1023 : vector<14x112xf32>
    %1025 = arith.addf %992, %1024 : vector<14x112xf32>
    %c150 = arith.constant 150 : index
    %1026 = memref.load %arg4[%c150] : memref<288xf32, #tpu.memory_space<smem>>
    %1027 = vector.broadcast %1026 : f32 to vector<14x112xf32>
    %1028 = arith.mulf %1001, %1027 : vector<14x112xf32>
    %1029 = arith.addf %996, %1028 : vector<14x112xf32>
    %c151 = arith.constant 151 : index
    %1030 = memref.load %arg4[%c151] : memref<288xf32, #tpu.memory_space<smem>>
    %1031 = vector.broadcast %1030 : f32 to vector<14x112xf32>
    %1032 = arith.mulf %1001, %1031 : vector<14x112xf32>
    %1033 = arith.addf %1000, %1032 : vector<14x112xf32>
    %c33_150 = arith.constant 33 : index
    %c2_151 = arith.constant 2 : index
    %1034 = vector.load %arg18[%c33_150, %c2_151] : memref<64x114xf32, #tpu.memory_space<vmem>>, vector<14x112xf32>
    %1035 = vector.extract_strided_slice %221 {offsets = [1, 0], sizes = [1, 112], strides = [1, 1]} : vector<2x112xf32> to vector<1x112xf32>
    %1036 = vector.broadcast %1035 : vector<1x112xf32> to vector<14x112xf32>
    %1037 = arith.mulf %1034, %1036 : vector<14x112xf32>
    %c176 = arith.constant 176 : index
    %1038 = memref.load %arg4[%c176] : memref<288xf32, #tpu.memory_space<smem>>
    %1039 = vector.broadcast %1038 : f32 to vector<14x112xf32>
    %1040 = arith.mulf %1037, %1039 : vector<14x112xf32>
    %1041 = arith.addf %1005, %1040 : vector<14x112xf32>
    %c177 = arith.constant 177 : index
    %1042 = memref.load %arg4[%c177] : memref<288xf32, #tpu.memory_space<smem>>
    %1043 = vector.broadcast %1042 : f32 to vector<14x112xf32>
    %1044 = arith.mulf %1037, %1043 : vector<14x112xf32>
    %1045 = arith.addf %1009, %1044 : vector<14x112xf32>
    %c178 = arith.constant 178 : index
    %1046 = memref.load %arg4[%c178] : memref<288xf32, #tpu.memory_space<smem>>
    %1047 = vector.broadcast %1046 : f32 to vector<14x112xf32>
    %1048 = arith.mulf %1037, %1047 : vector<14x112xf32>
    %1049 = arith.addf %1013, %1048 : vector<14x112xf32>
    %c179 = arith.constant 179 : index
    %1050 = memref.load %arg4[%c179] : memref<288xf32, #tpu.memory_space<smem>>
    %1051 = vector.broadcast %1050 : f32 to vector<14x112xf32>
    %1052 = arith.mulf %1037, %1051 : vector<14x112xf32>
    %1053 = arith.addf %1017, %1052 : vector<14x112xf32>
    %c180 = arith.constant 180 : index
    %1054 = memref.load %arg4[%c180] : memref<288xf32, #tpu.memory_space<smem>>
    %1055 = vector.broadcast %1054 : f32 to vector<14x112xf32>
    %1056 = arith.mulf %1037, %1055 : vector<14x112xf32>
    %1057 = arith.addf %1021, %1056 : vector<14x112xf32>
    %c181 = arith.constant 181 : index
    %1058 = memref.load %arg4[%c181] : memref<288xf32, #tpu.memory_space<smem>>
    %1059 = vector.broadcast %1058 : f32 to vector<14x112xf32>
    %1060 = arith.mulf %1037, %1059 : vector<14x112xf32>
    %1061 = arith.addf %1025, %1060 : vector<14x112xf32>
    %c182 = arith.constant 182 : index
    %1062 = memref.load %arg4[%c182] : memref<288xf32, #tpu.memory_space<smem>>
    %1063 = vector.broadcast %1062 : f32 to vector<14x112xf32>
    %1064 = arith.mulf %1037, %1063 : vector<14x112xf32>
    %1065 = arith.addf %1029, %1064 : vector<14x112xf32>
    %c183 = arith.constant 183 : index
    %1066 = memref.load %arg4[%c183] : memref<288xf32, #tpu.memory_space<smem>>
    %1067 = vector.broadcast %1066 : f32 to vector<14x112xf32>
    %1068 = arith.mulf %1037, %1067 : vector<14x112xf32>
    %1069 = arith.addf %1033, %1068 : vector<14x112xf32>
    %c34_152 = arith.constant 34 : index
    %c0_153 = arith.constant 0 : index
    %1070 = vector.load %arg18[%c34_152, %c0_153] : memref<64x114xf32, #tpu.memory_space<vmem>>, vector<14x112xf32>
    %1071 = vector.extract_strided_slice %221 {offsets = [0, 0], sizes = [1, 112], strides = [1, 1]} : vector<2x112xf32> to vector<1x112xf32>
    %1072 = vector.broadcast %1071 : vector<1x112xf32> to vector<14x112xf32>
    %1073 = arith.mulf %1070, %1072 : vector<14x112xf32>
    %c208 = arith.constant 208 : index
    %1074 = memref.load %arg4[%c208] : memref<288xf32, #tpu.memory_space<smem>>
    %1075 = vector.broadcast %1074 : f32 to vector<14x112xf32>
    %1076 = arith.mulf %1073, %1075 : vector<14x112xf32>
    %1077 = arith.addf %1041, %1076 : vector<14x112xf32>
    %c209 = arith.constant 209 : index
    %1078 = memref.load %arg4[%c209] : memref<288xf32, #tpu.memory_space<smem>>
    %1079 = vector.broadcast %1078 : f32 to vector<14x112xf32>
    %1080 = arith.mulf %1073, %1079 : vector<14x112xf32>
    %1081 = arith.addf %1045, %1080 : vector<14x112xf32>
    %c210 = arith.constant 210 : index
    %1082 = memref.load %arg4[%c210] : memref<288xf32, #tpu.memory_space<smem>>
    %1083 = vector.broadcast %1082 : f32 to vector<14x112xf32>
    %1084 = arith.mulf %1073, %1083 : vector<14x112xf32>
    %1085 = arith.addf %1049, %1084 : vector<14x112xf32>
    %c211 = arith.constant 211 : index
    %1086 = memref.load %arg4[%c211] : memref<288xf32, #tpu.memory_space<smem>>
    %1087 = vector.broadcast %1086 : f32 to vector<14x112xf32>
    %1088 = arith.mulf %1073, %1087 : vector<14x112xf32>
    %1089 = arith.addf %1053, %1088 : vector<14x112xf32>
    %c212 = arith.constant 212 : index
    %1090 = memref.load %arg4[%c212] : memref<288xf32, #tpu.memory_space<smem>>
    %1091 = vector.broadcast %1090 : f32 to vector<14x112xf32>
    %1092 = arith.mulf %1073, %1091 : vector<14x112xf32>
    %1093 = arith.addf %1057, %1092 : vector<14x112xf32>
    %c213 = arith.constant 213 : index
    %1094 = memref.load %arg4[%c213] : memref<288xf32, #tpu.memory_space<smem>>
    %1095 = vector.broadcast %1094 : f32 to vector<14x112xf32>
    %1096 = arith.mulf %1073, %1095 : vector<14x112xf32>
    %1097 = arith.addf %1061, %1096 : vector<14x112xf32>
    %c214 = arith.constant 214 : index
    %1098 = memref.load %arg4[%c214] : memref<288xf32, #tpu.memory_space<smem>>
    %1099 = vector.broadcast %1098 : f32 to vector<14x112xf32>
    %1100 = arith.mulf %1073, %1099 : vector<14x112xf32>
    %1101 = arith.addf %1065, %1100 : vector<14x112xf32>
    %c215 = arith.constant 215 : index
    %1102 = memref.load %arg4[%c215] : memref<288xf32, #tpu.memory_space<smem>>
    %1103 = vector.broadcast %1102 : f32 to vector<14x112xf32>
    %1104 = arith.mulf %1073, %1103 : vector<14x112xf32>
    %1105 = arith.addf %1069, %1104 : vector<14x112xf32>
    %c34_154 = arith.constant 34 : index
    %c1_155 = arith.constant 1 : index
    %1106 = vector.load %arg18[%c34_154, %c1_155] : memref<64x114xf32, #tpu.memory_space<vmem>>, vector<14x112xf32>
    %c240 = arith.constant 240 : index
    %1107 = memref.load %arg4[%c240] : memref<288xf32, #tpu.memory_space<smem>>
    %1108 = vector.broadcast %1107 : f32 to vector<14x112xf32>
    %1109 = arith.mulf %1106, %1108 : vector<14x112xf32>
    %1110 = arith.addf %1077, %1109 : vector<14x112xf32>
    %c241 = arith.constant 241 : index
    %1111 = memref.load %arg4[%c241] : memref<288xf32, #tpu.memory_space<smem>>
    %1112 = vector.broadcast %1111 : f32 to vector<14x112xf32>
    %1113 = arith.mulf %1106, %1112 : vector<14x112xf32>
    %1114 = arith.addf %1081, %1113 : vector<14x112xf32>
    %c242 = arith.constant 242 : index
    %1115 = memref.load %arg4[%c242] : memref<288xf32, #tpu.memory_space<smem>>
    %1116 = vector.broadcast %1115 : f32 to vector<14x112xf32>
    %1117 = arith.mulf %1106, %1116 : vector<14x112xf32>
    %1118 = arith.addf %1085, %1117 : vector<14x112xf32>
    %c243 = arith.constant 243 : index
    %1119 = memref.load %arg4[%c243] : memref<288xf32, #tpu.memory_space<smem>>
    %1120 = vector.broadcast %1119 : f32 to vector<14x112xf32>
    %1121 = arith.mulf %1106, %1120 : vector<14x112xf32>
    %1122 = arith.addf %1089, %1121 : vector<14x112xf32>
    %c244 = arith.constant 244 : index
    %1123 = memref.load %arg4[%c244] : memref<288xf32, #tpu.memory_space<smem>>
    %1124 = vector.broadcast %1123 : f32 to vector<14x112xf32>
    %1125 = arith.mulf %1106, %1124 : vector<14x112xf32>
    %1126 = arith.addf %1093, %1125 : vector<14x112xf32>
    %c245 = arith.constant 245 : index
    %1127 = memref.load %arg4[%c245] : memref<288xf32, #tpu.memory_space<smem>>
    %1128 = vector.broadcast %1127 : f32 to vector<14x112xf32>
    %1129 = arith.mulf %1106, %1128 : vector<14x112xf32>
    %1130 = arith.addf %1097, %1129 : vector<14x112xf32>
    %c246 = arith.constant 246 : index
    %1131 = memref.load %arg4[%c246] : memref<288xf32, #tpu.memory_space<smem>>
    %1132 = vector.broadcast %1131 : f32 to vector<14x112xf32>
    %1133 = arith.mulf %1106, %1132 : vector<14x112xf32>
    %1134 = arith.addf %1101, %1133 : vector<14x112xf32>
    %c247 = arith.constant 247 : index
    %1135 = memref.load %arg4[%c247] : memref<288xf32, #tpu.memory_space<smem>>
    %1136 = vector.broadcast %1135 : f32 to vector<14x112xf32>
    %1137 = arith.mulf %1106, %1136 : vector<14x112xf32>
    %1138 = arith.addf %1105, %1137 : vector<14x112xf32>
    %c34_156 = arith.constant 34 : index
    %c2_157 = arith.constant 2 : index
    %1139 = vector.load %arg18[%c34_156, %c2_157] : memref<64x114xf32, #tpu.memory_space<vmem>>, vector<14x112xf32>
    %1140 = vector.extract_strided_slice %221 {offsets = [1, 0], sizes = [1, 112], strides = [1, 1]} : vector<2x112xf32> to vector<1x112xf32>
    %1141 = vector.broadcast %1140 : vector<1x112xf32> to vector<14x112xf32>
    %1142 = arith.mulf %1139, %1141 : vector<14x112xf32>
    %c272 = arith.constant 272 : index
    %1143 = memref.load %arg4[%c272] : memref<288xf32, #tpu.memory_space<smem>>
    %1144 = vector.broadcast %1143 : f32 to vector<14x112xf32>
    %1145 = arith.mulf %1142, %1144 : vector<14x112xf32>
    %1146 = arith.addf %1110, %1145 : vector<14x112xf32>
    %c273 = arith.constant 273 : index
    %1147 = memref.load %arg4[%c273] : memref<288xf32, #tpu.memory_space<smem>>
    %1148 = vector.broadcast %1147 : f32 to vector<14x112xf32>
    %1149 = arith.mulf %1142, %1148 : vector<14x112xf32>
    %1150 = arith.addf %1114, %1149 : vector<14x112xf32>
    %c274 = arith.constant 274 : index
    %1151 = memref.load %arg4[%c274] : memref<288xf32, #tpu.memory_space<smem>>
    %1152 = vector.broadcast %1151 : f32 to vector<14x112xf32>
    %1153 = arith.mulf %1142, %1152 : vector<14x112xf32>
    %1154 = arith.addf %1118, %1153 : vector<14x112xf32>
    %c275 = arith.constant 275 : index
    %1155 = memref.load %arg4[%c275] : memref<288xf32, #tpu.memory_space<smem>>
    %1156 = vector.broadcast %1155 : f32 to vector<14x112xf32>
    %1157 = arith.mulf %1142, %1156 : vector<14x112xf32>
    %1158 = arith.addf %1122, %1157 : vector<14x112xf32>
    %c276 = arith.constant 276 : index
    %1159 = memref.load %arg4[%c276] : memref<288xf32, #tpu.memory_space<smem>>
    %1160 = vector.broadcast %1159 : f32 to vector<14x112xf32>
    %1161 = arith.mulf %1142, %1160 : vector<14x112xf32>
    %1162 = arith.addf %1126, %1161 : vector<14x112xf32>
    %c277 = arith.constant 277 : index
    %1163 = memref.load %arg4[%c277] : memref<288xf32, #tpu.memory_space<smem>>
    %1164 = vector.broadcast %1163 : f32 to vector<14x112xf32>
    %1165 = arith.mulf %1142, %1164 : vector<14x112xf32>
    %1166 = arith.addf %1130, %1165 : vector<14x112xf32>
    %c278 = arith.constant 278 : index
    %1167 = memref.load %arg4[%c278] : memref<288xf32, #tpu.memory_space<smem>>
    %1168 = vector.broadcast %1167 : f32 to vector<14x112xf32>
    %1169 = arith.mulf %1142, %1168 : vector<14x112xf32>
    %1170 = arith.addf %1134, %1169 : vector<14x112xf32>
    %c279 = arith.constant 279 : index
    %1171 = memref.load %arg4[%c279] : memref<288xf32, #tpu.memory_space<smem>>
    %1172 = vector.broadcast %1171 : f32 to vector<14x112xf32>
    %1173 = arith.mulf %1142, %1172 : vector<14x112xf32>
    %1174 = arith.addf %1138, %1173 : vector<14x112xf32>
    %c48_158 = arith.constant 48 : index
    %c0_159 = arith.constant 0 : index
    %1175 = vector.load %arg18[%c48_158, %c0_159] : memref<64x114xf32, #tpu.memory_space<vmem>>, vector<14x112xf32>
    %1176 = vector.extract_strided_slice %221 {offsets = [0, 0], sizes = [1, 112], strides = [1, 1]} : vector<2x112xf32> to vector<1x112xf32>
    %1177 = vector.broadcast %1176 : vector<1x112xf32> to vector<14x112xf32>
    %1178 = arith.mulf %1175, %1177 : vector<14x112xf32>
    %c24_160 = arith.constant 24 : index
    %1179 = memref.load %arg4[%c24_160] : memref<288xf32, #tpu.memory_space<smem>>
    %1180 = vector.broadcast %1179 : f32 to vector<14x112xf32>
    %1181 = arith.mulf %1178, %1180 : vector<14x112xf32>
    %1182 = arith.addf %1146, %1181 : vector<14x112xf32>
    %c25_161 = arith.constant 25 : index
    %1183 = memref.load %arg4[%c25_161] : memref<288xf32, #tpu.memory_space<smem>>
    %1184 = vector.broadcast %1183 : f32 to vector<14x112xf32>
    %1185 = arith.mulf %1178, %1184 : vector<14x112xf32>
    %1186 = arith.addf %1150, %1185 : vector<14x112xf32>
    %c26_162 = arith.constant 26 : index
    %1187 = memref.load %arg4[%c26_162] : memref<288xf32, #tpu.memory_space<smem>>
    %1188 = vector.broadcast %1187 : f32 to vector<14x112xf32>
    %1189 = arith.mulf %1178, %1188 : vector<14x112xf32>
    %1190 = arith.addf %1154, %1189 : vector<14x112xf32>
    %c27_163 = arith.constant 27 : index
    %1191 = memref.load %arg4[%c27_163] : memref<288xf32, #tpu.memory_space<smem>>
    %1192 = vector.broadcast %1191 : f32 to vector<14x112xf32>
    %1193 = arith.mulf %1178, %1192 : vector<14x112xf32>
    %1194 = arith.addf %1158, %1193 : vector<14x112xf32>
    %c28_164 = arith.constant 28 : index
    %1195 = memref.load %arg4[%c28_164] : memref<288xf32, #tpu.memory_space<smem>>
    %1196 = vector.broadcast %1195 : f32 to vector<14x112xf32>
    %1197 = arith.mulf %1178, %1196 : vector<14x112xf32>
    %1198 = arith.addf %1162, %1197 : vector<14x112xf32>
    %c29_165 = arith.constant 29 : index
    %1199 = memref.load %arg4[%c29_165] : memref<288xf32, #tpu.memory_space<smem>>
    %1200 = vector.broadcast %1199 : f32 to vector<14x112xf32>
    %1201 = arith.mulf %1178, %1200 : vector<14x112xf32>
    %1202 = arith.addf %1166, %1201 : vector<14x112xf32>
    %c30_166 = arith.constant 30 : index
    %1203 = memref.load %arg4[%c30_166] : memref<288xf32, #tpu.memory_space<smem>>
    %1204 = vector.broadcast %1203 : f32 to vector<14x112xf32>
    %1205 = arith.mulf %1178, %1204 : vector<14x112xf32>
    %1206 = arith.addf %1170, %1205 : vector<14x112xf32>
    %c31_167 = arith.constant 31 : index
    %1207 = memref.load %arg4[%c31_167] : memref<288xf32, #tpu.memory_space<smem>>
    %1208 = vector.broadcast %1207 : f32 to vector<14x112xf32>
    %1209 = arith.mulf %1178, %1208 : vector<14x112xf32>
    %1210 = arith.addf %1174, %1209 : vector<14x112xf32>
    %c48_168 = arith.constant 48 : index
    %c1_169 = arith.constant 1 : index
    %1211 = vector.load %arg18[%c48_168, %c1_169] : memref<64x114xf32, #tpu.memory_space<vmem>>, vector<14x112xf32>
    %c56_170 = arith.constant 56 : index
    %1212 = memref.load %arg4[%c56_170] : memref<288xf32, #tpu.memory_space<smem>>
    %1213 = vector.broadcast %1212 : f32 to vector<14x112xf32>
    %1214 = arith.mulf %1211, %1213 : vector<14x112xf32>
    %1215 = arith.addf %1182, %1214 : vector<14x112xf32>
    %c57 = arith.constant 57 : index
    %1216 = memref.load %arg4[%c57] : memref<288xf32, #tpu.memory_space<smem>>
    %1217 = vector.broadcast %1216 : f32 to vector<14x112xf32>
    %1218 = arith.mulf %1211, %1217 : vector<14x112xf32>
    %1219 = arith.addf %1186, %1218 : vector<14x112xf32>
    %c58 = arith.constant 58 : index
    %1220 = memref.load %arg4[%c58] : memref<288xf32, #tpu.memory_space<smem>>
    %1221 = vector.broadcast %1220 : f32 to vector<14x112xf32>
    %1222 = arith.mulf %1211, %1221 : vector<14x112xf32>
    %1223 = arith.addf %1190, %1222 : vector<14x112xf32>
    %c59 = arith.constant 59 : index
    %1224 = memref.load %arg4[%c59] : memref<288xf32, #tpu.memory_space<smem>>
    %1225 = vector.broadcast %1224 : f32 to vector<14x112xf32>
    %1226 = arith.mulf %1211, %1225 : vector<14x112xf32>
    %1227 = arith.addf %1194, %1226 : vector<14x112xf32>
    %c60 = arith.constant 60 : index
    %1228 = memref.load %arg4[%c60] : memref<288xf32, #tpu.memory_space<smem>>
    %1229 = vector.broadcast %1228 : f32 to vector<14x112xf32>
    %1230 = arith.mulf %1211, %1229 : vector<14x112xf32>
    %1231 = arith.addf %1198, %1230 : vector<14x112xf32>
    %c61 = arith.constant 61 : index
    %1232 = memref.load %arg4[%c61] : memref<288xf32, #tpu.memory_space<smem>>
    %1233 = vector.broadcast %1232 : f32 to vector<14x112xf32>
    %1234 = arith.mulf %1211, %1233 : vector<14x112xf32>
    %1235 = arith.addf %1202, %1234 : vector<14x112xf32>
    %c62 = arith.constant 62 : index
    %1236 = memref.load %arg4[%c62] : memref<288xf32, #tpu.memory_space<smem>>
    %1237 = vector.broadcast %1236 : f32 to vector<14x112xf32>
    %1238 = arith.mulf %1211, %1237 : vector<14x112xf32>
    %1239 = arith.addf %1206, %1238 : vector<14x112xf32>
    %c63 = arith.constant 63 : index
    %1240 = memref.load %arg4[%c63] : memref<288xf32, #tpu.memory_space<smem>>
    %1241 = vector.broadcast %1240 : f32 to vector<14x112xf32>
    %1242 = arith.mulf %1211, %1241 : vector<14x112xf32>
    %1243 = arith.addf %1210, %1242 : vector<14x112xf32>
    %c48_171 = arith.constant 48 : index
    %c2_172 = arith.constant 2 : index
    %1244 = vector.load %arg18[%c48_171, %c2_172] : memref<64x114xf32, #tpu.memory_space<vmem>>, vector<14x112xf32>
    %1245 = vector.extract_strided_slice %221 {offsets = [1, 0], sizes = [1, 112], strides = [1, 1]} : vector<2x112xf32> to vector<1x112xf32>
    %1246 = vector.broadcast %1245 : vector<1x112xf32> to vector<14x112xf32>
    %1247 = arith.mulf %1244, %1246 : vector<14x112xf32>
    %c88 = arith.constant 88 : index
    %1248 = memref.load %arg4[%c88] : memref<288xf32, #tpu.memory_space<smem>>
    %1249 = vector.broadcast %1248 : f32 to vector<14x112xf32>
    %1250 = arith.mulf %1247, %1249 : vector<14x112xf32>
    %1251 = arith.addf %1215, %1250 : vector<14x112xf32>
    %c89 = arith.constant 89 : index
    %1252 = memref.load %arg4[%c89] : memref<288xf32, #tpu.memory_space<smem>>
    %1253 = vector.broadcast %1252 : f32 to vector<14x112xf32>
    %1254 = arith.mulf %1247, %1253 : vector<14x112xf32>
    %1255 = arith.addf %1219, %1254 : vector<14x112xf32>
    %c90 = arith.constant 90 : index
    %1256 = memref.load %arg4[%c90] : memref<288xf32, #tpu.memory_space<smem>>
    %1257 = vector.broadcast %1256 : f32 to vector<14x112xf32>
    %1258 = arith.mulf %1247, %1257 : vector<14x112xf32>
    %1259 = arith.addf %1223, %1258 : vector<14x112xf32>
    %c91 = arith.constant 91 : index
    %1260 = memref.load %arg4[%c91] : memref<288xf32, #tpu.memory_space<smem>>
    %1261 = vector.broadcast %1260 : f32 to vector<14x112xf32>
    %1262 = arith.mulf %1247, %1261 : vector<14x112xf32>
    %1263 = arith.addf %1227, %1262 : vector<14x112xf32>
    %c92 = arith.constant 92 : index
    %1264 = memref.load %arg4[%c92] : memref<288xf32, #tpu.memory_space<smem>>
    %1265 = vector.broadcast %1264 : f32 to vector<14x112xf32>
    %1266 = arith.mulf %1247, %1265 : vector<14x112xf32>
    %1267 = arith.addf %1231, %1266 : vector<14x112xf32>
    %c93 = arith.constant 93 : index
    %1268 = memref.load %arg4[%c93] : memref<288xf32, #tpu.memory_space<smem>>
    %1269 = vector.broadcast %1268 : f32 to vector<14x112xf32>
    %1270 = arith.mulf %1247, %1269 : vector<14x112xf32>
    %1271 = arith.addf %1235, %1270 : vector<14x112xf32>
    %c94 = arith.constant 94 : index
    %1272 = memref.load %arg4[%c94] : memref<288xf32, #tpu.memory_space<smem>>
    %1273 = vector.broadcast %1272 : f32 to vector<14x112xf32>
    %1274 = arith.mulf %1247, %1273 : vector<14x112xf32>
    %1275 = arith.addf %1239, %1274 : vector<14x112xf32>
    %c95 = arith.constant 95 : index
    %1276 = memref.load %arg4[%c95] : memref<288xf32, #tpu.memory_space<smem>>
    %1277 = vector.broadcast %1276 : f32 to vector<14x112xf32>
    %1278 = arith.mulf %1247, %1277 : vector<14x112xf32>
    %1279 = arith.addf %1243, %1278 : vector<14x112xf32>
    %c49_173 = arith.constant 49 : index
    %c0_174 = arith.constant 0 : index
    %1280 = vector.load %arg18[%c49_173, %c0_174] : memref<64x114xf32, #tpu.memory_space<vmem>>, vector<14x112xf32>
    %1281 = vector.extract_strided_slice %221 {offsets = [0, 0], sizes = [1, 112], strides = [1, 1]} : vector<2x112xf32> to vector<1x112xf32>
    %1282 = vector.broadcast %1281 : vector<1x112xf32> to vector<14x112xf32>
    %1283 = arith.mulf %1280, %1282 : vector<14x112xf32>
    %c120 = arith.constant 120 : index
    %1284 = memref.load %arg4[%c120] : memref<288xf32, #tpu.memory_space<smem>>
    %1285 = vector.broadcast %1284 : f32 to vector<14x112xf32>
    %1286 = arith.mulf %1283, %1285 : vector<14x112xf32>
    %1287 = arith.addf %1251, %1286 : vector<14x112xf32>
    %c121 = arith.constant 121 : index
    %1288 = memref.load %arg4[%c121] : memref<288xf32, #tpu.memory_space<smem>>
    %1289 = vector.broadcast %1288 : f32 to vector<14x112xf32>
    %1290 = arith.mulf %1283, %1289 : vector<14x112xf32>
    %1291 = arith.addf %1255, %1290 : vector<14x112xf32>
    %c122 = arith.constant 122 : index
    %1292 = memref.load %arg4[%c122] : memref<288xf32, #tpu.memory_space<smem>>
    %1293 = vector.broadcast %1292 : f32 to vector<14x112xf32>
    %1294 = arith.mulf %1283, %1293 : vector<14x112xf32>
    %1295 = arith.addf %1259, %1294 : vector<14x112xf32>
    %c123 = arith.constant 123 : index
    %1296 = memref.load %arg4[%c123] : memref<288xf32, #tpu.memory_space<smem>>
    %1297 = vector.broadcast %1296 : f32 to vector<14x112xf32>
    %1298 = arith.mulf %1283, %1297 : vector<14x112xf32>
    %1299 = arith.addf %1263, %1298 : vector<14x112xf32>
    %c124 = arith.constant 124 : index
    %1300 = memref.load %arg4[%c124] : memref<288xf32, #tpu.memory_space<smem>>
    %1301 = vector.broadcast %1300 : f32 to vector<14x112xf32>
    %1302 = arith.mulf %1283, %1301 : vector<14x112xf32>
    %1303 = arith.addf %1267, %1302 : vector<14x112xf32>
    %c125 = arith.constant 125 : index
    %1304 = memref.load %arg4[%c125] : memref<288xf32, #tpu.memory_space<smem>>
    %1305 = vector.broadcast %1304 : f32 to vector<14x112xf32>
    %1306 = arith.mulf %1283, %1305 : vector<14x112xf32>
    %1307 = arith.addf %1271, %1306 : vector<14x112xf32>
    %c126 = arith.constant 126 : index
    %1308 = memref.load %arg4[%c126] : memref<288xf32, #tpu.memory_space<smem>>
    %1309 = vector.broadcast %1308 : f32 to vector<14x112xf32>
    %1310 = arith.mulf %1283, %1309 : vector<14x112xf32>
    %1311 = arith.addf %1275, %1310 : vector<14x112xf32>
    %c127 = arith.constant 127 : index
    %1312 = memref.load %arg4[%c127] : memref<288xf32, #tpu.memory_space<smem>>
    %1313 = vector.broadcast %1312 : f32 to vector<14x112xf32>
    %1314 = arith.mulf %1283, %1313 : vector<14x112xf32>
    %1315 = arith.addf %1279, %1314 : vector<14x112xf32>
    %c49_175 = arith.constant 49 : index
    %c1_176 = arith.constant 1 : index
    %1316 = vector.load %arg18[%c49_175, %c1_176] : memref<64x114xf32, #tpu.memory_space<vmem>>, vector<14x112xf32>
    %c152 = arith.constant 152 : index
    %1317 = memref.load %arg4[%c152] : memref<288xf32, #tpu.memory_space<smem>>
    %1318 = vector.broadcast %1317 : f32 to vector<14x112xf32>
    %1319 = arith.mulf %1316, %1318 : vector<14x112xf32>
    %1320 = arith.addf %1287, %1319 : vector<14x112xf32>
    %c153 = arith.constant 153 : index
    %1321 = memref.load %arg4[%c153] : memref<288xf32, #tpu.memory_space<smem>>
    %1322 = vector.broadcast %1321 : f32 to vector<14x112xf32>
    %1323 = arith.mulf %1316, %1322 : vector<14x112xf32>
    %1324 = arith.addf %1291, %1323 : vector<14x112xf32>
    %c154 = arith.constant 154 : index
    %1325 = memref.load %arg4[%c154] : memref<288xf32, #tpu.memory_space<smem>>
    %1326 = vector.broadcast %1325 : f32 to vector<14x112xf32>
    %1327 = arith.mulf %1316, %1326 : vector<14x112xf32>
    %1328 = arith.addf %1295, %1327 : vector<14x112xf32>
    %c155 = arith.constant 155 : index
    %1329 = memref.load %arg4[%c155] : memref<288xf32, #tpu.memory_space<smem>>
    %1330 = vector.broadcast %1329 : f32 to vector<14x112xf32>
    %1331 = arith.mulf %1316, %1330 : vector<14x112xf32>
    %1332 = arith.addf %1299, %1331 : vector<14x112xf32>
    %c156 = arith.constant 156 : index
    %1333 = memref.load %arg4[%c156] : memref<288xf32, #tpu.memory_space<smem>>
    %1334 = vector.broadcast %1333 : f32 to vector<14x112xf32>
    %1335 = arith.mulf %1316, %1334 : vector<14x112xf32>
    %1336 = arith.addf %1303, %1335 : vector<14x112xf32>
    %c157 = arith.constant 157 : index
    %1337 = memref.load %arg4[%c157] : memref<288xf32, #tpu.memory_space<smem>>
    %1338 = vector.broadcast %1337 : f32 to vector<14x112xf32>
    %1339 = arith.mulf %1316, %1338 : vector<14x112xf32>
    %1340 = arith.addf %1307, %1339 : vector<14x112xf32>
    %c158 = arith.constant 158 : index
    %1341 = memref.load %arg4[%c158] : memref<288xf32, #tpu.memory_space<smem>>
    %1342 = vector.broadcast %1341 : f32 to vector<14x112xf32>
    %1343 = arith.mulf %1316, %1342 : vector<14x112xf32>
    %1344 = arith.addf %1311, %1343 : vector<14x112xf32>
    %c159 = arith.constant 159 : index
    %1345 = memref.load %arg4[%c159] : memref<288xf32, #tpu.memory_space<smem>>
    %1346 = vector.broadcast %1345 : f32 to vector<14x112xf32>
    %1347 = arith.mulf %1316, %1346 : vector<14x112xf32>
    %1348 = arith.addf %1315, %1347 : vector<14x112xf32>
    %c49_177 = arith.constant 49 : index
    %c2_178 = arith.constant 2 : index
    %1349 = vector.load %arg18[%c49_177, %c2_178] : memref<64x114xf32, #tpu.memory_space<vmem>>, vector<14x112xf32>
    %1350 = vector.extract_strided_slice %221 {offsets = [1, 0], sizes = [1, 112], strides = [1, 1]} : vector<2x112xf32> to vector<1x112xf32>
    %1351 = vector.broadcast %1350 : vector<1x112xf32> to vector<14x112xf32>
    %1352 = arith.mulf %1349, %1351 : vector<14x112xf32>
    %c184 = arith.constant 184 : index
    %1353 = memref.load %arg4[%c184] : memref<288xf32, #tpu.memory_space<smem>>
    %1354 = vector.broadcast %1353 : f32 to vector<14x112xf32>
    %1355 = arith.mulf %1352, %1354 : vector<14x112xf32>
    %1356 = arith.addf %1320, %1355 : vector<14x112xf32>
    %c185 = arith.constant 185 : index
    %1357 = memref.load %arg4[%c185] : memref<288xf32, #tpu.memory_space<smem>>
    %1358 = vector.broadcast %1357 : f32 to vector<14x112xf32>
    %1359 = arith.mulf %1352, %1358 : vector<14x112xf32>
    %1360 = arith.addf %1324, %1359 : vector<14x112xf32>
    %c186 = arith.constant 186 : index
    %1361 = memref.load %arg4[%c186] : memref<288xf32, #tpu.memory_space<smem>>
    %1362 = vector.broadcast %1361 : f32 to vector<14x112xf32>
    %1363 = arith.mulf %1352, %1362 : vector<14x112xf32>
    %1364 = arith.addf %1328, %1363 : vector<14x112xf32>
    %c187 = arith.constant 187 : index
    %1365 = memref.load %arg4[%c187] : memref<288xf32, #tpu.memory_space<smem>>
    %1366 = vector.broadcast %1365 : f32 to vector<14x112xf32>
    %1367 = arith.mulf %1352, %1366 : vector<14x112xf32>
    %1368 = arith.addf %1332, %1367 : vector<14x112xf32>
    %c188 = arith.constant 188 : index
    %1369 = memref.load %arg4[%c188] : memref<288xf32, #tpu.memory_space<smem>>
    %1370 = vector.broadcast %1369 : f32 to vector<14x112xf32>
    %1371 = arith.mulf %1352, %1370 : vector<14x112xf32>
    %1372 = arith.addf %1336, %1371 : vector<14x112xf32>
    %c189 = arith.constant 189 : index
    %1373 = memref.load %arg4[%c189] : memref<288xf32, #tpu.memory_space<smem>>
    %1374 = vector.broadcast %1373 : f32 to vector<14x112xf32>
    %1375 = arith.mulf %1352, %1374 : vector<14x112xf32>
    %1376 = arith.addf %1340, %1375 : vector<14x112xf32>
    %c190 = arith.constant 190 : index
    %1377 = memref.load %arg4[%c190] : memref<288xf32, #tpu.memory_space<smem>>
    %1378 = vector.broadcast %1377 : f32 to vector<14x112xf32>
    %1379 = arith.mulf %1352, %1378 : vector<14x112xf32>
    %1380 = arith.addf %1344, %1379 : vector<14x112xf32>
    %c191 = arith.constant 191 : index
    %1381 = memref.load %arg4[%c191] : memref<288xf32, #tpu.memory_space<smem>>
    %1382 = vector.broadcast %1381 : f32 to vector<14x112xf32>
    %1383 = arith.mulf %1352, %1382 : vector<14x112xf32>
    %1384 = arith.addf %1348, %1383 : vector<14x112xf32>
    %c50_179 = arith.constant 50 : index
    %c0_180 = arith.constant 0 : index
    %1385 = vector.load %arg18[%c50_179, %c0_180] : memref<64x114xf32, #tpu.memory_space<vmem>>, vector<14x112xf32>
    %1386 = vector.extract_strided_slice %221 {offsets = [0, 0], sizes = [1, 112], strides = [1, 1]} : vector<2x112xf32> to vector<1x112xf32>
    %1387 = vector.broadcast %1386 : vector<1x112xf32> to vector<14x112xf32>
    %1388 = arith.mulf %1385, %1387 : vector<14x112xf32>
    %c216 = arith.constant 216 : index
    %1389 = memref.load %arg4[%c216] : memref<288xf32, #tpu.memory_space<smem>>
    %1390 = vector.broadcast %1389 : f32 to vector<14x112xf32>
    %1391 = arith.mulf %1388, %1390 : vector<14x112xf32>
    %1392 = arith.addf %1356, %1391 : vector<14x112xf32>
    %c217 = arith.constant 217 : index
    %1393 = memref.load %arg4[%c217] : memref<288xf32, #tpu.memory_space<smem>>
    %1394 = vector.broadcast %1393 : f32 to vector<14x112xf32>
    %1395 = arith.mulf %1388, %1394 : vector<14x112xf32>
    %1396 = arith.addf %1360, %1395 : vector<14x112xf32>
    %c218 = arith.constant 218 : index
    %1397 = memref.load %arg4[%c218] : memref<288xf32, #tpu.memory_space<smem>>
    %1398 = vector.broadcast %1397 : f32 to vector<14x112xf32>
    %1399 = arith.mulf %1388, %1398 : vector<14x112xf32>
    %1400 = arith.addf %1364, %1399 : vector<14x112xf32>
    %c219 = arith.constant 219 : index
    %1401 = memref.load %arg4[%c219] : memref<288xf32, #tpu.memory_space<smem>>
    %1402 = vector.broadcast %1401 : f32 to vector<14x112xf32>
    %1403 = arith.mulf %1388, %1402 : vector<14x112xf32>
    %1404 = arith.addf %1368, %1403 : vector<14x112xf32>
    %c220 = arith.constant 220 : index
    %1405 = memref.load %arg4[%c220] : memref<288xf32, #tpu.memory_space<smem>>
    %1406 = vector.broadcast %1405 : f32 to vector<14x112xf32>
    %1407 = arith.mulf %1388, %1406 : vector<14x112xf32>
    %1408 = arith.addf %1372, %1407 : vector<14x112xf32>
    %c221 = arith.constant 221 : index
    %1409 = memref.load %arg4[%c221] : memref<288xf32, #tpu.memory_space<smem>>
    %1410 = vector.broadcast %1409 : f32 to vector<14x112xf32>
    %1411 = arith.mulf %1388, %1410 : vector<14x112xf32>
    %1412 = arith.addf %1376, %1411 : vector<14x112xf32>
    %c222 = arith.constant 222 : index
    %1413 = memref.load %arg4[%c222] : memref<288xf32, #tpu.memory_space<smem>>
    %1414 = vector.broadcast %1413 : f32 to vector<14x112xf32>
    %1415 = arith.mulf %1388, %1414 : vector<14x112xf32>
    %1416 = arith.addf %1380, %1415 : vector<14x112xf32>
    %c223 = arith.constant 223 : index
    %1417 = memref.load %arg4[%c223] : memref<288xf32, #tpu.memory_space<smem>>
    %1418 = vector.broadcast %1417 : f32 to vector<14x112xf32>
    %1419 = arith.mulf %1388, %1418 : vector<14x112xf32>
    %1420 = arith.addf %1384, %1419 : vector<14x112xf32>
    %c50_181 = arith.constant 50 : index
    %c1_182 = arith.constant 1 : index
    %1421 = vector.load %arg18[%c50_181, %c1_182] : memref<64x114xf32, #tpu.memory_space<vmem>>, vector<14x112xf32>
    %c248 = arith.constant 248 : index
    %1422 = memref.load %arg4[%c248] : memref<288xf32, #tpu.memory_space<smem>>
    %1423 = vector.broadcast %1422 : f32 to vector<14x112xf32>
    %1424 = arith.mulf %1421, %1423 : vector<14x112xf32>
    %1425 = arith.addf %1392, %1424 : vector<14x112xf32>
    %c249 = arith.constant 249 : index
    %1426 = memref.load %arg4[%c249] : memref<288xf32, #tpu.memory_space<smem>>
    %1427 = vector.broadcast %1426 : f32 to vector<14x112xf32>
    %1428 = arith.mulf %1421, %1427 : vector<14x112xf32>
    %1429 = arith.addf %1396, %1428 : vector<14x112xf32>
    %c250 = arith.constant 250 : index
    %1430 = memref.load %arg4[%c250] : memref<288xf32, #tpu.memory_space<smem>>
    %1431 = vector.broadcast %1430 : f32 to vector<14x112xf32>
    %1432 = arith.mulf %1421, %1431 : vector<14x112xf32>
    %1433 = arith.addf %1400, %1432 : vector<14x112xf32>
    %c251 = arith.constant 251 : index
    %1434 = memref.load %arg4[%c251] : memref<288xf32, #tpu.memory_space<smem>>
    %1435 = vector.broadcast %1434 : f32 to vector<14x112xf32>
    %1436 = arith.mulf %1421, %1435 : vector<14x112xf32>
    %1437 = arith.addf %1404, %1436 : vector<14x112xf32>
    %c252 = arith.constant 252 : index
    %1438 = memref.load %arg4[%c252] : memref<288xf32, #tpu.memory_space<smem>>
    %1439 = vector.broadcast %1438 : f32 to vector<14x112xf32>
    %1440 = arith.mulf %1421, %1439 : vector<14x112xf32>
    %1441 = arith.addf %1408, %1440 : vector<14x112xf32>
    %c253 = arith.constant 253 : index
    %1442 = memref.load %arg4[%c253] : memref<288xf32, #tpu.memory_space<smem>>
    %1443 = vector.broadcast %1442 : f32 to vector<14x112xf32>
    %1444 = arith.mulf %1421, %1443 : vector<14x112xf32>
    %1445 = arith.addf %1412, %1444 : vector<14x112xf32>
    %c254 = arith.constant 254 : index
    %1446 = memref.load %arg4[%c254] : memref<288xf32, #tpu.memory_space<smem>>
    %1447 = vector.broadcast %1446 : f32 to vector<14x112xf32>
    %1448 = arith.mulf %1421, %1447 : vector<14x112xf32>
    %1449 = arith.addf %1416, %1448 : vector<14x112xf32>
    %c255 = arith.constant 255 : index
    %1450 = memref.load %arg4[%c255] : memref<288xf32, #tpu.memory_space<smem>>
    %1451 = vector.broadcast %1450 : f32 to vector<14x112xf32>
    %1452 = arith.mulf %1421, %1451 : vector<14x112xf32>
    %1453 = arith.addf %1420, %1452 : vector<14x112xf32>
    %c50_183 = arith.constant 50 : index
    %c2_184 = arith.constant 2 : index
    %1454 = vector.load %arg18[%c50_183, %c2_184] : memref<64x114xf32, #tpu.memory_space<vmem>>, vector<14x112xf32>
    %1455 = vector.extract_strided_slice %221 {offsets = [1, 0], sizes = [1, 112], strides = [1, 1]} : vector<2x112xf32> to vector<1x112xf32>
    %1456 = vector.broadcast %1455 : vector<1x112xf32> to vector<14x112xf32>
    %1457 = arith.mulf %1454, %1456 : vector<14x112xf32>
    %c280 = arith.constant 280 : index
    %1458 = memref.load %arg4[%c280] : memref<288xf32, #tpu.memory_space<smem>>
    %1459 = vector.broadcast %1458 : f32 to vector<14x112xf32>
    %1460 = arith.mulf %1457, %1459 : vector<14x112xf32>
    %1461 = arith.addf %1425, %1460 : vector<14x112xf32>
    %c281 = arith.constant 281 : index
    %1462 = memref.load %arg4[%c281] : memref<288xf32, #tpu.memory_space<smem>>
    %1463 = vector.broadcast %1462 : f32 to vector<14x112xf32>
    %1464 = arith.mulf %1457, %1463 : vector<14x112xf32>
    %1465 = arith.addf %1429, %1464 : vector<14x112xf32>
    %c282 = arith.constant 282 : index
    %1466 = memref.load %arg4[%c282] : memref<288xf32, #tpu.memory_space<smem>>
    %1467 = vector.broadcast %1466 : f32 to vector<14x112xf32>
    %1468 = arith.mulf %1457, %1467 : vector<14x112xf32>
    %1469 = arith.addf %1433, %1468 : vector<14x112xf32>
    %c283 = arith.constant 283 : index
    %1470 = memref.load %arg4[%c283] : memref<288xf32, #tpu.memory_space<smem>>
    %1471 = vector.broadcast %1470 : f32 to vector<14x112xf32>
    %1472 = arith.mulf %1457, %1471 : vector<14x112xf32>
    %1473 = arith.addf %1437, %1472 : vector<14x112xf32>
    %c284 = arith.constant 284 : index
    %1474 = memref.load %arg4[%c284] : memref<288xf32, #tpu.memory_space<smem>>
    %1475 = vector.broadcast %1474 : f32 to vector<14x112xf32>
    %1476 = arith.mulf %1457, %1475 : vector<14x112xf32>
    %1477 = arith.addf %1441, %1476 : vector<14x112xf32>
    %c285 = arith.constant 285 : index
    %1478 = memref.load %arg4[%c285] : memref<288xf32, #tpu.memory_space<smem>>
    %1479 = vector.broadcast %1478 : f32 to vector<14x112xf32>
    %1480 = arith.mulf %1457, %1479 : vector<14x112xf32>
    %1481 = arith.addf %1445, %1480 : vector<14x112xf32>
    %c286 = arith.constant 286 : index
    %1482 = memref.load %arg4[%c286] : memref<288xf32, #tpu.memory_space<smem>>
    %1483 = vector.broadcast %1482 : f32 to vector<14x112xf32>
    %1484 = arith.mulf %1457, %1483 : vector<14x112xf32>
    %1485 = arith.addf %1449, %1484 : vector<14x112xf32>
    %c287 = arith.constant 287 : index
    %1486 = memref.load %arg4[%c287] : memref<288xf32, #tpu.memory_space<smem>>
    %1487 = vector.broadcast %1486 : f32 to vector<14x112xf32>
    %1488 = arith.mulf %1457, %1487 : vector<14x112xf32>
    %1489 = arith.addf %1453, %1488 : vector<14x112xf32>
    %c0_185 = arith.constant 0 : index
    %1490 = memref.load %arg5[%c0_185] : memref<8xf32, #tpu.memory_space<smem>>
    %1491 = vector.broadcast %1490 : f32 to vector<14x112xf32>
    %1492 = arith.addf %1461, %1491 : vector<14x112xf32>
    %cst_186 = arith.constant 0.000000e+00 : f32
    %1493 = vector.broadcast %cst_186 : f32 to vector<14x112xf32>
    %1494 = arith.maximumf %1492, %1493 : vector<14x112xf32>
    %c0_187 = arith.constant 0 : index
    %c0_188 = arith.constant 0 : index
    %1495 = vector.load %arg19[%c0_187, %c0_188] : memref<112x112xf32, #tpu.memory_space<vmem>>, vector<14x112xf32>
    tpu.vector_store %arg19[%c0_187, %c0_188], %1494 {strides = array<i32>} : memref<112x112xf32, #tpu.memory_space<vmem>>, vector<14x112xf32>,
    %c1_189 = arith.constant 1 : index
    %1496 = memref.load %arg5[%c1_189] : memref<8xf32, #tpu.memory_space<smem>>
    %1497 = vector.broadcast %1496 : f32 to vector<14x112xf32>
    %1498 = arith.addf %1465, %1497 : vector<14x112xf32>
    %cst_190 = arith.constant 0.000000e+00 : f32
    %1499 = vector.broadcast %cst_190 : f32 to vector<14x112xf32>
    %1500 = arith.maximumf %1498, %1499 : vector<14x112xf32>
    %c14_191 = arith.constant 14 : index
    %c0_192 = arith.constant 0 : index
    %1501 = vector.load %arg19[%c14_191, %c0_192] : memref<112x112xf32, #tpu.memory_space<vmem>>, vector<14x112xf32>
    tpu.vector_store %arg19[%c14_191, %c0_192], %1500 {strides = array<i32>} : memref<112x112xf32, #tpu.memory_space<vmem>>, vector<14x112xf32>,
    %c2_193 = arith.constant 2 : index
    %1502 = memref.load %arg5[%c2_193] : memref<8xf32, #tpu.memory_space<smem>>
    %1503 = vector.broadcast %1502 : f32 to vector<14x112xf32>
    %1504 = arith.addf %1469, %1503 : vector<14x112xf32>
    %cst_194 = arith.constant 0.000000e+00 : f32
    %1505 = vector.broadcast %cst_194 : f32 to vector<14x112xf32>
    %1506 = arith.maximumf %1504, %1505 : vector<14x112xf32>
    %c28_195 = arith.constant 28 : index
    %c0_196 = arith.constant 0 : index
    %1507 = vector.load %arg19[%c28_195, %c0_196] : memref<112x112xf32, #tpu.memory_space<vmem>>, vector<14x112xf32>
    tpu.vector_store %arg19[%c28_195, %c0_196], %1506 {strides = array<i32>} : memref<112x112xf32, #tpu.memory_space<vmem>>, vector<14x112xf32>,
    %c3_197 = arith.constant 3 : index
    %1508 = memref.load %arg5[%c3_197] : memref<8xf32, #tpu.memory_space<smem>>
    %1509 = vector.broadcast %1508 : f32 to vector<14x112xf32>
    %1510 = arith.addf %1473, %1509 : vector<14x112xf32>
    %cst_198 = arith.constant 0.000000e+00 : f32
    %1511 = vector.broadcast %cst_198 : f32 to vector<14x112xf32>
    %1512 = arith.maximumf %1510, %1511 : vector<14x112xf32>
    %c42_199 = arith.constant 42 : index
    %c0_200 = arith.constant 0 : index
    %1513 = vector.load %arg19[%c42_199, %c0_200] : memref<112x112xf32, #tpu.memory_space<vmem>>, vector<14x112xf32>
    tpu.vector_store %arg19[%c42_199, %c0_200], %1512 {strides = array<i32>} : memref<112x112xf32, #tpu.memory_space<vmem>>, vector<14x112xf32>,
    %c4_201 = arith.constant 4 : index
    %1514 = memref.load %arg5[%c4_201] : memref<8xf32, #tpu.memory_space<smem>>
    %1515 = vector.broadcast %1514 : f32 to vector<14x112xf32>
    %1516 = arith.addf %1477, %1515 : vector<14x112xf32>
    %cst_202 = arith.constant 0.000000e+00 : f32
    %1517 = vector.broadcast %cst_202 : f32 to vector<14x112xf32>
    %1518 = arith.maximumf %1516, %1517 : vector<14x112xf32>
    %c56_203 = arith.constant 56 : index
    %c0_204 = arith.constant 0 : index
    %1519 = vector.load %arg19[%c56_203, %c0_204] : memref<112x112xf32, #tpu.memory_space<vmem>>, vector<14x112xf32>
    tpu.vector_store %arg19[%c56_203, %c0_204], %1518 {strides = array<i32>} : memref<112x112xf32, #tpu.memory_space<vmem>>, vector<14x112xf32>,
    %c5_205 = arith.constant 5 : index
    %1520 = memref.load %arg5[%c5_205] : memref<8xf32, #tpu.memory_space<smem>>
    %1521 = vector.broadcast %1520 : f32 to vector<14x112xf32>
    %1522 = arith.addf %1481, %1521 : vector<14x112xf32>
    %cst_206 = arith.constant 0.000000e+00 : f32
    %1523 = vector.broadcast %cst_206 : f32 to vector<14x112xf32>
    %1524 = arith.maximumf %1522, %1523 : vector<14x112xf32>
    %c70_207 = arith.constant 70 : index
    %c0_208 = arith.constant 0 : index
    %1525 = vector.load %arg19[%c70_207, %c0_208] : memref<112x112xf32, #tpu.memory_space<vmem>>, vector<14x112xf32>
    tpu.vector_store %arg19[%c70_207, %c0_208], %1524 {strides = array<i32>} : memref<112x112xf32, #tpu.memory_space<vmem>>, vector<14x112xf32>,
    %c6_209 = arith.constant 6 : index
    %1526 = memref.load %arg5[%c6_209] : memref<8xf32, #tpu.memory_space<smem>>
    %1527 = vector.broadcast %1526 : f32 to vector<14x112xf32>
    %1528 = arith.addf %1485, %1527 : vector<14x112xf32>
    %cst_210 = arith.constant 0.000000e+00 : f32
    %1529 = vector.broadcast %cst_210 : f32 to vector<14x112xf32>
    %1530 = arith.maximumf %1528, %1529 : vector<14x112xf32>
    %c84_211 = arith.constant 84 : index
    %c0_212 = arith.constant 0 : index
    %1531 = vector.load %arg19[%c84_211, %c0_212] : memref<112x112xf32, #tpu.memory_space<vmem>>, vector<14x112xf32>
    tpu.vector_store %arg19[%c84_211, %c0_212], %1530 {strides = array<i32>} : memref<112x112xf32, #tpu.memory_space<vmem>>, vector<14x112xf32>,
    %c7_213 = arith.constant 7 : index
    %1532 = memref.load %arg5[%c7_213] : memref<8xf32, #tpu.memory_space<smem>>
    %1533 = vector.broadcast %1532 : f32 to vector<14x112xf32>
    %1534 = arith.addf %1489, %1533 : vector<14x112xf32>
    %cst_214 = arith.constant 0.000000e+00 : f32
    %1535 = vector.broadcast %cst_214 : f32 to vector<14x112xf32>
    %1536 = arith.maximumf %1534, %1535 : vector<14x112xf32>
    %c98_215 = arith.constant 98 : index
    %c0_216 = arith.constant 0 : index
    %1537 = vector.load %arg19[%c98_215, %c0_216] : memref<112x112xf32, #tpu.memory_space<vmem>>, vector<14x112xf32>
    tpu.vector_store %arg19[%c98_215, %c0_216], %1536 {strides = array<i32>} : memref<112x112xf32, #tpu.memory_space<vmem>>, vector<14x112xf32>,
    %c0_217 = arith.constant 0 : index
    %c0_218 = arith.constant 0 : index
    %1538 = vector.load %arg19[%c0_217, %c0_218] : memref<112x112xf32, #tpu.memory_space<vmem>>, vector<112x112xf32>
    %c0_219 = arith.constant 0 : index
    %c0_220 = arith.constant 0 : index
    %c0_221 = arith.constant 0 : index
    %1539 = vector.load %arg10[%c0_219, %c0_220, %c0_221] : memref<2x56x112xf32, #tpu.memory_space<vmem>>, vector<1x56x112xf32>
    %1540 = vector.shape_cast %1539 : vector<1x56x112xf32> to vector<56x112xf32>
    %cst_222 = arith.constant dense<0.000000e+00> : vector<56x112xf32>
    %1541 = tpu.matmul %1540, %1538, %cst_222 {dimension_numbers = #tpu.dot_dimension_numbers<[1], [0], [0], [1], [0, 0, 1, 1], [], []>} : vector<56x112xf32>, vector<112x112xf32>, vector<56x112xf32> -> vector<56x112xf32>
    %c1_223 = arith.constant 1 : index
    %c0_224 = arith.constant 0 : index
    %c0_225 = arith.constant 0 : index
    %1542 = vector.load %arg10[%c1_223, %c0_224, %c0_225] : memref<2x56x112xf32, #tpu.memory_space<vmem>>, vector<1x56x112xf32>
    %1543 = vector.shape_cast %1542 : vector<1x56x112xf32> to vector<56x112xf32>
    %cst_226 = arith.constant dense<0.000000e+00> : vector<56x112xf32>
    %1544 = tpu.matmul %1543, %1538, %cst_226 {dimension_numbers = #tpu.dot_dimension_numbers<[1], [0], [0], [1], [0, 0, 1, 1], [], []>} : vector<56x112xf32>, vector<112x112xf32>, vector<56x112xf32> -> vector<56x112xf32>
    %1545 = arith.maximumf %1541, %1544 : vector<56x112xf32>
    %c0_227 = arith.constant 0 : index
    %c0_228 = arith.constant 0 : index
    %c0_229 = arith.constant 0 : index
    %1546 = vector.load %arg11[%c0_227, %c0_228, %c0_229] : memref<2x112x56xf32, #tpu.memory_space<vmem>>, vector<1x112x56xf32>
    %1547 = vector.shape_cast %1546 : vector<1x112x56xf32> to vector<112x56xf32>
    %cst_230 = arith.constant dense<0.000000e+00> : vector<56x56xf32>
    %1548 = tpu.matmul %1545, %1547, %cst_230 {dimension_numbers = #tpu.dot_dimension_numbers<[1], [0], [0], [1], [0, 0, 1, 1], [], []>} : vector<56x112xf32>, vector<112x56xf32>, vector<56x56xf32> -> vector<56x56xf32>
    %c1_231 = arith.constant 1 : index
    %c0_232 = arith.constant 0 : index
    %c0_233 = arith.constant 0 : index
    %1549 = vector.load %arg11[%c1_231, %c0_232, %c0_233] : memref<2x112x56xf32, #tpu.memory_space<vmem>>, vector<1x112x56xf32>
    %1550 = vector.shape_cast %1549 : vector<1x112x56xf32> to vector<112x56xf32>
    %cst_234 = arith.constant dense<0.000000e+00> : vector<56x56xf32>
    %1551 = tpu.matmul %1545, %1550, %cst_234 {dimension_numbers = #tpu.dot_dimension_numbers<[1], [0], [0], [1], [0, 0, 1, 1], [], []>} : vector<56x112xf32>, vector<112x56xf32>, vector<56x56xf32> -> vector<56x56xf32>
    %1552 = arith.maximumf %1548, %1551 : vector<56x56xf32>
    %cst_235 = arith.constant 0.000000e+00 : f32
    %1553 = vector.broadcast %cst_235 : f32 to vector<10x8xf32>
    %c0_236 = arith.constant 0 : index
    %c0_237 = arith.constant 0 : index
    %c0_238 = arith.constant 0 : index
    %1554 = vector.load %arg12[%c0_236, %c0_237, %c0_238] : memref<7x56x8xf32, #tpu.memory_space<vmem>>, vector<1x56x8xf32>
    %1555 = vector.shape_cast %1554 : vector<1x56x8xf32> to vector<56x8xf32>
    %cst_239 = arith.constant dense<0.000000e+00> : vector<56x8xf32>
    %1556 = tpu.matmul %1552, %1555, %cst_239 {dimension_numbers = #tpu.dot_dimension_numbers<[1], [0], [0], [1], [0, 0, 1, 1], [], []>} : vector<56x56xf32>, vector<56x8xf32>, vector<56x8xf32> -> vector<56x8xf32>
    %c0_240 = arith.constant 0 : index
    %c0_241 = arith.constant 0 : index
    %c0_242 = arith.constant 0 : index
    %1557 = vector.load %arg13[%c0_240, %c0_241, %c0_242] : memref<7x10x56xf32, #tpu.memory_space<vmem>>, vector<1x10x56xf32>
    %1558 = vector.shape_cast %1557 : vector<1x10x56xf32> to vector<10x56xf32>
    %cst_243 = arith.constant dense<0.000000e+00> : vector<10x8xf32>
    %1559 = tpu.matmul %1558, %1556, %cst_243 {dimension_numbers = #tpu.dot_dimension_numbers<[1], [0], [0], [1], [0, 0, 1, 1], [], []>} : vector<10x56xf32>, vector<56x8xf32>, vector<10x8xf32> -> vector<10x8xf32>
    %1560 = arith.addf %1553, %1559 : vector<10x8xf32>
    %c1_244 = arith.constant 1 : index
    %c0_245 = arith.constant 0 : index
    %c0_246 = arith.constant 0 : index
    %1561 = vector.load %arg12[%c1_244, %c0_245, %c0_246] : memref<7x56x8xf32, #tpu.memory_space<vmem>>, vector<1x56x8xf32>
    %1562 = vector.shape_cast %1561 : vector<1x56x8xf32> to vector<56x8xf32>
    %cst_247 = arith.constant dense<0.000000e+00> : vector<56x8xf32>
    %1563 = tpu.matmul %1552, %1562, %cst_247 {dimension_numbers = #tpu.dot_dimension_numbers<[1], [0], [0], [1], [0, 0, 1, 1], [], []>} : vector<56x56xf32>, vector<56x8xf32>, vector<56x8xf32> -> vector<56x8xf32>
    %c1_248 = arith.constant 1 : index
    %c0_249 = arith.constant 0 : index
    %c0_250 = arith.constant 0 : index
    %1564 = vector.load %arg13[%c1_248, %c0_249, %c0_250] : memref<7x10x56xf32, #tpu.memory_space<vmem>>, vector<1x10x56xf32>
    %1565 = vector.shape_cast %1564 : vector<1x10x56xf32> to vector<10x56xf32>
    %cst_251 = arith.constant dense<0.000000e+00> : vector<10x8xf32>
    %1566 = tpu.matmul %1565, %1563, %cst_251 {dimension_numbers = #tpu.dot_dimension_numbers<[1], [0], [0], [1], [0, 0, 1, 1], [], []>} : vector<10x56xf32>, vector<56x8xf32>, vector<10x8xf32> -> vector<10x8xf32>
    %1567 = arith.addf %1560, %1566 : vector<10x8xf32>
    %c2_252 = arith.constant 2 : index
    %c0_253 = arith.constant 0 : index
    %c0_254 = arith.constant 0 : index
    %1568 = vector.load %arg12[%c2_252, %c0_253, %c0_254] : memref<7x56x8xf32, #tpu.memory_space<vmem>>, vector<1x56x8xf32>
    %1569 = vector.shape_cast %1568 : vector<1x56x8xf32> to vector<56x8xf32>
    %cst_255 = arith.constant dense<0.000000e+00> : vector<56x8xf32>
    %1570 = tpu.matmul %1552, %1569, %cst_255 {dimension_numbers = #tpu.dot_dimension_numbers<[1], [0], [0], [1], [0, 0, 1, 1], [], []>} : vector<56x56xf32>, vector<56x8xf32>, vector<56x8xf32> -> vector<56x8xf32>
    %c2_256 = arith.constant 2 : index
    %c0_257 = arith.constant 0 : index
    %c0_258 = arith.constant 0 : index
    %1571 = vector.load %arg13[%c2_256, %c0_257, %c0_258] : memref<7x10x56xf32, #tpu.memory_space<vmem>>, vector<1x10x56xf32>
    %1572 = vector.shape_cast %1571 : vector<1x10x56xf32> to vector<10x56xf32>
    %cst_259 = arith.constant dense<0.000000e+00> : vector<10x8xf32>
    %1573 = tpu.matmul %1572, %1570, %cst_259 {dimension_numbers = #tpu.dot_dimension_numbers<[1], [0], [0], [1], [0, 0, 1, 1], [], []>} : vector<10x56xf32>, vector<56x8xf32>, vector<10x8xf32> -> vector<10x8xf32>
    %1574 = arith.addf %1567, %1573 : vector<10x8xf32>
    %c3_260 = arith.constant 3 : index
    %c0_261 = arith.constant 0 : index
    %c0_262 = arith.constant 0 : index
    %1575 = vector.load %arg12[%c3_260, %c0_261, %c0_262] : memref<7x56x8xf32, #tpu.memory_space<vmem>>, vector<1x56x8xf32>
    %1576 = vector.shape_cast %1575 : vector<1x56x8xf32> to vector<56x8xf32>
    %cst_263 = arith.constant dense<0.000000e+00> : vector<56x8xf32>
    %1577 = tpu.matmul %1552, %1576, %cst_263 {dimension_numbers = #tpu.dot_dimension_numbers<[1], [0], [0], [1], [0, 0, 1, 1], [], []>} : vector<56x56xf32>, vector<56x8xf32>, vector<56x8xf32> -> vector<56x8xf32>
    %c3_264 = arith.constant 3 : index
    %c0_265 = arith.constant 0 : index
    %c0_266 = arith.constant 0 : index
    %1578 = vector.load %arg13[%c3_264, %c0_265, %c0_266] : memref<7x10x56xf32, #tpu.memory_space<vmem>>, vector<1x10x56xf32>
    %1579 = vector.shape_cast %1578 : vector<1x10x56xf32> to vector<10x56xf32>
    %cst_267 = arith.constant dense<0.000000e+00> : vector<10x8xf32>
    %1580 = tpu.matmul %1579, %1577, %cst_267 {dimension_numbers = #tpu.dot_dimension_numbers<[1], [0], [0], [1], [0, 0, 1, 1], [], []>} : vector<10x56xf32>, vector<56x8xf32>, vector<10x8xf32> -> vector<10x8xf32>
    %1581 = arith.addf %1574, %1580 : vector<10x8xf32>
    %c4_268 = arith.constant 4 : index
    %c0_269 = arith.constant 0 : index
    %c0_270 = arith.constant 0 : index
    %1582 = vector.load %arg12[%c4_268, %c0_269, %c0_270] : memref<7x56x8xf32, #tpu.memory_space<vmem>>, vector<1x56x8xf32>
    %1583 = vector.shape_cast %1582 : vector<1x56x8xf32> to vector<56x8xf32>
    %cst_271 = arith.constant dense<0.000000e+00> : vector<56x8xf32>
    %1584 = tpu.matmul %1552, %1583, %cst_271 {dimension_numbers = #tpu.dot_dimension_numbers<[1], [0], [0], [1], [0, 0, 1, 1], [], []>} : vector<56x56xf32>, vector<56x8xf32>, vector<56x8xf32> -> vector<56x8xf32>
    %c4_272 = arith.constant 4 : index
    %c0_273 = arith.constant 0 : index
    %c0_274 = arith.constant 0 : index
    %1585 = vector.load %arg13[%c4_272, %c0_273, %c0_274] : memref<7x10x56xf32, #tpu.memory_space<vmem>>, vector<1x10x56xf32>
    %1586 = vector.shape_cast %1585 : vector<1x10x56xf32> to vector<10x56xf32>
    %cst_275 = arith.constant dense<0.000000e+00> : vector<10x8xf32>
    %1587 = tpu.matmul %1586, %1584, %cst_275 {dimension_numbers = #tpu.dot_dimension_numbers<[1], [0], [0], [1], [0, 0, 1, 1], [], []>} : vector<10x56xf32>, vector<56x8xf32>, vector<10x8xf32> -> vector<10x8xf32>
    %1588 = arith.addf %1581, %1587 : vector<10x8xf32>
    %c5_276 = arith.constant 5 : index
    %c0_277 = arith.constant 0 : index
    %c0_278 = arith.constant 0 : index
    %1589 = vector.load %arg12[%c5_276, %c0_277, %c0_278] : memref<7x56x8xf32, #tpu.memory_space<vmem>>, vector<1x56x8xf32>
    %1590 = vector.shape_cast %1589 : vector<1x56x8xf32> to vector<56x8xf32>
    %cst_279 = arith.constant dense<0.000000e+00> : vector<56x8xf32>
    %1591 = tpu.matmul %1552, %1590, %cst_279 {dimension_numbers = #tpu.dot_dimension_numbers<[1], [0], [0], [1], [0, 0, 1, 1], [], []>} : vector<56x56xf32>, vector<56x8xf32>, vector<56x8xf32> -> vector<56x8xf32>
    %c5_280 = arith.constant 5 : index
    %c0_281 = arith.constant 0 : index
    %c0_282 = arith.constant 0 : index
    %1592 = vector.load %arg13[%c5_280, %c0_281, %c0_282] : memref<7x10x56xf32, #tpu.memory_space<vmem>>, vector<1x10x56xf32>
    %1593 = vector.shape_cast %1592 : vector<1x10x56xf32> to vector<10x56xf32>
    %cst_283 = arith.constant dense<0.000000e+00> : vector<10x8xf32>
    %1594 = tpu.matmul %1593, %1591, %cst_283 {dimension_numbers = #tpu.dot_dimension_numbers<[1], [0], [0], [1], [0, 0, 1, 1], [], []>} : vector<10x56xf32>, vector<56x8xf32>, vector<10x8xf32> -> vector<10x8xf32>
    %1595 = arith.addf %1588, %1594 : vector<10x8xf32>
    %c6_284 = arith.constant 6 : index
    %c0_285 = arith.constant 0 : index
    %c0_286 = arith.constant 0 : index
    %1596 = vector.load %arg12[%c6_284, %c0_285, %c0_286] : memref<7x56x8xf32, #tpu.memory_space<vmem>>, vector<1x56x8xf32>
    %1597 = vector.shape_cast %1596 : vector<1x56x8xf32> to vector<56x8xf32>
    %cst_287 = arith.constant dense<0.000000e+00> : vector<56x8xf32>
    %1598 = tpu.matmul %1552, %1597, %cst_287 {dimension_numbers = #tpu.dot_dimension_numbers<[1], [0], [0], [1], [0, 0, 1, 1], [], []>} : vector<56x56xf32>, vector<56x8xf32>, vector<56x8xf32> -> vector<56x8xf32>
    %c6_288 = arith.constant 6 : index
    %c0_289 = arith.constant 0 : index
    %c0_290 = arith.constant 0 : index
    %1599 = vector.load %arg13[%c6_288, %c0_289, %c0_290] : memref<7x10x56xf32, #tpu.memory_space<vmem>>, vector<1x10x56xf32>
    %1600 = vector.shape_cast %1599 : vector<1x10x56xf32> to vector<10x56xf32>
    %cst_291 = arith.constant dense<0.000000e+00> : vector<10x8xf32>
    %1601 = tpu.matmul %1600, %1598, %cst_291 {dimension_numbers = #tpu.dot_dimension_numbers<[1], [0], [0], [1], [0, 0, 1, 1], [], []>} : vector<10x56xf32>, vector<56x8xf32>, vector<10x8xf32> -> vector<10x8xf32>
    %1602 = arith.addf %1595, %1601 : vector<10x8xf32>
    %c0_292 = arith.constant 0 : index
    %c0_293 = arith.constant 0 : index
    %1603 = vector.load %arg14[%c0_292, %c0_293] : memref<10x1xf32, #tpu.memory_space<vmem>>, vector<10x1xf32>
    %1604 = vector.broadcast %1603 : vector<10x1xf32> to vector<10x8xf32>
    %1605 = arith.addf %1602, %1604 : vector<10x8xf32>
    %c0_294 = arith.constant 0 : index
    %c0_295 = arith.constant 0 : index
    %c0_296 = arith.constant 0 : index
    %1606 = vector.load %arg15[%c0_294, %c0_295, %c0_296] : memref<1x10x8xf32, #tpu.memory_space<vmem>>, vector<1x10x8xf32>
    %1607 = vector.shape_cast %1606 : vector<1x10x8xf32> to vector<10x8xf32>
    %1608 = vector.shape_cast %1605 : vector<10x8xf32> to vector<1x10x8xf32>
    tpu.vector_store %arg15[%c0_294, %c0_295, %c0_296], %1608 {strides = array<i32>} : memref<1x10x8xf32, #tpu.memory_space<vmem>>, vector<1x10x8xf32>,
    return
  }
  func.func @transform_0(%arg0: i32) -> (i32, i32, i32) {
    %c0_i32 = arith.constant 0 : i32
    %c0_i32_0 = arith.constant 0 : i32
    %c0_i32_1 = arith.constant 0 : i32
    return %arg0, %c0_i32, %c0_i32_0 : i32, i32, i32
  }
  func.func @transform_1(%arg0: i32) -> i32 {
    %c0_i32 = arith.constant 0 : i32
    %c0_i32_0 = arith.constant 0 : i32
    return %c0_i32 : i32
  }
  func.func @transform_2(%arg0: i32) -> i32 {
    %c0_i32 = arith.constant 0 : i32
    %c0_i32_0 = arith.constant 0 : i32
    return %c0_i32 : i32
  }
  func.func @transform_3(%arg0: i32) -> i32 {
    %c0_i32 = arith.constant 0 : i32
    %c0_i32_0 = arith.constant 0 : i32
    return %c0_i32 : i32
  }
  func.func @transform_4(%arg0: i32) -> i32 {
    %c0_i32 = arith.constant 0 : i32
    %c0_i32_0 = arith.constant 0 : i32
    return %c0_i32 : i32
  }
  func.func @transform_5(%arg0: i32) -> (i32, i32) {
    %c0_i32 = arith.constant 0 : i32
    %c0_i32_0 = arith.constant 0 : i32
    %c0_i32_1 = arith.constant 0 : i32
    return %c0_i32, %c0_i32_0 : i32, i32
  }
  func.func @transform_6(%arg0: i32) -> (i32, i32) {
    %c0_i32 = arith.constant 0 : i32
    %c0_i32_0 = arith.constant 0 : i32
    %c0_i32_1 = arith.constant 0 : i32
    return %c0_i32, %c0_i32_0 : i32, i32
  }
  func.func @transform_7(%arg0: i32) -> (i32, i32, i32) {
    %c0_i32 = arith.constant 0 : i32
    %c0_i32_0 = arith.constant 0 : i32
    %c0_i32_1 = arith.constant 0 : i32
    %c0_i32_2 = arith.constant 0 : i32
    return %c0_i32, %c0_i32_0, %c0_i32_1 : i32, i32, i32
  }
  func.func @transform_8(%arg0: i32) -> (i32, i32, i32) {
    %c0_i32 = arith.constant 0 : i32
    %c0_i32_0 = arith.constant 0 : i32
    %c0_i32_1 = arith.constant 0 : i32
    %c0_i32_2 = arith.constant 0 : i32
    return %c0_i32, %c0_i32_0, %c0_i32_1 : i32, i32, i32
  }
  func.func @transform_9(%arg0: i32) -> (i32, i32, i32) {
    %c0_i32 = arith.constant 0 : i32
    %c0_i32_0 = arith.constant 0 : i32
    %c0_i32_1 = arith.constant 0 : i32
    %c0_i32_2 = arith.constant 0 : i32
    return %c0_i32, %c0_i32_0, %c0_i32_1 : i32, i32, i32
  }
  func.func @transform_10(%arg0: i32) -> (i32, i32, i32) {
    %c0_i32 = arith.constant 0 : i32
    %c0_i32_0 = arith.constant 0 : i32
    %c0_i32_1 = arith.constant 0 : i32
    %c0_i32_2 = arith.constant 0 : i32
    return %c0_i32, %c0_i32_0, %c0_i32_1 : i32, i32, i32
  }
  func.func @transform_11(%arg0: i32) -> (i32, i32, i32) {
    %c0_i32 = arith.constant 0 : i32
    %c0_i32_0 = arith.constant 0 : i32
    %c0_i32_1 = arith.constant 0 : i32
    %c0_i32_2 = arith.constant 0 : i32
    return %c0_i32, %c0_i32_0, %c0_i32_1 : i32, i32, i32
  }
  func.func @transform_12(%arg0: i32) -> (i32, i32, i32) {
    %c0_i32 = arith.constant 0 : i32
    %c0_i32_0 = arith.constant 0 : i32
    %c0_i32_1 = arith.constant 0 : i32
    %c0_i32_2 = arith.constant 0 : i32
    return %c0_i32, %c0_i32_0, %c0_i32_1 : i32, i32, i32
  }
  func.func @transform_13(%arg0: i32) -> (i32, i32) {
    %c0_i32 = arith.constant 0 : i32
    %c0_i32_0 = arith.constant 0 : i32
    %c0_i32_1 = arith.constant 0 : i32
    return %c0_i32, %c0_i32_0 : i32, i32
  }
  func.func @transform_14(%arg0: i32) -> (i32, i32, i32) {
    %c0_i32 = arith.constant 0 : i32
    %c0_i32_0 = arith.constant 0 : i32
    %c0_i32_1 = arith.constant 0 : i32
    return %arg0, %c0_i32, %c0_i32_0 : i32, i32, i32
  }
}

</mosaic_0001>

<llo_original>
// kernel: cnn_forward.1
$region0: #{cnn_forward.1}
  #allocation0 [shape = 'u32[]', space=smem, size = 0x4, offset = 0x4, fixed_abs, tag = 'smem constant byte address 0x4 - core index']
  #allocation1 [shape = 'u32[144,128]{1,0:T(1,128)}', space=vmem, size = 0x12000, scoped, tag = 'internal scratch']
  #allocation2 [shape = 'f32[30,226]{1,0:T(8,128)}', space=vmem, size = 0x8000, scoped, tag = 'scratch operand']
  #allocation3 [shape = 'f32[112,224]{1,0:T(8,128)}', space=vmem, size = 0x1c000, scoped, tag = 'scratch operand']
  #allocation4 [shape = 'f32[64,114]{1,0:T(8,128)}', space=vmem, size = 0x8000, scoped, tag = 'scratch operand']
  #allocation5 [shape = 'f32[112,112]{1,0:T(8,128)}', space=vmem, size = 0xe000, scoped, tag = 'scratch operand']
  %s0 = inlined_call_operand.vmem [shape: f32[1,28,224], index: 0, kind: input, shape index: {}]
  %s1 = inlined_call_operand.vmem [shape: f32[36], index: 1, kind: input, shape index: {}]
  %s2 = inlined_call_operand.vmem [shape: f32[4], index: 2, kind: input, shape index: {}]
  %s3 = inlined_call_operand.vmem [shape: f32[288], index: 3, kind: input, shape index: {}]
  %s4 = inlined_call_operand.vmem [shape: f32[8], index: 4, kind: input, shape index: {}]
  %s5 = inlined_call_operand.vmem [shape: f32[2,224], index: 5, kind: input, shape index: {}]
  %s6 = inlined_call_operand.vmem [shape: f32[2,112], index: 6, kind: input, shape index: {}]
  %s7 = inlined_call_operand.vmem [shape: f32[2,64,112], index: 7, kind: input, shape index: {}]
  %s8 = inlined_call_operand.vmem [shape: f32[2,224,114], index: 8, kind: input, shape index: {}]
  %s9 = inlined_call_operand.vmem [shape: f32[2,56,112], index: 9, kind: input, shape index: {}]
  %s10 = inlined_call_operand.vmem [shape: f32[2,112,56], index: 10, kind: input, shape index: {}]
  %s11 = inlined_call_operand.vmem [shape: f32[7,56,8], index: 11, kind: input, shape index: {}]
  %s12 = inlined_call_operand.vmem [shape: f32[7,10,56], index: 12, kind: input, shape index: {}]
  %s13 = inlined_call_operand.vmem [shape: f32[10,1], index: 13, kind: input, shape index: {}]
  %s14 = inlined_call_operand.vmem [shape: f32[1,10,8], index: 14, kind: output, shape index: {}]
  %s15 = sld [smem:[#allocation0]]
  $region82: #{cnn_forward.1} parent=0
    _
  %s17 = ssub.s32 1, %s15
  %s18 = scalar_select 0, %s17, %s15
  $region1: #{cnn_forward.1} parent=0
    #allocation6 [shape = 'u8[512]{0}', space=smem, size = 0x200, scoped, tag = 'input window, operand 1, single buffered']
    #allocation7 [shape = 's32[1]{0}', space=sflag, size = 0x4, scoped, tag = 'scoped memory for cnn_forward.1']
    #allocation8 [shape = 'u8[512]{0}', space=smem, size = 0x200, scoped, tag = 'input window, operand 2, single buffered']
    #allocation9 [shape = 's32[1]{0}', space=sflag, size = 0x4, scoped, tag = 'scoped memory for cnn_forward.1']
    #allocation10 [shape = 'u8[1536]{0}', space=smem, size = 0x600, scoped, tag = 'input window, operand 3, single buffered']
    #allocation11 [shape = 'u8[512]{0}', space=smem, size = 0x200, scoped, tag = 'input window, operand 4, single buffered']
    #allocation12 [shape = 's32[1]{0}', space=sflag, size = 0x4, scoped, tag = 'scoped memory for cnn_forward.1']
    %19 = vsyncpa [#allocation7], 0
    %20 = vsyncpa [#allocation9], 0
    %21 = vsyncpa [#allocation12], 0
    // Predicated region
    $region2: #{cnn_forward.1} parent=1 // pred_check
      _
    $region3: #{cnn_forward.1} parent=1 // pred_check_branch
      %23 = sbr.rel (0) target = $region5
    $region4: #{cnn_forward.1} parent=1 // pred_region
      _
    $region5: #{cnn_forward.1} parent=1 // pred_fallthru
      _
    // Predicated region
    $region6: #{cnn_forward.1} parent=1 // pred_check
      _
    $region7: #{cnn_forward.1} parent=1 // pred_check_branch
      %25 = sbr.rel (0) target = $region9
    $region8: #{cnn_forward.1} parent=1 // pred_region
      %s27 = ssub.s32 16, 16
      %28 = vsyncadd [#allocation7], %s27
      %s30 = sshll.u32 %s1, 4
      %s31 = int_to_ptr.vmem [resolvable:$true] %s30
      %33 = dma.vmem_to_smem %s31, 16, [#allocation6], [#allocation7]
    $region9: #{cnn_forward.1} parent=1 // pred_fallthru
      _
    // Predicated region
    $region10: #{cnn_forward.1} parent=1 // pred_check
      _
    $region11: #{cnn_forward.1} parent=1 // pred_check_branch
      %35 = sbr.rel (0) target = $region13
    $region12: #{cnn_forward.1} parent=1 // pred_region
      %s37 = ssub.s32 16, 16
      %38 = vsyncadd [#allocation9], %s37
      %s40 = sshll.u32 %s2, 4
      %s41 = int_to_ptr.vmem [resolvable:$true] %s40
      %43 = dma.vmem_to_smem %s41, 16, [#allocation8], [#allocation9]
    $region13: #{cnn_forward.1} parent=1 // pred_fallthru
      _
    // Predicated region
    $region14: #{cnn_forward.1} parent=1 // pred_check
      _
    $region15: #{cnn_forward.1} parent=1 // pred_check_branch
      %45 = sbr.rel (0) target = $region17
    $region16: #{cnn_forward.1} parent=1 // pred_region
      %s47 = ssub.s32 48, 48
      %48 = vsyncadd [#allocation9], %s47
      %s50 = sshll.u32 %s3, 4
      %s51 = int_to_ptr.vmem [resolvable:$true] %s50
      %53 = dma.vmem_to_smem %s51, 48, [#allocation10], [#allocation9]
    $region17: #{cnn_forward.1} parent=1 // pred_fallthru
      _
    // Predicated region
    $region18: #{cnn_forward.1} parent=1 // pred_check
      _
    $region19: #{cnn_forward.1} parent=1 // pred_check_branch
      %55 = sbr.rel (0) target = $region21
    $region20: #{cnn_forward.1} parent=1 // pred_region
      %s57 = ssub.s32 16, 16
      %58 = vsyncadd [#allocation12], %s57
      %s60 = sshll.u32 %s4, 4
      %s61 = int_to_ptr.vmem [resolvable:$true] %s60
      %63 = dma.vmem_to_smem %s61, 16, [#allocation11], [#allocation12]
    $region21: #{cnn_forward.1} parent=1 // pred_fallthru
      _
    // Predicated region
    $region22: #{cnn_forward.1} parent=1 // pred_check
      _
    $region23: #{cnn_forward.1} parent=1 // pred_check_branch
      %65 = sbr.rel (0) target = $region25
    $region24: #{cnn_forward.1} parent=1 // pred_region
      _
    $region25: #{cnn_forward.1} parent=1 // pred_fallthru
      _
    // Predicated region
    $region26: #{cnn_forward.1} parent=1 // pred_check
      _
    $region27: #{cnn_forward.1} parent=1 // pred_check_branch
      %67 = sbr.rel (0) target = $region29
    $region28: #{cnn_forward.1} parent=1 // pred_region
      _
    $region29: #{cnn_forward.1} parent=1 // pred_fallthru
      _
    // Predicated region
    $region30: #{cnn_forward.1} parent=1 // pred_check
      _
    $region31: #{cnn_forward.1} parent=1 // pred_check_branch
      %69 = sbr.rel (0) target = $region33
    $region32: #{cnn_forward.1} parent=1 // pred_region
      _
    $region33: #{cnn_forward.1} parent=1 // pred_fallthru
      _
    // Predicated region
    $region34: #{cnn_forward.1} parent=1 // pred_check
      _
    $region35: #{cnn_forward.1} parent=1 // pred_check_branch
      %71 = sbr.rel (0) target = $region37
    $region36: #{cnn_forward.1} parent=1 // pred_region
      _
    $region37: #{cnn_forward.1} parent=1 // pred_fallthru
      _
    // Predicated region
    $region38: #{cnn_forward.1} parent=1 // pred_check
      _
    $region39: #{cnn_forward.1} parent=1 // pred_check_branch
      %73 = sbr.rel (0) target = $region41
    $region40: #{cnn_forward.1} parent=1 // pred_region
      _
    $region41: #{cnn_forward.1} parent=1 // pred_fallthru
      _
    // Predicated region
    $region42: #{cnn_forward.1} parent=1 // pred_check
      _
    $region43: #{cnn_forward.1} parent=1 // pred_check_branch
      %75 = sbr.rel (0) target = $region45
    $region44: #{cnn_forward.1} parent=1 // pred_region
      _
    $region45: #{cnn_forward.1} parent=1 // pred_fallthru
      _
    // Predicated region
    $region46: #{cnn_forward.1} parent=1 // pred_check
      _
    $region47: #{cnn_forward.1} parent=1 // pred_check_branch
      %77 = sbr.rel (0) target = $region49
    $region48: #{cnn_forward.1} parent=1 // pred_region
      _
    $region49: #{cnn_forward.1} parent=1 // pred_fallthru
      _
    // Predicated region
    $region50: #{cnn_forward.1} parent=1 // pred_check
      _
    $region51: #{cnn_forward.1} parent=1 // pred_check_branch
      %79 = sbr.rel (0) target = $region53
    $region52: #{cnn_forward.1} parent=1 // pred_region
      _
    $region53: #{cnn_forward.1} parent=1 // pred_fallthru
      _
    // Predicated region
    $region54: #{cnn_forward.1} parent=1 // pred_check
      _
    $region55: #{cnn_forward.1} parent=1 // pred_check_branch
      %81 = sbr.rel (0) target = $region57
    $region56: #{cnn_forward.1} parent=1 // pred_region
      _
    $region57: #{cnn_forward.1} parent=1 // pred_fallthru
      _
    // Predicated region
    $region58: #{cnn_forward.1} parent=1 // pred_check
      _
    $region59: #{cnn_forward.1} parent=1 // pred_check_branch
      %83 = sbr.rel (0) target = $region61
    $region60: #{cnn_forward.1} parent=1 // pred_region
      %84 = dma.done [#allocation7], 16
    $region61: #{cnn_forward.1} parent=1 // pred_fallthru
      _
    // Predicated region
    $region62: #{cnn_forward.1} parent=1 // pred_check
      _
    $region63: #{cnn_forward.1} parent=1 // pred_check_branch
      %86 = sbr.rel (0) target = $region65
    $region64: #{cnn_forward.1} parent=1 // pred_region
      %87 = dma.done [#allocation9], 16
    $region65: #{cnn_forward.1} parent=1 // pred_fallthru
      _
    // Predicated region
    $region66: #{cnn_forward.1} parent=1 // pred_check
      _
    $region67: #{cnn_forward.1} parent=1 // pred_check_branch
      %89 = sbr.rel (0) target = $region69
    $region68: #{cnn_forward.1} parent=1 // pred_region
      %90 = dma.done [#allocation9], 48
    $region69: #{cnn_forward.1} parent=1 // pred_fallthru
      _
    // Predicated region
    $region70: #{cnn_forward.1} parent=1 // pred_check
      _
    $region71: #{cnn_forward.1} parent=1 // pred_check_branch
      %92 = sbr.rel (0) target = $region73
    $region72: #{cnn_forward.1} parent=1 // pred_region
      %93 = dma.done [#allocation12], 16
    $region73: #{cnn_forward.1} parent=1 // pred_fallthru
      _
    %94 = sfence
    %95 = vst [vmem:[#allocation2] sm:$0xff] 0.0
    %vm96 = vcmask 801792
    %97 = vst.msk [vmem:[#allocation2 + $0x8] sm:$0xff] %vm96, 0.0
    %98 = vst [vmem:[#allocation2 + $0x10] sm:$0xff] 0.0
    %99 = vst.msk [vmem:[#allocation2 + $0x18] sm:$0xff] %vm96, 0.0
    %100 = vst [vmem:[#allocation2 + $0x20] sm:$0xff] 0.0
    %101 = vst.msk [vmem:[#allocation2 + $0x28] sm:$0xff] %vm96, 0.0
    %102 = vst [vmem:[#allocation2 + $0x30] sm:$0x3f] 0.0
    %vm103 = vcmask 799744
    %104 = vst.msk [vmem:[#allocation2 + $0x38] sm:$0x3f] %vm103, 0.0
    %v105 = vld [vmem:[%s0] sm:$0xff]
    %v106 = vld [vmem:[%s0 + $0x8] sm:$0xff]
    %v107 = vld [vmem:[%s0 + $0x10] sm:$0xff]
    %v108 = vld [vmem:[%s0 + $0x18] sm:$0xff]
    %v109 = vld [vmem:[%s0 + $0x20] sm:$0xff]
    %v110 = vld [vmem:[%s0 + $0x28] sm:$0xff]
    %v111 = vld [vmem:[%s0 + $0x30] sm:$0xf]
    %v112 = vld [vmem:[%s0 + $0x38] sm:$0xf]
    %vm121 = vcmask 1040384
    %v122 = vrot.slane %v105, 7
    %v123 = vrot.slane %v106, 7
    %v124 = vrot.slane %v107, 7
    %v125 = vsel %vm121, %v122, %v124
    %v126 = vrot.slane %v108, 7
    %v127 = vsel %vm121, %v123, %v126
    %v128 = vrot.slane %v109, 7
    %v129 = vsel %vm121, %v124, %v128
    %v130 = vrot.slane %v110, 7
    %v131 = vsel %vm121, %v126, %v130
    %v132 = vrot.slane %v111, 7
    %v133 = vsel %vm121, %v128, %v132
    %v134 = vrot.slane %v112, 7
    %v135 = vsel %vm121, %v130, %v134
    %136 = vrot.lane.b32.xlu0 %v122, 1
    %v137 = vpop.permute.xlu0 %136
    %138 = vrot.lane.b32.xlu0 %v123, 1
    %v139 = vpop.permute.xlu0 %138
    %140 = vrot.lane.b32.xlu0 %v125, 1
    %v141 = vpop.permute.xlu0 %140
    %142 = vrot.lane.b32.xlu0 %v127, 1
    %v143 = vpop.permute.xlu0 %142
    %144 = vrot.lane.b32.xlu0 %v129, 1
    %v145 = vpop.permute.xlu0 %144
    %146 = vrot.lane.b32.xlu0 %v131, 1
    %v147 = vpop.permute.xlu0 %146
    %148 = vrot.lane.b32.xlu0 %v133, 1
    %v149 = vpop.permute.xlu0 %148
    %150 = vrot.lane.b32.xlu0 %v135, 1
    %v151 = vpop.permute.xlu0 %150
    %vm152 = vcmask 7168
    %v153 = vsel %vm152, %v137, %v139
    %v154 = vsel %vm152, %v141, %v143
    %v155 = vsel %vm152, %v145, %v147
    %v156 = vsel %vm152, %v149, %v151
    %vm165 = vcmask 1047561
    %166 = vst.msk [vmem:[#allocation2] sm:$0xfe] %vm165, %v137
    %vm167 = vcmask 793601
    %168 = vst.msk [vmem:[#allocation2 + $0x8] sm:$0xfe] %vm167, %v153
    %vm169 = vcmask 1047560
    %170 = vst.msk [vmem:[#allocation2 + $0x10] sm:$0xff] %vm169, %v141
    %vm171 = vcmask 793600
    %172 = vst.msk [vmem:[#allocation2 + $0x18] sm:$0xff] %vm171, %v154
    %173 = vst.msk [vmem:[#allocation2 + $0x20] sm:$0xff] %vm169, %v145
    %174 = vst.msk [vmem:[#allocation2 + $0x28] sm:$0xff] %vm171, %v155
    %vm175 = vcmask 1044488
    %176 = vst.msk [vmem:[#allocation2 + $0x30] sm:$0x1f] %vm175, %v149
    %vm177 = vcmask 790528
    %178 = vst.msk [vmem:[#allocation2 + $0x38] sm:$0x1f] %vm177, %v156
    %v179 = vld [vmem:[%s5] sm:$0xf]
    %v180 = vld [vmem:[#allocation2] sm:$0xff]
    %v181 = vld [vmem:[#allocation2 + $0x8] sm:$0xff]
    %v182 = vld [vmem:[#allocation2 + $0x10] sm:$0xff]
    %v183 = vld [vmem:[#allocation2 + $0x18] sm:$0xff]
    %v184 = vld [vmem:[#allocation2 + $0x20] sm:$0xff]
    %v185 = vld [vmem:[#allocation2 + $0x28] sm:$0xff]
    %v186 = vld [vmem:[#allocation2 + $0x30] sm:$0xf]
    %v187 = vld [vmem:[#allocation2 + $0x38] sm:$0xf]
    %v189 = vlaneseq
    %v190 = vshrl.u32 %v189, 7
    %v191 = vsub.s32 0, %v190
    %v192 = vrot.slane %v179, %v191
    %v193 = vlaneseq
    %v194 = vshrl.u32 %v193, 7
    %v195 = vsub.s32 2, %v194
    %v196 = vrot.slane %v179, %v195
    %v199 = vlaneseq
    %v200 = vshrl.u32 %v199, 7
    %v201 = vsub.s32 0, %v200
    %v202 = vrot.slane %v192, %v201
    %v203 = vlaneseq
    %v204 = vshrl.u32 %v203, 7
    %v205 = vsub.s32 0, %v204
    %v206 = vrot.slane %v196, %v205
    %v207 = vmul.f32 %v180, %v202
    %v208 = vmul.f32 %v181, %v206
    %v209 = vmul.f32 %v182, %v202
    %v210 = vmul.f32 %v183, %v206
    %v211 = vmul.f32 %v184, %v202
    %v212 = vmul.f32 %v185, %v206
    %v213 = vmul.f32 %v186, %v202
    %v214 = vmul.f32 %v187, %v206
    %s215 = sld [smem:[#allocation6]]
    %v216 = vstv %s215
    %v217 = vmul.f32 %v207, %v216
    %v218 = vmul.f32 %v208, %v216
    %v219 = vmul.f32 %v209, %v216
    %v220 = vmul.f32 %v210, %v216
    %v221 = vmul.f32 %v211, %v216
    %v222 = vmul.f32 %v212, %v216
    %v223 = vmul.f32 %v213, %v216
    %v224 = vmul.f32 %v214, %v216
    %v225 = vadd.f32 %v217, 0.0
    %v226 = vadd.f32 %v218, 0.0
    %v227 = vadd.f32 %v219, 0.0
    %v228 = vadd.f32 %v220, 0.0
    %v229 = vadd.f32 %v221, 0.0
    %v230 = vadd.f32 %v222, 0.0
    %v231 = vadd.f32 %v223, 0.0
    %v232 = vadd.f32 %v224, 0.0
    %s233 = sld [smem:[#allocation6 + $0x1]]
    %v234 = vstv %s233
    %v235 = vmul.f32 %v207, %v234
    %v236 = vmul.f32 %v208, %v234
    %v237 = vmul.f32 %v209, %v234
    %v238 = vmul.f32 %v210, %v234
    %v239 = vmul.f32 %v211, %v234
    %v240 = vmul.f32 %v212, %v234
    %v241 = vmul.f32 %v213, %v234
    %v242 = vmul.f32 %v214, %v234
    %v243 = vadd.f32 %v235, 0.0
    %v244 = vadd.f32 %v236, 0.0
    %v245 = vadd.f32 %v237, 0.0
    %v246 = vadd.f32 %v238, 0.0
    %v247 = vadd.f32 %v239, 0.0
    %v248 = vadd.f32 %v240, 0.0
    %v249 = vadd.f32 %v241, 0.0
    %v250 = vadd.f32 %v242, 0.0
    %s251 = sld [smem:[#allocation6 + $0x2]]
    %v252 = vstv %s251
    %v253 = vmul.f32 %v207, %v252
    %v254 = vmul.f32 %v208, %v252
    %v255 = vmul.f32 %v209, %v252
    %v256 = vmul.f32 %v210, %v252
    %v257 = vmul.f32 %v211, %v252
    %v258 = vmul.f32 %v212, %v252
    %v259 = vmul.f32 %v213, %v252
    %v260 = vmul.f32 %v214, %v252
    %v261 = vadd.f32 %v253, 0.0
    %v262 = vadd.f32 %v254, 0.0
    %v263 = vadd.f32 %v255, 0.0
    %v264 = vadd.f32 %v256, 0.0
    %v265 = vadd.f32 %v257, 0.0
    %v266 = vadd.f32 %v258, 0.0
    %v267 = vadd.f32 %v259, 0.0
    %v268 = vadd.f32 %v260, 0.0
    %s269 = sld [smem:[#allocation6 + $0x3]]
    %v270 = vstv %s269
    %v271 = vmul.f32 %v207, %v270
    %v272 = vmul.f32 %v208, %v270
    %v273 = vmul.f32 %v209, %v270
    %v274 = vmul.f32 %v210, %v270
    %v275 = vmul.f32 %v211, %v270
    %v276 = vmul.f32 %v212, %v270
    %v277 = vmul.f32 %v213, %v270
    %v278 = vmul.f32 %v214, %v270
    %v279 = vadd.f32 %v271, 0.0
    %v280 = vadd.f32 %v272, 0.0
    %v281 = vadd.f32 %v273, 0.0
    %v282 = vadd.f32 %v274, 0.0
    %v283 = vadd.f32 %v275, 0.0
    %v284 = vadd.f32 %v276, 0.0
    %v285 = vadd.f32 %v277, 0.0
    %v286 = vadd.f32 %v278, 0.0
    %s287 = sld [smem:[#allocation6 + $0x4]]
    %v288 = vstv %s287
    %v289 = vmul.f32 %v180, %v288
    %v290 = vmul.f32 %v181, %v288
    %v291 = vmul.f32 %v182, %v288
    %v292 = vmul.f32 %v183, %v288
    %v293 = vmul.f32 %v184, %v288
    %v294 = vmul.f32 %v185, %v288
    %v295 = vmul.f32 %v186, %v288
    %v296 = vmul.f32 %v187, %v288
    %305 = vrot.lane.b32.xlu0 %v289, 127
    %v306 = vpop.permute.xlu0 %305
    %307 = vrot.lane.b32.xlu0 %v290, 127
    %v308 = vpop.permute.xlu0 %307
    %309 = vrot.lane.b32.xlu0 %v291, 127
    %v310 = vpop.permute.xlu0 %309
    %311 = vrot.lane.b32.xlu0 %v292, 127
    %v312 = vpop.permute.xlu0 %311
    %313 = vrot.lane.b32.xlu0 %v293, 127
    %v314 = vpop.permute.xlu0 %313
    %315 = vrot.lane.b32.xlu0 %v294, 127
    %v316 = vpop.permute.xlu0 %315
    %317 = vrot.lane.b32.xlu0 %v295, 127
    %v318 = vpop.permute.xlu0 %317
    %319 = vrot.lane.b32.xlu0 %v296, 127
    %v320 = vpop.permute.xlu0 %319
    %vm321 = vcmask 1039360
    %v322 = vsel %vm321, %v306, %v308
    %v323 = vsel %vm321, %v310, %v312
    %v324 = vsel %vm321, %v314, %v316
    %v325 = vsel %vm321, %v318, %v320
    %v334 = vadd.f32 %v225, %v322
    %v335 = vadd.f32 %v226, %v308
    %v336 = vadd.f32 %v227, %v323
    %v337 = vadd.f32 %v228, %v312
    %v338 = vadd.f32 %v229, %v324
    %v339 = vadd.f32 %v230, %v316
    %v340 = vadd.f32 %v231, %v325
    %v341 = vadd.f32 %v232, %v320
    %s342 = sld [smem:[#allocation6 + $0x5]]
    %v343 = vstv %s342
    %v344 = vmul.f32 %v180, %v343
    %v345 = vmul.f32 %v181, %v343
    %v346 = vmul.f32 %v182, %v343
    %v347 = vmul.f32 %v183, %v343
    %v348 = vmul.f32 %v184, %v343
    %v349 = vmul.f32 %v185, %v343
    %v350 = vmul.f32 %v186, %v343
    %v351 = vmul.f32 %v187, %v343
    %360 = vrot.lane.b32.xlu0 %v344, 127
    %v361 = vpop.permute.xlu0 %360
    %362 = vrot.lane.b32.xlu0 %v345, 127
    %v363 = vpop.permute.xlu0 %362
    %364 = vrot.lane.b32.xlu0 %v346, 127
    %v365 = vpop.permute.xlu0 %364
    %366 = vrot.lane.b32.xlu0 %v347, 127
    %v367 = vpop.permute.xlu0 %366
    %368 = vrot.lane.b32.xlu0 %v348, 127
    %v369 = vpop.permute.xlu0 %368
    %370 = vrot.lane.b32.xlu0 %v349, 127
    %v371 = vpop.permute.xlu0 %370
    %372 = vrot.lane.b32.xlu0 %v350, 127
    %v373 = vpop.permute.xlu0 %372
    %374 = vrot.lane.b32.xlu0 %v351, 127
    %v375 = vpop.permute.xlu0 %374
    %v376 = vsel %vm321, %v361, %v363
    %v377 = vsel %vm321, %v365, %v367
    %v378 = vsel %vm321, %v369, %v371
    %v379 = vsel %vm321, %v373, %v375
    %v388 = vadd.f32 %v243, %v376
    %v389 = vadd.f32 %v244, %v363
    %v390 = vadd.f32 %v245, %v377
    %v391 = vadd.f32 %v246, %v367
    %v392 = vadd.f32 %v247, %v378
    %v393 = vadd.f32 %v248, %v371
    %v394 = vadd.f32 %v249, %v379
    %v395 = vadd.f32 %v250, %v375
    %s396 = sld [smem:[#allocation6 + $0x6]]
    %v397 = vstv %s396
    %v398 = vmul.f32 %v180, %v397
    %v399 = vmul.f32 %v181, %v397
    %v400 = vmul.f32 %v182, %v397
    %v401 = vmul.f32 %v183, %v397
    %v402 = vmul.f32 %v184, %v397
    %v403 = vmul.f32 %v185, %v397
    %v404 = vmul.f32 %v186, %v397
    %v405 = vmul.f32 %v187, %v397
    %414 = vrot.lane.b32.xlu0 %v398, 127
    %v415 = vpop.permute.xlu0 %414
    %416 = vrot.lane.b32.xlu0 %v399, 127
    %v417 = vpop.permute.xlu0 %416
    %418 = vrot.lane.b32.xlu0 %v400, 127
    %v419 = vpop.permute.xlu0 %418
    %420 = vrot.lane.b32.xlu0 %v401, 127
    %v421 = vpop.permute.xlu0 %420
    %422 = vrot.lane.b32.xlu0 %v402, 127
    %v423 = vpop.permute.xlu0 %422
    %424 = vrot.lane.b32.xlu0 %v403, 127
    %v425 = vpop.permute.xlu0 %424
    %426 = vrot.lane.b32.xlu0 %v404, 127
    %v427 = vpop.permute.xlu0 %426
    %428 = vrot.lane.b32.xlu0 %v405, 127
    %v429 = vpop.permute.xlu0 %428
    %v430 = vsel %vm321, %v415, %v417
    %v431 = vsel %vm321, %v419, %v421
    %v432 = vsel %vm321, %v423, %v425
    %v433 = vsel %vm321, %v427, %v429
    %v442 = vadd.f32 %v261, %v430
    %v443 = vadd.f32 %v262, %v417
    %v444 = vadd.f32 %v263, %v431
    %v445 = vadd.f32 %v264, %v421
    %v446 = vadd.f32 %v265, %v432
    %v447 = vadd.f32 %v266, %v425
    %v448 = vadd.f32 %v267, %v433
    %v449 = vadd.f32 %v268, %v429
    %s450 = sld [smem:[#allocation6 + $0x7]]
    %v451 = vstv %s450
    %v452 = vmul.f32 %v180, %v451
    %v453 = vmul.f32 %v181, %v451
    %v454 = vmul.f32 %v182, %v451
    %v455 = vmul.f32 %v183, %v451
    %v456 = vmul.f32 %v184, %v451
    %v457 = vmul.f32 %v185, %v451
    %v458 = vmul.f32 %v186, %v451
    %v459 = vmul.f32 %v187, %v451
    %468 = vrot.lane.b32.xlu0 %v452, 127
    %v469 = vpop.permute.xlu0 %468
    %470 = vrot.lane.b32.xlu0 %v453, 127
    %v471 = vpop.permute.xlu0 %470
    %472 = vrot.lane.b32.xlu0 %v454, 127
    %v473 = vpop.permute.xlu0 %472
    %474 = vrot.lane.b32.xlu0 %v455, 127
    %v475 = vpop.permute.xlu0 %474
    %476 = vrot.lane.b32.xlu0 %v456, 127
    %v477 = vpop.permute.xlu0 %476
    %478 = vrot.lane.b32.xlu0 %v457, 127
    %v479 = vpop.permute.xlu0 %478
    %480 = vrot.lane.b32.xlu0 %v458, 127
    %v481 = vpop.permute.xlu0 %480
    %482 = vrot.lane.b32.xlu0 %v459, 127
    %v483 = vpop.permute.xlu0 %482
    %v484 = vsel %vm321, %v469, %v471
    %v485 = vsel %vm321, %v473, %v475
    %v486 = vsel %vm321, %v477, %v479
    %v487 = vsel %vm321, %v481, %v483
    %v496 = vadd.f32 %v279, %v484
    %v497 = vadd.f32 %v280, %v471
    %v498 = vadd.f32 %v281, %v485
    %v499 = vadd.f32 %v282, %v475
    %v500 = vadd.f32 %v283, %v486
    %v501 = vadd.f32 %v284, %v479
    %v502 = vadd.f32 %v285, %v487
    %v503 = vadd.f32 %v286, %v483
    %v504 = vlaneseq
    %v505 = vshrl.u32 %v504, 7
    %v506 = vsub.s32 1, %v505
    %v507 = vrot.slane %v179, %v506
    %v508 = vlaneseq
    %v509 = vshrl.u32 %v508, 7
    %v510 = vsub.s32 3, %v509
    %v511 = vrot.slane %v179, %v510
    %v514 = vlaneseq
    %v515 = vshrl.u32 %v514, 7
    %v516 = vsub.s32 1, %v515
    %v517 = vrot.slane %v507, %v516
    %v518 = vlaneseq
    %v519 = vshrl.u32 %v518, 7
    %v520 = vsub.s32 1, %v519
    %v521 = vrot.slane %v511, %v520
    %524 = vrot.lane.b32.xlu0 %v517, 2
    %v525 = vpop.permute.xlu0 %524
    %526 = vrot.lane.b32.xlu0 %v521, 2
    %v527 = vpop.permute.xlu0 %526
    %vm528 = vcmask 15360
    %v529 = vsel %vm528, %v525, %v527
    %v532 = vmul.f32 %v180, %v525
    %v533 = vmul.f32 %v181, %v529
    %v534 = vmul.f32 %v182, %v525
    %v535 = vmul.f32 %v183, %v529
    %v536 = vmul.f32 %v184, %v525
    %v537 = vmul.f32 %v185, %v529
    %v538 = vmul.f32 %v186, %v525
    %v539 = vmul.f32 %v187, %v529
    %s540 = sld [smem:[#allocation6 + $0x8]]
    %v541 = vstv %s540
    %v542 = vmul.f32 %v532, %v541
    %v543 = vmul.f32 %v533, %v541
    %v544 = vmul.f32 %v534, %v541
    %v545 = vmul.f32 %v535, %v541
    %v546 = vmul.f32 %v536, %v541
    %v547 = vmul.f32 %v537, %v541
    %v548 = vmul.f32 %v538, %v541
    %v549 = vmul.f32 %v539, %v541
    %558 = vrot.lane.b32.xlu0 %v542, 126
    %v559 = vpop.permute.xlu0 %558
    %560 = vrot.lane.b32.xlu0 %v543, 126
    %v561 = vpop.permute.xlu0 %560
    %562 = vrot.lane.b32.xlu0 %v544, 126
    %v563 = vpop.permute.xlu0 %562
    %564 = vrot.lane.b32.xlu0 %v545, 126
    %v565 = vpop.permute.xlu0 %564
    %566 = vrot.lane.b32.xlu0 %v546, 126
    %v567 = vpop.permute.xlu0 %566
    %568 = vrot.lane.b32.xlu0 %v547, 126
    %v569 = vpop.permute.xlu0 %568
    %570 = vrot.lane.b32.xlu0 %v548, 126
    %v571 = vpop.permute.xlu0 %570
    %572 = vrot.lane.b32.xlu0 %v549, 126
    %v573 = vpop.permute.xlu0 %572
    %vm574 = vcmask 1031168
    %v575 = vsel %vm574, %v559, %v561
    %v576 = vsel %vm574, %v563, %v565
    %v577 = vsel %vm574, %v567, %v569
    %v578 = vsel %vm574, %v571, %v573
    %v587 = vadd.f32 %v334, %v575
    %v588 = vadd.f32 %v335, %v561
    %v589 = vadd.f32 %v336, %v576
    %v590 = vadd.f32 %v337, %v565
    %v591 = vadd.f32 %v338, %v577
    %v592 = vadd.f32 %v339, %v569
    %v593 = vadd.f32 %v340, %v578
    %v594 = vadd.f32 %v341, %v573
    %s595 = sld [smem:[#allocation6 + $0x9]]
    %v596 = vstv %s595
    %v597 = vmul.f32 %v532, %v596
    %v598 = vmul.f32 %v533, %v596
    %v599 = vmul.f32 %v534, %v596
    %v600 = vmul.f32 %v535, %v596
    %v601 = vmul.f32 %v536, %v596
    %v602 = vmul.f32 %v537, %v596
    %v603 = vmul.f32 %v538, %v596
    %v604 = vmul.f32 %v539, %v596
    %613 = vrot.lane.b32.xlu0 %v597, 126
    %v614 = vpop.permute.xlu0 %613
    %615 = vrot.lane.b32.xlu0 %v598, 126
    %v616 = vpop.permute.xlu0 %615
    %617 = vrot.lane.b32.xlu0 %v599, 126
    %v618 = vpop.permute.xlu0 %617
    %619 = vrot.lane.b32.xlu0 %v600, 126
    %v620 = vpop.permute.xlu0 %619
    %621 = vrot.lane.b32.xlu0 %v601, 126
    %v622 = vpop.permute.xlu0 %621
    %623 = vrot.lane.b32.xlu0 %v602, 126
    %v624 = vpop.permute.xlu0 %623
    %625 = vrot.lane.b32.xlu0 %v603, 126
    %v626 = vpop.permute.xlu0 %625
    %627 = vrot.lane.b32.xlu0 %v604, 126
    %v628 = vpop.permute.xlu0 %627
    %v629 = vsel %vm574, %v614, %v616
    %v630 = vsel %vm574, %v618, %v620
    %v631 = vsel %vm574, %v622, %v624
    %v632 = vsel %vm574, %v626, %v628
    %v641 = vadd.f32 %v388, %v629
    %v642 = vadd.f32 %v389, %v616
    %v643 = vadd.f32 %v390, %v630
    %v644 = vadd.f32 %v391, %v620
    %v645 = vadd.f32 %v392, %v631
    %v646 = vadd.f32 %v393, %v624
    %v647 = vadd.f32 %v394, %v632
    %v648 = vadd.f32 %v395, %v628
    %s649 = sld [smem:[#allocation6 + $0xa]]
    %v650 = vstv %s649
    %v651 = vmul.f32 %v532, %v650
    %v652 = vmul.f32 %v533, %v650
    %v653 = vmul.f32 %v534, %v650
    %v654 = vmul.f32 %v535, %v650
    %v655 = vmul.f32 %v536, %v650
    %v656 = vmul.f32 %v537, %v650
    %v657 = vmul.f32 %v538, %v650
    %v658 = vmul.f32 %v539, %v650
    %667 = vrot.lane.b32.xlu0 %v651, 126
    %v668 = vpop.permute.xlu0 %667
    %669 = vrot.lane.b32.xlu0 %v652, 126
    %v670 = vpop.permute.xlu0 %669
    %671 = vrot.lane.b32.xlu0 %v653, 126
    %v672 = vpop.permute.xlu0 %671
    %673 = vrot.lane.b32.xlu0 %v654, 126
    %v674 = vpop.permute.xlu0 %673
    %675 = vrot.lane.b32.xlu0 %v655, 126
    %v676 = vpop.permute.xlu0 %675
    %677 = vrot.lane.b32.xlu0 %v656, 126
    %v678 = vpop.permute.xlu0 %677
    %679 = vrot.lane.b32.xlu0 %v657, 126
    %v680 = vpop.permute.xlu0 %679
    %681 = vrot.lane.b32.xlu0 %v658, 126
    %v682 = vpop.permute.xlu0 %681
    %v683 = vsel %vm574, %v668, %v670
    %v684 = vsel %vm574, %v672, %v674
    %v685 = vsel %vm574, %v676, %v678
    %v686 = vsel %vm574, %v680, %v682
    %v695 = vadd.f32 %v442, %v683
    %v696 = vadd.f32 %v443, %v670
    %v697 = vadd.f32 %v444, %v684
    %v698 = vadd.f32 %v445, %v674
    %v699 = vadd.f32 %v446, %v685
    %v700 = vadd.f32 %v447, %v678
    %v701 = vadd.f32 %v448, %v686
    %v702 = vadd.f32 %v449, %v682
    %s703 = sld [smem:[#allocation6 + $0xb]]
    %v704 = vstv %s703
    %v705 = vmul.f32 %v532, %v704
    %v706 = vmul.f32 %v533, %v704
    %v707 = vmul.f32 %v534, %v704
    %v708 = vmul.f32 %v535, %v704
    %v709 = vmul.f32 %v536, %v704
    %v710 = vmul.f32 %v537, %v704
    %v711 = vmul.f32 %v538, %v704
    %v712 = vmul.f32 %v539, %v704
    %721 = vrot.lane.b32.xlu0 %v705, 126
    %v722 = vpop.permute.xlu0 %721
    %723 = vrot.lane.b32.xlu0 %v706, 126
    %v724 = vpop.permute.xlu0 %723
    %725 = vrot.lane.b32.xlu0 %v707, 126
    %v726 = vpop.permute.xlu0 %725
    %727 = vrot.lane.b32.xlu0 %v708, 126
    %v728 = vpop.permute.xlu0 %727
    %729 = vrot.lane.b32.xlu0 %v709, 126
    %v730 = vpop.permute.xlu0 %729
    %731 = vrot.lane.b32.xlu0 %v710, 126
    %v732 = vpop.permute.xlu0 %731
    %733 = vrot.lane.b32.xlu0 %v711, 126
    %v734 = vpop.permute.xlu0 %733
    %735 = vrot.lane.b32.xlu0 %v712, 126
    %v736 = vpop.permute.xlu0 %735
    %v737 = vsel %vm574, %v722, %v724
    %v738 = vsel %vm574, %v726, %v728
    %v739 = vsel %vm574, %v730, %v732
    %v740 = vsel %vm574, %v734, %v736
    %v749 = vadd.f32 %v496, %v737
    %v750 = vadd.f32 %v497, %v724
    %v751 = vadd.f32 %v498, %v738
    %v752 = vadd.f32 %v499, %v728
    %v753 = vadd.f32 %v500, %v739
    %v754 = vadd.f32 %v501, %v732
    %v755 = vadd.f32 %v502, %v740
    %v756 = vadd.f32 %v503, %v736
    %v757 = vld [vmem:[#allocation2] sm:$0xfe]
    %v758 = vld [vmem:[#allocation2 + $0x8] sm:$0xfe]
    %v759 = vld [vmem:[#allocation2 + $0x30] sm:$0x1f]
    %v760 = vld [vmem:[#allocation2 + $0x38] sm:$0x1f]
    %v761 = vmul.f32 %v757, %v202
    %v762 = vmul.f32 %v758, %v206
    %v763 = vmul.f32 %v759, %v202
    %v764 = vmul.f32 %v760, %v206
    %s765 = sld [smem:[#allocation6 + $0xc]]
    %v766 = vstv %s765
    %v767 = vmul.f32 %v761, %v766
    %v768 = vmul.f32 %v762, %v766
    %v769 = vmul.f32 %v209, %v766
    %v770 = vmul.f32 %v210, %v766
    %v771 = vmul.f32 %v211, %v766
    %v772 = vmul.f32 %v212, %v766
    %v773 = vmul.f32 %v763, %v766
    %v774 = vmul.f32 %v764, %v766
    %vm783 = vcmask 1046528
    %v784 = vrot.slane %v767, 1
    %v785 = vrot.slane %v769, 1
    %v786 = vsel %vm783, %v784, %v785
    %v787 = vrot.slane %v768, 1
    %v788 = vrot.slane %v770, 1
    %v789 = vsel %vm783, %v787, %v788
    %v790 = vrot.slane %v771, 1
    %v791 = vsel %vm783, %v785, %v790
    %v792 = vrot.slane %v772, 1
    %v793 = vsel %vm783, %v788, %v792
    %v794 = vrot.slane %v773, 1
    %v795 = vsel %vm783, %v790, %v794
    %v796 = vrot.slane %v774, 1
    %v797 = vsel %vm783, %v792, %v796
    %v806 = vadd.f32 %v587, %v786
    %v807 = vadd.f32 %v588, %v789
    %v808 = vadd.f32 %v589, %v791
    %v809 = vadd.f32 %v590, %v793
    %v810 = vadd.f32 %v591, %v795
    %v811 = vadd.f32 %v592, %v797
    %v812 = vadd.f32 %v593, %v794
    %v813 = vadd.f32 %v594, %v796
    %s814 = sld [smem:[#allocation6 + $0xd]]
    %v815 = vstv %s814
    %v816 = vmul.f32 %v761, %v815
    %v817 = vmul.f32 %v762, %v815
    %v818 = vmul.f32 %v209, %v815
    %v819 = vmul.f32 %v210, %v815
    %v820 = vmul.f32 %v211, %v815
    %v821 = vmul.f32 %v212, %v815
    %v822 = vmul.f32 %v763, %v815
    %v823 = vmul.f32 %v764, %v815
    %v832 = vrot.slane %v816, 1
    %v833 = vrot.slane %v818, 1
    %v834 = vsel %vm783, %v832, %v833
    %v835 = vrot.slane %v817, 1
    %v836 = vrot.slane %v819, 1
    %v837 = vsel %vm783, %v835, %v836
    %v838 = vrot.slane %v820, 1
    %v839 = vsel %vm783, %v833, %v838
    %v840 = vrot.slane %v821, 1
    %v841 = vsel %vm783, %v836, %v840
    %v842 = vrot.slane %v822, 1
    %v843 = vsel %vm783, %v838, %v842
    %v844 = vrot.slane %v823, 1
    %v845 = vsel %vm783, %v840, %v844
    %v854 = vadd.f32 %v641, %v834
    %v855 = vadd.f32 %v642, %v837
    %v856 = vadd.f32 %v643, %v839
    %v857 = vadd.f32 %v644, %v841
    %v858 = vadd.f32 %v645, %v843
    %v859 = vadd.f32 %v646, %v845
    %v860 = vadd.f32 %v647, %v842
    %v861 = vadd.f32 %v648, %v844
    %s862 = sld [smem:[#allocation6 + $0xe]]
    %v863 = vstv %s862
    %v864 = vmul.f32 %v761, %v863
    %v865 = vmul.f32 %v762, %v863
    %v866 = vmul.f32 %v209, %v863
    %v867 = vmul.f32 %v210, %v863
    %v868 = vmul.f32 %v211, %v863
    %v869 = vmul.f32 %v212, %v863
    %v870 = vmul.f32 %v763, %v863
    %v871 = vmul.f32 %v764, %v863
    %v880 = vrot.slane %v864, 1
    %v881 = vrot.slane %v866, 1
    %v882 = vsel %vm783, %v880, %v881
    %v883 = vrot.slane %v865, 1
    %v884 = vrot.slane %v867, 1
    %v885 = vsel %vm783, %v883, %v884
    %v886 = vrot.slane %v868, 1
    %v887 = vsel %vm783, %v881, %v886
    %v888 = vrot.slane %v869, 1
    %v889 = vsel %vm783, %v884, %v888
    %v890 = vrot.slane %v870, 1
    %v891 = vsel %vm783, %v886, %v890
    %v892 = vrot.slane %v871, 1
    %v893 = vsel %vm783, %v888, %v892
    %v902 = vadd.f32 %v695, %v882
    %v903 = vadd.f32 %v696, %v885
    %v904 = vadd.f32 %v697, %v887
    %v905 = vadd.f32 %v698, %v889
    %v906 = vadd.f32 %v699, %v891
    %v907 = vadd.f32 %v700, %v893
    %v908 = vadd.f32 %v701, %v890
    %v909 = vadd.f32 %v702, %v892
    %s910 = sld [smem:[#allocation6 + $0xf]]
    %v911 = vstv %s910
    %v912 = vmul.f32 %v761, %v911
    %v913 = vmul.f32 %v762, %v911
    %v914 = vmul.f32 %v209, %v911
    %v915 = vmul.f32 %v210, %v911
    %v916 = vmul.f32 %v211, %v911
    %v917 = vmul.f32 %v212, %v911
    %v918 = vmul.f32 %v763, %v911
    %v919 = vmul.f32 %v764, %v911
    %v928 = vrot.slane %v912, 1
    %v929 = vrot.slane %v914, 1
    %v930 = vsel %vm783, %v928, %v929
    %v931 = vrot.slane %v913, 1
    %v932 = vrot.slane %v915, 1
    %v933 = vsel %vm783, %v931, %v932
    %v934 = vrot.slane %v916, 1
    %v935 = vsel %vm783, %v929, %v934
    %v936 = vrot.slane %v917, 1
    %v937 = vsel %vm783, %v932, %v936
    %v938 = vrot.slane %v918, 1
    %v939 = vsel %vm783, %v934, %v938
    %v940 = vrot.slane %v919, 1
    %v941 = vsel %vm783, %v936, %v940
    %v950 = vadd.f32 %v749, %v930
    %v951 = vadd.f32 %v750, %v933
    %v952 = vadd.f32 %v751, %v935
    %v953 = vadd.f32 %v752, %v937
    %v954 = vadd.f32 %v753, %v939
    %v955 = vadd.f32 %v754, %v941
    %v956 = vadd.f32 %v755, %v938
    %v957 = vadd.f32 %v756, %v940
    %s958 = sld [smem:[#allocation6 + $0x10]]
    %v959 = vstv %s958
    %v960 = vmul.f32 %v757, %v959
    %v961 = vmul.f32 %v758, %v959
    %v962 = vmul.f32 %v182, %v959
    %v963 = vmul.f32 %v183, %v959
    %v964 = vmul.f32 %v184, %v959
    %v965 = vmul.f32 %v185, %v959
    %v966 = vmul.f32 %v759, %v959
    %v967 = vmul.f32 %v760, %v959
    %v976 = vrot.slane %v960, 1
    %v977 = vrot.slane %v962, 1
    %v978 = vsel %vm783, %v976, %v977
    %v979 = vrot.slane %v961, 1
    %v980 = vrot.slane %v963, 1
    %v981 = vsel %vm783, %v979, %v980
    %v982 = vrot.slane %v964, 1
    %v983 = vsel %vm783, %v977, %v982
    %v984 = vrot.slane %v965, 1
    %v985 = vsel %vm783, %v980, %v984
    %v986 = vrot.slane %v966, 1
    %v987 = vsel %vm783, %v982, %v986
    %v988 = vrot.slane %v967, 1
    %v989 = vsel %vm783, %v984, %v988
    %990 = vrot.lane.b32.xlu0 %v978, 127
    %v991 = vpop.permute.xlu0 %990
    %992 = vrot.lane.b32.xlu0 %v981, 127
    %v993 = vpop.permute.xlu0 %992
    %994 = vrot.lane.b32.xlu0 %v983, 127
    %v995 = vpop.permute.xlu0 %994
    %996 = vrot.lane.b32.xlu0 %v985, 127
    %v997 = vpop.permute.xlu0 %996
    %998 = vrot.lane.b32.xlu0 %v987, 127
    %v999 = vpop.permute.xlu0 %998
    %1000 = vrot.lane.b32.xlu0 %v989, 127
    %v1001 = vpop.permute.xlu0 %1000
    %1002 = vrot.lane.b32.xlu0 %v986, 127
    %v1003 = vpop.permute.xlu0 %1002
    %1004 = vrot.lane.b32.xlu0 %v988, 127
    %v1005 = vpop.permute.xlu0 %1004
    %v1006 = vsel %vm321, %v991, %v993
    %v1007 = vsel %vm321, %v995, %v997
    %v1008 = vsel %vm321, %v999, %v1001
    %v1009 = vsel %vm321, %v1003, %v1005
    %v1018 = vadd.f32 %v806, %v1006
    %v1019 = vadd.f32 %v807, %v993
    %v1020 = vadd.f32 %v808, %v1007
    %v1021 = vadd.f32 %v809, %v997
    %v1022 = vadd.f32 %v810, %v1008
    %v1023 = vadd.f32 %v811, %v1001
    %v1024 = vadd.f32 %v812, %v1009
    %v1025 = vadd.f32 %v813, %v1005
    %s1026 = sld [smem:[#allocation6 + $0x11]]
    %v1027 = vstv %s1026
    %v1028 = vmul.f32 %v757, %v1027
    %v1029 = vmul.f32 %v758, %v1027
    %v1030 = vmul.f32 %v182, %v1027
    %v1031 = vmul.f32 %v183, %v1027
    %v1032 = vmul.f32 %v184, %v1027
    %v1033 = vmul.f32 %v185, %v1027
    %v1034 = vmul.f32 %v759, %v1027
    %v1035 = vmul.f32 %v760, %v1027
    %v1044 = vrot.slane %v1028, 1
    %v1045 = vrot.slane %v1030, 1
    %v1046 = vsel %vm783, %v1044, %v1045
    %v1047 = vrot.slane %v1029, 1
    %v1048 = vrot.slane %v1031, 1
    %v1049 = vsel %vm783, %v1047, %v1048
    %v1050 = vrot.slane %v1032, 1
    %v1051 = vsel %vm783, %v1045, %v1050
    %v1052 = vrot.slane %v1033, 1
    %v1053 = vsel %vm783, %v1048, %v1052
    %v1054 = vrot.slane %v1034, 1
    %v1055 = vsel %vm783, %v1050, %v1054
    %v1056 = vrot.slane %v1035, 1
    %v1057 = vsel %vm783, %v1052, %v1056
    %1058 = vrot.lane.b32.xlu0 %v1046, 127
    %v1059 = vpop.permute.xlu0 %1058
    %1060 = vrot.lane.b32.xlu0 %v1049, 127
    %v1061 = vpop.permute.xlu0 %1060
    %1062 = vrot.lane.b32.xlu0 %v1051, 127
    %v1063 = vpop.permute.xlu0 %1062
    %1064 = vrot.lane.b32.xlu0 %v1053, 127
    %v1065 = vpop.permute.xlu0 %1064
    %1066 = vrot.lane.b32.xlu0 %v1055, 127
    %v1067 = vpop.permute.xlu0 %1066
    %1068 = vrot.lane.b32.xlu0 %v1057, 127
    %v1069 = vpop.permute.xlu0 %1068
    %1070 = vrot.lane.b32.xlu0 %v1054, 127
    %v1071 = vpop.permute.xlu0 %1070
    %1072 = vrot.lane.b32.xlu0 %v1056, 127
    %v1073 = vpop.permute.xlu0 %1072
    %v1074 = vsel %vm321, %v1059, %v1061
    %v1075 = vsel %vm321, %v1063, %v1065
    %v1076 = vsel %vm321, %v1067, %v1069
    %v1077 = vsel %vm321, %v1071, %v1073
    %v1086 = vadd.f32 %v854, %v1074
    %v1087 = vadd.f32 %v855, %v1061
    %v1088 = vadd.f32 %v856, %v1075
    %v1089 = vadd.f32 %v857, %v1065
    %v1090 = vadd.f32 %v858, %v1076
    %v1091 = vadd.f32 %v859, %v1069
    %v1092 = vadd.f32 %v860, %v1077
    %v1093 = vadd.f32 %v861, %v1073
    %s1094 = sld [smem:[#allocation6 + $0x12]]
    %v1095 = vstv %s1094
    %v1096 = vmul.f32 %v757, %v1095
    %v1097 = vmul.f32 %v758, %v1095
    %v1098 = vmul.f32 %v182, %v1095
    %v1099 = vmul.f32 %v183, %v1095
    %v1100 = vmul.f32 %v184, %v1095
    %v1101 = vmul.f32 %v185, %v1095
    %v1102 = vmul.f32 %v759, %v1095
    %v1103 = vmul.f32 %v760, %v1095
    %v1112 = vrot.slane %v1096, 1
    %v1113 = vrot.slane %v1098, 1
    %v1114 = vsel %vm783, %v1112, %v1113
    %v1115 = vrot.slane %v1097, 1
    %v1116 = vrot.slane %v1099, 1
    %v1117 = vsel %vm783, %v1115, %v1116
    %v1118 = vrot.slane %v1100, 1
    %v1119 = vsel %vm783, %v1113, %v1118
    %v1120 = vrot.slane %v1101, 1
    %v1121 = vsel %vm783, %v1116, %v1120
    %v1122 = vrot.slane %v1102, 1
    %v1123 = vsel %vm783, %v1118, %v1122
    %v1124 = vrot.slane %v1103, 1
    %v1125 = vsel %vm783, %v1120, %v1124
    %1126 = vrot.lane.b32.xlu0 %v1114, 127
    %v1127 = vpop.permute.xlu0 %1126
    %1128 = vrot.lane.b32.xlu0 %v1117, 127
    %v1129 = vpop.permute.xlu0 %1128
    %1130 = vrot.lane.b32.xlu0 %v1119, 127
    %v1131 = vpop.permute.xlu0 %1130
    %1132 = vrot.lane.b32.xlu0 %v1121, 127
    %v1133 = vpop.permute.xlu0 %1132
    %1134 = vrot.lane.b32.xlu0 %v1123, 127
    %v1135 = vpop.permute.xlu0 %1134
    %1136 = vrot.lane.b32.xlu0 %v1125, 127
    %v1137 = vpop.permute.xlu0 %1136
    %1138 = vrot.lane.b32.xlu0 %v1122, 127
    %v1139 = vpop.permute.xlu0 %1138
    %1140 = vrot.lane.b32.xlu0 %v1124, 127
    %v1141 = vpop.permute.xlu0 %1140
    %v1142 = vsel %vm321, %v1127, %v1129
    %v1143 = vsel %vm321, %v1131, %v1133
    %v1144 = vsel %vm321, %v1135, %v1137
    %v1145 = vsel %vm321, %v1139, %v1141
    %v1154 = vadd.f32 %v902, %v1142
    %v1155 = vadd.f32 %v903, %v1129
    %v1156 = vadd.f32 %v904, %v1143
    %v1157 = vadd.f32 %v905, %v1133
    %v1158 = vadd.f32 %v906, %v1144
    %v1159 = vadd.f32 %v907, %v1137
    %v1160 = vadd.f32 %v908, %v1145
    %v1161 = vadd.f32 %v909, %v1141
    %s1162 = sld [smem:[#allocation6 + $0x13]]
    %v1163 = vstv %s1162
    %v1164 = vmul.f32 %v757, %v1163
    %v1165 = vmul.f32 %v758, %v1163
    %v1166 = vmul.f32 %v182, %v1163
    %v1167 = vmul.f32 %v183, %v1163
    %v1168 = vmul.f32 %v184, %v1163
    %v1169 = vmul.f32 %v185, %v1163
    %v1170 = vmul.f32 %v759, %v1163
    %v1171 = vmul.f32 %v760, %v1163
    %v1180 = vrot.slane %v1164, 1
    %v1181 = vrot.slane %v1166, 1
    %v1182 = vsel %vm783, %v1180, %v1181
    %v1183 = vrot.slane %v1165, 1
    %v1184 = vrot.slane %v1167, 1
    %v1185 = vsel %vm783, %v1183, %v1184
    %v1186 = vrot.slane %v1168, 1
    %v1187 = vsel %vm783, %v1181, %v1186
    %v1188 = vrot.slane %v1169, 1
    %v1189 = vsel %vm783, %v1184, %v1188
    %v1190 = vrot.slane %v1170, 1
    %v1191 = vsel %vm783, %v1186, %v1190
    %v1192 = vrot.slane %v1171, 1
    %v1193 = vsel %vm783, %v1188, %v1192
    %1194 = vrot.lane.b32.xlu0 %v1182, 127
    %v1195 = vpop.permute.xlu0 %1194
    %1196 = vrot.lane.b32.xlu0 %v1185, 127
    %v1197 = vpop.permute.xlu0 %1196
    %1198 = vrot.lane.b32.xlu0 %v1187, 127
    %v1199 = vpop.permute.xlu0 %1198
    %1200 = vrot.lane.b32.xlu0 %v1189, 127
    %v1201 = vpop.permute.xlu0 %1200
    %1202 = vrot.lane.b32.xlu0 %v1191, 127
    %v1203 = vpop.permute.xlu0 %1202
    %1204 = vrot.lane.b32.xlu0 %v1193, 127
    %v1205 = vpop.permute.xlu0 %1204
    %1206 = vrot.lane.b32.xlu0 %v1190, 127
    %v1207 = vpop.permute.xlu0 %1206
    %1208 = vrot.lane.b32.xlu0 %v1192, 127
    %v1209 = vpop.permute.xlu0 %1208
    %v1210 = vsel %vm321, %v1195, %v1197
    %v1211 = vsel %vm321, %v1199, %v1201
    %v1212 = vsel %vm321, %v1203, %v1205
    %v1213 = vsel %vm321, %v1207, %v1209
    %v1222 = vadd.f32 %v950, %v1210
    %v1223 = vadd.f32 %v951, %v1197
    %v1224 = vadd.f32 %v952, %v1211
    %v1225 = vadd.f32 %v953, %v1201
    %v1226 = vadd.f32 %v954, %v1212
    %v1227 = vadd.f32 %v955, %v1205
    %v1228 = vadd.f32 %v956, %v1213
    %v1229 = vadd.f32 %v957, %v1209
    %v1230 = vmul.f32 %v757, %v525
    %v1231 = vmul.f32 %v758, %v529
    %v1232 = vmul.f32 %v759, %v525
    %v1233 = vmul.f32 %v760, %v529
    %s1234 = sld [smem:[#allocation6 + $0x14]]
    %v1235 = vstv %s1234
    %v1236 = vmul.f32 %v1230, %v1235
    %v1237 = vmul.f32 %v1231, %v1235
    %v1238 = vmul.f32 %v534, %v1235
    %v1239 = vmul.f32 %v535, %v1235
    %v1240 = vmul.f32 %v536, %v1235
    %v1241 = vmul.f32 %v537, %v1235
    %v1242 = vmul.f32 %v1232, %v1235
    %v1243 = vmul.f32 %v1233, %v1235
    %v1252 = vrot.slane %v1236, 1
    %v1253 = vrot.slane %v1238, 1
    %v1254 = vsel %vm783, %v1252, %v1253
    %v1255 = vrot.slane %v1237, 1
    %v1256 = vrot.slane %v1239, 1
    %v1257 = vsel %vm783, %v1255, %v1256
    %v1258 = vrot.slane %v1240, 1
    %v1259 = vsel %vm783, %v1253, %v1258
    %v1260 = vrot.slane %v1241, 1
    %v1261 = vsel %vm783, %v1256, %v1260
    %v1262 = vrot.slane %v1242, 1
    %v1263 = vsel %vm783, %v1258, %v1262
    %v1264 = vrot.slane %v1243, 1
    %v1265 = vsel %vm783, %v1260, %v1264
    %1266 = vrot.lane.b32.xlu0 %v1254, 126
    %v1267 = vpop.permute.xlu0 %1266
    %1268 = vrot.lane.b32.xlu0 %v1257, 126
    %v1269 = vpop.permute.xlu0 %1268
    %1270 = vrot.lane.b32.xlu0 %v1259, 126
    %v1271 = vpop.permute.xlu0 %1270
    %1272 = vrot.lane.b32.xlu0 %v1261, 126
    %v1273 = vpop.permute.xlu0 %1272
    %1274 = vrot.lane.b32.xlu0 %v1263, 126
    %v1275 = vpop.permute.xlu0 %1274
    %1276 = vrot.lane.b32.xlu0 %v1265, 126
    %v1277 = vpop.permute.xlu0 %1276
    %1278 = vrot.lane.b32.xlu0 %v1262, 126
    %v1279 = vpop.permute.xlu0 %1278
    %1280 = vrot.lane.b32.xlu0 %v1264, 126
    %v1281 = vpop.permute.xlu0 %1280
    %v1282 = vsel %vm574, %v1267, %v1269
    %v1283 = vsel %vm574, %v1271, %v1273
    %v1284 = vsel %vm574, %v1275, %v1277
    %v1285 = vsel %vm574, %v1279, %v1281
    %v1294 = vadd.f32 %v1018, %v1282
    %v1295 = vadd.f32 %v1019, %v1269
    %v1296 = vadd.f32 %v1020, %v1283
    %v1297 = vadd.f32 %v1021, %v1273
    %v1298 = vadd.f32 %v1022, %v1284
    %v1299 = vadd.f32 %v1023, %v1277
    %v1300 = vadd.f32 %v1024, %v1285
    %v1301 = vadd.f32 %v1025, %v1281
    %s1302 = sld [smem:[#allocation6 + $0x15]]
    %v1303 = vstv %s1302
    %v1304 = vmul.f32 %v1230, %v1303
    %v1305 = vmul.f32 %v1231, %v1303
    %v1306 = vmul.f32 %v534, %v1303
    %v1307 = vmul.f32 %v535, %v1303
    %v1308 = vmul.f32 %v536, %v1303
    %v1309 = vmul.f32 %v537, %v1303
    %v1310 = vmul.f32 %v1232, %v1303
    %v1311 = vmul.f32 %v1233, %v1303
    %v1320 = vrot.slane %v1304, 1
    %v1321 = vrot.slane %v1306, 1
    %v1322 = vsel %vm783, %v1320, %v1321
    %v1323 = vrot.slane %v1305, 1
    %v1324 = vrot.slane %v1307, 1
    %v1325 = vsel %vm783, %v1323, %v1324
    %v1326 = vrot.slane %v1308, 1
    %v1327 = vsel %vm783, %v1321, %v1326
    %v1328 = vrot.slane %v1309, 1
    %v1329 = vsel %vm783, %v1324, %v1328
    %v1330 = vrot.slane %v1310, 1
    %v1331 = vsel %vm783, %v1326, %v1330
    %v1332 = vrot.slane %v1311, 1
    %v1333 = vsel %vm783, %v1328, %v1332
    %1334 = vrot.lane.b32.xlu0 %v1322, 126
    %v1335 = vpop.permute.xlu0 %1334
    %1336 = vrot.lane.b32.xlu0 %v1325, 126
    %v1337 = vpop.permute.xlu0 %1336
    %1338 = vrot.lane.b32.xlu0 %v1327, 126
    %v1339 = vpop.permute.xlu0 %1338
    %1340 = vrot.lane.b32.xlu0 %v1329, 126
    %v1341 = vpop.permute.xlu0 %1340
    %1342 = vrot.lane.b32.xlu0 %v1331, 126
    %v1343 = vpop.permute.xlu0 %1342
    %1344 = vrot.lane.b32.xlu0 %v1333, 126
    %v1345 = vpop.permute.xlu0 %1344
    %1346 = vrot.lane.b32.xlu0 %v1330, 126
    %v1347 = vpop.permute.xlu0 %1346
    %1348 = vrot.lane.b32.xlu0 %v1332, 126
    %v1349 = vpop.permute.xlu0 %1348
    %v1350 = vsel %vm574, %v1335, %v1337
    %v1351 = vsel %vm574, %v1339, %v1341
    %v1352 = vsel %vm574, %v1343, %v1345
    %v1353 = vsel %vm574, %v1347, %v1349
    %v1362 = vadd.f32 %v1086, %v1350
    %v1363 = vadd.f32 %v1087, %v1337
    %v1364 = vadd.f32 %v1088, %v1351
    %v1365 = vadd.f32 %v1089, %v1341
    %v1366 = vadd.f32 %v1090, %v1352
    %v1367 = vadd.f32 %v1091, %v1345
    %v1368 = vadd.f32 %v1092, %v1353
    %v1369 = vadd.f32 %v1093, %v1349
    %s1370 = sld [smem:[#allocation6 + $0x16]]
    %v1371 = vstv %s1370
    %v1372 = vmul.f32 %v1230, %v1371
    %v1373 = vmul.f32 %v1231, %v1371
    %v1374 = vmul.f32 %v534, %v1371
    %v1375 = vmul.f32 %v535, %v1371
    %v1376 = vmul.f32 %v536, %v1371
    %v1377 = vmul.f32 %v537, %v1371
    %v1378 = vmul.f32 %v1232, %v1371
    %v1379 = vmul.f32 %v1233, %v1371
    %v1388 = vrot.slane %v1372, 1
    %v1389 = vrot.slane %v1374, 1
    %v1390 = vsel %vm783, %v1388, %v1389
    %v1391 = vrot.slane %v1373, 1
    %v1392 = vrot.slane %v1375, 1
    %v1393 = vsel %vm783, %v1391, %v1392
    %v1394 = vrot.slane %v1376, 1
    %v1395 = vsel %vm783, %v1389, %v1394
    %v1396 = vrot.slane %v1377, 1
    %v1397 = vsel %vm783, %v1392, %v1396
    %v1398 = vrot.slane %v1378, 1
    %v1399 = vsel %vm783, %v1394, %v1398
    %v1400 = vrot.slane %v1379, 1
    %v1401 = vsel %vm783, %v1396, %v1400
    %1402 = vrot.lane.b32.xlu0 %v1390, 126
    %v1403 = vpop.permute.xlu0 %1402
    %1404 = vrot.lane.b32.xlu0 %v1393, 126
    %v1405 = vpop.permute.xlu0 %1404
    %1406 = vrot.lane.b32.xlu0 %v1395, 126
    %v1407 = vpop.permute.xlu0 %1406
    %1408 = vrot.lane.b32.xlu0 %v1397, 126
    %v1409 = vpop.permute.xlu0 %1408
    %1410 = vrot.lane.b32.xlu0 %v1399, 126
    %v1411 = vpop.permute.xlu0 %1410
    %1412 = vrot.lane.b32.xlu0 %v1401, 126
    %v1413 = vpop.permute.xlu0 %1412
    %1414 = vrot.lane.b32.xlu0 %v1398, 126
    %v1415 = vpop.permute.xlu0 %1414
    %1416 = vrot.lane.b32.xlu0 %v1400, 126
    %v1417 = vpop.permute.xlu0 %1416
    %v1418 = vsel %vm574, %v1403, %v1405
    %v1419 = vsel %vm574, %v1407, %v1409
    %v1420 = vsel %vm574, %v1411, %v1413
    %v1421 = vsel %vm574, %v1415, %v1417
    %v1430 = vadd.f32 %v1154, %v1418
    %v1431 = vadd.f32 %v1155, %v1405
    %v1432 = vadd.f32 %v1156, %v1419
    %v1433 = vadd.f32 %v1157, %v1409
    %v1434 = vadd.f32 %v1158, %v1420
    %v1435 = vadd.f32 %v1159, %v1413
    %v1436 = vadd.f32 %v1160, %v1421
    %v1437 = vadd.f32 %v1161, %v1417
    %s1438 = sld [smem:[#allocation6 + $0x17]]
    %v1439 = vstv %s1438
    %v1440 = vmul.f32 %v1230, %v1439
    %v1441 = vmul.f32 %v1231, %v1439
    %v1442 = vmul.f32 %v534, %v1439
    %v1443 = vmul.f32 %v535, %v1439
    %v1444 = vmul.f32 %v536, %v1439
    %v1445 = vmul.f32 %v537, %v1439
    %v1446 = vmul.f32 %v1232, %v1439
    %v1447 = vmul.f32 %v1233, %v1439
    %v1456 = vrot.slane %v1440, 1
    %v1457 = vrot.slane %v1442, 1
    %v1458 = vsel %vm783, %v1456, %v1457
    %v1459 = vrot.slane %v1441, 1
    %v1460 = vrot.slane %v1443, 1
    %v1461 = vsel %vm783, %v1459, %v1460
    %v1462 = vrot.slane %v1444, 1
    %v1463 = vsel %vm783, %v1457, %v1462
    %v1464 = vrot.slane %v1445, 1
    %v1465 = vsel %vm783, %v1460, %v1464
    %v1466 = vrot.slane %v1446, 1
    %v1467 = vsel %vm783, %v1462, %v1466
    %v1468 = vrot.slane %v1447, 1
    %v1469 = vsel %vm783, %v1464, %v1468
    %1470 = vrot.lane.b32.xlu0 %v1458, 126
    %v1471 = vpop.permute.xlu0 %1470
    %1472 = vrot.lane.b32.xlu0 %v1461, 126
    %v1473 = vpop.permute.xlu0 %1472
    %1474 = vrot.lane.b32.xlu0 %v1463, 126
    %v1475 = vpop.permute.xlu0 %1474
    %1476 = vrot.lane.b32.xlu0 %v1465, 126
    %v1477 = vpop.permute.xlu0 %1476
    %1478 = vrot.lane.b32.xlu0 %v1467, 126
    %v1479 = vpop.permute.xlu0 %1478
    %1480 = vrot.lane.b32.xlu0 %v1469, 126
    %v1481 = vpop.permute.xlu0 %1480
    %1482 = vrot.lane.b32.xlu0 %v1466, 126
    %v1483 = vpop.permute.xlu0 %1482
    %1484 = vrot.lane.b32.xlu0 %v1468, 126
    %v1485 = vpop.permute.xlu0 %1484
    %v1486 = vsel %vm574, %v1471, %v1473
    %v1487 = vsel %vm574, %v1475, %v1477
    %v1488 = vsel %vm574, %v1479, %v1481
    %v1489 = vsel %vm574, %v1483, %v1485
    %v1498 = vadd.f32 %v1222, %v1486
    %v1499 = vadd.f32 %v1223, %v1473
    %v1500 = vadd.f32 %v1224, %v1487
    %v1501 = vadd.f32 %v1225, %v1477
    %v1502 = vadd.f32 %v1226, %v1488
    %v1503 = vadd.f32 %v1227, %v1481
    %v1504 = vadd.f32 %v1228, %v1489
    %v1505 = vadd.f32 %v1229, %v1485
    %v1506 = vld [vmem:[#allocation2] sm:$0xfc]
    %v1507 = vld [vmem:[#allocation2 + $0x8] sm:$0xfc]
    %v1508 = vld [vmem:[#allocation2 + $0x30] sm:$0x3f]
    %v1509 = vld [vmem:[#allocation2 + $0x38] sm:$0x3f]
    %v1510 = vmul.f32 %v1506, %v202
    %v1511 = vmul.f32 %v1507, %v206
    %v1512 = vmul.f32 %v1508, %v202
    %v1513 = vmul.f32 %v1509, %v206
    %s1514 = sld [smem:[#allocation6 + $0x18]]
    %v1515 = vstv %s1514
    %v1516 = vmul.f32 %v1510, %v1515
    %v1517 = vmul.f32 %v1511, %v1515
    %v1518 = vmul.f32 %v209, %v1515
    %v1519 = vmul.f32 %v210, %v1515
    %v1520 = vmul.f32 %v211, %v1515
    %v1521 = vmul.f32 %v212, %v1515
    %v1522 = vmul.f32 %v1512, %v1515
    %v1523 = vmul.f32 %v1513, %v1515
    %vm1532 = vcmask 1045504
    %v1533 = vrot.slane %v1516, 2
    %v1534 = vrot.slane %v1518, 2
    %v1535 = vsel %vm1532, %v1533, %v1534
    %v1536 = vrot.slane %v1517, 2
    %v1537 = vrot.slane %v1519, 2
    %v1538 = vsel %vm1532, %v1536, %v1537
    %v1539 = vrot.slane %v1520, 2
    %v1540 = vsel %vm1532, %v1534, %v1539
    %v1541 = vrot.slane %v1521, 2
    %v1542 = vsel %vm1532, %v1537, %v1541
    %v1543 = vrot.slane %v1522, 2
    %v1544 = vsel %vm1532, %v1539, %v1543
    %v1545 = vrot.slane %v1523, 2
    %v1546 = vsel %vm1532, %v1541, %v1545
    %v1555 = vadd.f32 %v1294, %v1535
    %v1556 = vadd.f32 %v1295, %v1538
    %v1557 = vadd.f32 %v1296, %v1540
    %v1558 = vadd.f32 %v1297, %v1542
    %v1559 = vadd.f32 %v1298, %v1544
    %v1560 = vadd.f32 %v1299, %v1546
    %v1561 = vadd.f32 %v1300, %v1543
    %v1562 = vadd.f32 %v1301, %v1545
    %s1563 = sld [smem:[#allocation6 + $0x19]]
    %v1564 = vstv %s1563
    %v1565 = vmul.f32 %v1510, %v1564
    %v1566 = vmul.f32 %v1511, %v1564
    %v1567 = vmul.f32 %v209, %v1564
    %v1568 = vmul.f32 %v210, %v1564
    %v1569 = vmul.f32 %v211, %v1564
    %v1570 = vmul.f32 %v212, %v1564
    %v1571 = vmul.f32 %v1512, %v1564
    %v1572 = vmul.f32 %v1513, %v1564
    %v1581 = vrot.slane %v1565, 2
    %v1582 = vrot.slane %v1567, 2
    %v1583 = vsel %vm1532, %v1581, %v1582
    %v1584 = vrot.slane %v1566, 2
    %v1585 = vrot.slane %v1568, 2
    %v1586 = vsel %vm1532, %v1584, %v1585
    %v1587 = vrot.slane %v1569, 2
    %v1588 = vsel %vm1532, %v1582, %v1587
    %v1589 = vrot.slane %v1570, 2
    %v1590 = vsel %vm1532, %v1585, %v1589
    %v1591 = vrot.slane %v1571, 2
    %v1592 = vsel %vm1532, %v1587, %v1591
    %v1593 = vrot.slane %v1572, 2
    %v1594 = vsel %vm1532, %v1589, %v1593
    %v1603 = vadd.f32 %v1362, %v1583
    %v1604 = vadd.f32 %v1363, %v1586
    %v1605 = vadd.f32 %v1364, %v1588
    %v1606 = vadd.f32 %v1365, %v1590
    %v1607 = vadd.f32 %v1366, %v1592
    %v1608 = vadd.f32 %v1367, %v1594
    %v1609 = vadd.f32 %v1368, %v1591
    %v1610 = vadd.f32 %v1369, %v1593
    %s1611 = sld [smem:[#allocation6 + $0x1a]]
    %v1612 = vstv %s1611
    %v1613 = vmul.f32 %v1510, %v1612
    %v1614 = vmul.f32 %v1511, %v1612
    %v1615 = vmul.f32 %v209, %v1612
    %v1616 = vmul.f32 %v210, %v1612
    %v1617 = vmul.f32 %v211, %v1612
    %v1618 = vmul.f32 %v212, %v1612
    %v1619 = vmul.f32 %v1512, %v1612
    %v1620 = vmul.f32 %v1513, %v1612
    %v1629 = vrot.slane %v1613, 2
    %v1630 = vrot.slane %v1615, 2
    %v1631 = vsel %vm1532, %v1629, %v1630
    %v1632 = vrot.slane %v1614, 2
    %v1633 = vrot.slane %v1616, 2
    %v1634 = vsel %vm1532, %v1632, %v1633
    %v1635 = vrot.slane %v1617, 2
    %v1636 = vsel %vm1532, %v1630, %v1635
    %v1637 = vrot.slane %v1618, 2
    %v1638 = vsel %vm1532, %v1633, %v1637
    %v1639 = vrot.slane %v1619, 2
    %v1640 = vsel %vm1532, %v1635, %v1639
    %v1641 = vrot.slane %v1620, 2
    %v1642 = vsel %vm1532, %v1637, %v1641
    %v1651 = vadd.f32 %v1430, %v1631
    %v1652 = vadd.f32 %v1431, %v1634
    %v1653 = vadd.f32 %v1432, %v1636
    %v1654 = vadd.f32 %v1433, %v1638
    %v1655 = vadd.f32 %v1434, %v1640
    %v1656 = vadd.f32 %v1435, %v1642
    %v1657 = vadd.f32 %v1436, %v1639
    %v1658 = vadd.f32 %v1437, %v1641
    %s1659 = sld [smem:[#allocation6 + $0x1b]]
    %v1660 = vstv %s1659
    %v1661 = vmul.f32 %v1510, %v1660
    %v1662 = vmul.f32 %v1511, %v1660
    %v1663 = vmul.f32 %v209, %v1660
    %v1664 = vmul.f32 %v210, %v1660
    %v1665 = vmul.f32 %v211, %v1660
    %v1666 = vmul.f32 %v212, %v1660
    %v1667 = vmul.f32 %v1512, %v1660
    %v1668 = vmul.f32 %v1513, %v1660
    %v1677 = vrot.slane %v1661, 2
    %v1678 = vrot.slane %v1663, 2
    %v1679 = vsel %vm1532, %v1677, %v1678
    %v1680 = vrot.slane %v1662, 2
    %v1681 = vrot.slane %v1664, 2
    %v1682 = vsel %vm1532, %v1680, %v1681
    %v1683 = vrot.slane %v1665, 2
    %v1684 = vsel %vm1532, %v1678, %v1683
    %v1685 = vrot.slane %v1666, 2
    %v1686 = vsel %vm1532, %v1681, %v1685
    %v1687 = vrot.slane %v1667, 2
    %v1688 = vsel %vm1532, %v1683, %v1687
    %v1689 = vrot.slane %v1668, 2
    %v1690 = vsel %vm1532, %v1685, %v1689
    %v1699 = vadd.f32 %v1498, %v1679
    %v1700 = vadd.f32 %v1499, %v1682
    %v1701 = vadd.f32 %v1500, %v1684
    %v1702 = vadd.f32 %v1501, %v1686
    %v1703 = vadd.f32 %v1502, %v1688
    %v1704 = vadd.f32 %v1503, %v1690
    %v1705 = vadd.f32 %v1504, %v1687
    %v1706 = vadd.f32 %v1505, %v1689
    %s1707 = sld [smem:[#allocation6 + $0x1c]]
    %v1708 = vstv %s1707
    %v1709 = vmul.f32 %v1506, %v1708
    %v1710 = vmul.f32 %v1507, %v1708
    %v1711 = vmul.f32 %v182, %v1708
    %v1712 = vmul.f32 %v183, %v1708
    %v1713 = vmul.f32 %v184, %v1708
    %v1714 = vmul.f32 %v185, %v1708
    %v1715 = vmul.f32 %v1508, %v1708
    %v1716 = vmul.f32 %v1509, %v1708
    %v1725 = vrot.slane %v1709, 2
    %v1726 = vrot.slane %v1711, 2
    %v1727 = vsel %vm1532, %v1725, %v1726
    %v1728 = vrot.slane %v1710, 2
    %v1729 = vrot.slane %v1712, 2
    %v1730 = vsel %vm1532, %v1728, %v1729
    %v1731 = vrot.slane %v1713, 2
    %v1732 = vsel %vm1532, %v1726, %v1731
    %v1733 = vrot.slane %v1714, 2
    %v1734 = vsel %vm1532, %v1729, %v1733
    %v1735 = vrot.slane %v1715, 2
    %v1736 = vsel %vm1532, %v1731, %v1735
    %v1737 = vrot.slane %v1716, 2
    %v1738 = vsel %vm1532, %v1733, %v1737
    %1739 = vrot.lane.b32.xlu0 %v1727, 127
    %v1740 = vpop.permute.xlu0 %1739
    %1741 = vrot.lane.b32.xlu0 %v1730, 127
    %v1742 = vpop.permute.xlu0 %1741
    %1743 = vrot.lane.b32.xlu0 %v1732, 127
    %v1744 = vpop.permute.xlu0 %1743
    %1745 = vrot.lane.b32.xlu0 %v1734, 127
    %v1746 = vpop.permute.xlu0 %1745
    %1747 = vrot.lane.b32.xlu0 %v1736, 127
    %v1748 = vpop.permute.xlu0 %1747
    %1749 = vrot.lane.b32.xlu0 %v1738, 127
    %v1750 = vpop.permute.xlu0 %1749
    %1751 = vrot.lane.b32.xlu0 %v1735, 127
    %v1752 = vpop.permute.xlu0 %1751
    %1753 = vrot.lane.b32.xlu0 %v1737, 127
    %v1754 = vpop.permute.xlu0 %1753
    %v1755 = vsel %vm321, %v1740, %v1742
    %v1756 = vsel %vm321, %v1744, %v1746
    %v1757 = vsel %vm321, %v1748, %v1750
    %v1758 = vsel %vm321, %v1752, %v1754
    %v1767 = vadd.f32 %v1555, %v1755
    %v1768 = vadd.f32 %v1556, %v1742
    %v1769 = vadd.f32 %v1557, %v1756
    %v1770 = vadd.f32 %v1558, %v1746
    %v1771 = vadd.f32 %v1559, %v1757
    %v1772 = vadd.f32 %v1560, %v1750
    %v1773 = vadd.f32 %v1561, %v1758
    %v1774 = vadd.f32 %v1562, %v1754
    %s1775 = sld [smem:[#allocation6 + $0x1d]]
    %v1776 = vstv %s1775
    %v1777 = vmul.f32 %v1506, %v1776
    %v1778 = vmul.f32 %v1507, %v1776
    %v1779 = vmul.f32 %v182, %v1776
    %v1780 = vmul.f32 %v183, %v1776
    %v1781 = vmul.f32 %v184, %v1776
    %v1782 = vmul.f32 %v185, %v1776
    %v1783 = vmul.f32 %v1508, %v1776
    %v1784 = vmul.f32 %v1509, %v1776
    %v1793 = vrot.slane %v1777, 2
    %v1794 = vrot.slane %v1779, 2
    %v1795 = vsel %vm1532, %v1793, %v1794
    %v1796 = vrot.slane %v1778, 2
    %v1797 = vrot.slane %v1780, 2
    %v1798 = vsel %vm1532, %v1796, %v1797
    %v1799 = vrot.slane %v1781, 2
    %v1800 = vsel %vm1532, %v1794, %v1799
    %v1801 = vrot.slane %v1782, 2
    %v1802 = vsel %vm1532, %v1797, %v1801
    %v1803 = vrot.slane %v1783, 2
    %v1804 = vsel %vm1532, %v1799, %v1803
    %v1805 = vrot.slane %v1784, 2
    %v1806 = vsel %vm1532, %v1801, %v1805
    %1807 = vrot.lane.b32.xlu0 %v1795, 127
    %v1808 = vpop.permute.xlu0 %1807
    %1809 = vrot.lane.b32.xlu0 %v1798, 127
    %v1810 = vpop.permute.xlu0 %1809
    %1811 = vrot.lane.b32.xlu0 %v1800, 127
    %v1812 = vpop.permute.xlu0 %1811
    %1813 = vrot.lane.b32.xlu0 %v1802, 127
    %v1814 = vpop.permute.xlu0 %1813
    %1815 = vrot.lane.b32.xlu0 %v1804, 127
    %v1816 = vpop.permute.xlu0 %1815
    %1817 = vrot.lane.b32.xlu0 %v1806, 127
    %v1818 = vpop.permute.xlu0 %1817
    %1819 = vrot.lane.b32.xlu0 %v1803, 127
    %v1820 = vpop.permute.xlu0 %1819
    %1821 = vrot.lane.b32.xlu0 %v1805, 127
    %v1822 = vpop.permute.xlu0 %1821
    %v1823 = vsel %vm321, %v1808, %v1810
    %v1824 = vsel %vm321, %v1812, %v1814
    %v1825 = vsel %vm321, %v1816, %v1818
    %v1826 = vsel %vm321, %v1820, %v1822
    %v1835 = vadd.f32 %v1603, %v1823
    %v1836 = vadd.f32 %v1604, %v1810
    %v1837 = vadd.f32 %v1605, %v1824
    %v1838 = vadd.f32 %v1606, %v1814
    %v1839 = vadd.f32 %v1607, %v1825
    %v1840 = vadd.f32 %v1608, %v1818
    %v1841 = vadd.f32 %v1609, %v1826
    %v1842 = vadd.f32 %v1610, %v1822
    %s1843 = sld [smem:[#allocation6 + $0x1e]]
    %v1844 = vstv %s1843
    %v1845 = vmul.f32 %v1506, %v1844
    %v1846 = vmul.f32 %v1507, %v1844
    %v1847 = vmul.f32 %v182, %v1844
    %v1848 = vmul.f32 %v183, %v1844
    %v1849 = vmul.f32 %v184, %v1844
    %v1850 = vmul.f32 %v185, %v1844
    %v1851 = vmul.f32 %v1508, %v1844
    %v1852 = vmul.f32 %v1509, %v1844
    %v1861 = vrot.slane %v1845, 2
    %v1862 = vrot.slane %v1847, 2
    %v1863 = vsel %vm1532, %v1861, %v1862
    %v1864 = vrot.slane %v1846, 2
    %v1865 = vrot.slane %v1848, 2
    %v1866 = vsel %vm1532, %v1864, %v1865
    %v1867 = vrot.slane %v1849, 2
    %v1868 = vsel %vm1532, %v1862, %v1867
    %v1869 = vrot.slane %v1850, 2
    %v1870 = vsel %vm1532, %v1865, %v1869
    %v1871 = vrot.slane %v1851, 2
    %v1872 = vsel %vm1532, %v1867, %v1871
    %v1873 = vrot.slane %v1852, 2
    %v1874 = vsel %vm1532, %v1869, %v1873
    %1875 = vrot.lane.b32.xlu0 %v1863, 127
    %v1876 = vpop.permute.xlu0 %1875
    %1877 = vrot.lane.b32.xlu0 %v1866, 127
    %v1878 = vpop.permute.xlu0 %1877
    %1879 = vrot.lane.b32.xlu0 %v1868, 127
    %v1880 = vpop.permute.xlu0 %1879
    %1881 = vrot.lane.b32.xlu0 %v1870, 127
    %v1882 = vpop.permute.xlu0 %1881
    %1883 = vrot.lane.b32.xlu0 %v1872, 127
    %v1884 = vpop.permute.xlu0 %1883
    %1885 = vrot.lane.b32.xlu0 %v1874, 127
    %v1886 = vpop.permute.xlu0 %1885
    %1887 = vrot.lane.b32.xlu0 %v1871, 127
    %v1888 = vpop.permute.xlu0 %1887
    %1889 = vrot.lane.b32.xlu0 %v1873, 127
    %v1890 = vpop.permute.xlu0 %1889
    %v1891 = vsel %vm321, %v1876, %v1878
    %v1892 = vsel %vm321, %v1880, %v1882
    %v1893 = vsel %vm321, %v1884, %v1886
    %v1894 = vsel %vm321, %v1888, %v1890
    %v1903 = vadd.f32 %v1651, %v1891
    %v1904 = vadd.f32 %v1652, %v1878
    %v1905 = vadd.f32 %v1653, %v1892
    %v1906 = vadd.f32 %v1654, %v1882
    %v1907 = vadd.f32 %v1655, %v1893
    %v1908 = vadd.f32 %v1656, %v1886
    %v1909 = vadd.f32 %v1657, %v1894
    %v1910 = vadd.f32 %v1658, %v1890
    %s1911 = sld [smem:[#allocation6 + $0x1f]]
    %v1912 = vstv %s1911
    %v1913 = vmul.f32 %v1506, %v1912
    %v1914 = vmul.f32 %v1507, %v1912
    %v1915 = vmul.f32 %v182, %v1912
    %v1916 = vmul.f32 %v183, %v1912
    %v1917 = vmul.f32 %v184, %v1912
    %v1918 = vmul.f32 %v185, %v1912
    %v1919 = vmul.f32 %v1508, %v1912
    %v1920 = vmul.f32 %v1509, %v1912
    %v1929 = vrot.slane %v1913, 2
    %v1930 = vrot.slane %v1915, 2
    %v1931 = vsel %vm1532, %v1929, %v1930
    %v1932 = vrot.slane %v1914, 2
    %v1933 = vrot.slane %v1916, 2
    %v1934 = vsel %vm1532, %v1932, %v1933
    %v1935 = vrot.slane %v1917, 2
    %v1936 = vsel %vm1532, %v1930, %v1935
    %v1937 = vrot.slane %v1918, 2
    %v1938 = vsel %vm1532, %v1933, %v1937
    %v1939 = vrot.slane %v1919, 2
    %v1940 = vsel %vm1532, %v1935, %v1939
    %v1941 = vrot.slane %v1920, 2
    %v1942 = vsel %vm1532, %v1937, %v1941
    %1943 = vrot.lane.b32.xlu0 %v1931, 127
    %v1944 = vpop.permute.xlu0 %1943
    %1945 = vrot.lane.b32.xlu0 %v1934, 127
    %v1946 = vpop.permute.xlu0 %1945
    %1947 = vrot.lane.b32.xlu0 %v1936, 127
    %v1948 = vpop.permute.xlu0 %1947
    %1949 = vrot.lane.b32.xlu0 %v1938, 127
    %v1950 = vpop.permute.xlu0 %1949
    %1951 = vrot.lane.b32.xlu0 %v1940, 127
    %v1952 = vpop.permute.xlu0 %1951
    %1953 = vrot.lane.b32.xlu0 %v1942, 127
    %v1954 = vpop.permute.xlu0 %1953
    %1955 = vrot.lane.b32.xlu0 %v1939, 127
    %v1956 = vpop.permute.xlu0 %1955
    %1957 = vrot.lane.b32.xlu0 %v1941, 127
    %v1958 = vpop.permute.xlu0 %1957
    %v1959 = vsel %vm321, %v1944, %v1946
    %v1960 = vsel %vm321, %v1948, %v1950
    %v1961 = vsel %vm321, %v1952, %v1954
    %v1962 = vsel %vm321, %v1956, %v1958
    %v1971 = vadd.f32 %v1699, %v1959
    %v1972 = vadd.f32 %v1700, %v1946
    %v1973 = vadd.f32 %v1701, %v1960
    %v1974 = vadd.f32 %v1702, %v1950
    %v1975 = vadd.f32 %v1703, %v1961
    %v1976 = vadd.f32 %v1704, %v1954
    %v1977 = vadd.f32 %v1705, %v1962
    %v1978 = vadd.f32 %v1706, %v1958
    %v1979 = vmul.f32 %v1506, %v525
    %v1980 = vmul.f32 %v1507, %v529
    %v1981 = vmul.f32 %v1508, %v525
    %v1982 = vmul.f32 %v1509, %v529
    %s1983 = sld [smem:[#allocation6 + $0x20]]
    %v1984 = vstv %s1983
    %v1985 = vmul.f32 %v1979, %v1984
    %v1986 = vmul.f32 %v1980, %v1984
    %v1987 = vmul.f32 %v534, %v1984
    %v1988 = vmul.f32 %v535, %v1984
    %v1989 = vmul.f32 %v536, %v1984
    %v1990 = vmul.f32 %v537, %v1984
    %v1991 = vmul.f32 %v1981, %v1984
    %v1992 = vmul.f32 %v1982, %v1984
    %v2001 = vrot.slane %v1985, 2
    %v2002 = vrot.slane %v1987, 2
    %v2003 = vsel %vm1532, %v2001, %v2002
    %v2004 = vrot.slane %v1986, 2
    %v2005 = vrot.slane %v1988, 2
    %v2006 = vsel %vm1532, %v2004, %v2005
    %v2007 = vrot.slane %v1989, 2
    %v2008 = vsel %vm1532, %v2002, %v2007
    %v2009 = vrot.slane %v1990, 2
    %v2010 = vsel %vm1532, %v2005, %v2009
    %v2011 = vrot.slane %v1991, 2
    %v2012 = vsel %vm1532, %v2007, %v2011
    %v2013 = vrot.slane %v1992, 2
    %v2014 = vsel %vm1532, %v2009, %v2013
    %2015 = vrot.lane.b32.xlu0 %v2003, 126
    %v2016 = vpop.permute.xlu0 %2015
    %2017 = vrot.lane.b32.xlu0 %v2006, 126
    %v2018 = vpop.permute.xlu0 %2017
    %2019 = vrot.lane.b32.xlu0 %v2008, 126
    %v2020 = vpop.permute.xlu0 %2019
    %2021 = vrot.lane.b32.xlu0 %v2010, 126
    %v2022 = vpop.permute.xlu0 %2021
    %2023 = vrot.lane.b32.xlu0 %v2012, 126
    %v2024 = vpop.permute.xlu0 %2023
    %2025 = vrot.lane.b32.xlu0 %v2014, 126
    %v2026 = vpop.permute.xlu0 %2025
    %2027 = vrot.lane.b32.xlu0 %v2011, 126
    %v2028 = vpop.permute.xlu0 %2027
    %2029 = vrot.lane.b32.xlu0 %v2013, 126
    %v2030 = vpop.permute.xlu0 %2029
    %v2031 = vsel %vm574, %v2016, %v2018
    %v2032 = vsel %vm574, %v2020, %v2022
    %v2033 = vsel %vm574, %v2024, %v2026
    %v2034 = vsel %vm574, %v2028, %v2030
    %v2043 = vadd.f32 %v1767, %v2031
    %v2044 = vadd.f32 %v1768, %v2018
    %v2045 = vadd.f32 %v1769, %v2032
    %v2046 = vadd.f32 %v1770, %v2022
    %v2047 = vadd.f32 %v1771, %v2033
    %v2048 = vadd.f32 %v1772, %v2026
    %v2049 = vadd.f32 %v1773, %v2034
    %v2050 = vadd.f32 %v1774, %v2030
    %s2051 = sld [smem:[#allocation6 + $0x21]]
    %v2052 = vstv %s2051
    %v2053 = vmul.f32 %v1979, %v2052
    %v2054 = vmul.f32 %v1980, %v2052
    %v2055 = vmul.f32 %v534, %v2052
    %v2056 = vmul.f32 %v535, %v2052
    %v2057 = vmul.f32 %v536, %v2052
    %v2058 = vmul.f32 %v537, %v2052
    %v2059 = vmul.f32 %v1981, %v2052
    %v2060 = vmul.f32 %v1982, %v2052
    %v2069 = vrot.slane %v2053, 2
    %v2070 = vrot.slane %v2055, 2
    %v2071 = vsel %vm1532, %v2069, %v2070
    %v2072 = vrot.slane %v2054, 2
    %v2073 = vrot.slane %v2056, 2
    %v2074 = vsel %vm1532, %v2072, %v2073
    %v2075 = vrot.slane %v2057, 2
    %v2076 = vsel %vm1532, %v2070, %v2075
    %v2077 = vrot.slane %v2058, 2
    %v2078 = vsel %vm1532, %v2073, %v2077
    %v2079 = vrot.slane %v2059, 2
    %v2080 = vsel %vm1532, %v2075, %v2079
    %v2081 = vrot.slane %v2060, 2
    %v2082 = vsel %vm1532, %v2077, %v2081
    %2083 = vrot.lane.b32.xlu0 %v2071, 126
    %v2084 = vpop.permute.xlu0 %2083
    %2085 = vrot.lane.b32.xlu0 %v2074, 126
    %v2086 = vpop.permute.xlu0 %2085
    %2087 = vrot.lane.b32.xlu0 %v2076, 126
    %v2088 = vpop.permute.xlu0 %2087
    %2089 = vrot.lane.b32.xlu0 %v2078, 126
    %v2090 = vpop.permute.xlu0 %2089
    %2091 = vrot.lane.b32.xlu0 %v2080, 126
    %v2092 = vpop.permute.xlu0 %2091
    %2093 = vrot.lane.b32.xlu0 %v2082, 126
    %v2094 = vpop.permute.xlu0 %2093
    %2095 = vrot.lane.b32.xlu0 %v2079, 126
    %v2096 = vpop.permute.xlu0 %2095
    %2097 = vrot.lane.b32.xlu0 %v2081, 126
    %v2098 = vpop.permute.xlu0 %2097
    %v2099 = vsel %vm574, %v2084, %v2086
    %v2100 = vsel %vm574, %v2088, %v2090
    %v2101 = vsel %vm574, %v2092, %v2094
    %v2102 = vsel %vm574, %v2096, %v2098
    %v2111 = vadd.f32 %v1835, %v2099
    %v2112 = vadd.f32 %v1836, %v2086
    %v2113 = vadd.f32 %v1837, %v2100
    %v2114 = vadd.f32 %v1838, %v2090
    %v2115 = vadd.f32 %v1839, %v2101
    %v2116 = vadd.f32 %v1840, %v2094
    %v2117 = vadd.f32 %v1841, %v2102
    %v2118 = vadd.f32 %v1842, %v2098
    %s2119 = sld [smem:[#allocation6 + $0x22]]
    %v2120 = vstv %s2119
    %v2121 = vmul.f32 %v1979, %v2120
    %v2122 = vmul.f32 %v1980, %v2120
    %v2123 = vmul.f32 %v534, %v2120
    %v2124 = vmul.f32 %v535, %v2120
    %v2125 = vmul.f32 %v536, %v2120
    %v2126 = vmul.f32 %v537, %v2120
    %v2127 = vmul.f32 %v1981, %v2120
    %v2128 = vmul.f32 %v1982, %v2120
    %v2137 = vrot.slane %v2121, 2
    %v2138 = vrot.slane %v2123, 2
    %v2139 = vsel %vm1532, %v2137, %v2138
    %v2140 = vrot.slane %v2122, 2
    %v2141 = vrot.slane %v2124, 2
    %v2142 = vsel %vm1532, %v2140, %v2141
    %v2143 = vrot.slane %v2125, 2
    %v2144 = vsel %vm1532, %v2138, %v2143
    %v2145 = vrot.slane %v2126, 2
    %v2146 = vsel %vm1532, %v2141, %v2145
    %v2147 = vrot.slane %v2127, 2
    %v2148 = vsel %vm1532, %v2143, %v2147
    %v2149 = vrot.slane %v2128, 2
    %v2150 = vsel %vm1532, %v2145, %v2149
    %2151 = vrot.lane.b32.xlu0 %v2139, 126
    %v2152 = vpop.permute.xlu0 %2151
    %2153 = vrot.lane.b32.xlu0 %v2142, 126
    %v2154 = vpop.permute.xlu0 %2153
    %2155 = vrot.lane.b32.xlu0 %v2144, 126
    %v2156 = vpop.permute.xlu0 %2155
    %2157 = vrot.lane.b32.xlu0 %v2146, 126
    %v2158 = vpop.permute.xlu0 %2157
    %2159 = vrot.lane.b32.xlu0 %v2148, 126
    %v2160 = vpop.permute.xlu0 %2159
    %2161 = vrot.lane.b32.xlu0 %v2150, 126
    %v2162 = vpop.permute.xlu0 %2161
    %2163 = vrot.lane.b32.xlu0 %v2147, 126
    %v2164 = vpop.permute.xlu0 %2163
    %2165 = vrot.lane.b32.xlu0 %v2149, 126
    %v2166 = vpop.permute.xlu0 %2165
    %v2167 = vsel %vm574, %v2152, %v2154
    %v2168 = vsel %vm574, %v2156, %v2158
    %v2169 = vsel %vm574, %v2160, %v2162
    %v2170 = vsel %vm574, %v2164, %v2166
    %v2179 = vadd.f32 %v1903, %v2167
    %v2180 = vadd.f32 %v1904, %v2154
    %v2181 = vadd.f32 %v1905, %v2168
    %v2182 = vadd.f32 %v1906, %v2158
    %v2183 = vadd.f32 %v1907, %v2169
    %v2184 = vadd.f32 %v1908, %v2162
    %v2185 = vadd.f32 %v1909, %v2170
    %v2186 = vadd.f32 %v1910, %v2166
    %s2187 = sld [smem:[#allocation6 + $0x23]]
    %v2188 = vstv %s2187
    %v2189 = vmul.f32 %v1979, %v2188
    %v2190 = vmul.f32 %v1980, %v2188
    %v2191 = vmul.f32 %v534, %v2188
    %v2192 = vmul.f32 %v535, %v2188
    %v2193 = vmul.f32 %v536, %v2188
    %v2194 = vmul.f32 %v537, %v2188
    %v2195 = vmul.f32 %v1981, %v2188
    %v2196 = vmul.f32 %v1982, %v2188
    %v2205 = vrot.slane %v2189, 2
    %v2206 = vrot.slane %v2191, 2
    %v2207 = vsel %vm1532, %v2205, %v2206
    %v2208 = vrot.slane %v2190, 2
    %v2209 = vrot.slane %v2192, 2
    %v2210 = vsel %vm1532, %v2208, %v2209
    %v2211 = vrot.slane %v2193, 2
    %v2212 = vsel %vm1532, %v2206, %v2211
    %v2213 = vrot.slane %v2194, 2
    %v2214 = vsel %vm1532, %v2209, %v2213
    %v2215 = vrot.slane %v2195, 2
    %v2216 = vsel %vm1532, %v2211, %v2215
    %v2217 = vrot.slane %v2196, 2
    %v2218 = vsel %vm1532, %v2213, %v2217
    %2219 = vrot.lane.b32.xlu0 %v2207, 126
    %v2220 = vpop.permute.xlu0 %2219
    %2221 = vrot.lane.b32.xlu0 %v2210, 126
    %v2222 = vpop.permute.xlu0 %2221
    %2223 = vrot.lane.b32.xlu0 %v2212, 126
    %v2224 = vpop.permute.xlu0 %2223
    %2225 = vrot.lane.b32.xlu0 %v2214, 126
    %v2226 = vpop.permute.xlu0 %2225
    %2227 = vrot.lane.b32.xlu0 %v2216, 126
    %v2228 = vpop.permute.xlu0 %2227
    %2229 = vrot.lane.b32.xlu0 %v2218, 126
    %v2230 = vpop.permute.xlu0 %2229
    %2231 = vrot.lane.b32.xlu0 %v2215, 126
    %v2232 = vpop.permute.xlu0 %2231
    %2233 = vrot.lane.b32.xlu0 %v2217, 126
    %v2234 = vpop.permute.xlu0 %2233
    %v2235 = vsel %vm574, %v2220, %v2222
    %v2236 = vsel %vm574, %v2224, %v2226
    %v2237 = vsel %vm574, %v2228, %v2230
    %v2238 = vsel %vm574, %v2232, %v2234
    %v2247 = vadd.f32 %v1971, %v2235
    %v2248 = vadd.f32 %v1972, %v2222
    %v2249 = vadd.f32 %v1973, %v2236
    %v2250 = vadd.f32 %v1974, %v2226
    %v2251 = vadd.f32 %v1975, %v2237
    %v2252 = vadd.f32 %v1976, %v2230
    %v2253 = vadd.f32 %v1977, %v2238
    %v2254 = vadd.f32 %v1978, %v2234
    %s2255 = sld [smem:[#allocation8]]
    %v2256 = vstv %s2255
    %v2257 = vadd.f32 %v2043, %v2256
    %v2258 = vadd.f32 %v2044, %v2256
    %v2259 = vadd.f32 %v2045, %v2256
    %v2260 = vadd.f32 %v2046, %v2256
    %v2261 = vadd.f32 %v2047, %v2256
    %v2262 = vadd.f32 %v2048, %v2256
    %v2263 = vadd.f32 %v2049, %v2256
    %v2264 = vadd.f32 %v2050, %v2256
    %v2265 = vmax.f32 %v2257, 0.0
    %v2266 = vmax.f32 %v2258, 0.0
    %v2267 = vmax.f32 %v2259, 0.0
    %v2268 = vmax.f32 %v2260, 0.0
    %v2269 = vmax.f32 %v2261, 0.0
    %v2270 = vmax.f32 %v2262, 0.0
    %v2271 = vmax.f32 %v2263, 0.0
    %v2272 = vmax.f32 %v2264, 0.0
    %2273 = vst [vmem:[#allocation3] sm:$0xff] %v2265
    %vm2274 = vcmask 785408
    %2275 = vst.msk [vmem:[#allocation3 + $0x8] sm:$0xff] %vm2274, %v2266
    %2276 = vst [vmem:[#allocation3 + $0x10] sm:$0xff] %v2267
    %2277 = vst.msk [vmem:[#allocation3 + $0x18] sm:$0xff] %vm2274, %v2268
    %2278 = vst [vmem:[#allocation3 + $0x20] sm:$0xff] %v2269
    %2279 = vst.msk [vmem:[#allocation3 + $0x28] sm:$0xff] %vm2274, %v2270
    %2280 = vst [vmem:[#allocation3 + $0x30] sm:$0xf] %v2271
    %vm2281 = vcmask 781312
    %2282 = vst.msk [vmem:[#allocation3 + $0x38] sm:$0xf] %vm2281, %v2272
    %s2283 = sld [smem:[#allocation8 + $0x1]]
    %v2284 = vstv %s2283
    %v2285 = vadd.f32 %v2111, %v2284
    %v2286 = vadd.f32 %v2112, %v2284
    %v2287 = vadd.f32 %v2113, %v2284
    %v2288 = vadd.f32 %v2114, %v2284
    %v2289 = vadd.f32 %v2115, %v2284
    %v2290 = vadd.f32 %v2116, %v2284
    %v2291 = vadd.f32 %v2117, %v2284
    %v2292 = vadd.f32 %v2118, %v2284
    %v2293 = vmax.f32 %v2285, 0.0
    %v2294 = vmax.f32 %v2286, 0.0
    %v2295 = vmax.f32 %v2287, 0.0
    %v2296 = vmax.f32 %v2288, 0.0
    %v2297 = vmax.f32 %v2289, 0.0
    %v2298 = vmax.f32 %v2290, 0.0
    %v2299 = vmax.f32 %v2291, 0.0
    %v2300 = vmax.f32 %v2292, 0.0
    %vm2309 = vcmask 1043456
    %v2310 = vrot.slane %v2293, 4
    %v2311 = vrot.slane %v2294, 4
    %v2312 = vrot.slane %v2295, 4
    %v2313 = vsel %vm2309, %v2310, %v2312
    %v2314 = vrot.slane %v2296, 4
    %v2315 = vsel %vm2309, %v2311, %v2314
    %v2316 = vrot.slane %v2297, 4
    %v2317 = vsel %vm2309, %v2312, %v2316
    %v2318 = vrot.slane %v2298, 4
    %v2319 = vsel %vm2309, %v2314, %v2318
    %v2320 = vrot.slane %v2299, 4
    %v2321 = vsel %vm2309, %v2316, %v2320
    %v2322 = vrot.slane %v2300, 4
    %v2323 = vsel %vm2309, %v2318, %v2322
    %2332 = vst [vmem:[#allocation3 + $0x30] sm:$0xf0] %v2310
    %vm2333 = vcmask 785412
    %2334 = vst.msk [vmem:[#allocation3 + $0x38] sm:$0xf0] %vm2333, %v2311
    %2335 = vst [vmem:[#allocation3 + $0x40] sm:$0xff] %v2313
    %2336 = vst.msk [vmem:[#allocation3 + $0x48] sm:$0xff] %vm2274, %v2315
    %2337 = vst [vmem:[#allocation3 + $0x50] sm:$0xff] %v2317
    %2338 = vst.msk [vmem:[#allocation3 + $0x58] sm:$0xff] %vm2274, %v2319
    %2339 = vst [vmem:[#allocation3 + $0x60] sm:$0xff] %v2321
    %2340 = vst.msk [vmem:[#allocation3 + $0x68] sm:$0xff] %vm2274, %v2323
    %s2341 = sld [smem:[#allocation8 + $0x2]]
    %v2342 = vstv %s2341
    %v2343 = vadd.f32 %v2179, %v2342
    %v2344 = vadd.f32 %v2180, %v2342
    %v2345 = vadd.f32 %v2181, %v2342
    %v2346 = vadd.f32 %v2182, %v2342
    %v2347 = vadd.f32 %v2183, %v2342
    %v2348 = vadd.f32 %v2184, %v2342
    %v2349 = vadd.f32 %v2185, %v2342
    %v2350 = vadd.f32 %v2186, %v2342
    %v2351 = vmax.f32 %v2343, 0.0
    %v2352 = vmax.f32 %v2344, 0.0
    %v2353 = vmax.f32 %v2345, 0.0
    %v2354 = vmax.f32 %v2346, 0.0
    %v2355 = vmax.f32 %v2347, 0.0
    %v2356 = vmax.f32 %v2348, 0.0
    %v2357 = vmax.f32 %v2349, 0.0
    %v2358 = vmax.f32 %v2350, 0.0
    %2359 = vst [vmem:[#allocation3 + $0x70] sm:$0xff] %v2351
    %2360 = vst.msk [vmem:[#allocation3 + $0x78] sm:$0xff] %vm2274, %v2352
    %2361 = vst [vmem:[#allocation3 + $0x80] sm:$0xff] %v2353
    %2362 = vst.msk [vmem:[#allocation3 + $0x88] sm:$0xff] %vm2274, %v2354
    %2363 = vst [vmem:[#allocation3 + $0x90] sm:$0xff] %v2355
    %2364 = vst.msk [vmem:[#allocation3 + $0x98] sm:$0xff] %vm2274, %v2356
    %2365 = vst [vmem:[#allocation3 + $0xa0] sm:$0xf] %v2357
    %2366 = vst.msk [vmem:[#allocation3 + $0xa8] sm:$0xf] %vm2281, %v2358
    %s2367 = sld [smem:[#allocation8 + $0x3]]
    %v2368 = vstv %s2367
    %v2369 = vadd.f32 %v2247, %v2368
    %v2370 = vadd.f32 %v2248, %v2368
    %v2371 = vadd.f32 %v2249, %v2368
    %v2372 = vadd.f32 %v2250, %v2368
    %v2373 = vadd.f32 %v2251, %v2368
    %v2374 = vadd.f32 %v2252, %v2368
    %v2375 = vadd.f32 %v2253, %v2368
    %v2376 = vadd.f32 %v2254, %v2368
    %v2377 = vmax.f32 %v2369, 0.0
    %v2378 = vmax.f32 %v2370, 0.0
    %v2379 = vmax.f32 %v2371, 0.0
    %v2380 = vmax.f32 %v2372, 0.0
    %v2381 = vmax.f32 %v2373, 0.0
    %v2382 = vmax.f32 %v2374, 0.0
    %v2383 = vmax.f32 %v2375, 0.0
    %v2384 = vmax.f32 %v2376, 0.0
    %v2393 = vrot.slane %v2377, 4
    %v2394 = vrot.slane %v2378, 4
    %v2395 = vrot.slane %v2379, 4
    %v2396 = vsel %vm2309, %v2393, %v2395
    %v2397 = vrot.slane %v2380, 4
    %v2398 = vsel %vm2309, %v2394, %v2397
    %v2399 = vrot.slane %v2381, 4
    %v2400 = vsel %vm2309, %v2395, %v2399
    %v2401 = vrot.slane %v2382, 4
    %v2402 = vsel %vm2309, %v2397, %v2401
    %v2403 = vrot.slane %v2383, 4
    %v2404 = vsel %vm2309, %v2399, %v2403
    %v2405 = vrot.slane %v2384, 4
    %v2406 = vsel %vm2309, %v2401, %v2405
    %2415 = vst [vmem:[#allocation3 + $0xa0] sm:$0xf0] %v2393
    %2416 = vst.msk [vmem:[#allocation3 + $0xa8] sm:$0xf0] %vm2333, %v2394
    %2417 = vst [vmem:[#allocation3 + $0xb0] sm:$0xff] %v2396
    %2418 = vst.msk [vmem:[#allocation3 + $0xb8] sm:$0xff] %vm2274, %v2398
    %2419 = vst [vmem:[#allocation3 + $0xc0] sm:$0xff] %v2400
    %2420 = vst.msk [vmem:[#allocation3 + $0xc8] sm:$0xff] %vm2274, %v2402
    %2421 = vst [vmem:[#allocation3 + $0xd0] sm:$0xff] %v2404
    %2422 = vst.msk [vmem:[#allocation3 + $0xd8] sm:$0xff] %vm2274, %v2406
    %v2423 = vld [vmem:[#allocation3] sm:$0xff]
    %v2424 = vld [vmem:[#allocation3 + $0x8] sm:$0xff]
    %v2425 = vld [vmem:[#allocation3 + $0x10] sm:$0xff]
    %v2426 = vld [vmem:[#allocation3 + $0x18] sm:$0xff]
    %v2427 = vld [vmem:[#allocation3 + $0x20] sm:$0xff]
    %v2428 = vld [vmem:[#allocation3 + $0x28] sm:$0xff]
    %v2429 = vld [vmem:[#allocation3 + $0x30] sm:$0xff]
    %v2430 = vld [vmem:[#allocation3 + $0x38] sm:$0xff]
    %v2431 = vld [vmem:[#allocation3 + $0x40] sm:$0xff]
    %v2432 = vld [vmem:[#allocation3 + $0x48] sm:$0xff]
    %v2433 = vld [vmem:[#allocation3 + $0x50] sm:$0xff]
    %v2434 = vld [vmem:[#allocation3 + $0x58] sm:$0xff]
    %v2435 = vld [vmem:[#allocation3 + $0x60] sm:$0xff]
    %v2436 = vld [vmem:[#allocation3 + $0x68] sm:$0xff]
    %v2437 = vld [vmem:[#allocation3 + $0x70] sm:$0xff]
    %v2438 = vld [vmem:[#allocation3 + $0x78] sm:$0xff]
    %v2439 = vld [vmem:[#allocation3 + $0x80] sm:$0xff]
    %v2440 = vld [vmem:[#allocation3 + $0x88] sm:$0xff]
    %v2441 = vld [vmem:[#allocation3 + $0x90] sm:$0xff]
    %v2442 = vld [vmem:[#allocation3 + $0x98] sm:$0xff]
    %v2443 = vld [vmem:[#allocation3 + $0xa0] sm:$0xff]
    %v2444 = vld [vmem:[#allocation3 + $0xa8] sm:$0xff]
    %v2445 = vld [vmem:[#allocation3 + $0xb0] sm:$0xff]
    %v2446 = vld [vmem:[#allocation3 + $0xb8] sm:$0xff]
    %v2447 = vld [vmem:[#allocation3 + $0xc0] sm:$0xff]
    %v2448 = vld [vmem:[#allocation3 + $0xc8] sm:$0xff]
    %v2449 = vld [vmem:[#allocation3 + $0xd0] sm:$0xff]
    %v2450 = vld [vmem:[#allocation3 + $0xd8] sm:$0xff]
    %v2451 = vld [vmem:[%s7] sm:$0xff]
    %v2452 = vld [vmem:[%s7 + $0x8] sm:$0xff]
    %v2453 = vld [vmem:[%s7 + $0x10] sm:$0xff]
    %v2454 = vld [vmem:[%s7 + $0x18] sm:$0xff]
    %v2455 = vld [vmem:[%s7 + $0x20] sm:$0xff]
    %v2456 = vld [vmem:[%s7 + $0x28] sm:$0xff]
    %v2457 = vld [vmem:[%s7 + $0x30] sm:$0xff]
    %v2458 = vld [vmem:[%s7 + $0x38] sm:$0xff]
    %vm2459 = vcmask 916480
    %v2461 = vsel %vm2459, %v2451, 0
    %v2464 = vsel %vm2459, %v2452, 0
    %v2467 = vsel %vm2459, %v2453, 0
    %v2470 = vsel %vm2459, %v2454, 0
    %v2473 = vsel %vm2459, %v2455, 0
    %v2476 = vsel %vm2459, %v2456, 0
    %v2479 = vsel %vm2459, %v2457, 0
    %v2482 = vsel %vm2459, %v2458, 0
    %2484 = vmatprep.subr.mxu0 %v2424
    %2485 = vmatpush1.msra.mxu0 %v2423
    %2486 = vmatprep.subr.mxu0 %v2426
    %2487 = vmatpush1.msra.mxu0 %v2425
    %2488 = vmatprep.subr.mxu0 %v2428
    %2489 = vmatpush1.msra.mxu0 %v2427
    %2490 = vmatprep.subr.mxu0 %v2430
    %2491 = vmatpush1.msra.mxu0 %v2429
    %2492 = vmatprep.subr.mxu0 %v2432
    %2493 = vmatpush1.msra.mxu0 %v2431
    %2494 = vmatprep.subr.mxu0 %v2434
    %2495 = vmatpush1.msra.mxu0 %v2433
    %2496 = vmatprep.subr.mxu0 %v2436
    %2497 = vmatpush1.msra.mxu0 %v2435
    %2498 = vmatprep.subr.mxu0 %v2438
    %2499 = vmatpush1.msra.mxu0 %v2437
    %2500 = vmatprep.subr.mxu0 %v2440
    %2501 = vmatpush1.msra.mxu0 %v2439
    %2502 = vmatprep.subr.mxu0 %v2442
    %2503 = vmatpush1.msra.mxu0 %v2441
    %2504 = vmatprep.subr.mxu0 %v2444
    %2505 = vmatpush1.msra.mxu0 %v2443
    %2506 = vmatprep.subr.mxu0 %v2446
    %2507 = vmatpush1.msra.mxu0 %v2445
    %2508 = vmatprep.subr.mxu0 %v2448
    %2509 = vmatpush1.msra.mxu0 %v2447
    %2510 = vmatprep.subr.mxu0 %v2450
    %2511 = vmatpush1.msra.mxu0 %v2449
    %2512 = vmatprep.subr.mxu0 0.0
    %2513 = vmatpush1.msra.mxu0 0.0
    %2514 = vmatprep.subr.mxu0 0.0
    %2515 = vmatpush1.msra.mxu0 0.0
    %2516 = vmatprep.subr.mxu0 0.0
    %2517 = vmatpush1.msra.mxu0 0.0
    %2518 = vmatprep.subr.mxu0 0.0
    %2519 = vmatpush1.msra.mxu0 0.0
    %2520 = vmatprep.subr.mxu0 0.0
    %2521 = vmatpush1.msra.mxu0 0.0
    %2522 = vmatprep.subr.mxu0 0.0
    %2523 = vmatpush1.msra.mxu0 0.0
    %2524 = vmatprep.subr.mxu0 0.0
    %2525 = vmatpush1.msra.mxu0 0.0
    %2526 = vmatprep.subr.mxu0 0.0
    %2527 = vmatpush1.msra.mxu0 0.0
    %2528 = vmatprep.subr.mxu0 0.0
    %2529 = vmatpush1.msra.mxu0 0.0
    %2530 = vmatprep.subr.mxu0 0.0
    %2531 = vmatpush1.msra.mxu0 0.0
    %2532 = vmatprep.subr.mxu0 0.0
    %2533 = vmatpush1.msra.mxu0 0.0
    %2534 = vmatprep.subr.mxu0 0.0
    %2535 = vmatpush1.msra.mxu0 0.0
    %2536 = vmatprep.subr.mxu0 0.0
    %2537 = vmatpush1.msra.mxu0 0.0
    %2538 = vmatprep.subr.mxu0 0.0
    %2539 = vmatpush1.msra.mxu0 0.0
    %2540 = vmatprep.subr.mxu0 0.0
    %2541 = vmatpush1.msra.mxu0 0.0
    %2542 = vmatprep.subr.mxu0 0.0
    %2543 = vmatpush1.msra.mxu0 0.0
    %2544 = vmatprep.subr.mxu0 0.0
    %2545 = vmatpush1.msra.mxu0 0.0
    %2546 = vmatprep.subr.mxu0 0.0
    %2547 = vmatpush1.msra.mxu0 0.0
    %2548 = vmatprep.mubr.f32.mxu0 0.0
    %2549 = vmatmul.mubr.f32.gmra.mrb[0].mxu0 %v2461
    %v2550 = vpop.f32.mrb[0].mxu0
    %v2551 = vadd.f32 0.0, %v2550
    %v2552 = vpop.f32.mrb[0].mxu0
    %v2553 = vadd.f32 0.0, %v2552
    %2554 = vmatprep.mubr.f32.mxu0 0.0
    %2555 = vmatmul.mubr.f32.gmra.mrb[0].mxu0 %v2464
    %v2556 = vpop.f32.mrb[0].mxu0
    %v2557 = vadd.f32 0.0, %v2556
    %v2558 = vpop.f32.mrb[0].mxu0
    %v2559 = vadd.f32 0.0, %v2558
    %2560 = vmatprep.mubr.f32.mxu0 0.0
    %2561 = vmatmul.mubr.f32.gmra.mrb[0].mxu0 %v2467
    %v2562 = vpop.f32.mrb[0].mxu0
    %v2563 = vadd.f32 0.0, %v2562
    %v2564 = vpop.f32.mrb[0].mxu0
    %v2565 = vadd.f32 0.0, %v2564
    %2566 = vmatprep.mubr.f32.mxu0 0.0
    %2567 = vmatmul.mubr.f32.gmra.mrb[0].mxu0 %v2470
    %v2568 = vpop.f32.mrb[0].mxu0
    %v2569 = vadd.f32 0.0, %v2568
    %v2570 = vpop.f32.mrb[0].mxu0
    %v2571 = vadd.f32 0.0, %v2570
    %2572 = vmatprep.mubr.f32.mxu0 0.0
    %2573 = vmatmul.mubr.f32.gmra.mrb[0].mxu0 %v2473
    %v2574 = vpop.f32.mrb[0].mxu0
    %v2575 = vadd.f32 0.0, %v2574
    %v2576 = vpop.f32.mrb[0].mxu0
    %v2577 = vadd.f32 0.0, %v2576
    %2578 = vmatprep.mubr.f32.mxu0 0.0
    %2579 = vmatmul.mubr.f32.gmra.mrb[0].mxu0 %v2476
    %v2580 = vpop.f32.mrb[0].mxu0
    %v2581 = vadd.f32 0.0, %v2580
    %v2582 = vpop.f32.mrb[0].mxu0
    %v2583 = vadd.f32 0.0, %v2582
    %2584 = vmatprep.mubr.f32.mxu0 0.0
    %2585 = vmatmul.mubr.f32.gmra.mrb[0].mxu0 %v2479
    %v2586 = vpop.f32.mrb[0].mxu0
    %v2587 = vadd.f32 0.0, %v2586
    %v2588 = vpop.f32.mrb[0].mxu0
    %v2589 = vadd.f32 0.0, %v2588
    %2590 = vmatprep.mubr.f32.mxu0 0.0
    %2591 = vmatmul.mubr.f32.gmra.mrb[0].mxu0 %v2482
    %v2592 = vpop.f32.mrb[0].mxu0
    %v2593 = vadd.f32 0.0, %v2592
    %v2594 = vpop.f32.mrb[0].mxu0
    %v2595 = vadd.f32 0.0, %v2594
    %2596 = vdwg.mxu0
    %s2597 = scalar_lea.vmem %s7, 64
    %v2598 = vld [vmem:[%s2597] sm:$0xff]
    %v2599 = vld [vmem:[%s2597 + $0x8] sm:$0xff]
    %v2600 = vld [vmem:[%s2597 + $0x10] sm:$0xff]
    %v2601 = vld [vmem:[%s2597 + $0x18] sm:$0xff]
    %v2602 = vld [vmem:[%s2597 + $0x20] sm:$0xff]
    %v2603 = vld [vmem:[%s2597 + $0x28] sm:$0xff]
    %v2604 = vld [vmem:[%s2597 + $0x30] sm:$0xff]
    %v2605 = vld [vmem:[%s2597 + $0x38] sm:$0xff]
    %v2607 = vsel %vm2459, %v2598, 0
    %v2610 = vsel %vm2459, %v2599, 0
    %v2613 = vsel %vm2459, %v2600, 0
    %v2616 = vsel %vm2459, %v2601, 0
    %v2619 = vsel %vm2459, %v2602, 0
    %v2622 = vsel %vm2459, %v2603, 0
    %v2625 = vsel %vm2459, %v2604, 0
    %v2628 = vsel %vm2459, %v2605, 0
    %2630 = vmatprep.subr.mxu0 %v2424
    %2631 = vmatpush1.msra.mxu0 %v2423
    %2632 = vmatprep.subr.mxu0 %v2426
    %2633 = vmatpush1.msra.mxu0 %v2425
    %2634 = vmatprep.subr.mxu0 %v2428
    %2635 = vmatpush1.msra.mxu0 %v2427
    %2636 = vmatprep.subr.mxu0 %v2430
    %2637 = vmatpush1.msra.mxu0 %v2429
    %2638 = vmatprep.subr.mxu0 %v2432
    %2639 = vmatpush1.msra.mxu0 %v2431
    %2640 = vmatprep.subr.mxu0 %v2434
    %2641 = vmatpush1.msra.mxu0 %v2433
    %2642 = vmatprep.subr.mxu0 %v2436
    %2643 = vmatpush1.msra.mxu0 %v2435
    %2644 = vmatprep.subr.mxu0 %v2438
    %2645 = vmatpush1.msra.mxu0 %v2437
    %2646 = vmatprep.subr.mxu0 %v2440
    %2647 = vmatpush1.msra.mxu0 %v2439
    %2648 = vmatprep.subr.mxu0 %v2442
    %2649 = vmatpush1.msra.mxu0 %v2441
    %2650 = vmatprep.subr.mxu0 %v2444
    %2651 = vmatpush1.msra.mxu0 %v2443
    %2652 = vmatprep.subr.mxu0 %v2446
    %2653 = vmatpush1.msra.mxu0 %v2445
    %2654 = vmatprep.subr.mxu0 %v2448
    %2655 = vmatpush1.msra.mxu0 %v2447
    %2656 = vmatprep.subr.mxu0 %v2450
    %2657 = vmatpush1.msra.mxu0 %v2449
    %2658 = vmatprep.subr.mxu0 0.0
    %2659 = vmatpush1.msra.mxu0 0.0
    %2660 = vmatprep.subr.mxu0 0.0
    %2661 = vmatpush1.msra.mxu0 0.0
    %2662 = vmatprep.subr.mxu0 0.0
    %2663 = vmatpush1.msra.mxu0 0.0
    %2664 = vmatprep.subr.mxu0 0.0
    %2665 = vmatpush1.msra.mxu0 0.0
    %2666 = vmatprep.subr.mxu0 0.0
    %2667 = vmatpush1.msra.mxu0 0.0
    %2668 = vmatprep.subr.mxu0 0.0
    %2669 = vmatpush1.msra.mxu0 0.0
    %2670 = vmatprep.subr.mxu0 0.0
    %2671 = vmatpush1.msra.mxu0 0.0
    %2672 = vmatprep.subr.mxu0 0.0
    %2673 = vmatpush1.msra.mxu0 0.0
    %2674 = vmatprep.subr.mxu0 0.0
    %2675 = vmatpush1.msra.mxu0 0.0
    %2676 = vmatprep.subr.mxu0 0.0
    %2677 = vmatpush1.msra.mxu0 0.0
    %2678 = vmatprep.subr.mxu0 0.0
    %2679 = vmatpush1.msra.mxu0 0.0
    %2680 = vmatprep.subr.mxu0 0.0
    %2681 = vmatpush1.msra.mxu0 0.0
    %2682 = vmatprep.subr.mxu0 0.0
    %2683 = vmatpush1.msra.mxu0 0.0
    %2684 = vmatprep.subr.mxu0 0.0
    %2685 = vmatpush1.msra.mxu0 0.0
    %2686 = vmatprep.subr.mxu0 0.0
    %2687 = vmatpush1.msra.mxu0 0.0
    %2688 = vmatprep.subr.mxu0 0.0
    %2689 = vmatpush1.msra.mxu0 0.0
    %2690 = vmatprep.subr.mxu0 0.0
    %2691 = vmatpush1.msra.mxu0 0.0
    %2692 = vmatprep.subr.mxu0 0.0
    %2693 = vmatpush1.msra.mxu0 0.0
    %2694 = vmatprep.mubr.f32.mxu0 0.0
    %2695 = vmatmul.mubr.f32.gmra.mrb[0].mxu0 %v2607
    %v2696 = vpop.f32.mrb[0].mxu0
    %v2697 = vadd.f32 0.0, %v2696
    %v2698 = vpop.f32.mrb[0].mxu0
    %v2699 = vadd.f32 0.0, %v2698
    %2700 = vmatprep.mubr.f32.mxu0 0.0
    %2701 = vmatmul.mubr.f32.gmra.mrb[0].mxu0 %v2610
    %v2702 = vpop.f32.mrb[0].mxu0
    %v2703 = vadd.f32 0.0, %v2702
    %v2704 = vpop.f32.mrb[0].mxu0
    %v2705 = vadd.f32 0.0, %v2704
    %2706 = vmatprep.mubr.f32.mxu0 0.0
    %2707 = vmatmul.mubr.f32.gmra.mrb[0].mxu0 %v2613
    %v2708 = vpop.f32.mrb[0].mxu0
    %v2709 = vadd.f32 0.0, %v2708
    %v2710 = vpop.f32.mrb[0].mxu0
    %v2711 = vadd.f32 0.0, %v2710
    %2712 = vmatprep.mubr.f32.mxu0 0.0
    %2713 = vmatmul.mubr.f32.gmra.mrb[0].mxu0 %v2616
    %v2714 = vpop.f32.mrb[0].mxu0
    %v2715 = vadd.f32 0.0, %v2714
    %v2716 = vpop.f32.mrb[0].mxu0
    %v2717 = vadd.f32 0.0, %v2716
    %2718 = vmatprep.mubr.f32.mxu0 0.0
    %2719 = vmatmul.mubr.f32.gmra.mrb[0].mxu0 %v2619
    %v2720 = vpop.f32.mrb[0].mxu0
    %v2721 = vadd.f32 0.0, %v2720
    %v2722 = vpop.f32.mrb[0].mxu0
    %v2723 = vadd.f32 0.0, %v2722
    %2724 = vmatprep.mubr.f32.mxu0 0.0
    %2725 = vmatmul.mubr.f32.gmra.mrb[0].mxu0 %v2622
    %v2726 = vpop.f32.mrb[0].mxu0
    %v2727 = vadd.f32 0.0, %v2726
    %v2728 = vpop.f32.mrb[0].mxu0
    %v2729 = vadd.f32 0.0, %v2728
    %2730 = vmatprep.mubr.f32.mxu0 0.0
    %2731 = vmatmul.mubr.f32.gmra.mrb[0].mxu0 %v2625
    %v2732 = vpop.f32.mrb[0].mxu0
    %v2733 = vadd.f32 0.0, %v2732
    %v2734 = vpop.f32.mrb[0].mxu0
    %v2735 = vadd.f32 0.0, %v2734
    %2736 = vmatprep.mubr.f32.mxu0 0.0
    %2737 = vmatmul.mubr.f32.gmra.mrb[0].mxu0 %v2628
    %v2738 = vpop.f32.mrb[0].mxu0
    %v2739 = vadd.f32 0.0, %v2738
    %v2740 = vpop.f32.mrb[0].mxu0
    %v2741 = vadd.f32 0.0, %v2740
    %2742 = vdwg.mxu0
    %v2743 = vmax.f32 %v2551, %v2697
    %v2744 = vmax.f32 %v2553, %v2699
    %v2745 = vmax.f32 %v2557, %v2703
    %v2746 = vmax.f32 %v2559, %v2705
    %v2747 = vmax.f32 %v2563, %v2709
    %v2748 = vmax.f32 %v2565, %v2711
    %v2749 = vmax.f32 %v2569, %v2715
    %v2750 = vmax.f32 %v2571, %v2717
    %v2751 = vmax.f32 %v2575, %v2721
    %v2752 = vmax.f32 %v2577, %v2723
    %v2753 = vmax.f32 %v2581, %v2727
    %v2754 = vmax.f32 %v2583, %v2729
    %v2755 = vmax.f32 %v2587, %v2733
    %v2756 = vmax.f32 %v2589, %v2735
    %v2757 = vmax.f32 %v2593, %v2739
    %v2758 = vmax.f32 %v2595, %v2741
    %v2759 = vld [vmem:[%s8] sm:$0xff]
    %v2760 = vld [vmem:[%s8 + $0x8] sm:$0xff]
    %v2761 = vld [vmem:[%s8 + $0x10] sm:$0xff]
    %v2762 = vld [vmem:[%s8 + $0x18] sm:$0xff]
    %v2763 = vld [vmem:[%s8 + $0x20] sm:$0xff]
    %v2764 = vld [vmem:[%s8 + $0x28] sm:$0xff]
    %v2765 = vld [vmem:[%s8 + $0x30] sm:$0xff]
    %v2766 = vld [vmem:[%s8 + $0x38] sm:$0xff]
    %v2767 = vld [vmem:[%s8 + $0x40] sm:$0xff]
    %v2768 = vld [vmem:[%s8 + $0x48] sm:$0xff]
    %v2769 = vld [vmem:[%s8 + $0x50] sm:$0xff]
    %v2770 = vld [vmem:[%s8 + $0x58] sm:$0xff]
    %v2771 = vld [vmem:[%s8 + $0x60] sm:$0xff]
    %v2772 = vld [vmem:[%s8 + $0x68] sm:$0xff]
    %v2773 = vld [vmem:[%s8 + $0x70] sm:$0xff]
    %v2774 = vld [vmem:[%s8 + $0x78] sm:$0xff]
    %v2775 = vld [vmem:[%s8 + $0x80] sm:$0xff]
    %v2776 = vld [vmem:[%s8 + $0x88] sm:$0xff]
    %v2777 = vld [vmem:[%s8 + $0x90] sm:$0xff]
    %v2778 = vld [vmem:[%s8 + $0x98] sm:$0xff]
    %v2779 = vld [vmem:[%s8 + $0xa0] sm:$0xff]
    %v2780 = vld [vmem:[%s8 + $0xa8] sm:$0xff]
    %v2781 = vld [vmem:[%s8 + $0xb0] sm:$0xff]
    %v2782 = vld [vmem:[%s8 + $0xb8] sm:$0xff]
    %v2783 = vld [vmem:[%s8 + $0xc0] sm:$0xff]
    %v2784 = vld [vmem:[%s8 + $0xc8] sm:$0xff]
    %v2785 = vld [vmem:[%s8 + $0xd0] sm:$0xff]
    %v2786 = vld [vmem:[%s8 + $0xd8] sm:$0xff]
    %v2788 = vsel %vm2274, %v2744, 0
    %v2791 = vsel %vm2274, %v2746, 0
    %v2794 = vsel %vm2274, %v2748, 0
    %v2797 = vsel %vm2274, %v2750, 0
    %v2800 = vsel %vm2274, %v2752, 0
    %v2803 = vsel %vm2274, %v2754, 0
    %v2806 = vsel %vm2274, %v2756, 0
    %v2809 = vsel %vm2274, %v2758, 0
    %2811 = vmatprep.subr.mxu0 0.0
    %2812 = vmatpush1.msra.mxu0 %v2759
    %2813 = vmatprep.subr.mxu0 0.0
    %2814 = vmatpush1.msra.mxu0 %v2760
    %2815 = vmatprep.subr.mxu0 0.0
    %2816 = vmatpush1.msra.mxu0 %v2761
    %2817 = vmatprep.subr.mxu0 0.0
    %2818 = vmatpush1.msra.mxu0 %v2762
    %2819 = vmatprep.subr.mxu0 0.0
    %2820 = vmatpush1.msra.mxu0 %v2763
    %2821 = vmatprep.subr.mxu0 0.0
    %2822 = vmatpush1.msra.mxu0 %v2764
    %2823 = vmatprep.subr.mxu0 0.0
    %2824 = vmatpush1.msra.mxu0 %v2765
    %2825 = vmatprep.subr.mxu0 0.0
    %2826 = vmatpush1.msra.mxu0 %v2766
    %2827 = vmatprep.subr.mxu0 0.0
    %2828 = vmatpush1.msra.mxu0 %v2767
    %2829 = vmatprep.subr.mxu0 0.0
    %2830 = vmatpush1.msra.mxu0 %v2768
    %2831 = vmatprep.subr.mxu0 0.0
    %2832 = vmatpush1.msra.mxu0 %v2769
    %2833 = vmatprep.subr.mxu0 0.0
    %2834 = vmatpush1.msra.mxu0 %v2770
    %2835 = vmatprep.subr.mxu0 0.0
    %2836 = vmatpush1.msra.mxu0 %v2771
    %2837 = vmatprep.subr.mxu0 0.0
    %2838 = vmatpush1.msra.mxu0 %v2772
    %2839 = vmatprep.subr.mxu0 0.0
    %2840 = vmatpush1.msra.mxu0 %v2773
    %2841 = vmatprep.subr.mxu0 0.0
    %2842 = vmatpush1.msra.mxu0 %v2774
    %2843 = vmatprep.subr.mxu0 0.0
    %2844 = vmatpush1.msra.mxu0 %v2775
    %2845 = vmatprep.subr.mxu0 0.0
    %2846 = vmatpush1.msra.mxu0 %v2776
    %2847 = vmatprep.subr.mxu0 0.0
    %2848 = vmatpush1.msra.mxu0 %v2777
    %2849 = vmatprep.subr.mxu0 0.0
    %2850 = vmatpush1.msra.mxu0 %v2778
    %2851 = vmatprep.subr.mxu0 0.0
    %2852 = vmatpush1.msra.mxu0 %v2779
    %2853 = vmatprep.subr.mxu0 0.0
    %2854 = vmatpush1.msra.mxu0 %v2780
    %2855 = vmatprep.subr.mxu0 0.0
    %2856 = vmatpush1.msra.mxu0 %v2781
    %2857 = vmatprep.subr.mxu0 0.0
    %2858 = vmatpush1.msra.mxu0 %v2782
    %2859 = vmatprep.subr.mxu0 0.0
    %2860 = vmatpush1.msra.mxu0 %v2783
    %2861 = vmatprep.subr.mxu0 0.0
    %2862 = vmatpush1.msra.mxu0 %v2784
    %2863 = vmatprep.subr.mxu0 0.0
    %2864 = vmatpush1.msra.mxu0 %v2785
    %2865 = vmatprep.subr.mxu0 0.0
    %2866 = vmatpush1.msra.mxu0 %v2786
    %2867 = vmatprep.subr.mxu0 0.0
    %2868 = vmatpush1.msra.mxu0 0.0
    %2869 = vmatprep.subr.mxu0 0.0
    %2870 = vmatpush1.msra.mxu0 0.0
    %2871 = vmatprep.subr.mxu0 0.0
    %2872 = vmatpush1.msra.mxu0 0.0
    %2873 = vmatprep.subr.mxu0 0.0
    %2874 = vmatpush1.msra.mxu0 0.0
    %2875 = vmatprep.mubr.f32.mxu0 %v2788
    %2876 = vmatmul.mubr.f32.gmra.mrb[0].mxu0 %v2743
    %v2877 = vpop.f32.mrb[0].mxu0
    %v2878 = vadd.f32 0.0, %v2877
    %v2879 = vpop.f32.mrb[0].mxu0
    %2880 = vmatprep.mubr.f32.mxu0 %v2791
    %2881 = vmatmul.mubr.f32.gmra.mrb[0].mxu0 %v2745
    %v2882 = vpop.f32.mrb[0].mxu0
    %v2883 = vadd.f32 0.0, %v2882
    %v2884 = vpop.f32.mrb[0].mxu0
    %2885 = vmatprep.mubr.f32.mxu0 %v2794
    %2886 = vmatmul.mubr.f32.gmra.mrb[0].mxu0 %v2747
    %v2887 = vpop.f32.mrb[0].mxu0
    %v2888 = vadd.f32 0.0, %v2887
    %v2889 = vpop.f32.mrb[0].mxu0
    %2890 = vmatprep.mubr.f32.mxu0 %v2797
    %2891 = vmatmul.mubr.f32.gmra.mrb[0].mxu0 %v2749
    %v2892 = vpop.f32.mrb[0].mxu0
    %v2893 = vadd.f32 0.0, %v2892
    %v2894 = vpop.f32.mrb[0].mxu0
    %2895 = vmatprep.mubr.f32.mxu0 %v2800
    %2896 = vmatmul.mubr.f32.gmra.mrb[0].mxu0 %v2751
    %v2897 = vpop.f32.mrb[0].mxu0
    %v2898 = vadd.f32 0.0, %v2897
    %v2899 = vpop.f32.mrb[0].mxu0
    %2900 = vmatprep.mubr.f32.mxu0 %v2803
    %2901 = vmatmul.mubr.f32.gmra.mrb[0].mxu0 %v2753
    %v2902 = vpop.f32.mrb[0].mxu0
    %v2903 = vadd.f32 0.0, %v2902
    %v2904 = vpop.f32.mrb[0].mxu0
    %2905 = vmatprep.mubr.f32.mxu0 %v2806
    %2906 = vmatmul.mubr.f32.gmra.mrb[0].mxu0 %v2755
    %v2907 = vpop.f32.mrb[0].mxu0
    %v2908 = vadd.f32 0.0, %v2907
    %v2909 = vpop.f32.mrb[0].mxu0
    %2910 = vmatprep.mubr.f32.mxu0 %v2809
    %2911 = vmatmul.mubr.f32.gmra.mrb[0].mxu0 %v2757
    %v2912 = vpop.f32.mrb[0].mxu0
    %v2913 = vadd.f32 0.0, %v2912
    %v2914 = vpop.f32.mrb[0].mxu0
    %2915 = vdwg.mxu0
    %s2916 = scalar_lea.vmem %s8, 224
    %v2917 = vld [vmem:[%s2916] sm:$0xff]
    %v2918 = vld [vmem:[%s2916 + $0x8] sm:$0xff]
    %v2919 = vld [vmem:[%s2916 + $0x10] sm:$0xff]
    %v2920 = vld [vmem:[%s2916 + $0x18] sm:$0xff]
    %v2921 = vld [vmem:[%s2916 + $0x20] sm:$0xff]
    %v2922 = vld [vmem:[%s2916 + $0x28] sm:$0xff]
    %v2923 = vld [vmem:[%s2916 + $0x30] sm:$0xff]
    %v2924 = vld [vmem:[%s2916 + $0x38] sm:$0xff]
    %v2925 = vld [vmem:[%s2916 + $0x40] sm:$0xff]
    %v2926 = vld [vmem:[%s2916 + $0x48] sm:$0xff]
    %v2927 = vld [vmem:[%s2916 + $0x50] sm:$0xff]
    %v2928 = vld [vmem:[%s2916 + $0x58] sm:$0xff]
    %v2929 = vld [vmem:[%s2916 + $0x60] sm:$0xff]
    %v2930 = vld [vmem:[%s2916 + $0x68] sm:$0xff]
    %v2931 = vld [vmem:[%s2916 + $0x70] sm:$0xff]
    %v2932 = vld [vmem:[%s2916 + $0x78] sm:$0xff]
    %v2933 = vld [vmem:[%s2916 + $0x80] sm:$0xff]
    %v2934 = vld [vmem:[%s2916 + $0x88] sm:$0xff]
    %v2935 = vld [vmem:[%s2916 + $0x90] sm:$0xff]
    %v2936 = vld [vmem:[%s2916 + $0x98] sm:$0xff]
    %v2937 = vld [vmem:[%s2916 + $0xa0] sm:$0xff]
    %v2938 = vld [vmem:[%s2916 + $0xa8] sm:$0xff]
    %v2939 = vld [vmem:[%s2916 + $0xb0] sm:$0xff]
    %v2940 = vld [vmem:[%s2916 + $0xb8] sm:$0xff]
    %v2941 = vld [vmem:[%s2916 + $0xc0] sm:$0xff]
    %v2942 = vld [vmem:[%s2916 + $0xc8] sm:$0xff]
    %v2943 = vld [vmem:[%s2916 + $0xd0] sm:$0xff]
    %v2944 = vld [vmem:[%s2916 + $0xd8] sm:$0xff]
    %2945 = vmatprep.subr.mxu0 0.0
    %2946 = vmatpush1.msra.mxu0 %v2917
    %2947 = vmatprep.subr.mxu0 0.0
    %2948 = vmatpush1.msra.mxu0 %v2918
    %2949 = vmatprep.subr.mxu0 0.0
    %2950 = vmatpush1.msra.mxu0 %v2919
    %2951 = vmatprep.subr.mxu0 0.0
    %2952 = vmatpush1.msra.mxu0 %v2920
    %2953 = vmatprep.subr.mxu0 0.0
    %2954 = vmatpush1.msra.mxu0 %v2921
    %2955 = vmatprep.subr.mxu0 0.0
    %2956 = vmatpush1.msra.mxu0 %v2922
    %2957 = vmatprep.subr.mxu0 0.0
    %2958 = vmatpush1.msra.mxu0 %v2923
    %2959 = vmatprep.subr.mxu0 0.0
    %2960 = vmatpush1.msra.mxu0 %v2924
    %2961 = vmatprep.subr.mxu0 0.0
    %2962 = vmatpush1.msra.mxu0 %v2925
    %2963 = vmatprep.subr.mxu0 0.0
    %2964 = vmatpush1.msra.mxu0 %v2926
    %2965 = vmatprep.subr.mxu0 0.0
    %2966 = vmatpush1.msra.mxu0 %v2927
    %2967 = vmatprep.subr.mxu0 0.0
    %2968 = vmatpush1.msra.mxu0 %v2928
    %2969 = vmatprep.subr.mxu0 0.0
    %2970 = vmatpush1.msra.mxu0 %v2929
    %2971 = vmatprep.subr.mxu0 0.0
    %2972 = vmatpush1.msra.mxu0 %v2930
    %2973 = vmatprep.subr.mxu0 0.0
    %2974 = vmatpush1.msra.mxu0 %v2931
    %2975 = vmatprep.subr.mxu0 0.0
    %2976 = vmatpush1.msra.mxu0 %v2932
    %2977 = vmatprep.subr.mxu0 0.0
    %2978 = vmatpush1.msra.mxu0 %v2933
    %2979 = vmatprep.subr.mxu0 0.0
    %2980 = vmatpush1.msra.mxu0 %v2934
    %2981 = vmatprep.subr.mxu0 0.0
    %2982 = vmatpush1.msra.mxu0 %v2935
    %2983 = vmatprep.subr.mxu0 0.0
    %2984 = vmatpush1.msra.mxu0 %v2936
    %2985 = vmatprep.subr.mxu0 0.0
    %2986 = vmatpush1.msra.mxu0 %v2937
    %2987 = vmatprep.subr.mxu0 0.0
    %2988 = vmatpush1.msra.mxu0 %v2938
    %2989 = vmatprep.subr.mxu0 0.0
    %2990 = vmatpush1.msra.mxu0 %v2939
    %2991 = vmatprep.subr.mxu0 0.0
    %2992 = vmatpush1.msra.mxu0 %v2940
    %2993 = vmatprep.subr.mxu0 0.0
    %2994 = vmatpush1.msra.mxu0 %v2941
    %2995 = vmatprep.subr.mxu0 0.0
    %2996 = vmatpush1.msra.mxu0 %v2942
    %2997 = vmatprep.subr.mxu0 0.0
    %2998 = vmatpush1.msra.mxu0 %v2943
    %2999 = vmatprep.subr.mxu0 0.0
    %3000 = vmatpush1.msra.mxu0 %v2944
    %3001 = vmatprep.subr.mxu0 0.0
    %3002 = vmatpush1.msra.mxu0 0.0
    %3003 = vmatprep.subr.mxu0 0.0
    %3004 = vmatpush1.msra.mxu0 0.0
    %3005 = vmatprep.subr.mxu0 0.0
    %3006 = vmatpush1.msra.mxu0 0.0
    %3007 = vmatprep.subr.mxu0 0.0
    %3008 = vmatpush1.msra.mxu0 0.0
    %3009 = vmatprep.mubr.f32.mxu0 %v2788
    %3010 = vmatmul.mubr.f32.gmra.mrb[0].mxu0 %v2743
    %v3011 = vpop.f32.mrb[0].mxu0
    %v3012 = vadd.f32 0.0, %v3011
    %v3013 = vpop.f32.mrb[0].mxu0
    %3014 = vmatprep.mubr.f32.mxu0 %v2791
    %3015 = vmatmul.mubr.f32.gmra.mrb[0].mxu0 %v2745
    %v3016 = vpop.f32.mrb[0].mxu0
    %v3017 = vadd.f32 0.0, %v3016
    %v3018 = vpop.f32.mrb[0].mxu0
    %3019 = vmatprep.mubr.f32.mxu0 %v2794
    %3020 = vmatmul.mubr.f32.gmra.mrb[0].mxu0 %v2747
    %v3021 = vpop.f32.mrb[0].mxu0
    %v3022 = vadd.f32 0.0, %v3021
    %v3023 = vpop.f32.mrb[0].mxu0
    %3024 = vmatprep.mubr.f32.mxu0 %v2797
    %3025 = vmatmul.mubr.f32.gmra.mrb[0].mxu0 %v2749
    %v3026 = vpop.f32.mrb[0].mxu0
    %v3027 = vadd.f32 0.0, %v3026
    %v3028 = vpop.f32.mrb[0].mxu0
    %3029 = vmatprep.mubr.f32.mxu0 %v2800
    %3030 = vmatmul.mubr.f32.gmra.mrb[0].mxu0 %v2751
    %v3031 = vpop.f32.mrb[0].mxu0
    %v3032 = vadd.f32 0.0, %v3031
    %v3033 = vpop.f32.mrb[0].mxu0
    %3034 = vmatprep.mubr.f32.mxu0 %v2803
    %3035 = vmatmul.mubr.f32.gmra.mrb[0].mxu0 %v2753
    %v3036 = vpop.f32.mrb[0].mxu0
    %v3037 = vadd.f32 0.0, %v3036
    %v3038 = vpop.f32.mrb[0].mxu0
    %3039 = vmatprep.mubr.f32.mxu0 %v2806
    %3040 = vmatmul.mubr.f32.gmra.mrb[0].mxu0 %v2755
    %v3041 = vpop.f32.mrb[0].mxu0
    %v3042 = vadd.f32 0.0, %v3041
    %v3043 = vpop.f32.mrb[0].mxu0
    %3044 = vmatprep.mubr.f32.mxu0 %v2809
    %3045 = vmatmul.mubr.f32.gmra.mrb[0].mxu0 %v2757
    %v3046 = vpop.f32.mrb[0].mxu0
    %v3047 = vadd.f32 0.0, %v3046
    %v3048 = vpop.f32.mrb[0].mxu0
    %3049 = vdwg.mxu0
    %v3050 = vmax.f32 %v2878, %v3012
    %v3051 = vmax.f32 %v2883, %v3017
    %v3052 = vmax.f32 %v2888, %v3022
    %v3053 = vmax.f32 %v2893, %v3027
    %v3054 = vmax.f32 %v2898, %v3032
    %v3055 = vmax.f32 %v2903, %v3037
    %v3056 = vmax.f32 %v2908, %v3042
    %v3057 = vmax.f32 %v2913, %v3047
    %vm3058 = vcmask 932864
    %3059 = vst.msk [vmem:[#allocation4] sm:$0xff] %vm3058, %v3050
    %3060 = vst.msk [vmem:[#allocation4 + $0x8] sm:$0xff] %vm3058, %v3051
    %3061 = vst.msk [vmem:[#allocation4 + $0x10] sm:$0xff] %vm3058, %v3052
    %3062 = vst.msk [vmem:[#allocation4 + $0x18] sm:$0xff] %vm3058, %v3053
    %3063 = vst.msk [vmem:[#allocation4 + $0x20] sm:$0xff] %vm3058, %v3054
    %3064 = vst.msk [vmem:[#allocation4 + $0x28] sm:$0xff] %vm3058, %v3055
    %3065 = vst.msk [vmem:[#allocation4 + $0x30] sm:$0xff] %vm3058, %v3056
    %3066 = vst.msk [vmem:[#allocation4 + $0x38] sm:$0xff] %vm3058, %v3057
    %v3067 = vld [vmem:[%s6] sm:$0x3]
    %v3068 = vld [vmem:[#allocation4] sm:$0xff]
    %v3069 = vld [vmem:[#allocation4 + $0x8] sm:$0x3f]
    %v3070 = vlaneseq
    %v3071 = vshrl.u32 %v3070, 7
    %v3072 = vsub.s32 0, %v3071
    %v3073 = vrot.slane %v3067, %v3072
    %v3074 = vmul.f32 %v3068, %v3073
    %v3075 = vmul.f32 %v3069, %v3073
    %s3076 = sld [smem:[#allocation10]]
    %v3077 = vstv %s3076
    %v3078 = vmul.f32 %v3074, %v3077
    %v3079 = vmul.f32 %v3075, %v3077
    %v3080 = vadd.f32 %v3078, 0.0
    %v3081 = vadd.f32 %v3079, 0.0
    %s3082 = sld [smem:[#allocation10 + $0x1]]
    %v3083 = vstv %s3082
    %v3084 = vmul.f32 %v3074, %v3083
    %v3085 = vmul.f32 %v3075, %v3083
    %v3086 = vadd.f32 %v3084, 0.0
    %v3087 = vadd.f32 %v3085, 0.0
    %s3088 = sld [smem:[#allocation10 + $0x2]]
    %v3089 = vstv %s3088
    %v3090 = vmul.f32 %v3074, %v3089
    %v3091 = vmul.f32 %v3075, %v3089
    %v3092 = vadd.f32 %v3090, 0.0
    %v3093 = vadd.f32 %v3091, 0.0
    %s3094 = sld [smem:[#allocation10 + $0x3]]
    %v3095 = vstv %s3094
    %v3096 = vmul.f32 %v3074, %v3095
    %v3097 = vmul.f32 %v3075, %v3095
    %v3098 = vadd.f32 %v3096, 0.0
    %v3099 = vadd.f32 %v3097, 0.0
    %s3100 = sld [smem:[#allocation10 + $0x4]]
    %v3101 = vstv %s3100
    %v3102 = vmul.f32 %v3074, %v3101
    %v3103 = vmul.f32 %v3075, %v3101
    %v3104 = vadd.f32 %v3102, 0.0
    %v3105 = vadd.f32 %v3103, 0.0
    %s3106 = sld [smem:[#allocation10 + $0x5]]
    %v3107 = vstv %s3106
    %v3108 = vmul.f32 %v3074, %v3107
    %v3109 = vmul.f32 %v3075, %v3107
    %v3110 = vadd.f32 %v3108, 0.0
    %v3111 = vadd.f32 %v3109, 0.0
    %s3112 = sld [smem:[#allocation10 + $0x6]]
    %v3113 = vstv %s3112
    %v3114 = vmul.f32 %v3074, %v3113
    %v3115 = vmul.f32 %v3075, %v3113
    %v3116 = vadd.f32 %v3114, 0.0
    %v3117 = vadd.f32 %v3115, 0.0
    %s3118 = sld [smem:[#allocation10 + $0x7]]
    %v3119 = vstv %s3118
    %v3120 = vmul.f32 %v3074, %v3119
    %v3121 = vmul.f32 %v3075, %v3119
    %v3122 = vadd.f32 %v3120, 0.0
    %v3123 = vadd.f32 %v3121, 0.0
    %s3124 = sld [smem:[#allocation10 + $0x20]]
    %v3125 = vstv %s3124
    %v3126 = vmul.f32 %v3068, %v3125
    %v3127 = vmul.f32 %v3069, %v3125
    %3130 = vrot.lane.b32.xlu0 %v3126, 127
    %v3131 = vpop.permute.xlu0 %3130
    %3132 = vrot.lane.b32.xlu0 %v3127, 127
    %v3133 = vpop.permute.xlu0 %3132
    %v3136 = vadd.f32 %v3080, %v3131
    %v3137 = vadd.f32 %v3081, %v3133
    %s3138 = sld [smem:[#allocation10 + $0x21]]
    %v3139 = vstv %s3138
    %v3140 = vmul.f32 %v3068, %v3139
    %v3141 = vmul.f32 %v3069, %v3139
    %3144 = vrot.lane.b32.xlu0 %v3140, 127
    %v3145 = vpop.permute.xlu0 %3144
    %3146 = vrot.lane.b32.xlu0 %v3141, 127
    %v3147 = vpop.permute.xlu0 %3146
    %v3150 = vadd.f32 %v3086, %v3145
    %v3151 = vadd.f32 %v3087, %v3147
    %s3152 = sld [smem:[#allocation10 + $0x22]]
    %v3153 = vstv %s3152
    %v3154 = vmul.f32 %v3068, %v3153
    %v3155 = vmul.f32 %v3069, %v3153
    %3158 = vrot.lane.b32.xlu0 %v3154, 127
    %v3159 = vpop.permute.xlu0 %3158
    %3160 = vrot.lane.b32.xlu0 %v3155, 127
    %v3161 = vpop.permute.xlu0 %3160
    %v3164 = vadd.f32 %v3092, %v3159
    %v3165 = vadd.f32 %v3093, %v3161
    %s3166 = sld [smem:[#allocation10 + $0x23]]
    %v3167 = vstv %s3166
    %v3168 = vmul.f32 %v3068, %v3167
    %v3169 = vmul.f32 %v3069, %v3167
    %3172 = vrot.lane.b32.xlu0 %v3168, 127
    %v3173 = vpop.permute.xlu0 %3172
    %3174 = vrot.lane.b32.xlu0 %v3169, 127
    %v3175 = vpop.permute.xlu0 %3174
    %v3178 = vadd.f32 %v3098, %v3173
    %v3179 = vadd.f32 %v3099, %v3175
    %s3180 = sld [smem:[#allocation10 + $0x24]]
    %v3181 = vstv %s3180
    %v3182 = vmul.f32 %v3068, %v3181
    %v3183 = vmul.f32 %v3069, %v3181
    %3186 = vrot.lane.b32.xlu0 %v3182, 127
    %v3187 = vpop.permute.xlu0 %3186
    %3188 = vrot.lane.b32.xlu0 %v3183, 127
    %v3189 = vpop.permute.xlu0 %3188
    %v3192 = vadd.f32 %v3104, %v3187
    %v3193 = vadd.f32 %v3105, %v3189
    %s3194 = sld [smem:[#allocation10 + $0x25]]
    %v3195 = vstv %s3194
    %v3196 = vmul.f32 %v3068, %v3195
    %v3197 = vmul.f32 %v3069, %v3195
    %3200 = vrot.lane.b32.xlu0 %v3196, 127
    %v3201 = vpop.permute.xlu0 %3200
    %3202 = vrot.lane.b32.xlu0 %v3197, 127
    %v3203 = vpop.permute.xlu0 %3202
    %v3206 = vadd.f32 %v3110, %v3201
    %v3207 = vadd.f32 %v3111, %v3203
    %s3208 = sld [smem:[#allocation10 + $0x26]]
    %v3209 = vstv %s3208
    %v3210 = vmul.f32 %v3068, %v3209
    %v3211 = vmul.f32 %v3069, %v3209
    %3214 = vrot.lane.b32.xlu0 %v3210, 127
    %v3215 = vpop.permute.xlu0 %3214
    %3216 = vrot.lane.b32.xlu0 %v3211, 127
    %v3217 = vpop.permute.xlu0 %3216
    %v3220 = vadd.f32 %v3116, %v3215
    %v3221 = vadd.f32 %v3117, %v3217
    %s3222 = sld [smem:[#allocation10 + $0x27]]
    %v3223 = vstv %s3222
    %v3224 = vmul.f32 %v3068, %v3223
    %v3225 = vmul.f32 %v3069, %v3223
    %3228 = vrot.lane.b32.xlu0 %v3224, 127
    %v3229 = vpop.permute.xlu0 %3228
    %3230 = vrot.lane.b32.xlu0 %v3225, 127
    %v3231 = vpop.permute.xlu0 %3230
    %v3234 = vadd.f32 %v3122, %v3229
    %v3235 = vadd.f32 %v3123, %v3231
    %v3236 = vlaneseq
    %v3237 = vshrl.u32 %v3236, 7
    %v3238 = vsub.s32 1, %v3237
    %v3239 = vrot.slane %v3067, %v3238
    %3241 = vrot.lane.b32.xlu0 %v3239, 2
    %v3242 = vpop.permute.xlu0 %3241
    %v3244 = vmul.f32 %v3068, %v3242
    %v3245 = vmul.f32 %v3069, %v3242
    %s3246 = sld [smem:[#allocation10 + $0x40]]
    %v3247 = vstv %s3246
    %v3248 = vmul.f32 %v3244, %v3247
    %v3249 = vmul.f32 %v3245, %v3247
    %3252 = vrot.lane.b32.xlu0 %v3248, 126
    %v3253 = vpop.permute.xlu0 %3252
    %3254 = vrot.lane.b32.xlu0 %v3249, 126
    %v3255 = vpop.permute.xlu0 %3254
    %v3258 = vadd.f32 %v3136, %v3253
    %v3259 = vadd.f32 %v3137, %v3255
    %s3260 = sld [smem:[#allocation10 + $0x41]]
    %v3261 = vstv %s3260
    %v3262 = vmul.f32 %v3244, %v3261
    %v3263 = vmul.f32 %v3245, %v3261
    %3266 = vrot.lane.b32.xlu0 %v3262, 126
    %v3267 = vpop.permute.xlu0 %3266
    %3268 = vrot.lane.b32.xlu0 %v3263, 126
    %v3269 = vpop.permute.xlu0 %3268
    %v3272 = vadd.f32 %v3150, %v3267
    %v3273 = vadd.f32 %v3151, %v3269
    %s3274 = sld [smem:[#allocation10 + $0x42]]
    %v3275 = vstv %s3274
    %v3276 = vmul.f32 %v3244, %v3275
    %v3277 = vmul.f32 %v3245, %v3275
    %3280 = vrot.lane.b32.xlu0 %v3276, 126
    %v3281 = vpop.permute.xlu0 %3280
    %3282 = vrot.lane.b32.xlu0 %v3277, 126
    %v3283 = vpop.permute.xlu0 %3282
    %v3286 = vadd.f32 %v3164, %v3281
    %v3287 = vadd.f32 %v3165, %v3283
    %s3288 = sld [smem:[#allocation10 + $0x43]]
    %v3289 = vstv %s3288
    %v3290 = vmul.f32 %v3244, %v3289
    %v3291 = vmul.f32 %v3245, %v3289
    %3294 = vrot.lane.b32.xlu0 %v3290, 126
    %v3295 = vpop.permute.xlu0 %3294
    %3296 = vrot.lane.b32.xlu0 %v3291, 126
    %v3297 = vpop.permute.xlu0 %3296
    %v3300 = vadd.f32 %v3178, %v3295
    %v3301 = vadd.f32 %v3179, %v3297
    %s3302 = sld [smem:[#allocation10 + $0x44]]
    %v3303 = vstv %s3302
    %v3304 = vmul.f32 %v3244, %v3303
    %v3305 = vmul.f32 %v3245, %v3303
    %3308 = vrot.lane.b32.xlu0 %v3304, 126
    %v3309 = vpop.permute.xlu0 %3308
    %3310 = vrot.lane.b32.xlu0 %v3305, 126
    %v3311 = vpop.permute.xlu0 %3310
    %v3314 = vadd.f32 %v3192, %v3309
    %v3315 = vadd.f32 %v3193, %v3311
    %s3316 = sld [smem:[#allocation10 + $0x45]]
    %v3317 = vstv %s3316
    %v3318 = vmul.f32 %v3244, %v3317
    %v3319 = vmul.f32 %v3245, %v3317
    %3322 = vrot.lane.b32.xlu0 %v3318, 126
    %v3323 = vpop.permute.xlu0 %3322
    %3324 = vrot.lane.b32.xlu0 %v3319, 126
    %v3325 = vpop.permute.xlu0 %3324
    %v3328 = vadd.f32 %v3206, %v3323
    %v3329 = vadd.f32 %v3207, %v3325
    %s3330 = sld [smem:[#allocation10 + $0x46]]
    %v3331 = vstv %s3330
    %v3332 = vmul.f32 %v3244, %v3331
    %v3333 = vmul.f32 %v3245, %v3331
    %3336 = vrot.lane.b32.xlu0 %v3332, 126
    %v3337 = vpop.permute.xlu0 %3336
    %3338 = vrot.lane.b32.xlu0 %v3333, 126
    %v3339 = vpop.permute.xlu0 %3338
    %v3342 = vadd.f32 %v3220, %v3337
    %v3343 = vadd.f32 %v3221, %v3339
    %s3344 = sld [smem:[#allocation10 + $0x47]]
    %v3345 = vstv %s3344
    %v3346 = vmul.f32 %v3244, %v3345
    %v3347 = vmul.f32 %v3245, %v3345
    %3350 = vrot.lane.b32.xlu0 %v3346, 126
    %v3351 = vpop.permute.xlu0 %3350
    %3352 = vrot.lane.b32.xlu0 %v3347, 126
    %v3353 = vpop.permute.xlu0 %3352
    %v3356 = vadd.f32 %v3234, %v3351
    %v3357 = vadd.f32 %v3235, %v3353
    %v3358 = vld [vmem:[#allocation4 + $0x1] sm:$0xff]
    %v3359 = vld [vmem:[#allocation4 + $0x9] sm:$0x3f]
    %v3360 = vmul.f32 %v3358, %v3073
    %v3361 = vmul.f32 %v3359, %v3073
    %s3362 = sld [smem:[#allocation10 + $0x60]]
    %v3363 = vstv %s3362
    %v3364 = vmul.f32 %v3360, %v3363
    %v3365 = vmul.f32 %v3361, %v3363
    %v3366 = vadd.f32 %v3258, %v3364
    %v3367 = vadd.f32 %v3259, %v3365
    %s3368 = sld [smem:[#allocation10 + $0x61]]
    %v3369 = vstv %s3368
    %v3370 = vmul.f32 %v3360, %v3369
    %v3371 = vmul.f32 %v3361, %v3369
    %v3372 = vadd.f32 %v3272, %v3370
    %v3373 = vadd.f32 %v3273, %v3371
    %s3374 = sld [smem:[#allocation10 + $0x62]]
    %v3375 = vstv %s3374
    %v3376 = vmul.f32 %v3360, %v3375
    %v3377 = vmul.f32 %v3361, %v3375
    %v3378 = vadd.f32 %v3286, %v3376
    %v3379 = vadd.f32 %v3287, %v3377
    %s3380 = sld [smem:[#allocation10 + $0x63]]
    %v3381 = vstv %s3380
    %v3382 = vmul.f32 %v3360, %v3381
    %v3383 = vmul.f32 %v3361, %v3381
    %v3384 = vadd.f32 %v3300, %v3382
    %v3385 = vadd.f32 %v3301, %v3383
    %s3386 = sld [smem:[#allocation10 + $0x64]]
    %v3387 = vstv %s3386
    %v3388 = vmul.f32 %v3360, %v3387
    %v3389 = vmul.f32 %v3361, %v3387
    %v3390 = vadd.f32 %v3314, %v3388
    %v3391 = vadd.f32 %v3315, %v3389
    %s3392 = sld [smem:[#allocation10 + $0x65]]
    %v3393 = vstv %s3392
    %v3394 = vmul.f32 %v3360, %v3393
    %v3395 = vmul.f32 %v3361, %v3393
    %v3396 = vadd.f32 %v3328, %v3394
    %v3397 = vadd.f32 %v3329, %v3395
    %s3398 = sld [smem:[#allocation10 + $0x66]]
    %v3399 = vstv %s3398
    %v3400 = vmul.f32 %v3360, %v3399
    %v3401 = vmul.f32 %v3361, %v3399
    %v3402 = vadd.f32 %v3342, %v3400
    %v3403 = vadd.f32 %v3343, %v3401
    %s3404 = sld [smem:[#allocation10 + $0x67]]
    %v3405 = vstv %s3404
    %v3406 = vmul.f32 %v3360, %v3405
    %v3407 = vmul.f32 %v3361, %v3405
    %v3408 = vadd.f32 %v3356, %v3406
    %v3409 = vadd.f32 %v3357, %v3407
    %s3410 = sld [smem:[#allocation10 + $0x80]]
    %v3411 = vstv %s3410
    %v3412 = vmul.f32 %v3358, %v3411
    %v3413 = vmul.f32 %v3359, %v3411
    %3416 = vrot.lane.b32.xlu0 %v3412, 127
    %v3417 = vpop.permute.xlu0 %3416
    %3418 = vrot.lane.b32.xlu0 %v3413, 127
    %v3419 = vpop.permute.xlu0 %3418
    %v3422 = vadd.f32 %v3366, %v3417
    %v3423 = vadd.f32 %v3367, %v3419
    %s3424 = sld [smem:[#allocation10 + $0x81]]
    %v3425 = vstv %s3424
    %v3426 = vmul.f32 %v3358, %v3425
    %v3427 = vmul.f32 %v3359, %v3425
    %3430 = vrot.lane.b32.xlu0 %v3426, 127
    %v3431 = vpop.permute.xlu0 %3430
    %3432 = vrot.lane.b32.xlu0 %v3427, 127
    %v3433 = vpop.permute.xlu0 %3432
    %v3436 = vadd.f32 %v3372, %v3431
    %v3437 = vadd.f32 %v3373, %v3433
    %s3438 = sld [smem:[#allocation10 + $0x82]]
    %v3439 = vstv %s3438
    %v3440 = vmul.f32 %v3358, %v3439
    %v3441 = vmul.f32 %v3359, %v3439
    %3444 = vrot.lane.b32.xlu0 %v3440, 127
    %v3445 = vpop.permute.xlu0 %3444
    %3446 = vrot.lane.b32.xlu0 %v3441, 127
    %v3447 = vpop.permute.xlu0 %3446
    %v3450 = vadd.f32 %v3378, %v3445
    %v3451 = vadd.f32 %v3379, %v3447
    %s3452 = sld [smem:[#allocation10 + $0x83]]
    %v3453 = vstv %s3452
    %v3454 = vmul.f32 %v3358, %v3453
    %v3455 = vmul.f32 %v3359, %v3453
    %3458 = vrot.lane.b32.xlu0 %v3454, 127
    %v3459 = vpop.permute.xlu0 %3458
    %3460 = vrot.lane.b32.xlu0 %v3455, 127
    %v3461 = vpop.permute.xlu0 %3460
    %v3464 = vadd.f32 %v3384, %v3459
    %v3465 = vadd.f32 %v3385, %v3461
    %s3466 = sld [smem:[#allocation10 + $0x84]]
    %v3467 = vstv %s3466
    %v3468 = vmul.f32 %v3358, %v3467
    %v3469 = vmul.f32 %v3359, %v3467
    %3472 = vrot.lane.b32.xlu0 %v3468, 127
    %v3473 = vpop.permute.xlu0 %3472
    %3474 = vrot.lane.b32.xlu0 %v3469, 127
    %v3475 = vpop.permute.xlu0 %3474
    %v3478 = vadd.f32 %v3390, %v3473
    %v3479 = vadd.f32 %v3391, %v3475
    %s3480 = sld [smem:[#allocation10 + $0x85]]
    %v3481 = vstv %s3480
    %v3482 = vmul.f32 %v3358, %v3481
    %v3483 = vmul.f32 %v3359, %v3481
    %3486 = vrot.lane.b32.xlu0 %v3482, 127
    %v3487 = vpop.permute.xlu0 %3486
    %3488 = vrot.lane.b32.xlu0 %v3483, 127
    %v3489 = vpop.permute.xlu0 %3488
    %v3492 = vadd.f32 %v3396, %v3487
    %v3493 = vadd.f32 %v3397, %v3489
    %s3494 = sld [smem:[#allocation10 + $0x86]]
    %v3495 = vstv %s3494
    %v3496 = vmul.f32 %v3358, %v3495
    %v3497 = vmul.f32 %v3359, %v3495
    %3500 = vrot.lane.b32.xlu0 %v3496, 127
    %v3501 = vpop.permute.xlu0 %3500
    %3502 = vrot.lane.b32.xlu0 %v3497, 127
    %v3503 = vpop.permute.xlu0 %3502
    %v3506 = vadd.f32 %v3402, %v3501
    %v3507 = vadd.f32 %v3403, %v3503
    %s3508 = sld [smem:[#allocation10 + $0x87]]
    %v3509 = vstv %s3508
    %v3510 = vmul.f32 %v3358, %v3509
    %v3511 = vmul.f32 %v3359, %v3509
    %3514 = vrot.lane.b32.xlu0 %v3510, 127
    %v3515 = vpop.permute.xlu0 %3514
    %3516 = vrot.lane.b32.xlu0 %v3511, 127
    %v3517 = vpop.permute.xlu0 %3516
    %v3520 = vadd.f32 %v3408, %v3515
    %v3521 = vadd.f32 %v3409, %v3517
    %v3522 = vmul.f32 %v3358, %v3242
    %v3523 = vmul.f32 %v3359, %v3242
    %s3524 = sld [smem:[#allocation10 + $0xa0]]
    %v3525 = vstv %s3524
    %v3526 = vmul.f32 %v3522, %v3525
    %v3527 = vmul.f32 %v3523, %v3525
    %3530 = vrot.lane.b32.xlu0 %v3526, 126
    %v3531 = vpop.permute.xlu0 %3530
    %3532 = vrot.lane.b32.xlu0 %v3527, 126
    %v3533 = vpop.permute.xlu0 %3532
    %v3536 = vadd.f32 %v3422, %v3531
    %v3537 = vadd.f32 %v3423, %v3533
    %s3538 = sld [smem:[#allocation10 + $0xa1]]
    %v3539 = vstv %s3538
    %v3540 = vmul.f32 %v3522, %v3539
    %v3541 = vmul.f32 %v3523, %v3539
    %3544 = vrot.lane.b32.xlu0 %v3540, 126
    %v3545 = vpop.permute.xlu0 %3544
    %3546 = vrot.lane.b32.xlu0 %v3541, 126
    %v3547 = vpop.permute.xlu0 %3546
    %v3550 = vadd.f32 %v3436, %v3545
    %v3551 = vadd.f32 %v3437, %v3547
    %s3552 = sld [smem:[#allocation10 + $0xa2]]
    %v3553 = vstv %s3552
    %v3554 = vmul.f32 %v3522, %v3553
    %v3555 = vmul.f32 %v3523, %v3553
    %3558 = vrot.lane.b32.xlu0 %v3554, 126
    %v3559 = vpop.permute.xlu0 %3558
    %3560 = vrot.lane.b32.xlu0 %v3555, 126
    %v3561 = vpop.permute.xlu0 %3560
    %v3564 = vadd.f32 %v3450, %v3559
    %v3565 = vadd.f32 %v3451, %v3561
    %s3566 = sld [smem:[#allocation10 + $0xa3]]
    %v3567 = vstv %s3566
    %v3568 = vmul.f32 %v3522, %v3567
    %v3569 = vmul.f32 %v3523, %v3567
    %3572 = vrot.lane.b32.xlu0 %v3568, 126
    %v3573 = vpop.permute.xlu0 %3572
    %3574 = vrot.lane.b32.xlu0 %v3569, 126
    %v3575 = vpop.permute.xlu0 %3574
    %v3578 = vadd.f32 %v3464, %v3573
    %v3579 = vadd.f32 %v3465, %v3575
    %s3580 = sld [smem:[#allocation10 + $0xa4]]
    %v3581 = vstv %s3580
    %v3582 = vmul.f32 %v3522, %v3581
    %v3583 = vmul.f32 %v3523, %v3581
    %3586 = vrot.lane.b32.xlu0 %v3582, 126
    %v3587 = vpop.permute.xlu0 %3586
    %3588 = vrot.lane.b32.xlu0 %v3583, 126
    %v3589 = vpop.permute.xlu0 %3588
    %v3592 = vadd.f32 %v3478, %v3587
    %v3593 = vadd.f32 %v3479, %v3589
    %s3594 = sld [smem:[#allocation10 + $0xa5]]
    %v3595 = vstv %s3594
    %v3596 = vmul.f32 %v3522, %v3595
    %v3597 = vmul.f32 %v3523, %v3595
    %3600 = vrot.lane.b32.xlu0 %v3596, 126
    %v3601 = vpop.permute.xlu0 %3600
    %3602 = vrot.lane.b32.xlu0 %v3597, 126
    %v3603 = vpop.permute.xlu0 %3602
    %v3606 = vadd.f32 %v3492, %v3601
    %v3607 = vadd.f32 %v3493, %v3603
    %s3608 = sld [smem:[#allocation10 + $0xa6]]
    %v3609 = vstv %s3608
    %v3610 = vmul.f32 %v3522, %v3609
    %v3611 = vmul.f32 %v3523, %v3609
    %3614 = vrot.lane.b32.xlu0 %v3610, 126
    %v3615 = vpop.permute.xlu0 %3614
    %3616 = vrot.lane.b32.xlu0 %v3611, 126
    %v3617 = vpop.permute.xlu0 %3616
    %v3620 = vadd.f32 %v3506, %v3615
    %v3621 = vadd.f32 %v3507, %v3617
    %s3622 = sld [smem:[#allocation10 + $0xa7]]
    %v3623 = vstv %s3622
    %v3624 = vmul.f32 %v3522, %v3623
    %v3625 = vmul.f32 %v3523, %v3623
    %3628 = vrot.lane.b32.xlu0 %v3624, 126
    %v3629 = vpop.permute.xlu0 %3628
    %3630 = vrot.lane.b32.xlu0 %v3625, 126
    %v3631 = vpop.permute.xlu0 %3630
    %v3634 = vadd.f32 %v3520, %v3629
    %v3635 = vadd.f32 %v3521, %v3631
    %v3636 = vld [vmem:[#allocation4 + $0x2] sm:$0xff]
    %v3637 = vld [vmem:[#allocation4 + $0xa] sm:$0x3f]
    %v3638 = vmul.f32 %v3636, %v3073
    %v3639 = vmul.f32 %v3637, %v3073
    %s3640 = sld [smem:[#allocation10 + $0xc0]]
    %v3641 = vstv %s3640
    %v3642 = vmul.f32 %v3638, %v3641
    %v3643 = vmul.f32 %v3639, %v3641
    %v3644 = vadd.f32 %v3536, %v3642
    %v3645 = vadd.f32 %v3537, %v3643
    %s3646 = sld [smem:[#allocation10 + $0xc1]]
    %v3647 = vstv %s3646
    %v3648 = vmul.f32 %v3638, %v3647
    %v3649 = vmul.f32 %v3639, %v3647
    %v3650 = vadd.f32 %v3550, %v3648
    %v3651 = vadd.f32 %v3551, %v3649
    %s3652 = sld [smem:[#allocation10 + $0xc2]]
    %v3653 = vstv %s3652
    %v3654 = vmul.f32 %v3638, %v3653
    %v3655 = vmul.f32 %v3639, %v3653
    %v3656 = vadd.f32 %v3564, %v3654
    %v3657 = vadd.f32 %v3565, %v3655
    %s3658 = sld [smem:[#allocation10 + $0xc3]]
    %v3659 = vstv %s3658
    %v3660 = vmul.f32 %v3638, %v3659
    %v3661 = vmul.f32 %v3639, %v3659
    %v3662 = vadd.f32 %v3578, %v3660
    %v3663 = vadd.f32 %v3579, %v3661
    %s3664 = sld [smem:[#allocation10 + $0xc4]]
    %v3665 = vstv %s3664
    %v3666 = vmul.f32 %v3638, %v3665
    %v3667 = vmul.f32 %v3639, %v3665
    %v3668 = vadd.f32 %v3592, %v3666
    %v3669 = vadd.f32 %v3593, %v3667
    %s3670 = sld [smem:[#allocation10 + $0xc5]]
    %v3671 = vstv %s3670
    %v3672 = vmul.f32 %v3638, %v3671
    %v3673 = vmul.f32 %v3639, %v3671
    %v3674 = vadd.f32 %v3606, %v3672
    %v3675 = vadd.f32 %v3607, %v3673
    %s3676 = sld [smem:[#allocation10 + $0xc6]]
    %v3677 = vstv %s3676
    %v3678 = vmul.f32 %v3638, %v3677
    %v3679 = vmul.f32 %v3639, %v3677
    %v3680 = vadd.f32 %v3620, %v3678
    %v3681 = vadd.f32 %v3621, %v3679
    %s3682 = sld [smem:[#allocation10 + $0xc7]]
    %v3683 = vstv %s3682
    %v3684 = vmul.f32 %v3638, %v3683
    %v3685 = vmul.f32 %v3639, %v3683
    %v3686 = vadd.f32 %v3634, %v3684
    %v3687 = vadd.f32 %v3635, %v3685
    %s3688 = sld [smem:[#allocation10 + $0xe0]]
    %v3689 = vstv %s3688
    %v3690 = vmul.f32 %v3636, %v3689
    %v3691 = vmul.f32 %v3637, %v3689
    %3694 = vrot.lane.b32.xlu0 %v3690, 127
    %v3695 = vpop.permute.xlu0 %3694
    %3696 = vrot.lane.b32.xlu0 %v3691, 127
    %v3697 = vpop.permute.xlu0 %3696
    %v3700 = vadd.f32 %v3644, %v3695
    %v3701 = vadd.f32 %v3645, %v3697
    %s3702 = sld [smem:[#allocation10 + $0xe1]]
    %v3703 = vstv %s3702
    %v3704 = vmul.f32 %v3636, %v3703
    %v3705 = vmul.f32 %v3637, %v3703
    %3708 = vrot.lane.b32.xlu0 %v3704, 127
    %v3709 = vpop.permute.xlu0 %3708
    %3710 = vrot.lane.b32.xlu0 %v3705, 127
    %v3711 = vpop.permute.xlu0 %3710
    %v3714 = vadd.f32 %v3650, %v3709
    %v3715 = vadd.f32 %v3651, %v3711
    %s3716 = sld [smem:[#allocation10 + $0xe2]]
    %v3717 = vstv %s3716
    %v3718 = vmul.f32 %v3636, %v3717
    %v3719 = vmul.f32 %v3637, %v3717
    %3722 = vrot.lane.b32.xlu0 %v3718, 127
    %v3723 = vpop.permute.xlu0 %3722
    %3724 = vrot.lane.b32.xlu0 %v3719, 127
    %v3725 = vpop.permute.xlu0 %3724
    %v3728 = vadd.f32 %v3656, %v3723
    %v3729 = vadd.f32 %v3657, %v3725
    %s3730 = sld [smem:[#allocation10 + $0xe3]]
    %v3731 = vstv %s3730
    %v3732 = vmul.f32 %v3636, %v3731
    %v3733 = vmul.f32 %v3637, %v3731
    %3736 = vrot.lane.b32.xlu0 %v3732, 127
    %v3737 = vpop.permute.xlu0 %3736
    %3738 = vrot.lane.b32.xlu0 %v3733, 127
    %v3739 = vpop.permute.xlu0 %3738
    %v3742 = vadd.f32 %v3662, %v3737
    %v3743 = vadd.f32 %v3663, %v3739
    %s3744 = sld [smem:[#allocation10 + $0xe4]]
    %v3745 = vstv %s3744
    %v3746 = vmul.f32 %v3636, %v3745
    %v3747 = vmul.f32 %v3637, %v3745
    %3750 = vrot.lane.b32.xlu0 %v3746, 127
    %v3751 = vpop.permute.xlu0 %3750
    %3752 = vrot.lane.b32.xlu0 %v3747, 127
    %v3753 = vpop.permute.xlu0 %3752
    %v3756 = vadd.f32 %v3668, %v3751
    %v3757 = vadd.f32 %v3669, %v3753
    %s3758 = sld [smem:[#allocation10 + $0xe5]]
    %v3759 = vstv %s3758
    %v3760 = vmul.f32 %v3636, %v3759
    %v3761 = vmul.f32 %v3637, %v3759
    %3764 = vrot.lane.b32.xlu0 %v3760, 127
    %v3765 = vpop.permute.xlu0 %3764
    %3766 = vrot.lane.b32.xlu0 %v3761, 127
    %v3767 = vpop.permute.xlu0 %3766
    %v3770 = vadd.f32 %v3674, %v3765
    %v3771 = vadd.f32 %v3675, %v3767
    %s3772 = sld [smem:[#allocation10 + $0xe6]]
    %v3773 = vstv %s3772
    %v3774 = vmul.f32 %v3636, %v3773
    %v3775 = vmul.f32 %v3637, %v3773
    %3778 = vrot.lane.b32.xlu0 %v3774, 127
    %v3779 = vpop.permute.xlu0 %3778
    %3780 = vrot.lane.b32.xlu0 %v3775, 127
    %v3781 = vpop.permute.xlu0 %3780
    %v3784 = vadd.f32 %v3680, %v3779
    %v3785 = vadd.f32 %v3681, %v3781
    %s3786 = sld [smem:[#allocation10 + $0xe7]]
    %v3787 = vstv %s3786
    %v3788 = vmul.f32 %v3636, %v3787
    %v3789 = vmul.f32 %v3637, %v3787
    %3792 = vrot.lane.b32.xlu0 %v3788, 127
    %v3793 = vpop.permute.xlu0 %3792
    %3794 = vrot.lane.b32.xlu0 %v3789, 127
    %v3795 = vpop.permute.xlu0 %3794
    %v3798 = vadd.f32 %v3686, %v3793
    %v3799 = vadd.f32 %v3687, %v3795
    %v3800 = vmul.f32 %v3636, %v3242
    %v3801 = vmul.f32 %v3637, %v3242
    %s3802 = sld [smem:[#allocation10 + $0x100]]
    %v3803 = vstv %s3802
    %v3804 = vmul.f32 %v3800, %v3803
    %v3805 = vmul.f32 %v3801, %v3803
    %3808 = vrot.lane.b32.xlu0 %v3804, 126
    %v3809 = vpop.permute.xlu0 %3808
    %3810 = vrot.lane.b32.xlu0 %v3805, 126
    %v3811 = vpop.permute.xlu0 %3810
    %v3814 = vadd.f32 %v3700, %v3809
    %v3815 = vadd.f32 %v3701, %v3811
    %s3816 = sld [smem:[#allocation10 + $0x101]]
    %v3817 = vstv %s3816
    %v3818 = vmul.f32 %v3800, %v3817
    %v3819 = vmul.f32 %v3801, %v3817
    %3822 = vrot.lane.b32.xlu0 %v3818, 126
    %v3823 = vpop.permute.xlu0 %3822
    %3824 = vrot.lane.b32.xlu0 %v3819, 126
    %v3825 = vpop.permute.xlu0 %3824
    %v3828 = vadd.f32 %v3714, %v3823
    %v3829 = vadd.f32 %v3715, %v3825
    %s3830 = sld [smem:[#allocation10 + $0x102]]
    %v3831 = vstv %s3830
    %v3832 = vmul.f32 %v3800, %v3831
    %v3833 = vmul.f32 %v3801, %v3831
    %3836 = vrot.lane.b32.xlu0 %v3832, 126
    %v3837 = vpop.permute.xlu0 %3836
    %3838 = vrot.lane.b32.xlu0 %v3833, 126
    %v3839 = vpop.permute.xlu0 %3838
    %v3842 = vadd.f32 %v3728, %v3837
    %v3843 = vadd.f32 %v3729, %v3839
    %s3844 = sld [smem:[#allocation10 + $0x103]]
    %v3845 = vstv %s3844
    %v3846 = vmul.f32 %v3800, %v3845
    %v3847 = vmul.f32 %v3801, %v3845
    %3850 = vrot.lane.b32.xlu0 %v3846, 126
    %v3851 = vpop.permute.xlu0 %3850
    %3852 = vrot.lane.b32.xlu0 %v3847, 126
    %v3853 = vpop.permute.xlu0 %3852
    %v3856 = vadd.f32 %v3742, %v3851
    %v3857 = vadd.f32 %v3743, %v3853
    %s3858 = sld [smem:[#allocation10 + $0x104]]
    %v3859 = vstv %s3858
    %v3860 = vmul.f32 %v3800, %v3859
    %v3861 = vmul.f32 %v3801, %v3859
    %3864 = vrot.lane.b32.xlu0 %v3860, 126
    %v3865 = vpop.permute.xlu0 %3864
    %3866 = vrot.lane.b32.xlu0 %v3861, 126
    %v3867 = vpop.permute.xlu0 %3866
    %v3870 = vadd.f32 %v3756, %v3865
    %v3871 = vadd.f32 %v3757, %v3867
    %s3872 = sld [smem:[#allocation10 + $0x105]]
    %v3873 = vstv %s3872
    %v3874 = vmul.f32 %v3800, %v3873
    %v3875 = vmul.f32 %v3801, %v3873
    %3878 = vrot.lane.b32.xlu0 %v3874, 126
    %v3879 = vpop.permute.xlu0 %3878
    %3880 = vrot.lane.b32.xlu0 %v3875, 126
    %v3881 = vpop.permute.xlu0 %3880
    %v3884 = vadd.f32 %v3770, %v3879
    %v3885 = vadd.f32 %v3771, %v3881
    %s3886 = sld [smem:[#allocation10 + $0x106]]
    %v3887 = vstv %s3886
    %v3888 = vmul.f32 %v3800, %v3887
    %v3889 = vmul.f32 %v3801, %v3887
    %3892 = vrot.lane.b32.xlu0 %v3888, 126
    %v3893 = vpop.permute.xlu0 %3892
    %3894 = vrot.lane.b32.xlu0 %v3889, 126
    %v3895 = vpop.permute.xlu0 %3894
    %v3898 = vadd.f32 %v3784, %v3893
    %v3899 = vadd.f32 %v3785, %v3895
    %s3900 = sld [smem:[#allocation10 + $0x107]]
    %v3901 = vstv %s3900
    %v3902 = vmul.f32 %v3800, %v3901
    %v3903 = vmul.f32 %v3801, %v3901
    %3906 = vrot.lane.b32.xlu0 %v3902, 126
    %v3907 = vpop.permute.xlu0 %3906
    %3908 = vrot.lane.b32.xlu0 %v3903, 126
    %v3909 = vpop.permute.xlu0 %3908
    %v3912 = vadd.f32 %v3798, %v3907
    %v3913 = vadd.f32 %v3799, %v3909
    %v3914 = vld [vmem:[#allocation4 + $0x10] sm:$0xff]
    %v3915 = vld [vmem:[#allocation4 + $0x18] sm:$0x3f]
    %v3916 = vmul.f32 %v3914, %v3073
    %v3917 = vmul.f32 %v3915, %v3073
    %s3918 = sld [smem:[#allocation10 + $0x8]]
    %v3919 = vstv %s3918
    %v3920 = vmul.f32 %v3916, %v3919
    %v3921 = vmul.f32 %v3917, %v3919
    %v3922 = vadd.f32 %v3814, %v3920
    %v3923 = vadd.f32 %v3815, %v3921
    %s3924 = sld [smem:[#allocation10 + $0x9]]
    %v3925 = vstv %s3924
    %v3926 = vmul.f32 %v3916, %v3925
    %v3927 = vmul.f32 %v3917, %v3925
    %v3928 = vadd.f32 %v3828, %v3926
    %v3929 = vadd.f32 %v3829, %v3927
    %s3930 = sld [smem:[#allocation10 + $0xa]]
    %v3931 = vstv %s3930
    %v3932 = vmul.f32 %v3916, %v3931
    %v3933 = vmul.f32 %v3917, %v3931
    %v3934 = vadd.f32 %v3842, %v3932
    %v3935 = vadd.f32 %v3843, %v3933
    %s3936 = sld [smem:[#allocation10 + $0xb]]
    %v3937 = vstv %s3936
    %v3938 = vmul.f32 %v3916, %v3937
    %v3939 = vmul.f32 %v3917, %v3937
    %v3940 = vadd.f32 %v3856, %v3938
    %v3941 = vadd.f32 %v3857, %v3939
    %s3942 = sld [smem:[#allocation10 + $0xc]]
    %v3943 = vstv %s3942
    %v3944 = vmul.f32 %v3916, %v3943
    %v3945 = vmul.f32 %v3917, %v3943
    %v3946 = vadd.f32 %v3870, %v3944
    %v3947 = vadd.f32 %v3871, %v3945
    %s3948 = sld [smem:[#allocation10 + $0xd]]
    %v3949 = vstv %s3948
    %v3950 = vmul.f32 %v3916, %v3949
    %v3951 = vmul.f32 %v3917, %v3949
    %v3952 = vadd.f32 %v3884, %v3950
    %v3953 = vadd.f32 %v3885, %v3951
    %s3954 = sld [smem:[#allocation10 + $0xe]]
    %v3955 = vstv %s3954
    %v3956 = vmul.f32 %v3916, %v3955
    %v3957 = vmul.f32 %v3917, %v3955
    %v3958 = vadd.f32 %v3898, %v3956
    %v3959 = vadd.f32 %v3899, %v3957
    %s3960 = sld [smem:[#allocation10 + $0xf]]
    %v3961 = vstv %s3960
    %v3962 = vmul.f32 %v3916, %v3961
    %v3963 = vmul.f32 %v3917, %v3961
    %v3964 = vadd.f32 %v3912, %v3962
    %v3965 = vadd.f32 %v3913, %v3963
    %s3966 = sld [smem:[#allocation10 + $0x28]]
    %v3967 = vstv %s3966
    %v3968 = vmul.f32 %v3914, %v3967
    %v3969 = vmul.f32 %v3915, %v3967
    %3972 = vrot.lane.b32.xlu0 %v3968, 127
    %v3973 = vpop.permute.xlu0 %3972
    %3974 = vrot.lane.b32.xlu0 %v3969, 127
    %v3975 = vpop.permute.xlu0 %3974
    %v3978 = vadd.f32 %v3922, %v3973
    %v3979 = vadd.f32 %v3923, %v3975
    %s3980 = sld [smem:[#allocation10 + $0x29]]
    %v3981 = vstv %s3980
    %v3982 = vmul.f32 %v3914, %v3981
    %v3983 = vmul.f32 %v3915, %v3981
    %3986 = vrot.lane.b32.xlu0 %v3982, 127
    %v3987 = vpop.permute.xlu0 %3986
    %3988 = vrot.lane.b32.xlu0 %v3983, 127
    %v3989 = vpop.permute.xlu0 %3988
    %v3992 = vadd.f32 %v3928, %v3987
    %v3993 = vadd.f32 %v3929, %v3989
    %s3994 = sld [smem:[#allocation10 + $0x2a]]
    %v3995 = vstv %s3994
    %v3996 = vmul.f32 %v3914, %v3995
    %v3997 = vmul.f32 %v3915, %v3995
    %4000 = vrot.lane.b32.xlu0 %v3996, 127
    %v4001 = vpop.permute.xlu0 %4000
    %4002 = vrot.lane.b32.xlu0 %v3997, 127
    %v4003 = vpop.permute.xlu0 %4002
    %v4006 = vadd.f32 %v3934, %v4001
    %v4007 = vadd.f32 %v3935, %v4003
    %s4008 = sld [smem:[#allocation10 + $0x2b]]
    %v4009 = vstv %s4008
    %v4010 = vmul.f32 %v3914, %v4009
    %v4011 = vmul.f32 %v3915, %v4009
    %4014 = vrot.lane.b32.xlu0 %v4010, 127
    %v4015 = vpop.permute.xlu0 %4014
    %4016 = vrot.lane.b32.xlu0 %v4011, 127
    %v4017 = vpop.permute.xlu0 %4016
    %v4020 = vadd.f32 %v3940, %v4015
    %v4021 = vadd.f32 %v3941, %v4017
    %s4022 = sld [smem:[#allocation10 + $0x2c]]
    %v4023 = vstv %s4022
    %v4024 = vmul.f32 %v3914, %v4023
    %v4025 = vmul.f32 %v3915, %v4023
    %4028 = vrot.lane.b32.xlu0 %v4024, 127
    %v4029 = vpop.permute.xlu0 %4028
    %4030 = vrot.lane.b32.xlu0 %v4025, 127
    %v4031 = vpop.permute.xlu0 %4030
    %v4034 = vadd.f32 %v3946, %v4029
    %v4035 = vadd.f32 %v3947, %v4031
    %s4036 = sld [smem:[#allocation10 + $0x2d]]
    %v4037 = vstv %s4036
    %v4038 = vmul.f32 %v3914, %v4037
    %v4039 = vmul.f32 %v3915, %v4037
    %4042 = vrot.lane.b32.xlu0 %v4038, 127
    %v4043 = vpop.permute.xlu0 %4042
    %4044 = vrot.lane.b32.xlu0 %v4039, 127
    %v4045 = vpop.permute.xlu0 %4044
    %v4048 = vadd.f32 %v3952, %v4043
    %v4049 = vadd.f32 %v3953, %v4045
    %s4050 = sld [smem:[#allocation10 + $0x2e]]
    %v4051 = vstv %s4050
    %v4052 = vmul.f32 %v3914, %v4051
    %v4053 = vmul.f32 %v3915, %v4051
    %4056 = vrot.lane.b32.xlu0 %v4052, 127
    %v4057 = vpop.permute.xlu0 %4056
    %4058 = vrot.lane.b32.xlu0 %v4053, 127
    %v4059 = vpop.permute.xlu0 %4058
    %v4062 = vadd.f32 %v3958, %v4057
    %v4063 = vadd.f32 %v3959, %v4059
    %s4064 = sld [smem:[#allocation10 + $0x2f]]
    %v4065 = vstv %s4064
    %v4066 = vmul.f32 %v3914, %v4065
    %v4067 = vmul.f32 %v3915, %v4065
    %4070 = vrot.lane.b32.xlu0 %v4066, 127
    %v4071 = vpop.permute.xlu0 %4070
    %4072 = vrot.lane.b32.xlu0 %v4067, 127
    %v4073 = vpop.permute.xlu0 %4072
    %v4076 = vadd.f32 %v3964, %v4071
    %v4077 = vadd.f32 %v3965, %v4073
    %v4078 = vmul.f32 %v3914, %v3242
    %v4079 = vmul.f32 %v3915, %v3242
    %s4080 = sld [smem:[#allocation10 + $0x48]]
    %v4081 = vstv %s4080
    %v4082 = vmul.f32 %v4078, %v4081
    %v4083 = vmul.f32 %v4079, %v4081
    %4086 = vrot.lane.b32.xlu0 %v4082, 126
    %v4087 = vpop.permute.xlu0 %4086
    %4088 = vrot.lane.b32.xlu0 %v4083, 126
    %v4089 = vpop.permute.xlu0 %4088
    %v4092 = vadd.f32 %v3978, %v4087
    %v4093 = vadd.f32 %v3979, %v4089
    %s4094 = sld [smem:[#allocation10 + $0x49]]
    %v4095 = vstv %s4094
    %v4096 = vmul.f32 %v4078, %v4095
    %v4097 = vmul.f32 %v4079, %v4095
    %4100 = vrot.lane.b32.xlu0 %v4096, 126
    %v4101 = vpop.permute.xlu0 %4100
    %4102 = vrot.lane.b32.xlu0 %v4097, 126
    %v4103 = vpop.permute.xlu0 %4102
    %v4106 = vadd.f32 %v3992, %v4101
    %v4107 = vadd.f32 %v3993, %v4103
    %s4108 = sld [smem:[#allocation10 + $0x4a]]
    %v4109 = vstv %s4108
    %v4110 = vmul.f32 %v4078, %v4109
    %v4111 = vmul.f32 %v4079, %v4109
    %4114 = vrot.lane.b32.xlu0 %v4110, 126
    %v4115 = vpop.permute.xlu0 %4114
    %4116 = vrot.lane.b32.xlu0 %v4111, 126
    %v4117 = vpop.permute.xlu0 %4116
    %v4120 = vadd.f32 %v4006, %v4115
    %v4121 = vadd.f32 %v4007, %v4117
    %s4122 = sld [smem:[#allocation10 + $0x4b]]
    %v4123 = vstv %s4122
    %v4124 = vmul.f32 %v4078, %v4123
    %v4125 = vmul.f32 %v4079, %v4123
    %4128 = vrot.lane.b32.xlu0 %v4124, 126
    %v4129 = vpop.permute.xlu0 %4128
    %4130 = vrot.lane.b32.xlu0 %v4125, 126
    %v4131 = vpop.permute.xlu0 %4130
    %v4134 = vadd.f32 %v4020, %v4129
    %v4135 = vadd.f32 %v4021, %v4131
    %s4136 = sld [smem:[#allocation10 + $0x4c]]
    %v4137 = vstv %s4136
    %v4138 = vmul.f32 %v4078, %v4137
    %v4139 = vmul.f32 %v4079, %v4137
    %4142 = vrot.lane.b32.xlu0 %v4138, 126
    %v4143 = vpop.permute.xlu0 %4142
    %4144 = vrot.lane.b32.xlu0 %v4139, 126
    %v4145 = vpop.permute.xlu0 %4144
    %v4148 = vadd.f32 %v4034, %v4143
    %v4149 = vadd.f32 %v4035, %v4145
    %s4150 = sld [smem:[#allocation10 + $0x4d]]
    %v4151 = vstv %s4150
    %v4152 = vmul.f32 %v4078, %v4151
    %v4153 = vmul.f32 %v4079, %v4151
    %4156 = vrot.lane.b32.xlu0 %v4152, 126
    %v4157 = vpop.permute.xlu0 %4156
    %4158 = vrot.lane.b32.xlu0 %v4153, 126
    %v4159 = vpop.permute.xlu0 %4158
    %v4162 = vadd.f32 %v4048, %v4157
    %v4163 = vadd.f32 %v4049, %v4159
    %s4164 = sld [smem:[#allocation10 + $0x4e]]
    %v4165 = vstv %s4164
    %v4166 = vmul.f32 %v4078, %v4165
    %v4167 = vmul.f32 %v4079, %v4165
    %4170 = vrot.lane.b32.xlu0 %v4166, 126
    %v4171 = vpop.permute.xlu0 %4170
    %4172 = vrot.lane.b32.xlu0 %v4167, 126
    %v4173 = vpop.permute.xlu0 %4172
    %v4176 = vadd.f32 %v4062, %v4171
    %v4177 = vadd.f32 %v4063, %v4173
    %s4178 = sld [smem:[#allocation10 + $0x4f]]
    %v4179 = vstv %s4178
    %v4180 = vmul.f32 %v4078, %v4179
    %v4181 = vmul.f32 %v4079, %v4179
    %4184 = vrot.lane.b32.xlu0 %v4180, 126
    %v4185 = vpop.permute.xlu0 %4184
    %4186 = vrot.lane.b32.xlu0 %v4181, 126
    %v4187 = vpop.permute.xlu0 %4186
    %v4190 = vadd.f32 %v4076, %v4185
    %v4191 = vadd.f32 %v4077, %v4187
    %v4192 = vld [vmem:[#allocation4 + $0x11] sm:$0xff]
    %v4193 = vld [vmem:[#allocation4 + $0x19] sm:$0x3f]
    %v4194 = vmul.f32 %v4192, %v3073
    %v4195 = vmul.f32 %v4193, %v3073
    %s4196 = sld [smem:[#allocation10 + $0x68]]
    %v4197 = vstv %s4196
    %v4198 = vmul.f32 %v4194, %v4197
    %v4199 = vmul.f32 %v4195, %v4197
    %v4200 = vadd.f32 %v4092, %v4198
    %v4201 = vadd.f32 %v4093, %v4199
    %s4202 = sld [smem:[#allocation10 + $0x69]]
    %v4203 = vstv %s4202
    %v4204 = vmul.f32 %v4194, %v4203
    %v4205 = vmul.f32 %v4195, %v4203
    %v4206 = vadd.f32 %v4106, %v4204
    %v4207 = vadd.f32 %v4107, %v4205
    %s4208 = sld [smem:[#allocation10 + $0x6a]]
    %v4209 = vstv %s4208
    %v4210 = vmul.f32 %v4194, %v4209
    %v4211 = vmul.f32 %v4195, %v4209
    %v4212 = vadd.f32 %v4120, %v4210
    %v4213 = vadd.f32 %v4121, %v4211
    %s4214 = sld [smem:[#allocation10 + $0x6b]]
    %v4215 = vstv %s4214
    %v4216 = vmul.f32 %v4194, %v4215
    %v4217 = vmul.f32 %v4195, %v4215
    %v4218 = vadd.f32 %v4134, %v4216
    %v4219 = vadd.f32 %v4135, %v4217
    %s4220 = sld [smem:[#allocation10 + $0x6c]]
    %v4221 = vstv %s4220
    %v4222 = vmul.f32 %v4194, %v4221
    %v4223 = vmul.f32 %v4195, %v4221
    %v4224 = vadd.f32 %v4148, %v4222
    %v4225 = vadd.f32 %v4149, %v4223
    %s4226 = sld [smem:[#allocation10 + $0x6d]]
    %v4227 = vstv %s4226
    %v4228 = vmul.f32 %v4194, %v4227
    %v4229 = vmul.f32 %v4195, %v4227
    %v4230 = vadd.f32 %v4162, %v4228
    %v4231 = vadd.f32 %v4163, %v4229
    %s4232 = sld [smem:[#allocation10 + $0x6e]]
    %v4233 = vstv %s4232
    %v4234 = vmul.f32 %v4194, %v4233
    %v4235 = vmul.f32 %v4195, %v4233
    %v4236 = vadd.f32 %v4176, %v4234
    %v4237 = vadd.f32 %v4177, %v4235
    %s4238 = sld [smem:[#allocation10 + $0x6f]]
    %v4239 = vstv %s4238
    %v4240 = vmul.f32 %v4194, %v4239
    %v4241 = vmul.f32 %v4195, %v4239
    %v4242 = vadd.f32 %v4190, %v4240
    %v4243 = vadd.f32 %v4191, %v4241
    %s4244 = sld [smem:[#allocation10 + $0x88]]
    %v4245 = vstv %s4244
    %v4246 = vmul.f32 %v4192, %v4245
    %v4247 = vmul.f32 %v4193, %v4245
    %4250 = vrot.lane.b32.xlu0 %v4246, 127
    %v4251 = vpop.permute.xlu0 %4250
    %4252 = vrot.lane.b32.xlu0 %v4247, 127
    %v4253 = vpop.permute.xlu0 %4252
    %v4256 = vadd.f32 %v4200, %v4251
    %v4257 = vadd.f32 %v4201, %v4253
    %s4258 = sld [smem:[#allocation10 + $0x89]]
    %v4259 = vstv %s4258
    %v4260 = vmul.f32 %v4192, %v4259
    %v4261 = vmul.f32 %v4193, %v4259
    %4264 = vrot.lane.b32.xlu0 %v4260, 127
    %v4265 = vpop.permute.xlu0 %4264
    %4266 = vrot.lane.b32.xlu0 %v4261, 127
    %v4267 = vpop.permute.xlu0 %4266
    %v4270 = vadd.f32 %v4206, %v4265
    %v4271 = vadd.f32 %v4207, %v4267
    %s4272 = sld [smem:[#allocation10 + $0x8a]]
    %v4273 = vstv %s4272
    %v4274 = vmul.f32 %v4192, %v4273
    %v4275 = vmul.f32 %v4193, %v4273
    %4278 = vrot.lane.b32.xlu0 %v4274, 127
    %v4279 = vpop.permute.xlu0 %4278
    %4280 = vrot.lane.b32.xlu0 %v4275, 127
    %v4281 = vpop.permute.xlu0 %4280
    %v4284 = vadd.f32 %v4212, %v4279
    %v4285 = vadd.f32 %v4213, %v4281
    %s4286 = sld [smem:[#allocation10 + $0x8b]]
    %v4287 = vstv %s4286
    %v4288 = vmul.f32 %v4192, %v4287
    %v4289 = vmul.f32 %v4193, %v4287
    %4292 = vrot.lane.b32.xlu0 %v4288, 127
    %v4293 = vpop.permute.xlu0 %4292
    %4294 = vrot.lane.b32.xlu0 %v4289, 127
    %v4295 = vpop.permute.xlu0 %4294
    %v4298 = vadd.f32 %v4218, %v4293
    %v4299 = vadd.f32 %v4219, %v4295
    %s4300 = sld [smem:[#allocation10 + $0x8c]]
    %v4301 = vstv %s4300
    %v4302 = vmul.f32 %v4192, %v4301
    %v4303 = vmul.f32 %v4193, %v4301
    %4306 = vrot.lane.b32.xlu0 %v4302, 127
    %v4307 = vpop.permute.xlu0 %4306
    %4308 = vrot.lane.b32.xlu0 %v4303, 127
    %v4309 = vpop.permute.xlu0 %4308
    %v4312 = vadd.f32 %v4224, %v4307
    %v4313 = vadd.f32 %v4225, %v4309
    %s4314 = sld [smem:[#allocation10 + $0x8d]]
    %v4315 = vstv %s4314
    %v4316 = vmul.f32 %v4192, %v4315
    %v4317 = vmul.f32 %v4193, %v4315
    %4320 = vrot.lane.b32.xlu0 %v4316, 127
    %v4321 = vpop.permute.xlu0 %4320
    %4322 = vrot.lane.b32.xlu0 %v4317, 127
    %v4323 = vpop.permute.xlu0 %4322
    %v4326 = vadd.f32 %v4230, %v4321
    %v4327 = vadd.f32 %v4231, %v4323
    %s4328 = sld [smem:[#allocation10 + $0x8e]]
    %v4329 = vstv %s4328
    %v4330 = vmul.f32 %v4192, %v4329
    %v4331 = vmul.f32 %v4193, %v4329
    %4334 = vrot.lane.b32.xlu0 %v4330, 127
    %v4335 = vpop.permute.xlu0 %4334
    %4336 = vrot.lane.b32.xlu0 %v4331, 127
    %v4337 = vpop.permute.xlu0 %4336
    %v4340 = vadd.f32 %v4236, %v4335
    %v4341 = vadd.f32 %v4237, %v4337
    %s4342 = sld [smem:[#allocation10 + $0x8f]]
    %v4343 = vstv %s4342
    %v4344 = vmul.f32 %v4192, %v4343
    %v4345 = vmul.f32 %v4193, %v4343
    %4348 = vrot.lane.b32.xlu0 %v4344, 127
    %v4349 = vpop.permute.xlu0 %4348
    %4350 = vrot.lane.b32.xlu0 %v4345, 127
    %v4351 = vpop.permute.xlu0 %4350
    %v4354 = vadd.f32 %v4242, %v4349
    %v4355 = vadd.f32 %v4243, %v4351
    %v4356 = vmul.f32 %v4192, %v3242
    %v4357 = vmul.f32 %v4193, %v3242
    %s4358 = sld [smem:[#allocation10 + $0xa8]]
    %v4359 = vstv %s4358
    %v4360 = vmul.f32 %v4356, %v4359
    %v4361 = vmul.f32 %v4357, %v4359
    %4364 = vrot.lane.b32.xlu0 %v4360, 126
    %v4365 = vpop.permute.xlu0 %4364
    %4366 = vrot.lane.b32.xlu0 %v4361, 126
    %v4367 = vpop.permute.xlu0 %4366
    %v4370 = vadd.f32 %v4256, %v4365
    %v4371 = vadd.f32 %v4257, %v4367
    %s4372 = sld [smem:[#allocation10 + $0xa9]]
    %v4373 = vstv %s4372
    %v4374 = vmul.f32 %v4356, %v4373
    %v4375 = vmul.f32 %v4357, %v4373
    %4378 = vrot.lane.b32.xlu0 %v4374, 126
    %v4379 = vpop.permute.xlu0 %4378
    %4380 = vrot.lane.b32.xlu0 %v4375, 126
    %v4381 = vpop.permute.xlu0 %4380
    %v4384 = vadd.f32 %v4270, %v4379
    %v4385 = vadd.f32 %v4271, %v4381
    %s4386 = sld [smem:[#allocation10 + $0xaa]]
    %v4387 = vstv %s4386
    %v4388 = vmul.f32 %v4356, %v4387
    %v4389 = vmul.f32 %v4357, %v4387
    %4392 = vrot.lane.b32.xlu0 %v4388, 126
    %v4393 = vpop.permute.xlu0 %4392
    %4394 = vrot.lane.b32.xlu0 %v4389, 126
    %v4395 = vpop.permute.xlu0 %4394
    %v4398 = vadd.f32 %v4284, %v4393
    %v4399 = vadd.f32 %v4285, %v4395
    %s4400 = sld [smem:[#allocation10 + $0xab]]
    %v4401 = vstv %s4400
    %v4402 = vmul.f32 %v4356, %v4401
    %v4403 = vmul.f32 %v4357, %v4401
    %4406 = vrot.lane.b32.xlu0 %v4402, 126
    %v4407 = vpop.permute.xlu0 %4406
    %4408 = vrot.lane.b32.xlu0 %v4403, 126
    %v4409 = vpop.permute.xlu0 %4408
    %v4412 = vadd.f32 %v4298, %v4407
    %v4413 = vadd.f32 %v4299, %v4409
    %s4414 = sld [smem:[#allocation10 + $0xac]]
    %v4415 = vstv %s4414
    %v4416 = vmul.f32 %v4356, %v4415
    %v4417 = vmul.f32 %v4357, %v4415
    %4420 = vrot.lane.b32.xlu0 %v4416, 126
    %v4421 = vpop.permute.xlu0 %4420
    %4422 = vrot.lane.b32.xlu0 %v4417, 126
    %v4423 = vpop.permute.xlu0 %4422
    %v4426 = vadd.f32 %v4312, %v4421
    %v4427 = vadd.f32 %v4313, %v4423
    %s4428 = sld [smem:[#allocation10 + $0xad]]
    %v4429 = vstv %s4428
    %v4430 = vmul.f32 %v4356, %v4429
    %v4431 = vmul.f32 %v4357, %v4429
    %4434 = vrot.lane.b32.xlu0 %v4430, 126
    %v4435 = vpop.permute.xlu0 %4434
    %4436 = vrot.lane.b32.xlu0 %v4431, 126
    %v4437 = vpop.permute.xlu0 %4436
    %v4440 = vadd.f32 %v4326, %v4435
    %v4441 = vadd.f32 %v4327, %v4437
    %s4442 = sld [smem:[#allocation10 + $0xae]]
    %v4443 = vstv %s4442
    %v4444 = vmul.f32 %v4356, %v4443
    %v4445 = vmul.f32 %v4357, %v4443
    %4448 = vrot.lane.b32.xlu0 %v4444, 126
    %v4449 = vpop.permute.xlu0 %4448
    %4450 = vrot.lane.b32.xlu0 %v4445, 126
    %v4451 = vpop.permute.xlu0 %4450
    %v4454 = vadd.f32 %v4340, %v4449
    %v4455 = vadd.f32 %v4341, %v4451
    %s4456 = sld [smem:[#allocation10 + $0xaf]]
    %v4457 = vstv %s4456
    %v4458 = vmul.f32 %v4356, %v4457
    %v4459 = vmul.f32 %v4357, %v4457
    %4462 = vrot.lane.b32.xlu0 %v4458, 126
    %v4463 = vpop.permute.xlu0 %4462
    %4464 = vrot.lane.b32.xlu0 %v4459, 126
    %v4465 = vpop.permute.xlu0 %4464
    %v4468 = vadd.f32 %v4354, %v4463
    %v4469 = vadd.f32 %v4355, %v4465
    %v4470 = vld [vmem:[#allocation4 + $0x12] sm:$0xff]
    %v4471 = vld [vmem:[#allocation4 + $0x1a] sm:$0x3f]
    %v4472 = vmul.f32 %v4470, %v3073
    %v4473 = vmul.f32 %v4471, %v3073
    %s4474 = sld [smem:[#allocation10 + $0xc8]]
    %v4475 = vstv %s4474
    %v4476 = vmul.f32 %v4472, %v4475
    %v4477 = vmul.f32 %v4473, %v4475
    %v4478 = vadd.f32 %v4370, %v4476
    %v4479 = vadd.f32 %v4371, %v4477
    %s4480 = sld [smem:[#allocation10 + $0xc9]]
    %v4481 = vstv %s4480
    %v4482 = vmul.f32 %v4472, %v4481
    %v4483 = vmul.f32 %v4473, %v4481
    %v4484 = vadd.f32 %v4384, %v4482
    %v4485 = vadd.f32 %v4385, %v4483
    %s4486 = sld [smem:[#allocation10 + $0xca]]
    %v4487 = vstv %s4486
    %v4488 = vmul.f32 %v4472, %v4487
    %v4489 = vmul.f32 %v4473, %v4487
    %v4490 = vadd.f32 %v4398, %v4488
    %v4491 = vadd.f32 %v4399, %v4489
    %s4492 = sld [smem:[#allocation10 + $0xcb]]
    %v4493 = vstv %s4492
    %v4494 = vmul.f32 %v4472, %v4493
    %v4495 = vmul.f32 %v4473, %v4493
    %v4496 = vadd.f32 %v4412, %v4494
    %v4497 = vadd.f32 %v4413, %v4495
    %s4498 = sld [smem:[#allocation10 + $0xcc]]
    %v4499 = vstv %s4498
    %v4500 = vmul.f32 %v4472, %v4499
    %v4501 = vmul.f32 %v4473, %v4499
    %v4502 = vadd.f32 %v4426, %v4500
    %v4503 = vadd.f32 %v4427, %v4501
    %s4504 = sld [smem:[#allocation10 + $0xcd]]
    %v4505 = vstv %s4504
    %v4506 = vmul.f32 %v4472, %v4505
    %v4507 = vmul.f32 %v4473, %v4505
    %v4508 = vadd.f32 %v4440, %v4506
    %v4509 = vadd.f32 %v4441, %v4507
    %s4510 = sld [smem:[#allocation10 + $0xce]]
    %v4511 = vstv %s4510
    %v4512 = vmul.f32 %v4472, %v4511
    %v4513 = vmul.f32 %v4473, %v4511
    %v4514 = vadd.f32 %v4454, %v4512
    %v4515 = vadd.f32 %v4455, %v4513
    %s4516 = sld [smem:[#allocation10 + $0xcf]]
    %v4517 = vstv %s4516
    %v4518 = vmul.f32 %v4472, %v4517
    %v4519 = vmul.f32 %v4473, %v4517
    %v4520 = vadd.f32 %v4468, %v4518
    %v4521 = vadd.f32 %v4469, %v4519
    %s4522 = sld [smem:[#allocation10 + $0xe8]]
    %v4523 = vstv %s4522
    %v4524 = vmul.f32 %v4470, %v4523
    %v4525 = vmul.f32 %v4471, %v4523
    %4528 = vrot.lane.b32.xlu0 %v4524, 127
    %v4529 = vpop.permute.xlu0 %4528
    %4530 = vrot.lane.b32.xlu0 %v4525, 127
    %v4531 = vpop.permute.xlu0 %4530
    %v4534 = vadd.f32 %v4478, %v4529
    %v4535 = vadd.f32 %v4479, %v4531
    %s4536 = sld [smem:[#allocation10 + $0xe9]]
    %v4537 = vstv %s4536
    %v4538 = vmul.f32 %v4470, %v4537
    %v4539 = vmul.f32 %v4471, %v4537
    %4542 = vrot.lane.b32.xlu0 %v4538, 127
    %v4543 = vpop.permute.xlu0 %4542
    %4544 = vrot.lane.b32.xlu0 %v4539, 127
    %v4545 = vpop.permute.xlu0 %4544
    %v4548 = vadd.f32 %v4484, %v4543
    %v4549 = vadd.f32 %v4485, %v4545
    %s4550 = sld [smem:[#allocation10 + $0xea]]
    %v4551 = vstv %s4550
    %v4552 = vmul.f32 %v4470, %v4551
    %v4553 = vmul.f32 %v4471, %v4551
    %4556 = vrot.lane.b32.xlu0 %v4552, 127
    %v4557 = vpop.permute.xlu0 %4556
    %4558 = vrot.lane.b32.xlu0 %v4553, 127
    %v4559 = vpop.permute.xlu0 %4558
    %v4562 = vadd.f32 %v4490, %v4557
    %v4563 = vadd.f32 %v4491, %v4559
    %s4564 = sld [smem:[#allocation10 + $0xeb]]
    %v4565 = vstv %s4564
    %v4566 = vmul.f32 %v4470, %v4565
    %v4567 = vmul.f32 %v4471, %v4565
    %4570 = vrot.lane.b32.xlu0 %v4566, 127
    %v4571 = vpop.permute.xlu0 %4570
    %4572 = vrot.lane.b32.xlu0 %v4567, 127
    %v4573 = vpop.permute.xlu0 %4572
    %v4576 = vadd.f32 %v4496, %v4571
    %v4577 = vadd.f32 %v4497, %v4573
    %s4578 = sld [smem:[#allocation10 + $0xec]]
    %v4579 = vstv %s4578
    %v4580 = vmul.f32 %v4470, %v4579
    %v4581 = vmul.f32 %v4471, %v4579
    %4584 = vrot.lane.b32.xlu0 %v4580, 127
    %v4585 = vpop.permute.xlu0 %4584
    %4586 = vrot.lane.b32.xlu0 %v4581, 127
    %v4587 = vpop.permute.xlu0 %4586
    %v4590 = vadd.f32 %v4502, %v4585
    %v4591 = vadd.f32 %v4503, %v4587
    %s4592 = sld [smem:[#allocation10 + $0xed]]
    %v4593 = vstv %s4592
    %v4594 = vmul.f32 %v4470, %v4593
    %v4595 = vmul.f32 %v4471, %v4593
    %4598 = vrot.lane.b32.xlu0 %v4594, 127
    %v4599 = vpop.permute.xlu0 %4598
    %4600 = vrot.lane.b32.xlu0 %v4595, 127
    %v4601 = vpop.permute.xlu0 %4600
    %v4604 = vadd.f32 %v4508, %v4599
    %v4605 = vadd.f32 %v4509, %v4601
    %s4606 = sld [smem:[#allocation10 + $0xee]]
    %v4607 = vstv %s4606
    %v4608 = vmul.f32 %v4470, %v4607
    %v4609 = vmul.f32 %v4471, %v4607
    %4612 = vrot.lane.b32.xlu0 %v4608, 127
    %v4613 = vpop.permute.xlu0 %4612
    %4614 = vrot.lane.b32.xlu0 %v4609, 127
    %v4615 = vpop.permute.xlu0 %4614
    %v4618 = vadd.f32 %v4514, %v4613
    %v4619 = vadd.f32 %v4515, %v4615
    %s4620 = sld [smem:[#allocation10 + $0xef]]
    %v4621 = vstv %s4620
    %v4622 = vmul.f32 %v4470, %v4621
    %v4623 = vmul.f32 %v4471, %v4621
    %4626 = vrot.lane.b32.xlu0 %v4622, 127
    %v4627 = vpop.permute.xlu0 %4626
    %4628 = vrot.lane.b32.xlu0 %v4623, 127
    %v4629 = vpop.permute.xlu0 %4628
    %v4632 = vadd.f32 %v4520, %v4627
    %v4633 = vadd.f32 %v4521, %v4629
    %v4634 = vmul.f32 %v4470, %v3242
    %v4635 = vmul.f32 %v4471, %v3242
    %s4636 = sld [smem:[#allocation10 + $0x108]]
    %v4637 = vstv %s4636
    %v4638 = vmul.f32 %v4634, %v4637
    %v4639 = vmul.f32 %v4635, %v4637
    %4642 = vrot.lane.b32.xlu0 %v4638, 126
    %v4643 = vpop.permute.xlu0 %4642
    %4644 = vrot.lane.b32.xlu0 %v4639, 126
    %v4645 = vpop.permute.xlu0 %4644
    %v4648 = vadd.f32 %v4534, %v4643
    %v4649 = vadd.f32 %v4535, %v4645
    %s4650 = sld [smem:[#allocation10 + $0x109]]
    %v4651 = vstv %s4650
    %v4652 = vmul.f32 %v4634, %v4651
    %v4653 = vmul.f32 %v4635, %v4651
    %4656 = vrot.lane.b32.xlu0 %v4652, 126
    %v4657 = vpop.permute.xlu0 %4656
    %4658 = vrot.lane.b32.xlu0 %v4653, 126
    %v4659 = vpop.permute.xlu0 %4658
    %v4662 = vadd.f32 %v4548, %v4657
    %v4663 = vadd.f32 %v4549, %v4659
    %s4664 = sld [smem:[#allocation10 + $0x10a]]
    %v4665 = vstv %s4664
    %v4666 = vmul.f32 %v4634, %v4665
    %v4667 = vmul.f32 %v4635, %v4665
    %4670 = vrot.lane.b32.xlu0 %v4666, 126
    %v4671 = vpop.permute.xlu0 %4670
    %4672 = vrot.lane.b32.xlu0 %v4667, 126
    %v4673 = vpop.permute.xlu0 %4672
    %v4676 = vadd.f32 %v4562, %v4671
    %v4677 = vadd.f32 %v4563, %v4673
    %s4678 = sld [smem:[#allocation10 + $0x10b]]
    %v4679 = vstv %s4678
    %v4680 = vmul.f32 %v4634, %v4679
    %v4681 = vmul.f32 %v4635, %v4679
    %4684 = vrot.lane.b32.xlu0 %v4680, 126
    %v4685 = vpop.permute.xlu0 %4684
    %4686 = vrot.lane.b32.xlu0 %v4681, 126
    %v4687 = vpop.permute.xlu0 %4686
    %v4690 = vadd.f32 %v4576, %v4685
    %v4691 = vadd.f32 %v4577, %v4687
    %s4692 = sld [smem:[#allocation10 + $0x10c]]
    %v4693 = vstv %s4692
    %v4694 = vmul.f32 %v4634, %v4693
    %v4695 = vmul.f32 %v4635, %v4693
    %4698 = vrot.lane.b32.xlu0 %v4694, 126
    %v4699 = vpop.permute.xlu0 %4698
    %4700 = vrot.lane.b32.xlu0 %v4695, 126
    %v4701 = vpop.permute.xlu0 %4700
    %v4704 = vadd.f32 %v4590, %v4699
    %v4705 = vadd.f32 %v4591, %v4701
    %s4706 = sld [smem:[#allocation10 + $0x10d]]
    %v4707 = vstv %s4706
    %v4708 = vmul.f32 %v4634, %v4707
    %v4709 = vmul.f32 %v4635, %v4707
    %4712 = vrot.lane.b32.xlu0 %v4708, 126
    %v4713 = vpop.permute.xlu0 %4712
    %4714 = vrot.lane.b32.xlu0 %v4709, 126
    %v4715 = vpop.permute.xlu0 %4714
    %v4718 = vadd.f32 %v4604, %v4713
    %v4719 = vadd.f32 %v4605, %v4715
    %s4720 = sld [smem:[#allocation10 + $0x10e]]
    %v4721 = vstv %s4720
    %v4722 = vmul.f32 %v4634, %v4721
    %v4723 = vmul.f32 %v4635, %v4721
    %4726 = vrot.lane.b32.xlu0 %v4722, 126
    %v4727 = vpop.permute.xlu0 %4726
    %4728 = vrot.lane.b32.xlu0 %v4723, 126
    %v4729 = vpop.permute.xlu0 %4728
    %v4732 = vadd.f32 %v4618, %v4727
    %v4733 = vadd.f32 %v4619, %v4729
    %s4734 = sld [smem:[#allocation10 + $0x10f]]
    %v4735 = vstv %s4734
    %v4736 = vmul.f32 %v4634, %v4735
    %v4737 = vmul.f32 %v4635, %v4735
    %4740 = vrot.lane.b32.xlu0 %v4736, 126
    %v4741 = vpop.permute.xlu0 %4740
    %4742 = vrot.lane.b32.xlu0 %v4737, 126
    %v4743 = vpop.permute.xlu0 %4742
    %v4746 = vadd.f32 %v4632, %v4741
    %v4747 = vadd.f32 %v4633, %v4743
    %v4748 = vld [vmem:[#allocation4 + $0x20] sm:$0xff]
    %v4749 = vld [vmem:[#allocation4 + $0x28] sm:$0x3f]
    %v4750 = vmul.f32 %v4748, %v3073
    %v4751 = vmul.f32 %v4749, %v3073
    %s4752 = sld [smem:[#allocation10 + $0x10]]
    %v4753 = vstv %s4752
    %v4754 = vmul.f32 %v4750, %v4753
    %v4755 = vmul.f32 %v4751, %v4753
    %v4756 = vadd.f32 %v4648, %v4754
    %v4757 = vadd.f32 %v4649, %v4755
    %s4758 = sld [smem:[#allocation10 + $0x11]]
    %v4759 = vstv %s4758
    %v4760 = vmul.f32 %v4750, %v4759
    %v4761 = vmul.f32 %v4751, %v4759
    %v4762 = vadd.f32 %v4662, %v4760
    %v4763 = vadd.f32 %v4663, %v4761
    %s4764 = sld [smem:[#allocation10 + $0x12]]
    %v4765 = vstv %s4764
    %v4766 = vmul.f32 %v4750, %v4765
    %v4767 = vmul.f32 %v4751, %v4765
    %v4768 = vadd.f32 %v4676, %v4766
    %v4769 = vadd.f32 %v4677, %v4767
    %s4770 = sld [smem:[#allocation10 + $0x13]]
    %v4771 = vstv %s4770
    %v4772 = vmul.f32 %v4750, %v4771
    %v4773 = vmul.f32 %v4751, %v4771
    %v4774 = vadd.f32 %v4690, %v4772
    %v4775 = vadd.f32 %v4691, %v4773
    %s4776 = sld [smem:[#allocation10 + $0x14]]
    %v4777 = vstv %s4776
    %v4778 = vmul.f32 %v4750, %v4777
    %v4779 = vmul.f32 %v4751, %v4777
    %v4780 = vadd.f32 %v4704, %v4778
    %v4781 = vadd.f32 %v4705, %v4779
    %s4782 = sld [smem:[#allocation10 + $0x15]]
    %v4783 = vstv %s4782
    %v4784 = vmul.f32 %v4750, %v4783
    %v4785 = vmul.f32 %v4751, %v4783
    %v4786 = vadd.f32 %v4718, %v4784
    %v4787 = vadd.f32 %v4719, %v4785
    %s4788 = sld [smem:[#allocation10 + $0x16]]
    %v4789 = vstv %s4788
    %v4790 = vmul.f32 %v4750, %v4789
    %v4791 = vmul.f32 %v4751, %v4789
    %v4792 = vadd.f32 %v4732, %v4790
    %v4793 = vadd.f32 %v4733, %v4791
    %s4794 = sld [smem:[#allocation10 + $0x17]]
    %v4795 = vstv %s4794
    %v4796 = vmul.f32 %v4750, %v4795
    %v4797 = vmul.f32 %v4751, %v4795
    %v4798 = vadd.f32 %v4746, %v4796
    %v4799 = vadd.f32 %v4747, %v4797
    %s4800 = sld [smem:[#allocation10 + $0x30]]
    %v4801 = vstv %s4800
    %v4802 = vmul.f32 %v4748, %v4801
    %v4803 = vmul.f32 %v4749, %v4801
    %4806 = vrot.lane.b32.xlu0 %v4802, 127
    %v4807 = vpop.permute.xlu0 %4806
    %4808 = vrot.lane.b32.xlu0 %v4803, 127
    %v4809 = vpop.permute.xlu0 %4808
    %v4812 = vadd.f32 %v4756, %v4807
    %v4813 = vadd.f32 %v4757, %v4809
    %s4814 = sld [smem:[#allocation10 + $0x31]]
    %v4815 = vstv %s4814
    %v4816 = vmul.f32 %v4748, %v4815
    %v4817 = vmul.f32 %v4749, %v4815
    %4820 = vrot.lane.b32.xlu0 %v4816, 127
    %v4821 = vpop.permute.xlu0 %4820
    %4822 = vrot.lane.b32.xlu0 %v4817, 127
    %v4823 = vpop.permute.xlu0 %4822
    %v4826 = vadd.f32 %v4762, %v4821
    %v4827 = vadd.f32 %v4763, %v4823
    %s4828 = sld [smem:[#allocation10 + $0x32]]
    %v4829 = vstv %s4828
    %v4830 = vmul.f32 %v4748, %v4829
    %v4831 = vmul.f32 %v4749, %v4829
    %4834 = vrot.lane.b32.xlu0 %v4830, 127
    %v4835 = vpop.permute.xlu0 %4834
    %4836 = vrot.lane.b32.xlu0 %v4831, 127
    %v4837 = vpop.permute.xlu0 %4836
    %v4840 = vadd.f32 %v4768, %v4835
    %v4841 = vadd.f32 %v4769, %v4837
    %s4842 = sld [smem:[#allocation10 + $0x33]]
    %v4843 = vstv %s4842
    %v4844 = vmul.f32 %v4748, %v4843
    %v4845 = vmul.f32 %v4749, %v4843
    %4848 = vrot.lane.b32.xlu0 %v4844, 127
    %v4849 = vpop.permute.xlu0 %4848
    %4850 = vrot.lane.b32.xlu0 %v4845, 127
    %v4851 = vpop.permute.xlu0 %4850
    %v4854 = vadd.f32 %v4774, %v4849
    %v4855 = vadd.f32 %v4775, %v4851
    %s4856 = sld [smem:[#allocation10 + $0x34]]
    %v4857 = vstv %s4856
    %v4858 = vmul.f32 %v4748, %v4857
    %v4859 = vmul.f32 %v4749, %v4857
    %4862 = vrot.lane.b32.xlu0 %v4858, 127
    %v4863 = vpop.permute.xlu0 %4862
    %4864 = vrot.lane.b32.xlu0 %v4859, 127
    %v4865 = vpop.permute.xlu0 %4864
    %v4868 = vadd.f32 %v4780, %v4863
    %v4869 = vadd.f32 %v4781, %v4865
    %s4870 = sld [smem:[#allocation10 + $0x35]]
    %v4871 = vstv %s4870
    %v4872 = vmul.f32 %v4748, %v4871
    %v4873 = vmul.f32 %v4749, %v4871
    %4876 = vrot.lane.b32.xlu0 %v4872, 127
    %v4877 = vpop.permute.xlu0 %4876
    %4878 = vrot.lane.b32.xlu0 %v4873, 127
    %v4879 = vpop.permute.xlu0 %4878
    %v4882 = vadd.f32 %v4786, %v4877
    %v4883 = vadd.f32 %v4787, %v4879
    %s4884 = sld [smem:[#allocation10 + $0x36]]
    %v4885 = vstv %s4884
    %v4886 = vmul.f32 %v4748, %v4885
    %v4887 = vmul.f32 %v4749, %v4885
    %4890 = vrot.lane.b32.xlu0 %v4886, 127
    %v4891 = vpop.permute.xlu0 %4890
    %4892 = vrot.lane.b32.xlu0 %v4887, 127
    %v4893 = vpop.permute.xlu0 %4892
    %v4896 = vadd.f32 %v4792, %v4891
    %v4897 = vadd.f32 %v4793, %v4893
    %s4898 = sld [smem:[#allocation10 + $0x37]]
    %v4899 = vstv %s4898
    %v4900 = vmul.f32 %v4748, %v4899
    %v4901 = vmul.f32 %v4749, %v4899
    %4904 = vrot.lane.b32.xlu0 %v4900, 127
    %v4905 = vpop.permute.xlu0 %4904
    %4906 = vrot.lane.b32.xlu0 %v4901, 127
    %v4907 = vpop.permute.xlu0 %4906
    %v4910 = vadd.f32 %v4798, %v4905
    %v4911 = vadd.f32 %v4799, %v4907
    %v4912 = vmul.f32 %v4748, %v3242
    %v4913 = vmul.f32 %v4749, %v3242
    %s4914 = sld [smem:[#allocation10 + $0x50]]
    %v4915 = vstv %s4914
    %v4916 = vmul.f32 %v4912, %v4915
    %v4917 = vmul.f32 %v4913, %v4915
    %4920 = vrot.lane.b32.xlu0 %v4916, 126
    %v4921 = vpop.permute.xlu0 %4920
    %4922 = vrot.lane.b32.xlu0 %v4917, 126
    %v4923 = vpop.permute.xlu0 %4922
    %v4926 = vadd.f32 %v4812, %v4921
    %v4927 = vadd.f32 %v4813, %v4923
    %s4928 = sld [smem:[#allocation10 + $0x51]]
    %v4929 = vstv %s4928
    %v4930 = vmul.f32 %v4912, %v4929
    %v4931 = vmul.f32 %v4913, %v4929
    %4934 = vrot.lane.b32.xlu0 %v4930, 126
    %v4935 = vpop.permute.xlu0 %4934
    %4936 = vrot.lane.b32.xlu0 %v4931, 126
    %v4937 = vpop.permute.xlu0 %4936
    %v4940 = vadd.f32 %v4826, %v4935
    %v4941 = vadd.f32 %v4827, %v4937
    %s4942 = sld [smem:[#allocation10 + $0x52]]
    %v4943 = vstv %s4942
    %v4944 = vmul.f32 %v4912, %v4943
    %v4945 = vmul.f32 %v4913, %v4943
    %4948 = vrot.lane.b32.xlu0 %v4944, 126
    %v4949 = vpop.permute.xlu0 %4948
    %4950 = vrot.lane.b32.xlu0 %v4945, 126
    %v4951 = vpop.permute.xlu0 %4950
    %v4954 = vadd.f32 %v4840, %v4949
    %v4955 = vadd.f32 %v4841, %v4951
    %s4956 = sld [smem:[#allocation10 + $0x53]]
    %v4957 = vstv %s4956
    %v4958 = vmul.f32 %v4912, %v4957
    %v4959 = vmul.f32 %v4913, %v4957
    %4962 = vrot.lane.b32.xlu0 %v4958, 126
    %v4963 = vpop.permute.xlu0 %4962
    %4964 = vrot.lane.b32.xlu0 %v4959, 126
    %v4965 = vpop.permute.xlu0 %4964
    %v4968 = vadd.f32 %v4854, %v4963
    %v4969 = vadd.f32 %v4855, %v4965
    %s4970 = sld [smem:[#allocation10 + $0x54]]
    %v4971 = vstv %s4970
    %v4972 = vmul.f32 %v4912, %v4971
    %v4973 = vmul.f32 %v4913, %v4971
    %4976 = vrot.lane.b32.xlu0 %v4972, 126
    %v4977 = vpop.permute.xlu0 %4976
    %4978 = vrot.lane.b32.xlu0 %v4973, 126
    %v4979 = vpop.permute.xlu0 %4978
    %v4982 = vadd.f32 %v4868, %v4977
    %v4983 = vadd.f32 %v4869, %v4979
    %s4984 = sld [smem:[#allocation10 + $0x55]]
    %v4985 = vstv %s4984
    %v4986 = vmul.f32 %v4912, %v4985
    %v4987 = vmul.f32 %v4913, %v4985
    %4990 = vrot.lane.b32.xlu0 %v4986, 126
    %v4991 = vpop.permute.xlu0 %4990
    %4992 = vrot.lane.b32.xlu0 %v4987, 126
    %v4993 = vpop.permute.xlu0 %4992
    %v4996 = vadd.f32 %v4882, %v4991
    %v4997 = vadd.f32 %v4883, %v4993
    %s4998 = sld [smem:[#allocation10 + $0x56]]
    %v4999 = vstv %s4998
    %v5000 = vmul.f32 %v4912, %v4999
    %v5001 = vmul.f32 %v4913, %v4999
    %5004 = vrot.lane.b32.xlu0 %v5000, 126
    %v5005 = vpop.permute.xlu0 %5004
    %5006 = vrot.lane.b32.xlu0 %v5001, 126
    %v5007 = vpop.permute.xlu0 %5006
    %v5010 = vadd.f32 %v4896, %v5005
    %v5011 = vadd.f32 %v4897, %v5007
    %s5012 = sld [smem:[#allocation10 + $0x57]]
    %v5013 = vstv %s5012
    %v5014 = vmul.f32 %v4912, %v5013
    %v5015 = vmul.f32 %v4913, %v5013
    %5018 = vrot.lane.b32.xlu0 %v5014, 126
    %v5019 = vpop.permute.xlu0 %5018
    %5020 = vrot.lane.b32.xlu0 %v5015, 126
    %v5021 = vpop.permute.xlu0 %5020
    %v5024 = vadd.f32 %v4910, %v5019
    %v5025 = vadd.f32 %v4911, %v5021
    %v5026 = vld [vmem:[#allocation4 + $0x21] sm:$0xff]
    %v5027 = vld [vmem:[#allocation4 + $0x29] sm:$0x3f]
    %v5028 = vmul.f32 %v5026, %v3073
    %v5029 = vmul.f32 %v5027, %v3073
    %s5030 = sld [smem:[#allocation10 + $0x70]]
    %v5031 = vstv %s5030
    %v5032 = vmul.f32 %v5028, %v5031
    %v5033 = vmul.f32 %v5029, %v5031
    %v5034 = vadd.f32 %v4926, %v5032
    %v5035 = vadd.f32 %v4927, %v5033
    %s5036 = sld [smem:[#allocation10 + $0x71]]
    %v5037 = vstv %s5036
    %v5038 = vmul.f32 %v5028, %v5037
    %v5039 = vmul.f32 %v5029, %v5037
    %v5040 = vadd.f32 %v4940, %v5038
    %v5041 = vadd.f32 %v4941, %v5039
    %s5042 = sld [smem:[#allocation10 + $0x72]]
    %v5043 = vstv %s5042
    %v5044 = vmul.f32 %v5028, %v5043
    %v5045 = vmul.f32 %v5029, %v5043
    %v5046 = vadd.f32 %v4954, %v5044
    %v5047 = vadd.f32 %v4955, %v5045
    %s5048 = sld [smem:[#allocation10 + $0x73]]
    %v5049 = vstv %s5048
    %v5050 = vmul.f32 %v5028, %v5049
    %v5051 = vmul.f32 %v5029, %v5049
    %v5052 = vadd.f32 %v4968, %v5050
    %v5053 = vadd.f32 %v4969, %v5051
    %s5054 = sld [smem:[#allocation10 + $0x74]]
    %v5055 = vstv %s5054
    %v5056 = vmul.f32 %v5028, %v5055
    %v5057 = vmul.f32 %v5029, %v5055
    %v5058 = vadd.f32 %v4982, %v5056
    %v5059 = vadd.f32 %v4983, %v5057
    %s5060 = sld [smem:[#allocation10 + $0x75]]
    %v5061 = vstv %s5060
    %v5062 = vmul.f32 %v5028, %v5061
    %v5063 = vmul.f32 %v5029, %v5061
    %v5064 = vadd.f32 %v4996, %v5062
    %v5065 = vadd.f32 %v4997, %v5063
    %s5066 = sld [smem:[#allocation10 + $0x76]]
    %v5067 = vstv %s5066
    %v5068 = vmul.f32 %v5028, %v5067
    %v5069 = vmul.f32 %v5029, %v5067
    %v5070 = vadd.f32 %v5010, %v5068
    %v5071 = vadd.f32 %v5011, %v5069
    %s5072 = sld [smem:[#allocation10 + $0x77]]
    %v5073 = vstv %s5072
    %v5074 = vmul.f32 %v5028, %v5073
    %v5075 = vmul.f32 %v5029, %v5073
    %v5076 = vadd.f32 %v5024, %v5074
    %v5077 = vadd.f32 %v5025, %v5075
    %s5078 = sld [smem:[#allocation10 + $0x90]]
    %v5079 = vstv %s5078
    %v5080 = vmul.f32 %v5026, %v5079
    %v5081 = vmul.f32 %v5027, %v5079
    %5084 = vrot.lane.b32.xlu0 %v5080, 127
    %v5085 = vpop.permute.xlu0 %5084
    %5086 = vrot.lane.b32.xlu0 %v5081, 127
    %v5087 = vpop.permute.xlu0 %5086
    %v5090 = vadd.f32 %v5034, %v5085
    %v5091 = vadd.f32 %v5035, %v5087
    %s5092 = sld [smem:[#allocation10 + $0x91]]
    %v5093 = vstv %s5092
    %v5094 = vmul.f32 %v5026, %v5093
    %v5095 = vmul.f32 %v5027, %v5093
    %5098 = vrot.lane.b32.xlu0 %v5094, 127
    %v5099 = vpop.permute.xlu0 %5098
    %5100 = vrot.lane.b32.xlu0 %v5095, 127
    %v5101 = vpop.permute.xlu0 %5100
    %v5104 = vadd.f32 %v5040, %v5099
    %v5105 = vadd.f32 %v5041, %v5101
    %s5106 = sld [smem:[#allocation10 + $0x92]]
    %v5107 = vstv %s5106
    %v5108 = vmul.f32 %v5026, %v5107
    %v5109 = vmul.f32 %v5027, %v5107
    %5112 = vrot.lane.b32.xlu0 %v5108, 127
    %v5113 = vpop.permute.xlu0 %5112
    %5114 = vrot.lane.b32.xlu0 %v5109, 127
    %v5115 = vpop.permute.xlu0 %5114
    %v5118 = vadd.f32 %v5046, %v5113
    %v5119 = vadd.f32 %v5047, %v5115
    %s5120 = sld [smem:[#allocation10 + $0x93]]
    %v5121 = vstv %s5120
    %v5122 = vmul.f32 %v5026, %v5121
    %v5123 = vmul.f32 %v5027, %v5121
    %5126 = vrot.lane.b32.xlu0 %v5122, 127
    %v5127 = vpop.permute.xlu0 %5126
    %5128 = vrot.lane.b32.xlu0 %v5123, 127
    %v5129 = vpop.permute.xlu0 %5128
    %v5132 = vadd.f32 %v5052, %v5127
    %v5133 = vadd.f32 %v5053, %v5129
    %s5134 = sld [smem:[#allocation10 + $0x94]]
    %v5135 = vstv %s5134
    %v5136 = vmul.f32 %v5026, %v5135
    %v5137 = vmul.f32 %v5027, %v5135
    %5140 = vrot.lane.b32.xlu0 %v5136, 127
    %v5141 = vpop.permute.xlu0 %5140
    %5142 = vrot.lane.b32.xlu0 %v5137, 127
    %v5143 = vpop.permute.xlu0 %5142
    %v5146 = vadd.f32 %v5058, %v5141
    %v5147 = vadd.f32 %v5059, %v5143
    %s5148 = sld [smem:[#allocation10 + $0x95]]
    %v5149 = vstv %s5148
    %v5150 = vmul.f32 %v5026, %v5149
    %v5151 = vmul.f32 %v5027, %v5149
    %5154 = vrot.lane.b32.xlu0 %v5150, 127
    %v5155 = vpop.permute.xlu0 %5154
    %5156 = vrot.lane.b32.xlu0 %v5151, 127
    %v5157 = vpop.permute.xlu0 %5156
    %v5160 = vadd.f32 %v5064, %v5155
    %v5161 = vadd.f32 %v5065, %v5157
    %s5162 = sld [smem:[#allocation10 + $0x96]]
    %v5163 = vstv %s5162
    %v5164 = vmul.f32 %v5026, %v5163
    %v5165 = vmul.f32 %v5027, %v5163
    %5168 = vrot.lane.b32.xlu0 %v5164, 127
    %v5169 = vpop.permute.xlu0 %5168
    %5170 = vrot.lane.b32.xlu0 %v5165, 127
    %v5171 = vpop.permute.xlu0 %5170
    %v5174 = vadd.f32 %v5070, %v5169
    %v5175 = vadd.f32 %v5071, %v5171
    %s5176 = sld [smem:[#allocation10 + $0x97]]
    %v5177 = vstv %s5176
    %v5178 = vmul.f32 %v5026, %v5177
    %v5179 = vmul.f32 %v5027, %v5177
    %5182 = vrot.lane.b32.xlu0 %v5178, 127
    %v5183 = vpop.permute.xlu0 %5182
    %5184 = vrot.lane.b32.xlu0 %v5179, 127
    %v5185 = vpop.permute.xlu0 %5184
    %v5188 = vadd.f32 %v5076, %v5183
    %v5189 = vadd.f32 %v5077, %v5185
    %v5190 = vmul.f32 %v5026, %v3242
    %v5191 = vmul.f32 %v5027, %v3242
    %s5192 = sld [smem:[#allocation10 + $0xb0]]
    %v5193 = vstv %s5192
    %v5194 = vmul.f32 %v5190, %v5193
    %v5195 = vmul.f32 %v5191, %v5193
    %5198 = vrot.lane.b32.xlu0 %v5194, 126
    %v5199 = vpop.permute.xlu0 %5198
    %5200 = vrot.lane.b32.xlu0 %v5195, 126
    %v5201 = vpop.permute.xlu0 %5200
    %v5204 = vadd.f32 %v5090, %v5199
    %v5205 = vadd.f32 %v5091, %v5201
    %s5206 = sld [smem:[#allocation10 + $0xb1]]
    %v5207 = vstv %s5206
    %v5208 = vmul.f32 %v5190, %v5207
    %v5209 = vmul.f32 %v5191, %v5207
    %5212 = vrot.lane.b32.xlu0 %v5208, 126
    %v5213 = vpop.permute.xlu0 %5212
    %5214 = vrot.lane.b32.xlu0 %v5209, 126
    %v5215 = vpop.permute.xlu0 %5214
    %v5218 = vadd.f32 %v5104, %v5213
    %v5219 = vadd.f32 %v5105, %v5215
    %s5220 = sld [smem:[#allocation10 + $0xb2]]
    %v5221 = vstv %s5220
    %v5222 = vmul.f32 %v5190, %v5221
    %v5223 = vmul.f32 %v5191, %v5221
    %5226 = vrot.lane.b32.xlu0 %v5222, 126
    %v5227 = vpop.permute.xlu0 %5226
    %5228 = vrot.lane.b32.xlu0 %v5223, 126
    %v5229 = vpop.permute.xlu0 %5228
    %v5232 = vadd.f32 %v5118, %v5227
    %v5233 = vadd.f32 %v5119, %v5229
    %s5234 = sld [smem:[#allocation10 + $0xb3]]
    %v5235 = vstv %s5234
    %v5236 = vmul.f32 %v5190, %v5235
    %v5237 = vmul.f32 %v5191, %v5235
    %5240 = vrot.lane.b32.xlu0 %v5236, 126
    %v5241 = vpop.permute.xlu0 %5240
    %5242 = vrot.lane.b32.xlu0 %v5237, 126
    %v5243 = vpop.permute.xlu0 %5242
    %v5246 = vadd.f32 %v5132, %v5241
    %v5247 = vadd.f32 %v5133, %v5243
    %s5248 = sld [smem:[#allocation10 + $0xb4]]
    %v5249 = vstv %s5248
    %v5250 = vmul.f32 %v5190, %v5249
    %v5251 = vmul.f32 %v5191, %v5249
    %5254 = vrot.lane.b32.xlu0 %v5250, 126
    %v5255 = vpop.permute.xlu0 %5254
    %5256 = vrot.lane.b32.xlu0 %v5251, 126
    %v5257 = vpop.permute.xlu0 %5256
    %v5260 = vadd.f32 %v5146, %v5255
    %v5261 = vadd.f32 %v5147, %v5257
    %s5262 = sld [smem:[#allocation10 + $0xb5]]
    %v5263 = vstv %s5262
    %v5264 = vmul.f32 %v5190, %v5263
    %v5265 = vmul.f32 %v5191, %v5263
    %5268 = vrot.lane.b32.xlu0 %v5264, 126
    %v5269 = vpop.permute.xlu0 %5268
    %5270 = vrot.lane.b32.xlu0 %v5265, 126
    %v5271 = vpop.permute.xlu0 %5270
    %v5274 = vadd.f32 %v5160, %v5269
    %v5275 = vadd.f32 %v5161, %v5271
    %s5276 = sld [smem:[#allocation10 + $0xb6]]
    %v5277 = vstv %s5276
    %v5278 = vmul.f32 %v5190, %v5277
    %v5279 = vmul.f32 %v5191, %v5277
    %5282 = vrot.lane.b32.xlu0 %v5278, 126
    %v5283 = vpop.permute.xlu0 %5282
    %5284 = vrot.lane.b32.xlu0 %v5279, 126
    %v5285 = vpop.permute.xlu0 %5284
    %v5288 = vadd.f32 %v5174, %v5283
    %v5289 = vadd.f32 %v5175, %v5285
    %s5290 = sld [smem:[#allocation10 + $0xb7]]
    %v5291 = vstv %s5290
    %v5292 = vmul.f32 %v5190, %v5291
    %v5293 = vmul.f32 %v5191, %v5291
    %5296 = vrot.lane.b32.xlu0 %v5292, 126
    %v5297 = vpop.permute.xlu0 %5296
    %5298 = vrot.lane.b32.xlu0 %v5293, 126
    %v5299 = vpop.permute.xlu0 %5298
    %v5302 = vadd.f32 %v5188, %v5297
    %v5303 = vadd.f32 %v5189, %v5299
    %v5304 = vld [vmem:[#allocation4 + $0x22] sm:$0xff]
    %v5305 = vld [vmem:[#allocation4 + $0x2a] sm:$0x3f]
    %v5306 = vmul.f32 %v5304, %v3073
    %v5307 = vmul.f32 %v5305, %v3073
    %s5308 = sld [smem:[#allocation10 + $0xd0]]
    %v5309 = vstv %s5308
    %v5310 = vmul.f32 %v5306, %v5309
    %v5311 = vmul.f32 %v5307, %v5309
    %v5312 = vadd.f32 %v5204, %v5310
    %v5313 = vadd.f32 %v5205, %v5311
    %s5314 = sld [smem:[#allocation10 + $0xd1]]
    %v5315 = vstv %s5314
    %v5316 = vmul.f32 %v5306, %v5315
    %v5317 = vmul.f32 %v5307, %v5315
    %v5318 = vadd.f32 %v5218, %v5316
    %v5319 = vadd.f32 %v5219, %v5317
    %s5320 = sld [smem:[#allocation10 + $0xd2]]
    %v5321 = vstv %s5320
    %v5322 = vmul.f32 %v5306, %v5321
    %v5323 = vmul.f32 %v5307, %v5321
    %v5324 = vadd.f32 %v5232, %v5322
    %v5325 = vadd.f32 %v5233, %v5323
    %s5326 = sld [smem:[#allocation10 + $0xd3]]
    %v5327 = vstv %s5326
    %v5328 = vmul.f32 %v5306, %v5327
    %v5329 = vmul.f32 %v5307, %v5327
    %v5330 = vadd.f32 %v5246, %v5328
    %v5331 = vadd.f32 %v5247, %v5329
    %s5332 = sld [smem:[#allocation10 + $0xd4]]
    %v5333 = vstv %s5332
    %v5334 = vmul.f32 %v5306, %v5333
    %v5335 = vmul.f32 %v5307, %v5333
    %v5336 = vadd.f32 %v5260, %v5334
    %v5337 = vadd.f32 %v5261, %v5335
    %s5338 = sld [smem:[#allocation10 + $0xd5]]
    %v5339 = vstv %s5338
    %v5340 = vmul.f32 %v5306, %v5339
    %v5341 = vmul.f32 %v5307, %v5339
    %v5342 = vadd.f32 %v5274, %v5340
    %v5343 = vadd.f32 %v5275, %v5341
    %s5344 = sld [smem:[#allocation10 + $0xd6]]
    %v5345 = vstv %s5344
    %v5346 = vmul.f32 %v5306, %v5345
    %v5347 = vmul.f32 %v5307, %v5345
    %v5348 = vadd.f32 %v5288, %v5346
    %v5349 = vadd.f32 %v5289, %v5347
    %s5350 = sld [smem:[#allocation10 + $0xd7]]
    %v5351 = vstv %s5350
    %v5352 = vmul.f32 %v5306, %v5351
    %v5353 = vmul.f32 %v5307, %v5351
    %v5354 = vadd.f32 %v5302, %v5352
    %v5355 = vadd.f32 %v5303, %v5353
    %s5356 = sld [smem:[#allocation10 + $0xf0]]
    %v5357 = vstv %s5356
    %v5358 = vmul.f32 %v5304, %v5357
    %v5359 = vmul.f32 %v5305, %v5357
    %5362 = vrot.lane.b32.xlu0 %v5358, 127
    %v5363 = vpop.permute.xlu0 %5362
    %5364 = vrot.lane.b32.xlu0 %v5359, 127
    %v5365 = vpop.permute.xlu0 %5364
    %v5368 = vadd.f32 %v5312, %v5363
    %v5369 = vadd.f32 %v5313, %v5365
    %s5370 = sld [smem:[#allocation10 + $0xf1]]
    %v5371 = vstv %s5370
    %v5372 = vmul.f32 %v5304, %v5371
    %v5373 = vmul.f32 %v5305, %v5371
    %5376 = vrot.lane.b32.xlu0 %v5372, 127
    %v5377 = vpop.permute.xlu0 %5376
    %5378 = vrot.lane.b32.xlu0 %v5373, 127
    %v5379 = vpop.permute.xlu0 %5378
    %v5382 = vadd.f32 %v5318, %v5377
    %v5383 = vadd.f32 %v5319, %v5379
    %s5384 = sld [smem:[#allocation10 + $0xf2]]
    %v5385 = vstv %s5384
    %v5386 = vmul.f32 %v5304, %v5385
    %v5387 = vmul.f32 %v5305, %v5385
    %5390 = vrot.lane.b32.xlu0 %v5386, 127
    %v5391 = vpop.permute.xlu0 %5390
    %5392 = vrot.lane.b32.xlu0 %v5387, 127
    %v5393 = vpop.permute.xlu0 %5392
    %v5396 = vadd.f32 %v5324, %v5391
    %v5397 = vadd.f32 %v5325, %v5393
    %s5398 = sld [smem:[#allocation10 + $0xf3]]
    %v5399 = vstv %s5398
    %v5400 = vmul.f32 %v5304, %v5399
    %v5401 = vmul.f32 %v5305, %v5399
    %5404 = vrot.lane.b32.xlu0 %v5400, 127
    %v5405 = vpop.permute.xlu0 %5404
    %5406 = vrot.lane.b32.xlu0 %v5401, 127
    %v5407 = vpop.permute.xlu0 %5406
    %v5410 = vadd.f32 %v5330, %v5405
    %v5411 = vadd.f32 %v5331, %v5407
    %s5412 = sld [smem:[#allocation10 + $0xf4]]
    %v5413 = vstv %s5412
    %v5414 = vmul.f32 %v5304, %v5413
    %v5415 = vmul.f32 %v5305, %v5413
    %5418 = vrot.lane.b32.xlu0 %v5414, 127
    %v5419 = vpop.permute.xlu0 %5418
    %5420 = vrot.lane.b32.xlu0 %v5415, 127
    %v5421 = vpop.permute.xlu0 %5420
    %v5424 = vadd.f32 %v5336, %v5419
    %v5425 = vadd.f32 %v5337, %v5421
    %s5426 = sld [smem:[#allocation10 + $0xf5]]
    %v5427 = vstv %s5426
    %v5428 = vmul.f32 %v5304, %v5427
    %v5429 = vmul.f32 %v5305, %v5427
    %5432 = vrot.lane.b32.xlu0 %v5428, 127
    %v5433 = vpop.permute.xlu0 %5432
    %5434 = vrot.lane.b32.xlu0 %v5429, 127
    %v5435 = vpop.permute.xlu0 %5434
    %v5438 = vadd.f32 %v5342, %v5433
    %v5439 = vadd.f32 %v5343, %v5435
    %s5440 = sld [smem:[#allocation10 + $0xf6]]
    %v5441 = vstv %s5440
    %v5442 = vmul.f32 %v5304, %v5441
    %v5443 = vmul.f32 %v5305, %v5441
    %5446 = vrot.lane.b32.xlu0 %v5442, 127
    %v5447 = vpop.permute.xlu0 %5446
    %5448 = vrot.lane.b32.xlu0 %v5443, 127
    %v5449 = vpop.permute.xlu0 %5448
    %v5452 = vadd.f32 %v5348, %v5447
    %v5453 = vadd.f32 %v5349, %v5449
    %s5454 = sld [smem:[#allocation10 + $0xf7]]
    %v5455 = vstv %s5454
    %v5456 = vmul.f32 %v5304, %v5455
    %v5457 = vmul.f32 %v5305, %v5455
    %5460 = vrot.lane.b32.xlu0 %v5456, 127
    %v5461 = vpop.permute.xlu0 %5460
    %5462 = vrot.lane.b32.xlu0 %v5457, 127
    %v5463 = vpop.permute.xlu0 %5462
    %v5466 = vadd.f32 %v5354, %v5461
    %v5467 = vadd.f32 %v5355, %v5463
    %v5468 = vmul.f32 %v5304, %v3242
    %v5469 = vmul.f32 %v5305, %v3242
    %s5470 = sld [smem:[#allocation10 + $0x110]]
    %v5471 = vstv %s5470
    %v5472 = vmul.f32 %v5468, %v5471
    %v5473 = vmul.f32 %v5469, %v5471
    %5476 = vrot.lane.b32.xlu0 %v5472, 126
    %v5477 = vpop.permute.xlu0 %5476
    %5478 = vrot.lane.b32.xlu0 %v5473, 126
    %v5479 = vpop.permute.xlu0 %5478
    %v5482 = vadd.f32 %v5368, %v5477
    %v5483 = vadd.f32 %v5369, %v5479
    %s5484 = sld [smem:[#allocation10 + $0x111]]
    %v5485 = vstv %s5484
    %v5486 = vmul.f32 %v5468, %v5485
    %v5487 = vmul.f32 %v5469, %v5485
    %5490 = vrot.lane.b32.xlu0 %v5486, 126
    %v5491 = vpop.permute.xlu0 %5490
    %5492 = vrot.lane.b32.xlu0 %v5487, 126
    %v5493 = vpop.permute.xlu0 %5492
    %v5496 = vadd.f32 %v5382, %v5491
    %v5497 = vadd.f32 %v5383, %v5493
    %s5498 = sld [smem:[#allocation10 + $0x112]]
    %v5499 = vstv %s5498
    %v5500 = vmul.f32 %v5468, %v5499
    %v5501 = vmul.f32 %v5469, %v5499
    %5504 = vrot.lane.b32.xlu0 %v5500, 126
    %v5505 = vpop.permute.xlu0 %5504
    %5506 = vrot.lane.b32.xlu0 %v5501, 126
    %v5507 = vpop.permute.xlu0 %5506
    %v5510 = vadd.f32 %v5396, %v5505
    %v5511 = vadd.f32 %v5397, %v5507
    %s5512 = sld [smem:[#allocation10 + $0x113]]
    %v5513 = vstv %s5512
    %v5514 = vmul.f32 %v5468, %v5513
    %v5515 = vmul.f32 %v5469, %v5513
    %5518 = vrot.lane.b32.xlu0 %v5514, 126
    %v5519 = vpop.permute.xlu0 %5518
    %5520 = vrot.lane.b32.xlu0 %v5515, 126
    %v5521 = vpop.permute.xlu0 %5520
    %v5524 = vadd.f32 %v5410, %v5519
    %v5525 = vadd.f32 %v5411, %v5521
    %s5526 = sld [smem:[#allocation10 + $0x114]]
    %v5527 = vstv %s5526
    %v5528 = vmul.f32 %v5468, %v5527
    %v5529 = vmul.f32 %v5469, %v5527
    %5532 = vrot.lane.b32.xlu0 %v5528, 126
    %v5533 = vpop.permute.xlu0 %5532
    %5534 = vrot.lane.b32.xlu0 %v5529, 126
    %v5535 = vpop.permute.xlu0 %5534
    %v5538 = vadd.f32 %v5424, %v5533
    %v5539 = vadd.f32 %v5425, %v5535
    %s5540 = sld [smem:[#allocation10 + $0x115]]
    %v5541 = vstv %s5540
    %v5542 = vmul.f32 %v5468, %v5541
    %v5543 = vmul.f32 %v5469, %v5541
    %5546 = vrot.lane.b32.xlu0 %v5542, 126
    %v5547 = vpop.permute.xlu0 %5546
    %5548 = vrot.lane.b32.xlu0 %v5543, 126
    %v5549 = vpop.permute.xlu0 %5548
    %v5552 = vadd.f32 %v5438, %v5547
    %v5553 = vadd.f32 %v5439, %v5549
    %s5554 = sld [smem:[#allocation10 + $0x116]]
    %v5555 = vstv %s5554
    %v5556 = vmul.f32 %v5468, %v5555
    %v5557 = vmul.f32 %v5469, %v5555
    %5560 = vrot.lane.b32.xlu0 %v5556, 126
    %v5561 = vpop.permute.xlu0 %5560
    %5562 = vrot.lane.b32.xlu0 %v5557, 126
    %v5563 = vpop.permute.xlu0 %5562
    %v5566 = vadd.f32 %v5452, %v5561
    %v5567 = vadd.f32 %v5453, %v5563
    %s5568 = sld [smem:[#allocation10 + $0x117]]
    %v5569 = vstv %s5568
    %v5570 = vmul.f32 %v5468, %v5569
    %v5571 = vmul.f32 %v5469, %v5569
    %5574 = vrot.lane.b32.xlu0 %v5570, 126
    %v5575 = vpop.permute.xlu0 %5574
    %5576 = vrot.lane.b32.xlu0 %v5571, 126
    %v5577 = vpop.permute.xlu0 %5576
    %v5580 = vadd.f32 %v5466, %v5575
    %v5581 = vadd.f32 %v5467, %v5577
    %v5582 = vld [vmem:[#allocation4 + $0x30] sm:$0xff]
    %v5583 = vld [vmem:[#allocation4 + $0x38] sm:$0x3f]
    %v5584 = vmul.f32 %v5582, %v3073
    %v5585 = vmul.f32 %v5583, %v3073
    %s5586 = sld [smem:[#allocation10 + $0x18]]
    %v5587 = vstv %s5586
    %v5588 = vmul.f32 %v5584, %v5587
    %v5589 = vmul.f32 %v5585, %v5587
    %v5590 = vadd.f32 %v5482, %v5588
    %v5591 = vadd.f32 %v5483, %v5589
    %s5592 = sld [smem:[#allocation10 + $0x19]]
    %v5593 = vstv %s5592
    %v5594 = vmul.f32 %v5584, %v5593
    %v5595 = vmul.f32 %v5585, %v5593
    %v5596 = vadd.f32 %v5496, %v5594
    %v5597 = vadd.f32 %v5497, %v5595
    %s5598 = sld [smem:[#allocation10 + $0x1a]]
    %v5599 = vstv %s5598
    %v5600 = vmul.f32 %v5584, %v5599
    %v5601 = vmul.f32 %v5585, %v5599
    %v5602 = vadd.f32 %v5510, %v5600
    %v5603 = vadd.f32 %v5511, %v5601
    %s5604 = sld [smem:[#allocation10 + $0x1b]]
    %v5605 = vstv %s5604
    %v5606 = vmul.f32 %v5584, %v5605
    %v5607 = vmul.f32 %v5585, %v5605
    %v5608 = vadd.f32 %v5524, %v5606
    %v5609 = vadd.f32 %v5525, %v5607
    %s5610 = sld [smem:[#allocation10 + $0x1c]]
    %v5611 = vstv %s5610
    %v5612 = vmul.f32 %v5584, %v5611
    %v5613 = vmul.f32 %v5585, %v5611
    %v5614 = vadd.f32 %v5538, %v5612
    %v5615 = vadd.f32 %v5539, %v5613
    %s5616 = sld [smem:[#allocation10 + $0x1d]]
    %v5617 = vstv %s5616
    %v5618 = vmul.f32 %v5584, %v5617
    %v5619 = vmul.f32 %v5585, %v5617
    %v5620 = vadd.f32 %v5552, %v5618
    %v5621 = vadd.f32 %v5553, %v5619
    %s5622 = sld [smem:[#allocation10 + $0x1e]]
    %v5623 = vstv %s5622
    %v5624 = vmul.f32 %v5584, %v5623
    %v5625 = vmul.f32 %v5585, %v5623
    %v5626 = vadd.f32 %v5566, %v5624
    %v5627 = vadd.f32 %v5567, %v5625
    %s5628 = sld [smem:[#allocation10 + $0x1f]]
    %v5629 = vstv %s5628
    %v5630 = vmul.f32 %v5584, %v5629
    %v5631 = vmul.f32 %v5585, %v5629
    %v5632 = vadd.f32 %v5580, %v5630
    %v5633 = vadd.f32 %v5581, %v5631
    %s5634 = sld [smem:[#allocation10 + $0x38]]
    %v5635 = vstv %s5634
    %v5636 = vmul.f32 %v5582, %v5635
    %v5637 = vmul.f32 %v5583, %v5635
    %5640 = vrot.lane.b32.xlu0 %v5636, 127
    %v5641 = vpop.permute.xlu0 %5640
    %5642 = vrot.lane.b32.xlu0 %v5637, 127
    %v5643 = vpop.permute.xlu0 %5642
    %v5646 = vadd.f32 %v5590, %v5641
    %v5647 = vadd.f32 %v5591, %v5643
    %s5648 = sld [smem:[#allocation10 + $0x39]]
    %v5649 = vstv %s5648
    %v5650 = vmul.f32 %v5582, %v5649
    %v5651 = vmul.f32 %v5583, %v5649
    %5654 = vrot.lane.b32.xlu0 %v5650, 127
    %v5655 = vpop.permute.xlu0 %5654
    %5656 = vrot.lane.b32.xlu0 %v5651, 127
    %v5657 = vpop.permute.xlu0 %5656
    %v5660 = vadd.f32 %v5596, %v5655
    %v5661 = vadd.f32 %v5597, %v5657
    %s5662 = sld [smem:[#allocation10 + $0x3a]]
    %v5663 = vstv %s5662
    %v5664 = vmul.f32 %v5582, %v5663
    %v5665 = vmul.f32 %v5583, %v5663
    %5668 = vrot.lane.b32.xlu0 %v5664, 127
    %v5669 = vpop.permute.xlu0 %5668
    %5670 = vrot.lane.b32.xlu0 %v5665, 127
    %v5671 = vpop.permute.xlu0 %5670
    %v5674 = vadd.f32 %v5602, %v5669
    %v5675 = vadd.f32 %v5603, %v5671
    %s5676 = sld [smem:[#allocation10 + $0x3b]]
    %v5677 = vstv %s5676
    %v5678 = vmul.f32 %v5582, %v5677
    %v5679 = vmul.f32 %v5583, %v5677
    %5682 = vrot.lane.b32.xlu0 %v5678, 127
    %v5683 = vpop.permute.xlu0 %5682
    %5684 = vrot.lane.b32.xlu0 %v5679, 127
    %v5685 = vpop.permute.xlu0 %5684
    %v5688 = vadd.f32 %v5608, %v5683
    %v5689 = vadd.f32 %v5609, %v5685
    %s5690 = sld [smem:[#allocation10 + $0x3c]]
    %v5691 = vstv %s5690
    %v5692 = vmul.f32 %v5582, %v5691
    %v5693 = vmul.f32 %v5583, %v5691
    %5696 = vrot.lane.b32.xlu0 %v5692, 127
    %v5697 = vpop.permute.xlu0 %5696
    %5698 = vrot.lane.b32.xlu0 %v5693, 127
    %v5699 = vpop.permute.xlu0 %5698
    %v5702 = vadd.f32 %v5614, %v5697
    %v5703 = vadd.f32 %v5615, %v5699
    %s5704 = sld [smem:[#allocation10 + $0x3d]]
    %v5705 = vstv %s5704
    %v5706 = vmul.f32 %v5582, %v5705
    %v5707 = vmul.f32 %v5583, %v5705
    %5710 = vrot.lane.b32.xlu0 %v5706, 127
    %v5711 = vpop.permute.xlu0 %5710
    %5712 = vrot.lane.b32.xlu0 %v5707, 127
    %v5713 = vpop.permute.xlu0 %5712
    %v5716 = vadd.f32 %v5620, %v5711
    %v5717 = vadd.f32 %v5621, %v5713
    %s5718 = sld [smem:[#allocation10 + $0x3e]]
    %v5719 = vstv %s5718
    %v5720 = vmul.f32 %v5582, %v5719
    %v5721 = vmul.f32 %v5583, %v5719
    %5724 = vrot.lane.b32.xlu0 %v5720, 127
    %v5725 = vpop.permute.xlu0 %5724
    %5726 = vrot.lane.b32.xlu0 %v5721, 127
    %v5727 = vpop.permute.xlu0 %5726
    %v5730 = vadd.f32 %v5626, %v5725
    %v5731 = vadd.f32 %v5627, %v5727
    %s5732 = sld [smem:[#allocation10 + $0x3f]]
    %v5733 = vstv %s5732
    %v5734 = vmul.f32 %v5582, %v5733
    %v5735 = vmul.f32 %v5583, %v5733
    %5738 = vrot.lane.b32.xlu0 %v5734, 127
    %v5739 = vpop.permute.xlu0 %5738
    %5740 = vrot.lane.b32.xlu0 %v5735, 127
    %v5741 = vpop.permute.xlu0 %5740
    %v5744 = vadd.f32 %v5632, %v5739
    %v5745 = vadd.f32 %v5633, %v5741
    %v5746 = vmul.f32 %v5582, %v3242
    %v5747 = vmul.f32 %v5583, %v3242
    %s5748 = sld [smem:[#allocation10 + $0x58]]
    %v5749 = vstv %s5748
    %v5750 = vmul.f32 %v5746, %v5749
    %v5751 = vmul.f32 %v5747, %v5749
    %5754 = vrot.lane.b32.xlu0 %v5750, 126
    %v5755 = vpop.permute.xlu0 %5754
    %5756 = vrot.lane.b32.xlu0 %v5751, 126
    %v5757 = vpop.permute.xlu0 %5756
    %v5760 = vadd.f32 %v5646, %v5755
    %v5761 = vadd.f32 %v5647, %v5757
    %s5762 = sld [smem:[#allocation10 + $0x59]]
    %v5763 = vstv %s5762
    %v5764 = vmul.f32 %v5746, %v5763
    %v5765 = vmul.f32 %v5747, %v5763
    %5768 = vrot.lane.b32.xlu0 %v5764, 126
    %v5769 = vpop.permute.xlu0 %5768
    %5770 = vrot.lane.b32.xlu0 %v5765, 126
    %v5771 = vpop.permute.xlu0 %5770
    %v5774 = vadd.f32 %v5660, %v5769
    %v5775 = vadd.f32 %v5661, %v5771
    %s5776 = sld [smem:[#allocation10 + $0x5a]]
    %v5777 = vstv %s5776
    %v5778 = vmul.f32 %v5746, %v5777
    %v5779 = vmul.f32 %v5747, %v5777
    %5782 = vrot.lane.b32.xlu0 %v5778, 126
    %v5783 = vpop.permute.xlu0 %5782
    %5784 = vrot.lane.b32.xlu0 %v5779, 126
    %v5785 = vpop.permute.xlu0 %5784
    %v5788 = vadd.f32 %v5674, %v5783
    %v5789 = vadd.f32 %v5675, %v5785
    %s5790 = sld [smem:[#allocation10 + $0x5b]]
    %v5791 = vstv %s5790
    %v5792 = vmul.f32 %v5746, %v5791
    %v5793 = vmul.f32 %v5747, %v5791
    %5796 = vrot.lane.b32.xlu0 %v5792, 126
    %v5797 = vpop.permute.xlu0 %5796
    %5798 = vrot.lane.b32.xlu0 %v5793, 126
    %v5799 = vpop.permute.xlu0 %5798
    %v5802 = vadd.f32 %v5688, %v5797
    %v5803 = vadd.f32 %v5689, %v5799
    %s5804 = sld [smem:[#allocation10 + $0x5c]]
    %v5805 = vstv %s5804
    %v5806 = vmul.f32 %v5746, %v5805
    %v5807 = vmul.f32 %v5747, %v5805
    %5810 = vrot.lane.b32.xlu0 %v5806, 126
    %v5811 = vpop.permute.xlu0 %5810
    %5812 = vrot.lane.b32.xlu0 %v5807, 126
    %v5813 = vpop.permute.xlu0 %5812
    %v5816 = vadd.f32 %v5702, %v5811
    %v5817 = vadd.f32 %v5703, %v5813
    %s5818 = sld [smem:[#allocation10 + $0x5d]]
    %v5819 = vstv %s5818
    %v5820 = vmul.f32 %v5746, %v5819
    %v5821 = vmul.f32 %v5747, %v5819
    %5824 = vrot.lane.b32.xlu0 %v5820, 126
    %v5825 = vpop.permute.xlu0 %5824
    %5826 = vrot.lane.b32.xlu0 %v5821, 126
    %v5827 = vpop.permute.xlu0 %5826
    %v5830 = vadd.f32 %v5716, %v5825
    %v5831 = vadd.f32 %v5717, %v5827
    %s5832 = sld [smem:[#allocation10 + $0x5e]]
    %v5833 = vstv %s5832
    %v5834 = vmul.f32 %v5746, %v5833
    %v5835 = vmul.f32 %v5747, %v5833
    %5838 = vrot.lane.b32.xlu0 %v5834, 126
    %v5839 = vpop.permute.xlu0 %5838
    %5840 = vrot.lane.b32.xlu0 %v5835, 126
    %v5841 = vpop.permute.xlu0 %5840
    %v5844 = vadd.f32 %v5730, %v5839
    %v5845 = vadd.f32 %v5731, %v5841
    %s5846 = sld [smem:[#allocation10 + $0x5f]]
    %v5847 = vstv %s5846
    %v5848 = vmul.f32 %v5746, %v5847
    %v5849 = vmul.f32 %v5747, %v5847
    %5852 = vrot.lane.b32.xlu0 %v5848, 126
    %v5853 = vpop.permute.xlu0 %5852
    %5854 = vrot.lane.b32.xlu0 %v5849, 126
    %v5855 = vpop.permute.xlu0 %5854
    %v5858 = vadd.f32 %v5744, %v5853
    %v5859 = vadd.f32 %v5745, %v5855
    %v5860 = vld [vmem:[#allocation4 + $0x31] sm:$0xff]
    %v5861 = vld [vmem:[#allocation4 + $0x39] sm:$0x3f]
    %v5862 = vmul.f32 %v5860, %v3073
    %v5863 = vmul.f32 %v5861, %v3073
    %s5864 = sld [smem:[#allocation10 + $0x78]]
    %v5865 = vstv %s5864
    %v5866 = vmul.f32 %v5862, %v5865
    %v5867 = vmul.f32 %v5863, %v5865
    %v5868 = vadd.f32 %v5760, %v5866
    %v5869 = vadd.f32 %v5761, %v5867
    %s5870 = sld [smem:[#allocation10 + $0x79]]
    %v5871 = vstv %s5870
    %v5872 = vmul.f32 %v5862, %v5871
    %v5873 = vmul.f32 %v5863, %v5871
    %v5874 = vadd.f32 %v5774, %v5872
    %v5875 = vadd.f32 %v5775, %v5873
    %s5876 = sld [smem:[#allocation10 + $0x7a]]
    %v5877 = vstv %s5876
    %v5878 = vmul.f32 %v5862, %v5877
    %v5879 = vmul.f32 %v5863, %v5877
    %v5880 = vadd.f32 %v5788, %v5878
    %v5881 = vadd.f32 %v5789, %v5879
    %s5882 = sld [smem:[#allocation10 + $0x7b]]
    %v5883 = vstv %s5882
    %v5884 = vmul.f32 %v5862, %v5883
    %v5885 = vmul.f32 %v5863, %v5883
    %v5886 = vadd.f32 %v5802, %v5884
    %v5887 = vadd.f32 %v5803, %v5885
    %s5888 = sld [smem:[#allocation10 + $0x7c]]
    %v5889 = vstv %s5888
    %v5890 = vmul.f32 %v5862, %v5889
    %v5891 = vmul.f32 %v5863, %v5889
    %v5892 = vadd.f32 %v5816, %v5890
    %v5893 = vadd.f32 %v5817, %v5891
    %s5894 = sld [smem:[#allocation10 + $0x7d]]
    %v5895 = vstv %s5894
    %v5896 = vmul.f32 %v5862, %v5895
    %v5897 = vmul.f32 %v5863, %v5895
    %v5898 = vadd.f32 %v5830, %v5896
    %v5899 = vadd.f32 %v5831, %v5897
    %s5900 = sld [smem:[#allocation10 + $0x7e]]
    %v5901 = vstv %s5900
    %v5902 = vmul.f32 %v5862, %v5901
    %v5903 = vmul.f32 %v5863, %v5901
    %v5904 = vadd.f32 %v5844, %v5902
    %v5905 = vadd.f32 %v5845, %v5903
    %s5906 = sld [smem:[#allocation10 + $0x7f]]
    %v5907 = vstv %s5906
    %v5908 = vmul.f32 %v5862, %v5907
    %v5909 = vmul.f32 %v5863, %v5907
    %v5910 = vadd.f32 %v5858, %v5908
    %v5911 = vadd.f32 %v5859, %v5909
    %s5912 = sld [smem:[#allocation10 + $0x98]]
    %v5913 = vstv %s5912
    %v5914 = vmul.f32 %v5860, %v5913
    %v5915 = vmul.f32 %v5861, %v5913
    %5918 = vrot.lane.b32.xlu0 %v5914, 127
    %v5919 = vpop.permute.xlu0 %5918
    %5920 = vrot.lane.b32.xlu0 %v5915, 127
    %v5921 = vpop.permute.xlu0 %5920
    %v5924 = vadd.f32 %v5868, %v5919
    %v5925 = vadd.f32 %v5869, %v5921
    %s5926 = sld [smem:[#allocation10 + $0x99]]
    %v5927 = vstv %s5926
    %v5928 = vmul.f32 %v5860, %v5927
    %v5929 = vmul.f32 %v5861, %v5927
    %5932 = vrot.lane.b32.xlu0 %v5928, 127
    %v5933 = vpop.permute.xlu0 %5932
    %5934 = vrot.lane.b32.xlu0 %v5929, 127
    %v5935 = vpop.permute.xlu0 %5934
    %v5938 = vadd.f32 %v5874, %v5933
    %v5939 = vadd.f32 %v5875, %v5935
    %s5940 = sld [smem:[#allocation10 + $0x9a]]
    %v5941 = vstv %s5940
    %v5942 = vmul.f32 %v5860, %v5941
    %v5943 = vmul.f32 %v5861, %v5941
    %5946 = vrot.lane.b32.xlu0 %v5942, 127
    %v5947 = vpop.permute.xlu0 %5946
    %5948 = vrot.lane.b32.xlu0 %v5943, 127
    %v5949 = vpop.permute.xlu0 %5948
    %v5952 = vadd.f32 %v5880, %v5947
    %v5953 = vadd.f32 %v5881, %v5949
    %s5954 = sld [smem:[#allocation10 + $0x9b]]
    %v5955 = vstv %s5954
    %v5956 = vmul.f32 %v5860, %v5955
    %v5957 = vmul.f32 %v5861, %v5955
    %5960 = vrot.lane.b32.xlu0 %v5956, 127
    %v5961 = vpop.permute.xlu0 %5960
    %5962 = vrot.lane.b32.xlu0 %v5957, 127
    %v5963 = vpop.permute.xlu0 %5962
    %v5966 = vadd.f32 %v5886, %v5961
    %v5967 = vadd.f32 %v5887, %v5963
    %s5968 = sld [smem:[#allocation10 + $0x9c]]
    %v5969 = vstv %s5968
    %v5970 = vmul.f32 %v5860, %v5969
    %v5971 = vmul.f32 %v5861, %v5969
    %5974 = vrot.lane.b32.xlu0 %v5970, 127
    %v5975 = vpop.permute.xlu0 %5974
    %5976 = vrot.lane.b32.xlu0 %v5971, 127
    %v5977 = vpop.permute.xlu0 %5976
    %v5980 = vadd.f32 %v5892, %v5975
    %v5981 = vadd.f32 %v5893, %v5977
    %s5982 = sld [smem:[#allocation10 + $0x9d]]
    %v5983 = vstv %s5982
    %v5984 = vmul.f32 %v5860, %v5983
    %v5985 = vmul.f32 %v5861, %v5983
    %5988 = vrot.lane.b32.xlu0 %v5984, 127
    %v5989 = vpop.permute.xlu0 %5988
    %5990 = vrot.lane.b32.xlu0 %v5985, 127
    %v5991 = vpop.permute.xlu0 %5990
    %v5994 = vadd.f32 %v5898, %v5989
    %v5995 = vadd.f32 %v5899, %v5991
    %s5996 = sld [smem:[#allocation10 + $0x9e]]
    %v5997 = vstv %s5996
    %v5998 = vmul.f32 %v5860, %v5997
    %v5999 = vmul.f32 %v5861, %v5997
    %6002 = vrot.lane.b32.xlu0 %v5998, 127
    %v6003 = vpop.permute.xlu0 %6002
    %6004 = vrot.lane.b32.xlu0 %v5999, 127
    %v6005 = vpop.permute.xlu0 %6004
    %v6008 = vadd.f32 %v5904, %v6003
    %v6009 = vadd.f32 %v5905, %v6005
    %s6010 = sld [smem:[#allocation10 + $0x9f]]
    %v6011 = vstv %s6010
    %v6012 = vmul.f32 %v5860, %v6011
    %v6013 = vmul.f32 %v5861, %v6011
    %6016 = vrot.lane.b32.xlu0 %v6012, 127
    %v6017 = vpop.permute.xlu0 %6016
    %6018 = vrot.lane.b32.xlu0 %v6013, 127
    %v6019 = vpop.permute.xlu0 %6018
    %v6022 = vadd.f32 %v5910, %v6017
    %v6023 = vadd.f32 %v5911, %v6019
    %v6024 = vmul.f32 %v5860, %v3242
    %v6025 = vmul.f32 %v5861, %v3242
    %s6026 = sld [smem:[#allocation10 + $0xb8]]
    %v6027 = vstv %s6026
    %v6028 = vmul.f32 %v6024, %v6027
    %v6029 = vmul.f32 %v6025, %v6027
    %6032 = vrot.lane.b32.xlu0 %v6028, 126
    %v6033 = vpop.permute.xlu0 %6032
    %6034 = vrot.lane.b32.xlu0 %v6029, 126
    %v6035 = vpop.permute.xlu0 %6034
    %v6038 = vadd.f32 %v5924, %v6033
    %v6039 = vadd.f32 %v5925, %v6035
    %s6040 = sld [smem:[#allocation10 + $0xb9]]
    %v6041 = vstv %s6040
    %v6042 = vmul.f32 %v6024, %v6041
    %v6043 = vmul.f32 %v6025, %v6041
    %6046 = vrot.lane.b32.xlu0 %v6042, 126
    %v6047 = vpop.permute.xlu0 %6046
    %6048 = vrot.lane.b32.xlu0 %v6043, 126
    %v6049 = vpop.permute.xlu0 %6048
    %v6052 = vadd.f32 %v5938, %v6047
    %v6053 = vadd.f32 %v5939, %v6049
    %s6054 = sld [smem:[#allocation10 + $0xba]]
    %v6055 = vstv %s6054
    %v6056 = vmul.f32 %v6024, %v6055
    %v6057 = vmul.f32 %v6025, %v6055
    %6060 = vrot.lane.b32.xlu0 %v6056, 126
    %v6061 = vpop.permute.xlu0 %6060
    %6062 = vrot.lane.b32.xlu0 %v6057, 126
    %v6063 = vpop.permute.xlu0 %6062
    %v6066 = vadd.f32 %v5952, %v6061
    %v6067 = vadd.f32 %v5953, %v6063
    %s6068 = sld [smem:[#allocation10 + $0xbb]]
    %v6069 = vstv %s6068
    %v6070 = vmul.f32 %v6024, %v6069
    %v6071 = vmul.f32 %v6025, %v6069
    %6074 = vrot.lane.b32.xlu0 %v6070, 126
    %v6075 = vpop.permute.xlu0 %6074
    %6076 = vrot.lane.b32.xlu0 %v6071, 126
    %v6077 = vpop.permute.xlu0 %6076
    %v6080 = vadd.f32 %v5966, %v6075
    %v6081 = vadd.f32 %v5967, %v6077
    %s6082 = sld [smem:[#allocation10 + $0xbc]]
    %v6083 = vstv %s6082
    %v6084 = vmul.f32 %v6024, %v6083
    %v6085 = vmul.f32 %v6025, %v6083
    %6088 = vrot.lane.b32.xlu0 %v6084, 126
    %v6089 = vpop.permute.xlu0 %6088
    %6090 = vrot.lane.b32.xlu0 %v6085, 126
    %v6091 = vpop.permute.xlu0 %6090
    %v6094 = vadd.f32 %v5980, %v6089
    %v6095 = vadd.f32 %v5981, %v6091
    %s6096 = sld [smem:[#allocation10 + $0xbd]]
    %v6097 = vstv %s6096
    %v6098 = vmul.f32 %v6024, %v6097
    %v6099 = vmul.f32 %v6025, %v6097
    %6102 = vrot.lane.b32.xlu0 %v6098, 126
    %v6103 = vpop.permute.xlu0 %6102
    %6104 = vrot.lane.b32.xlu0 %v6099, 126
    %v6105 = vpop.permute.xlu0 %6104
    %v6108 = vadd.f32 %v5994, %v6103
    %v6109 = vadd.f32 %v5995, %v6105
    %s6110 = sld [smem:[#allocation10 + $0xbe]]
    %v6111 = vstv %s6110
    %v6112 = vmul.f32 %v6024, %v6111
    %v6113 = vmul.f32 %v6025, %v6111
    %6116 = vrot.lane.b32.xlu0 %v6112, 126
    %v6117 = vpop.permute.xlu0 %6116
    %6118 = vrot.lane.b32.xlu0 %v6113, 126
    %v6119 = vpop.permute.xlu0 %6118
    %v6122 = vadd.f32 %v6008, %v6117
    %v6123 = vadd.f32 %v6009, %v6119
    %s6124 = sld [smem:[#allocation10 + $0xbf]]
    %v6125 = vstv %s6124
    %v6126 = vmul.f32 %v6024, %v6125
    %v6127 = vmul.f32 %v6025, %v6125
    %6130 = vrot.lane.b32.xlu0 %v6126, 126
    %v6131 = vpop.permute.xlu0 %6130
    %6132 = vrot.lane.b32.xlu0 %v6127, 126
    %v6133 = vpop.permute.xlu0 %6132
    %v6136 = vadd.f32 %v6022, %v6131
    %v6137 = vadd.f32 %v6023, %v6133
    %v6138 = vld [vmem:[#allocation4 + $0x32] sm:$0xff]
    %v6139 = vld [vmem:[#allocation4 + $0x3a] sm:$0x3f]
    %v6140 = vmul.f32 %v6138, %v3073
    %v6141 = vmul.f32 %v6139, %v3073
    %s6142 = sld [smem:[#allocation10 + $0xd8]]
    %v6143 = vstv %s6142
    %v6144 = vmul.f32 %v6140, %v6143
    %v6145 = vmul.f32 %v6141, %v6143
    %v6146 = vadd.f32 %v6038, %v6144
    %v6147 = vadd.f32 %v6039, %v6145
    %s6148 = sld [smem:[#allocation10 + $0xd9]]
    %v6149 = vstv %s6148
    %v6150 = vmul.f32 %v6140, %v6149
    %v6151 = vmul.f32 %v6141, %v6149
    %v6152 = vadd.f32 %v6052, %v6150
    %v6153 = vadd.f32 %v6053, %v6151
    %s6154 = sld [smem:[#allocation10 + $0xda]]
    %v6155 = vstv %s6154
    %v6156 = vmul.f32 %v6140, %v6155
    %v6157 = vmul.f32 %v6141, %v6155
    %v6158 = vadd.f32 %v6066, %v6156
    %v6159 = vadd.f32 %v6067, %v6157
    %s6160 = sld [smem:[#allocation10 + $0xdb]]
    %v6161 = vstv %s6160
    %v6162 = vmul.f32 %v6140, %v6161
    %v6163 = vmul.f32 %v6141, %v6161
    %v6164 = vadd.f32 %v6080, %v6162
    %v6165 = vadd.f32 %v6081, %v6163
    %s6166 = sld [smem:[#allocation10 + $0xdc]]
    %v6167 = vstv %s6166
    %v6168 = vmul.f32 %v6140, %v6167
    %v6169 = vmul.f32 %v6141, %v6167
    %v6170 = vadd.f32 %v6094, %v6168
    %v6171 = vadd.f32 %v6095, %v6169
    %s6172 = sld [smem:[#allocation10 + $0xdd]]
    %v6173 = vstv %s6172
    %v6174 = vmul.f32 %v6140, %v6173
    %v6175 = vmul.f32 %v6141, %v6173
    %v6176 = vadd.f32 %v6108, %v6174
    %v6177 = vadd.f32 %v6109, %v6175
    %s6178 = sld [smem:[#allocation10 + $0xde]]
    %v6179 = vstv %s6178
    %v6180 = vmul.f32 %v6140, %v6179
    %v6181 = vmul.f32 %v6141, %v6179
    %v6182 = vadd.f32 %v6122, %v6180
    %v6183 = vadd.f32 %v6123, %v6181
    %s6184 = sld [smem:[#allocation10 + $0xdf]]
    %v6185 = vstv %s6184
    %v6186 = vmul.f32 %v6140, %v6185
    %v6187 = vmul.f32 %v6141, %v6185
    %v6188 = vadd.f32 %v6136, %v6186
    %v6189 = vadd.f32 %v6137, %v6187
    %s6190 = sld [smem:[#allocation10 + $0xf8]]
    %v6191 = vstv %s6190
    %v6192 = vmul.f32 %v6138, %v6191
    %v6193 = vmul.f32 %v6139, %v6191
    %6196 = vrot.lane.b32.xlu0 %v6192, 127
    %v6197 = vpop.permute.xlu0 %6196
    %6198 = vrot.lane.b32.xlu0 %v6193, 127
    %v6199 = vpop.permute.xlu0 %6198
    %v6202 = vadd.f32 %v6146, %v6197
    %v6203 = vadd.f32 %v6147, %v6199
    %s6204 = sld [smem:[#allocation10 + $0xf9]]
    %v6205 = vstv %s6204
    %v6206 = vmul.f32 %v6138, %v6205
    %v6207 = vmul.f32 %v6139, %v6205
    %6210 = vrot.lane.b32.xlu0 %v6206, 127
    %v6211 = vpop.permute.xlu0 %6210
    %6212 = vrot.lane.b32.xlu0 %v6207, 127
    %v6213 = vpop.permute.xlu0 %6212
    %v6216 = vadd.f32 %v6152, %v6211
    %v6217 = vadd.f32 %v6153, %v6213
    %s6218 = sld [smem:[#allocation10 + $0xfa]]
    %v6219 = vstv %s6218
    %v6220 = vmul.f32 %v6138, %v6219
    %v6221 = vmul.f32 %v6139, %v6219
    %6224 = vrot.lane.b32.xlu0 %v6220, 127
    %v6225 = vpop.permute.xlu0 %6224
    %6226 = vrot.lane.b32.xlu0 %v6221, 127
    %v6227 = vpop.permute.xlu0 %6226
    %v6230 = vadd.f32 %v6158, %v6225
    %v6231 = vadd.f32 %v6159, %v6227
    %s6232 = sld [smem:[#allocation10 + $0xfb]]
    %v6233 = vstv %s6232
    %v6234 = vmul.f32 %v6138, %v6233
    %v6235 = vmul.f32 %v6139, %v6233
    %6238 = vrot.lane.b32.xlu0 %v6234, 127
    %v6239 = vpop.permute.xlu0 %6238
    %6240 = vrot.lane.b32.xlu0 %v6235, 127
    %v6241 = vpop.permute.xlu0 %6240
    %v6244 = vadd.f32 %v6164, %v6239
    %v6245 = vadd.f32 %v6165, %v6241
    %s6246 = sld [smem:[#allocation10 + $0xfc]]
    %v6247 = vstv %s6246
    %v6248 = vmul.f32 %v6138, %v6247
    %v6249 = vmul.f32 %v6139, %v6247
    %6252 = vrot.lane.b32.xlu0 %v6248, 127
    %v6253 = vpop.permute.xlu0 %6252
    %6254 = vrot.lane.b32.xlu0 %v6249, 127
    %v6255 = vpop.permute.xlu0 %6254
    %v6258 = vadd.f32 %v6170, %v6253
    %v6259 = vadd.f32 %v6171, %v6255
    %s6260 = sld [smem:[#allocation10 + $0xfd]]
    %v6261 = vstv %s6260
    %v6262 = vmul.f32 %v6138, %v6261
    %v6263 = vmul.f32 %v6139, %v6261
    %6266 = vrot.lane.b32.xlu0 %v6262, 127
    %v6267 = vpop.permute.xlu0 %6266
    %6268 = vrot.lane.b32.xlu0 %v6263, 127
    %v6269 = vpop.permute.xlu0 %6268
    %v6272 = vadd.f32 %v6176, %v6267
    %v6273 = vadd.f32 %v6177, %v6269
    %s6274 = sld [smem:[#allocation10 + $0xfe]]
    %v6275 = vstv %s6274
    %v6276 = vmul.f32 %v6138, %v6275
    %v6277 = vmul.f32 %v6139, %v6275
    %6280 = vrot.lane.b32.xlu0 %v6276, 127
    %v6281 = vpop.permute.xlu0 %6280
    %6282 = vrot.lane.b32.xlu0 %v6277, 127
    %v6283 = vpop.permute.xlu0 %6282
    %v6286 = vadd.f32 %v6182, %v6281
    %v6287 = vadd.f32 %v6183, %v6283
    %s6288 = sld [smem:[#allocation10 + $0xff]]
    %v6289 = vstv %s6288
    %v6290 = vmul.f32 %v6138, %v6289
    %v6291 = vmul.f32 %v6139, %v6289
    %6294 = vrot.lane.b32.xlu0 %v6290, 127
    %v6295 = vpop.permute.xlu0 %6294
    %6296 = vrot.lane.b32.xlu0 %v6291, 127
    %v6297 = vpop.permute.xlu0 %6296
    %v6300 = vadd.f32 %v6188, %v6295
    %v6301 = vadd.f32 %v6189, %v6297
    %v6302 = vmul.f32 %v6138, %v3242
    %v6303 = vmul.f32 %v6139, %v3242
    %s6304 = sld [smem:[#allocation10 + $0x118]]
    %v6305 = vstv %s6304
    %v6306 = vmul.f32 %v6302, %v6305
    %v6307 = vmul.f32 %v6303, %v6305
    %6310 = vrot.lane.b32.xlu0 %v6306, 126
    %v6311 = vpop.permute.xlu0 %6310
    %6312 = vrot.lane.b32.xlu0 %v6307, 126
    %v6313 = vpop.permute.xlu0 %6312
    %v6316 = vadd.f32 %v6202, %v6311
    %v6317 = vadd.f32 %v6203, %v6313
    %s6318 = sld [smem:[#allocation10 + $0x119]]
    %v6319 = vstv %s6318
    %v6320 = vmul.f32 %v6302, %v6319
    %v6321 = vmul.f32 %v6303, %v6319
    %6324 = vrot.lane.b32.xlu0 %v6320, 126
    %v6325 = vpop.permute.xlu0 %6324
    %6326 = vrot.lane.b32.xlu0 %v6321, 126
    %v6327 = vpop.permute.xlu0 %6326
    %v6330 = vadd.f32 %v6216, %v6325
    %v6331 = vadd.f32 %v6217, %v6327
    %s6332 = sld [smem:[#allocation10 + $0x11a]]
    %v6333 = vstv %s6332
    %v6334 = vmul.f32 %v6302, %v6333
    %v6335 = vmul.f32 %v6303, %v6333
    %6338 = vrot.lane.b32.xlu0 %v6334, 126
    %v6339 = vpop.permute.xlu0 %6338
    %6340 = vrot.lane.b32.xlu0 %v6335, 126
    %v6341 = vpop.permute.xlu0 %6340
    %v6344 = vadd.f32 %v6230, %v6339
    %v6345 = vadd.f32 %v6231, %v6341
    %s6346 = sld [smem:[#allocation10 + $0x11b]]
    %v6347 = vstv %s6346
    %v6348 = vmul.f32 %v6302, %v6347
    %v6349 = vmul.f32 %v6303, %v6347
    %6352 = vrot.lane.b32.xlu0 %v6348, 126
    %v6353 = vpop.permute.xlu0 %6352
    %6354 = vrot.lane.b32.xlu0 %v6349, 126
    %v6355 = vpop.permute.xlu0 %6354
    %v6358 = vadd.f32 %v6244, %v6353
    %v6359 = vadd.f32 %v6245, %v6355
    %s6360 = sld [smem:[#allocation10 + $0x11c]]
    %v6361 = vstv %s6360
    %v6362 = vmul.f32 %v6302, %v6361
    %v6363 = vmul.f32 %v6303, %v6361
    %6366 = vrot.lane.b32.xlu0 %v6362, 126
    %v6367 = vpop.permute.xlu0 %6366
    %6368 = vrot.lane.b32.xlu0 %v6363, 126
    %v6369 = vpop.permute.xlu0 %6368
    %v6372 = vadd.f32 %v6258, %v6367
    %v6373 = vadd.f32 %v6259, %v6369
    %s6374 = sld [smem:[#allocation10 + $0x11d]]
    %v6375 = vstv %s6374
    %v6376 = vmul.f32 %v6302, %v6375
    %v6377 = vmul.f32 %v6303, %v6375
    %6380 = vrot.lane.b32.xlu0 %v6376, 126
    %v6381 = vpop.permute.xlu0 %6380
    %6382 = vrot.lane.b32.xlu0 %v6377, 126
    %v6383 = vpop.permute.xlu0 %6382
    %v6386 = vadd.f32 %v6272, %v6381
    %v6387 = vadd.f32 %v6273, %v6383
    %s6388 = sld [smem:[#allocation10 + $0x11e]]
    %v6389 = vstv %s6388
    %v6390 = vmul.f32 %v6302, %v6389
    %v6391 = vmul.f32 %v6303, %v6389
    %6394 = vrot.lane.b32.xlu0 %v6390, 126
    %v6395 = vpop.permute.xlu0 %6394
    %6396 = vrot.lane.b32.xlu0 %v6391, 126
    %v6397 = vpop.permute.xlu0 %6396
    %v6400 = vadd.f32 %v6286, %v6395
    %v6401 = vadd.f32 %v6287, %v6397
    %s6402 = sld [smem:[#allocation10 + $0x11f]]
    %v6403 = vstv %s6402
    %v6404 = vmul.f32 %v6302, %v6403
    %v6405 = vmul.f32 %v6303, %v6403
    %6408 = vrot.lane.b32.xlu0 %v6404, 126
    %v6409 = vpop.permute.xlu0 %6408
    %6410 = vrot.lane.b32.xlu0 %v6405, 126
    %v6411 = vpop.permute.xlu0 %6410
    %v6414 = vadd.f32 %v6300, %v6409
    %v6415 = vadd.f32 %v6301, %v6411
    %s6416 = sld [smem:[#allocation11]]
    %v6417 = vstv %s6416
    %v6418 = vadd.f32 %v6316, %v6417
    %v6419 = vadd.f32 %v6317, %v6417
    %v6420 = vmax.f32 %v6418, 0.0
    %v6421 = vmax.f32 %v6419, 0.0
    %6422 = vst.msk [vmem:[#allocation5] sm:$0xff] %vm2459, %v6420
    %vm6423 = vcmask 914432
    %6424 = vst.msk [vmem:[#allocation5 + $0x8] sm:$0x3f] %vm6423, %v6421
    %s6425 = sld [smem:[#allocation11 + $0x1]]
    %v6426 = vstv %s6425
    %v6427 = vadd.f32 %v6330, %v6426
    %v6428 = vadd.f32 %v6331, %v6426
    %v6429 = vmax.f32 %v6427, 0.0
    %v6430 = vmax.f32 %v6428, 0.0
    %6431 = vst.msk [vmem:[#allocation5 + $0xe] sm:$0xff] %vm2459, %v6429
    %6432 = vst.msk [vmem:[#allocation5 + $0x16] sm:$0x3f] %vm6423, %v6430
    %s6433 = sld [smem:[#allocation11 + $0x2]]
    %v6434 = vstv %s6433
    %v6435 = vadd.f32 %v6344, %v6434
    %v6436 = vadd.f32 %v6345, %v6434
    %v6437 = vmax.f32 %v6435, 0.0
    %v6438 = vmax.f32 %v6436, 0.0
    %6439 = vst.msk [vmem:[#allocation5 + $0x1c] sm:$0xff] %vm2459, %v6437
    %6440 = vst.msk [vmem:[#allocation5 + $0x24] sm:$0x3f] %vm6423, %v6438
    %s6441 = sld [smem:[#allocation11 + $0x3]]
    %v6442 = vstv %s6441
    %v6443 = vadd.f32 %v6358, %v6442
    %v6444 = vadd.f32 %v6359, %v6442
    %v6445 = vmax.f32 %v6443, 0.0
    %v6446 = vmax.f32 %v6444, 0.0
    %6447 = vst.msk [vmem:[#allocation5 + $0x2a] sm:$0xff] %vm2459, %v6445
    %6448 = vst.msk [vmem:[#allocation5 + $0x32] sm:$0x3f] %vm6423, %v6446
    %s6449 = sld [smem:[#allocation11 + $0x4]]
    %v6450 = vstv %s6449
    %v6451 = vadd.f32 %v6372, %v6450
    %v6452 = vadd.f32 %v6373, %v6450
    %v6453 = vmax.f32 %v6451, 0.0
    %v6454 = vmax.f32 %v6452, 0.0
    %6455 = vst.msk [vmem:[#allocation5 + $0x38] sm:$0xff] %vm2459, %v6453
    %6456 = vst.msk [vmem:[#allocation5 + $0x40] sm:$0x3f] %vm6423, %v6454
    %s6457 = sld [smem:[#allocation11 + $0x5]]
    %v6458 = vstv %s6457
    %v6459 = vadd.f32 %v6386, %v6458
    %v6460 = vadd.f32 %v6387, %v6458
    %v6461 = vmax.f32 %v6459, 0.0
    %v6462 = vmax.f32 %v6460, 0.0
    %6463 = vst.msk [vmem:[#allocation5 + $0x46] sm:$0xff] %vm2459, %v6461
    %6464 = vst.msk [vmem:[#allocation5 + $0x4e] sm:$0x3f] %vm6423, %v6462
    %s6465 = sld [smem:[#allocation11 + $0x6]]
    %v6466 = vstv %s6465
    %v6467 = vadd.f32 %v6400, %v6466
    %v6468 = vadd.f32 %v6401, %v6466
    %v6469 = vmax.f32 %v6467, 0.0
    %v6470 = vmax.f32 %v6468, 0.0
    %6471 = vst.msk [vmem:[#allocation5 + $0x54] sm:$0xff] %vm2459, %v6469
    %6472 = vst.msk [vmem:[#allocation5 + $0x5c] sm:$0x3f] %vm6423, %v6470
    %s6473 = sld [smem:[#allocation11 + $0x7]]
    %v6474 = vstv %s6473
    %v6475 = vadd.f32 %v6414, %v6474
    %v6476 = vadd.f32 %v6415, %v6474
    %v6477 = vmax.f32 %v6475, 0.0
    %v6478 = vmax.f32 %v6476, 0.0
    %6479 = vst.msk [vmem:[#allocation5 + $0x62] sm:$0xff] %vm2459, %v6477
    %6480 = vst.msk [vmem:[#allocation5 + $0x6a] sm:$0x3f] %vm6423, %v6478
    %v6481 = vld [vmem:[#allocation5] sm:$0xff]
    %v6482 = vld [vmem:[#allocation5 + $0x8] sm:$0xff]
    %v6483 = vld [vmem:[#allocation5 + $0x10] sm:$0xff]
    %v6484 = vld [vmem:[#allocation5 + $0x18] sm:$0xff]
    %v6485 = vld [vmem:[#allocation5 + $0x20] sm:$0xff]
    %v6486 = vld [vmem:[#allocation5 + $0x28] sm:$0xff]
    %v6487 = vld [vmem:[#allocation5 + $0x30] sm:$0xff]
    %v6488 = vld [vmem:[#allocation5 + $0x38] sm:$0xff]
    %v6489 = vld [vmem:[#allocation5 + $0x40] sm:$0xff]
    %v6490 = vld [vmem:[#allocation5 + $0x48] sm:$0xff]
    %v6491 = vld [vmem:[#allocation5 + $0x50] sm:$0xff]
    %v6492 = vld [vmem:[#allocation5 + $0x58] sm:$0xff]
    %v6493 = vld [vmem:[#allocation5 + $0x60] sm:$0xff]
    %v6494 = vld [vmem:[#allocation5 + $0x68] sm:$0xff]
    %v6495 = vld [vmem:[%s9] sm:$0xff]
    %v6496 = vld [vmem:[%s9 + $0x8] sm:$0xff]
    %v6497 = vld [vmem:[%s9 + $0x10] sm:$0xff]
    %v6498 = vld [vmem:[%s9 + $0x18] sm:$0xff]
    %v6499 = vld [vmem:[%s9 + $0x20] sm:$0xff]
    %v6500 = vld [vmem:[%s9 + $0x28] sm:$0xff]
    %v6501 = vld [vmem:[%s9 + $0x30] sm:$0xff]
    %v6503 = vsel %vm2459, %v6495, 0
    %v6506 = vsel %vm2459, %v6496, 0
    %v6509 = vsel %vm2459, %v6497, 0
    %v6512 = vsel %vm2459, %v6498, 0
    %v6515 = vsel %vm2459, %v6499, 0
    %v6518 = vsel %vm2459, %v6500, 0
    %v6521 = vsel %vm2459, %v6501, 0
    %6523 = vmatprep.subr.mxu0 0.0
    %6524 = vmatpush1.msra.mxu0 %v6481
    %6525 = vmatprep.subr.mxu0 0.0
    %6526 = vmatpush1.msra.mxu0 %v6482
    %6527 = vmatprep.subr.mxu0 0.0
    %6528 = vmatpush1.msra.mxu0 %v6483
    %6529 = vmatprep.subr.mxu0 0.0
    %6530 = vmatpush1.msra.mxu0 %v6484
    %6531 = vmatprep.subr.mxu0 0.0
    %6532 = vmatpush1.msra.mxu0 %v6485
    %6533 = vmatprep.subr.mxu0 0.0
    %6534 = vmatpush1.msra.mxu0 %v6486
    %6535 = vmatprep.subr.mxu0 0.0
    %6536 = vmatpush1.msra.mxu0 %v6487
    %6537 = vmatprep.subr.mxu0 0.0
    %6538 = vmatpush1.msra.mxu0 %v6488
    %6539 = vmatprep.subr.mxu0 0.0
    %6540 = vmatpush1.msra.mxu0 %v6489
    %6541 = vmatprep.subr.mxu0 0.0
    %6542 = vmatpush1.msra.mxu0 %v6490
    %6543 = vmatprep.subr.mxu0 0.0
    %6544 = vmatpush1.msra.mxu0 %v6491
    %6545 = vmatprep.subr.mxu0 0.0
    %6546 = vmatpush1.msra.mxu0 %v6492
    %6547 = vmatprep.subr.mxu0 0.0
    %6548 = vmatpush1.msra.mxu0 %v6493
    %6549 = vmatprep.subr.mxu0 0.0
    %6550 = vmatpush1.msra.mxu0 %v6494
    %6551 = vmatprep.subr.mxu0 0.0
    %6552 = vmatpush1.msra.mxu0 0.0
    %6553 = vmatprep.subr.mxu0 0.0
    %6554 = vmatpush1.msra.mxu0 0.0
    %6555 = vmatprep.subr.mxu0 0.0
    %6556 = vmatpush1.msra.mxu0 0.0
    %6557 = vmatprep.subr.mxu0 0.0
    %6558 = vmatpush1.msra.mxu0 0.0
    %6559 = vmatprep.subr.mxu0 0.0
    %6560 = vmatpush1.msra.mxu0 0.0
    %6561 = vmatprep.subr.mxu0 0.0
    %6562 = vmatpush1.msra.mxu0 0.0
    %6563 = vmatprep.subr.mxu0 0.0
    %6564 = vmatpush1.msra.mxu0 0.0
    %6565 = vmatprep.subr.mxu0 0.0
    %6566 = vmatpush1.msra.mxu0 0.0
    %6567 = vmatprep.subr.mxu0 0.0
    %6568 = vmatpush1.msra.mxu0 0.0
    %6569 = vmatprep.subr.mxu0 0.0
    %6570 = vmatpush1.msra.mxu0 0.0
    %6571 = vmatprep.subr.mxu0 0.0
    %6572 = vmatpush1.msra.mxu0 0.0
    %6573 = vmatprep.subr.mxu0 0.0
    %6574 = vmatpush1.msra.mxu0 0.0
    %6575 = vmatprep.subr.mxu0 0.0
    %6576 = vmatpush1.msra.mxu0 0.0
    %6577 = vmatprep.subr.mxu0 0.0
    %6578 = vmatpush1.msra.mxu0 0.0
    %6579 = vmatprep.subr.mxu0 0.0
    %6580 = vmatpush1.msra.mxu0 0.0
    %6581 = vmatprep.subr.mxu0 0.0
    %6582 = vmatpush1.msra.mxu0 0.0
    %6583 = vmatprep.subr.mxu0 0.0
    %6584 = vmatpush1.msra.mxu0 0.0
    %6585 = vmatprep.subr.mxu0 0.0
    %6586 = vmatpush1.msra.mxu0 0.0
    %6587 = vmatprep.mubr.f32.mxu0 0.0
    %6588 = vmatmul.mubr.f32.gmra.mrb[0].mxu0 %v6503
    %v6589 = vpop.f32.mrb[0].mxu0
    %v6590 = vadd.f32 0.0, %v6589
    %v6591 = vpop.f32.mrb[0].mxu0
    %6592 = vmatprep.mubr.f32.mxu0 0.0
    %6593 = vmatmul.mubr.f32.gmra.mrb[0].mxu0 %v6506
    %v6594 = vpop.f32.mrb[0].mxu0
    %v6595 = vadd.f32 0.0, %v6594
    %v6596 = vpop.f32.mrb[0].mxu0
    %6597 = vmatprep.mubr.f32.mxu0 0.0
    %6598 = vmatmul.mubr.f32.gmra.mrb[0].mxu0 %v6509
    %v6599 = vpop.f32.mrb[0].mxu0
    %v6600 = vadd.f32 0.0, %v6599
    %v6601 = vpop.f32.mrb[0].mxu0
    %6602 = vmatprep.mubr.f32.mxu0 0.0
    %6603 = vmatmul.mubr.f32.gmra.mrb[0].mxu0 %v6512
    %v6604 = vpop.f32.mrb[0].mxu0
    %v6605 = vadd.f32 0.0, %v6604
    %v6606 = vpop.f32.mrb[0].mxu0
    %6607 = vmatprep.mubr.f32.mxu0 0.0
    %6608 = vmatmul.mubr.f32.gmra.mrb[0].mxu0 %v6515
    %v6609 = vpop.f32.mrb[0].mxu0
    %v6610 = vadd.f32 0.0, %v6609
    %v6611 = vpop.f32.mrb[0].mxu0
    %6612 = vmatprep.mubr.f32.mxu0 0.0
    %6613 = vmatmul.mubr.f32.gmra.mrb[0].mxu0 %v6518
    %v6614 = vpop.f32.mrb[0].mxu0
    %v6615 = vadd.f32 0.0, %v6614
    %v6616 = vpop.f32.mrb[0].mxu0
    %6617 = vmatprep.mubr.f32.mxu0 0.0
    %6618 = vmatmul.mubr.f32.gmra.mrb[0].mxu0 %v6521
    %v6619 = vpop.f32.mrb[0].mxu0
    %v6620 = vadd.f32 0.0, %v6619
    %v6621 = vpop.f32.mrb[0].mxu0
    %6622 = vdwg.mxu0
    %s6623 = scalar_lea.vmem %s9, 56
    %v6624 = vld [vmem:[%s6623] sm:$0xff]
    %v6625 = vld [vmem:[%s6623 + $0x8] sm:$0xff]
    %v6626 = vld [vmem:[%s6623 + $0x10] sm:$0xff]
    %v6627 = vld [vmem:[%s6623 + $0x18] sm:$0xff]
    %v6628 = vld [vmem:[%s6623 + $0x20] sm:$0xff]
    %v6629 = vld [vmem:[%s6623 + $0x28] sm:$0xff]
    %v6630 = vld [vmem:[%s6623 + $0x30] sm:$0xff]
    %v6632 = vsel %vm2459, %v6624, 0
    %v6635 = vsel %vm2459, %v6625, 0
    %v6638 = vsel %vm2459, %v6626, 0
    %v6641 = vsel %vm2459, %v6627, 0
    %v6644 = vsel %vm2459, %v6628, 0
    %v6647 = vsel %vm2459, %v6629, 0
    %v6650 = vsel %vm2459, %v6630, 0
    %6652 = vmatprep.subr.mxu0 0.0
    %6653 = vmatpush1.msra.mxu0 %v6481
    %6654 = vmatprep.subr.mxu0 0.0
    %6655 = vmatpush1.msra.mxu0 %v6482
    %6656 = vmatprep.subr.mxu0 0.0
    %6657 = vmatpush1.msra.mxu0 %v6483
    %6658 = vmatprep.subr.mxu0 0.0
    %6659 = vmatpush1.msra.mxu0 %v6484
    %6660 = vmatprep.subr.mxu0 0.0
    %6661 = vmatpush1.msra.mxu0 %v6485
    %6662 = vmatprep.subr.mxu0 0.0
    %6663 = vmatpush1.msra.mxu0 %v6486
    %6664 = vmatprep.subr.mxu0 0.0
    %6665 = vmatpush1.msra.mxu0 %v6487
    %6666 = vmatprep.subr.mxu0 0.0
    %6667 = vmatpush1.msra.mxu0 %v6488
    %6668 = vmatprep.subr.mxu0 0.0
    %6669 = vmatpush1.msra.mxu0 %v6489
    %6670 = vmatprep.subr.mxu0 0.0
    %6671 = vmatpush1.msra.mxu0 %v6490
    %6672 = vmatprep.subr.mxu0 0.0
    %6673 = vmatpush1.msra.mxu0 %v6491
    %6674 = vmatprep.subr.mxu0 0.0
    %6675 = vmatpush1.msra.mxu0 %v6492
    %6676 = vmatprep.subr.mxu0 0.0
    %6677 = vmatpush1.msra.mxu0 %v6493
    %6678 = vmatprep.subr.mxu0 0.0
    %6679 = vmatpush1.msra.mxu0 %v6494
    %6680 = vmatprep.subr.mxu0 0.0
    %6681 = vmatpush1.msra.mxu0 0.0
    %6682 = vmatprep.subr.mxu0 0.0
    %6683 = vmatpush1.msra.mxu0 0.0
    %6684 = vmatprep.subr.mxu0 0.0
    %6685 = vmatpush1.msra.mxu0 0.0
    %6686 = vmatprep.subr.mxu0 0.0
    %6687 = vmatpush1.msra.mxu0 0.0
    %6688 = vmatprep.subr.mxu0 0.0
    %6689 = vmatpush1.msra.mxu0 0.0
    %6690 = vmatprep.subr.mxu0 0.0
    %6691 = vmatpush1.msra.mxu0 0.0
    %6692 = vmatprep.subr.mxu0 0.0
    %6693 = vmatpush1.msra.mxu0 0.0
    %6694 = vmatprep.subr.mxu0 0.0
    %6695 = vmatpush1.msra.mxu0 0.0
    %6696 = vmatprep.subr.mxu0 0.0
    %6697 = vmatpush1.msra.mxu0 0.0
    %6698 = vmatprep.subr.mxu0 0.0
    %6699 = vmatpush1.msra.mxu0 0.0
    %6700 = vmatprep.subr.mxu0 0.0
    %6701 = vmatpush1.msra.mxu0 0.0
    %6702 = vmatprep.subr.mxu0 0.0
    %6703 = vmatpush1.msra.mxu0 0.0
    %6704 = vmatprep.subr.mxu0 0.0
    %6705 = vmatpush1.msra.mxu0 0.0
    %6706 = vmatprep.subr.mxu0 0.0
    %6707 = vmatpush1.msra.mxu0 0.0
    %6708 = vmatprep.subr.mxu0 0.0
    %6709 = vmatpush1.msra.mxu0 0.0
    %6710 = vmatprep.subr.mxu0 0.0
    %6711 = vmatpush1.msra.mxu0 0.0
    %6712 = vmatprep.subr.mxu0 0.0
    %6713 = vmatpush1.msra.mxu0 0.0
    %6714 = vmatprep.subr.mxu0 0.0
    %6715 = vmatpush1.msra.mxu0 0.0
    %6716 = vmatprep.mubr.f32.mxu0 0.0
    %6717 = vmatmul.mubr.f32.gmra.mrb[0].mxu0 %v6632
    %v6718 = vpop.f32.mrb[0].mxu0
    %v6719 = vadd.f32 0.0, %v6718
    %v6720 = vpop.f32.mrb[0].mxu0
    %6721 = vmatprep.mubr.f32.mxu0 0.0
    %6722 = vmatmul.mubr.f32.gmra.mrb[0].mxu0 %v6635
    %v6723 = vpop.f32.mrb[0].mxu0
    %v6724 = vadd.f32 0.0, %v6723
    %v6725 = vpop.f32.mrb[0].mxu0
    %6726 = vmatprep.mubr.f32.mxu0 0.0
    %6727 = vmatmul.mubr.f32.gmra.mrb[0].mxu0 %v6638
    %v6728 = vpop.f32.mrb[0].mxu0
    %v6729 = vadd.f32 0.0, %v6728
    %v6730 = vpop.f32.mrb[0].mxu0
    %6731 = vmatprep.mubr.f32.mxu0 0.0
    %6732 = vmatmul.mubr.f32.gmra.mrb[0].mxu0 %v6641
    %v6733 = vpop.f32.mrb[0].mxu0
    %v6734 = vadd.f32 0.0, %v6733
    %v6735 = vpop.f32.mrb[0].mxu0
    %6736 = vmatprep.mubr.f32.mxu0 0.0
    %6737 = vmatmul.mubr.f32.gmra.mrb[0].mxu0 %v6644
    %v6738 = vpop.f32.mrb[0].mxu0
    %v6739 = vadd.f32 0.0, %v6738
    %v6740 = vpop.f32.mrb[0].mxu0
    %6741 = vmatprep.mubr.f32.mxu0 0.0
    %6742 = vmatmul.mubr.f32.gmra.mrb[0].mxu0 %v6647
    %v6743 = vpop.f32.mrb[0].mxu0
    %v6744 = vadd.f32 0.0, %v6743
    %v6745 = vpop.f32.mrb[0].mxu0
    %6746 = vmatprep.mubr.f32.mxu0 0.0
    %6747 = vmatmul.mubr.f32.gmra.mrb[0].mxu0 %v6650
    %v6748 = vpop.f32.mrb[0].mxu0
    %v6749 = vadd.f32 0.0, %v6748
    %v6750 = vpop.f32.mrb[0].mxu0
    %6751 = vdwg.mxu0
    %v6752 = vmax.f32 %v6590, %v6719
    %v6753 = vmax.f32 %v6595, %v6724
    %v6754 = vmax.f32 %v6600, %v6729
    %v6755 = vmax.f32 %v6605, %v6734
    %v6756 = vmax.f32 %v6610, %v6739
    %v6757 = vmax.f32 %v6615, %v6744
    %v6758 = vmax.f32 %v6620, %v6749
    %v6759 = vld [vmem:[%s10] sm:$0xff]
    %v6760 = vld [vmem:[%s10 + $0x8] sm:$0xff]
    %v6761 = vld [vmem:[%s10 + $0x10] sm:$0xff]
    %v6762 = vld [vmem:[%s10 + $0x18] sm:$0xff]
    %v6763 = vld [vmem:[%s10 + $0x20] sm:$0xff]
    %v6764 = vld [vmem:[%s10 + $0x28] sm:$0xff]
    %v6765 = vld [vmem:[%s10 + $0x30] sm:$0xff]
    %v6766 = vld [vmem:[%s10 + $0x38] sm:$0xff]
    %v6767 = vld [vmem:[%s10 + $0x40] sm:$0xff]
    %v6768 = vld [vmem:[%s10 + $0x48] sm:$0xff]
    %v6769 = vld [vmem:[%s10 + $0x50] sm:$0xff]
    %v6770 = vld [vmem:[%s10 + $0x58] sm:$0xff]
    %v6771 = vld [vmem:[%s10 + $0x60] sm:$0xff]
    %v6772 = vld [vmem:[%s10 + $0x68] sm:$0xff]
    %v6774 = vsel %vm2459, %v6752, 0
    %v6777 = vsel %vm2459, %v6753, 0
    %v6780 = vsel %vm2459, %v6754, 0
    %v6783 = vsel %vm2459, %v6755, 0
    %v6786 = vsel %vm2459, %v6756, 0
    %v6789 = vsel %vm2459, %v6757, 0
    %v6792 = vsel %vm2459, %v6758, 0
    %6794 = vmatprep.subr.mxu0 0.0
    %6795 = vmatpush1.msra.mxu0 %v6759
    %6796 = vmatprep.subr.mxu0 0.0
    %6797 = vmatpush1.msra.mxu0 %v6760
    %6798 = vmatprep.subr.mxu0 0.0
    %6799 = vmatpush1.msra.mxu0 %v6761
    %6800 = vmatprep.subr.mxu0 0.0
    %6801 = vmatpush1.msra.mxu0 %v6762
    %6802 = vmatprep.subr.mxu0 0.0
    %6803 = vmatpush1.msra.mxu0 %v6763
    %6804 = vmatprep.subr.mxu0 0.0
    %6805 = vmatpush1.msra.mxu0 %v6764
    %6806 = vmatprep.subr.mxu0 0.0
    %6807 = vmatpush1.msra.mxu0 %v6765
    %6808 = vmatprep.subr.mxu0 0.0
    %6809 = vmatpush1.msra.mxu0 %v6766
    %6810 = vmatprep.subr.mxu0 0.0
    %6811 = vmatpush1.msra.mxu0 %v6767
    %6812 = vmatprep.subr.mxu0 0.0
    %6813 = vmatpush1.msra.mxu0 %v6768
    %6814 = vmatprep.subr.mxu0 0.0
    %6815 = vmatpush1.msra.mxu0 %v6769
    %6816 = vmatprep.subr.mxu0 0.0
    %6817 = vmatpush1.msra.mxu0 %v6770
    %6818 = vmatprep.subr.mxu0 0.0
    %6819 = vmatpush1.msra.mxu0 %v6771
    %6820 = vmatprep.subr.mxu0 0.0
    %6821 = vmatpush1.msra.mxu0 %v6772
    %6822 = vmatprep.subr.mxu0 0.0
    %6823 = vmatpush1.msra.mxu0 0.0
    %6824 = vmatprep.subr.mxu0 0.0
    %6825 = vmatpush1.msra.mxu0 0.0
    %6826 = vmatprep.subr.mxu0 0.0
    %6827 = vmatpush1.msra.mxu0 0.0
    %6828 = vmatprep.subr.mxu0 0.0
    %6829 = vmatpush1.msra.mxu0 0.0
    %6830 = vmatprep.subr.mxu0 0.0
    %6831 = vmatpush1.msra.mxu0 0.0
    %6832 = vmatprep.subr.mxu0 0.0
    %6833 = vmatpush1.msra.mxu0 0.0
    %6834 = vmatprep.subr.mxu0 0.0
    %6835 = vmatpush1.msra.mxu0 0.0
    %6836 = vmatprep.subr.mxu0 0.0
    %6837 = vmatpush1.msra.mxu0 0.0
    %6838 = vmatprep.subr.mxu0 0.0
    %6839 = vmatpush1.msra.mxu0 0.0
    %6840 = vmatprep.subr.mxu0 0.0
    %6841 = vmatpush1.msra.mxu0 0.0
    %6842 = vmatprep.subr.mxu0 0.0
    %6843 = vmatpush1.msra.mxu0 0.0
    %6844 = vmatprep.subr.mxu0 0.0
    %6845 = vmatpush1.msra.mxu0 0.0
    %6846 = vmatprep.subr.mxu0 0.0
    %6847 = vmatpush1.msra.mxu0 0.0
    %6848 = vmatprep.subr.mxu0 0.0
    %6849 = vmatpush1.msra.mxu0 0.0
    %6850 = vmatprep.subr.mxu0 0.0
    %6851 = vmatpush1.msra.mxu0 0.0
    %6852 = vmatprep.subr.mxu0 0.0
    %6853 = vmatpush1.msra.mxu0 0.0
    %6854 = vmatprep.subr.mxu0 0.0
    %6855 = vmatpush1.msra.mxu0 0.0
    %6856 = vmatprep.subr.mxu0 0.0
    %6857 = vmatpush1.msra.mxu0 0.0
    %6858 = vmatprep.mubr.f32.mxu0 0.0
    %6859 = vmatmul.mubr.f32.gmra.mrb[0].mxu0 %v6774
    %v6860 = vpop.f32.mrb[0].mxu0
    %v6861 = vadd.f32 0.0, %v6860
    %v6862 = vpop.f32.mrb[0].mxu0
    %6863 = vmatprep.mubr.f32.mxu0 0.0
    %6864 = vmatmul.mubr.f32.gmra.mrb[0].mxu0 %v6777
    %v6865 = vpop.f32.mrb[0].mxu0
    %v6866 = vadd.f32 0.0, %v6865
    %v6867 = vpop.f32.mrb[0].mxu0
    %6868 = vmatprep.mubr.f32.mxu0 0.0
    %6869 = vmatmul.mubr.f32.gmra.mrb[0].mxu0 %v6780
    %v6870 = vpop.f32.mrb[0].mxu0
    %v6871 = vadd.f32 0.0, %v6870
    %v6872 = vpop.f32.mrb[0].mxu0
    %6873 = vmatprep.mubr.f32.mxu0 0.0
    %6874 = vmatmul.mubr.f32.gmra.mrb[0].mxu0 %v6783
    %v6875 = vpop.f32.mrb[0].mxu0
    %v6876 = vadd.f32 0.0, %v6875
    %v6877 = vpop.f32.mrb[0].mxu0
    %6878 = vmatprep.mubr.f32.mxu0 0.0
    %6879 = vmatmul.mubr.f32.gmra.mrb[0].mxu0 %v6786
    %v6880 = vpop.f32.mrb[0].mxu0
    %v6881 = vadd.f32 0.0, %v6880
    %v6882 = vpop.f32.mrb[0].mxu0
    %6883 = vmatprep.mubr.f32.mxu0 0.0
    %6884 = vmatmul.mubr.f32.gmra.mrb[0].mxu0 %v6789
    %v6885 = vpop.f32.mrb[0].mxu0
    %v6886 = vadd.f32 0.0, %v6885
    %v6887 = vpop.f32.mrb[0].mxu0
    %6888 = vmatprep.mubr.f32.mxu0 0.0
    %6889 = vmatmul.mubr.f32.gmra.mrb[0].mxu0 %v6792
    %v6890 = vpop.f32.mrb[0].mxu0
    %v6891 = vadd.f32 0.0, %v6890
    %v6892 = vpop.f32.mrb[0].mxu0
    %6893 = vdwg.mxu0
    %s6894 = scalar_lea.vmem %s10, 112
    %v6895 = vld [vmem:[%s6894] sm:$0xff]
    %v6896 = vld [vmem:[%s6894 + $0x8] sm:$0xff]
    %v6897 = vld [vmem:[%s6894 + $0x10] sm:$0xff]
    %v6898 = vld [vmem:[%s6894 + $0x18] sm:$0xff]
    %v6899 = vld [vmem:[%s6894 + $0x20] sm:$0xff]
    %v6900 = vld [vmem:[%s6894 + $0x28] sm:$0xff]
    %v6901 = vld [vmem:[%s6894 + $0x30] sm:$0xff]
    %v6902 = vld [vmem:[%s6894 + $0x38] sm:$0xff]
    %v6903 = vld [vmem:[%s6894 + $0x40] sm:$0xff]
    %v6904 = vld [vmem:[%s6894 + $0x48] sm:$0xff]
    %v6905 = vld [vmem:[%s6894 + $0x50] sm:$0xff]
    %v6906 = vld [vmem:[%s6894 + $0x58] sm:$0xff]
    %v6907 = vld [vmem:[%s6894 + $0x60] sm:$0xff]
    %v6908 = vld [vmem:[%s6894 + $0x68] sm:$0xff]
    %6909 = vmatprep.subr.mxu0 0.0
    %6910 = vmatpush1.msra.mxu0 %v6895
    %6911 = vmatprep.subr.mxu0 0.0
    %6912 = vmatpush1.msra.mxu0 %v6896
    %6913 = vmatprep.subr.mxu0 0.0
    %6914 = vmatpush1.msra.mxu0 %v6897
    %6915 = vmatprep.subr.mxu0 0.0
    %6916 = vmatpush1.msra.mxu0 %v6898
    %6917 = vmatprep.subr.mxu0 0.0
    %6918 = vmatpush1.msra.mxu0 %v6899
    %6919 = vmatprep.subr.mxu0 0.0
    %6920 = vmatpush1.msra.mxu0 %v6900
    %6921 = vmatprep.subr.mxu0 0.0
    %6922 = vmatpush1.msra.mxu0 %v6901
    %6923 = vmatprep.subr.mxu0 0.0
    %6924 = vmatpush1.msra.mxu0 %v6902
    %6925 = vmatprep.subr.mxu0 0.0
    %6926 = vmatpush1.msra.mxu0 %v6903
    %6927 = vmatprep.subr.mxu0 0.0
    %6928 = vmatpush1.msra.mxu0 %v6904
    %6929 = vmatprep.subr.mxu0 0.0
    %6930 = vmatpush1.msra.mxu0 %v6905
    %6931 = vmatprep.subr.mxu0 0.0
    %6932 = vmatpush1.msra.mxu0 %v6906
    %6933 = vmatprep.subr.mxu0 0.0
    %6934 = vmatpush1.msra.mxu0 %v6907
    %6935 = vmatprep.subr.mxu0 0.0
    %6936 = vmatpush1.msra.mxu0 %v6908
    %6937 = vmatprep.subr.mxu0 0.0
    %6938 = vmatpush1.msra.mxu0 0.0
    %6939 = vmatprep.subr.mxu0 0.0
    %6940 = vmatpush1.msra.mxu0 0.0
    %6941 = vmatprep.subr.mxu0 0.0
    %6942 = vmatpush1.msra.mxu0 0.0
    %6943 = vmatprep.subr.mxu0 0.0
    %6944 = vmatpush1.msra.mxu0 0.0
    %6945 = vmatprep.subr.mxu0 0.0
    %6946 = vmatpush1.msra.mxu0 0.0
    %6947 = vmatprep.subr.mxu0 0.0
    %6948 = vmatpush1.msra.mxu0 0.0
    %6949 = vmatprep.subr.mxu0 0.0
    %6950 = vmatpush1.msra.mxu0 0.0
    %6951 = vmatprep.subr.mxu0 0.0
    %6952 = vmatpush1.msra.mxu0 0.0
    %6953 = vmatprep.subr.mxu0 0.0
    %6954 = vmatpush1.msra.mxu0 0.0
    %6955 = vmatprep.subr.mxu0 0.0
    %6956 = vmatpush1.msra.mxu0 0.0
    %6957 = vmatprep.subr.mxu0 0.0
    %6958 = vmatpush1.msra.mxu0 0.0
    %6959 = vmatprep.subr.mxu0 0.0
    %6960 = vmatpush1.msra.mxu0 0.0
    %6961 = vmatprep.subr.mxu0 0.0
    %6962 = vmatpush1.msra.mxu0 0.0
    %6963 = vmatprep.subr.mxu0 0.0
    %6964 = vmatpush1.msra.mxu0 0.0
    %6965 = vmatprep.subr.mxu0 0.0
    %6966 = vmatpush1.msra.mxu0 0.0
    %6967 = vmatprep.subr.mxu0 0.0
    %6968 = vmatpush1.msra.mxu0 0.0
    %6969 = vmatprep.subr.mxu0 0.0
    %6970 = vmatpush1.msra.mxu0 0.0
    %6971 = vmatprep.subr.mxu0 0.0
    %6972 = vmatpush1.msra.mxu0 0.0
    %6973 = vmatprep.mubr.f32.mxu0 0.0
    %6974 = vmatmul.mubr.f32.gmra.mrb[0].mxu0 %v6774
    %v6975 = vpop.f32.mrb[0].mxu0
    %v6976 = vadd.f32 0.0, %v6975
    %v6977 = vpop.f32.mrb[0].mxu0
    %6978 = vmatprep.mubr.f32.mxu0 0.0
    %6979 = vmatmul.mubr.f32.gmra.mrb[0].mxu0 %v6777
    %v6980 = vpop.f32.mrb[0].mxu0
    %v6981 = vadd.f32 0.0, %v6980
    %v6982 = vpop.f32.mrb[0].mxu0
    %6983 = vmatprep.mubr.f32.mxu0 0.0
    %6984 = vmatmul.mubr.f32.gmra.mrb[0].mxu0 %v6780
    %v6985 = vpop.f32.mrb[0].mxu0
    %v6986 = vadd.f32 0.0, %v6985
    %v6987 = vpop.f32.mrb[0].mxu0
    %6988 = vmatprep.mubr.f32.mxu0 0.0
    %6989 = vmatmul.mubr.f32.gmra.mrb[0].mxu0 %v6783
    %v6990 = vpop.f32.mrb[0].mxu0
    %v6991 = vadd.f32 0.0, %v6990
    %v6992 = vpop.f32.mrb[0].mxu0
    %6993 = vmatprep.mubr.f32.mxu0 0.0
    %6994 = vmatmul.mubr.f32.gmra.mrb[0].mxu0 %v6786
    %v6995 = vpop.f32.mrb[0].mxu0
    %v6996 = vadd.f32 0.0, %v6995
    %v6997 = vpop.f32.mrb[0].mxu0
    %6998 = vmatprep.mubr.f32.mxu0 0.0
    %6999 = vmatmul.mubr.f32.gmra.mrb[0].mxu0 %v6789
    %v7000 = vpop.f32.mrb[0].mxu0
    %v7001 = vadd.f32 0.0, %v7000
    %v7002 = vpop.f32.mrb[0].mxu0
    %7003 = vmatprep.mubr.f32.mxu0 0.0
    %7004 = vmatmul.mubr.f32.gmra.mrb[0].mxu0 %v6792
    %v7005 = vpop.f32.mrb[0].mxu0
    %v7006 = vadd.f32 0.0, %v7005
    %v7007 = vpop.f32.mrb[0].mxu0
    %7008 = vdwg.mxu0
    %v7009 = vmax.f32 %v6861, %v6976
    %v7010 = vmax.f32 %v6866, %v6981
    %v7011 = vmax.f32 %v6871, %v6986
    %v7012 = vmax.f32 %v6876, %v6991
    %v7013 = vmax.f32 %v6881, %v6996
    %v7014 = vmax.f32 %v6886, %v7001
    %v7015 = vmax.f32 %v6891, %v7006
    %v7016 = vld [vmem:[%s11] sm:$0xff]
    %v7017 = vld [vmem:[%s11 + $0x8] sm:$0xff]
    %v7018 = vld [vmem:[%s11 + $0x10] sm:$0xff]
    %v7019 = vld [vmem:[%s11 + $0x18] sm:$0xff]
    %v7020 = vld [vmem:[%s11 + $0x20] sm:$0xff]
    %v7021 = vld [vmem:[%s11 + $0x28] sm:$0xff]
    %v7022 = vld [vmem:[%s11 + $0x30] sm:$0xff]
    %vm7023 = vcmask 457728
    %v7025 = vsel %vm7023, %v7009, 0
    %v7028 = vsel %vm7023, %v7010, 0
    %v7031 = vsel %vm7023, %v7011, 0
    %v7034 = vsel %vm7023, %v7012, 0
    %v7037 = vsel %vm7023, %v7013, 0
    %v7040 = vsel %vm7023, %v7014, 0
    %v7043 = vsel %vm7023, %v7015, 0
    %7045 = vmatprep.subr.mxu0 0.0
    %7046 = vmatpush1.msra.mxu0 %v7016
    %7047 = vmatprep.subr.mxu0 0.0
    %7048 = vmatpush1.msra.mxu0 %v7017
    %7049 = vmatprep.subr.mxu0 0.0
    %7050 = vmatpush1.msra.mxu0 %v7018
    %7051 = vmatprep.subr.mxu0 0.0
    %7052 = vmatpush1.msra.mxu0 %v7019
    %7053 = vmatprep.subr.mxu0 0.0
    %7054 = vmatpush1.msra.mxu0 %v7020
    %7055 = vmatprep.subr.mxu0 0.0
    %7056 = vmatpush1.msra.mxu0 %v7021
    %7057 = vmatprep.subr.mxu0 0.0
    %7058 = vmatpush1.msra.mxu0 %v7022
    %7059 = vmatprep.subr.mxu0 0.0
    %7060 = vmatpush1.msra.mxu0 0.0
    %7061 = vmatprep.subr.mxu0 0.0
    %7062 = vmatpush1.msra.mxu0 0.0
    %7063 = vmatprep.subr.mxu0 0.0
    %7064 = vmatpush1.msra.mxu0 0.0
    %7065 = vmatprep.subr.mxu0 0.0
    %7066 = vmatpush1.msra.mxu0 0.0
    %7067 = vmatprep.subr.mxu0 0.0
    %7068 = vmatpush1.msra.mxu0 0.0
    %7069 = vmatprep.subr.mxu0 0.0
    %7070 = vmatpush1.msra.mxu0 0.0
    %7071 = vmatprep.subr.mxu0 0.0
    %7072 = vmatpush1.msra.mxu0 0.0
    %7073 = vmatprep.subr.mxu0 0.0
    %7074 = vmatpush1.msra.mxu0 0.0
    %7075 = vmatprep.subr.mxu0 0.0
    %7076 = vmatpush1.msra.mxu0 0.0
    %7077 = vmatprep.subr.mxu0 0.0
    %7078 = vmatpush1.msra.mxu0 0.0
    %7079 = vmatprep.subr.mxu0 0.0
    %7080 = vmatpush1.msra.mxu0 0.0
    %7081 = vmatprep.subr.mxu0 0.0
    %7082 = vmatpush1.msra.mxu0 0.0
    %7083 = vmatprep.subr.mxu0 0.0
    %7084 = vmatpush1.msra.mxu0 0.0
    %7085 = vmatprep.subr.mxu0 0.0
    %7086 = vmatpush1.msra.mxu0 0.0
    %7087 = vmatprep.subr.mxu0 0.0
    %7088 = vmatpush1.msra.mxu0 0.0
    %7089 = vmatprep.subr.mxu0 0.0
    %7090 = vmatpush1.msra.mxu0 0.0
    %7091 = vmatprep.subr.mxu0 0.0
    %7092 = vmatpush1.msra.mxu0 0.0
    %7093 = vmatprep.subr.mxu0 0.0
    %7094 = vmatpush1.msra.mxu0 0.0
    %7095 = vmatprep.subr.mxu0 0.0
    %7096 = vmatpush1.msra.mxu0 0.0
    %7097 = vmatprep.subr.mxu0 0.0
    %7098 = vmatpush1.msra.mxu0 0.0
    %7099 = vmatprep.subr.mxu0 0.0
    %7100 = vmatpush1.msra.mxu0 0.0
    %7101 = vmatprep.subr.mxu0 0.0
    %7102 = vmatpush1.msra.mxu0 0.0
    %7103 = vmatprep.subr.mxu0 0.0
    %7104 = vmatpush1.msra.mxu0 0.0
    %7105 = vmatprep.subr.mxu0 0.0
    %7106 = vmatpush1.msra.mxu0 0.0
    %7107 = vmatprep.subr.mxu0 0.0
    %7108 = vmatpush1.msra.mxu0 0.0
    %7109 = vmatprep.mubr.f32.mxu0 0.0
    %7110 = vmatmul.mubr.f32.gmra.mrb[0].mxu0 %v7025
    %v7111 = vpop.f32.mrb[0].mxu0
    %v7112 = vadd.f32 0.0, %v7111
    %v7113 = vpop.f32.mrb[0].mxu0
    %7114 = vmatprep.mubr.f32.mxu0 0.0
    %7115 = vmatmul.mubr.f32.gmra.mrb[0].mxu0 %v7028
    %v7116 = vpop.f32.mrb[0].mxu0
    %v7117 = vadd.f32 0.0, %v7116
    %v7118 = vpop.f32.mrb[0].mxu0
    %7119 = vmatprep.mubr.f32.mxu0 0.0
    %7120 = vmatmul.mubr.f32.gmra.mrb[0].mxu0 %v7031
    %v7121 = vpop.f32.mrb[0].mxu0
    %v7122 = vadd.f32 0.0, %v7121
    %v7123 = vpop.f32.mrb[0].mxu0
    %7124 = vmatprep.mubr.f32.mxu0 0.0
    %7125 = vmatmul.mubr.f32.gmra.mrb[0].mxu0 %v7034
    %v7126 = vpop.f32.mrb[0].mxu0
    %v7127 = vadd.f32 0.0, %v7126
    %v7128 = vpop.f32.mrb[0].mxu0
    %7129 = vmatprep.mubr.f32.mxu0 0.0
    %7130 = vmatmul.mubr.f32.gmra.mrb[0].mxu0 %v7037
    %v7131 = vpop.f32.mrb[0].mxu0
    %v7132 = vadd.f32 0.0, %v7131
    %v7133 = vpop.f32.mrb[0].mxu0
    %7134 = vmatprep.mubr.f32.mxu0 0.0
    %7135 = vmatmul.mubr.f32.gmra.mrb[0].mxu0 %v7040
    %v7136 = vpop.f32.mrb[0].mxu0
    %v7137 = vadd.f32 0.0, %v7136
    %v7138 = vpop.f32.mrb[0].mxu0
    %7139 = vmatprep.mubr.f32.mxu0 0.0
    %7140 = vmatmul.mubr.f32.gmra.mrb[0].mxu0 %v7043
    %v7141 = vpop.f32.mrb[0].mxu0
    %v7142 = vadd.f32 0.0, %v7141
    %v7143 = vpop.f32.mrb[0].mxu0
    %7144 = vdwg.mxu0
    %v7145 = vld [vmem:[%s12] sm:$0xff]
    %v7146 = vld [vmem:[%s12 + $0x8] sm:$0x3]
    %s7147 = scalar_lea.vmem %s11, 56
    %v7148 = vld [vmem:[%s7147] sm:$0xff]
    %v7149 = vld [vmem:[%s7147 + $0x8] sm:$0xff]
    %v7150 = vld [vmem:[%s7147 + $0x10] sm:$0xff]
    %v7151 = vld [vmem:[%s7147 + $0x18] sm:$0xff]
    %v7152 = vld [vmem:[%s7147 + $0x20] sm:$0xff]
    %v7153 = vld [vmem:[%s7147 + $0x28] sm:$0xff]
    %v7154 = vld [vmem:[%s7147 + $0x30] sm:$0xff]
    %7155 = vmatprep.subr.mxu0 0.0
    %7156 = vmatpush1.msra.mxu0 %v7148
    %7157 = vmatprep.subr.mxu0 0.0
    %7158 = vmatpush1.msra.mxu0 %v7149
    %7159 = vmatprep.subr.mxu0 0.0
    %7160 = vmatpush1.msra.mxu0 %v7150
    %7161 = vmatprep.subr.mxu0 0.0
    %7162 = vmatpush1.msra.mxu0 %v7151
    %7163 = vmatprep.subr.mxu0 0.0
    %7164 = vmatpush1.msra.mxu0 %v7152
    %7165 = vmatprep.subr.mxu0 0.0
    %7166 = vmatpush1.msra.mxu0 %v7153
    %7167 = vmatprep.subr.mxu0 0.0
    %7168 = vmatpush1.msra.mxu0 %v7154
    %7169 = vmatprep.subr.mxu0 0.0
    %7170 = vmatpush1.msra.mxu0 0.0
    %7171 = vmatprep.subr.mxu0 0.0
    %7172 = vmatpush1.msra.mxu0 0.0
    %7173 = vmatprep.subr.mxu0 0.0
    %7174 = vmatpush1.msra.mxu0 0.0
    %7175 = vmatprep.subr.mxu0 0.0
    %7176 = vmatpush1.msra.mxu0 0.0
    %7177 = vmatprep.subr.mxu0 0.0
    %7178 = vmatpush1.msra.mxu0 0.0
    %7179 = vmatprep.subr.mxu0 0.0
    %7180 = vmatpush1.msra.mxu0 0.0
    %7181 = vmatprep.subr.mxu0 0.0
    %7182 = vmatpush1.msra.mxu0 0.0
    %7183 = vmatprep.subr.mxu0 0.0
    %7184 = vmatpush1.msra.mxu0 0.0
    %7185 = vmatprep.subr.mxu0 0.0
    %7186 = vmatpush1.msra.mxu0 0.0
    %7187 = vmatprep.subr.mxu0 0.0
    %7188 = vmatpush1.msra.mxu0 0.0
    %7189 = vmatprep.subr.mxu0 0.0
    %7190 = vmatpush1.msra.mxu0 0.0
    %7191 = vmatprep.subr.mxu0 0.0
    %7192 = vmatpush1.msra.mxu0 0.0
    %7193 = vmatprep.subr.mxu0 0.0
    %7194 = vmatpush1.msra.mxu0 0.0
    %7195 = vmatprep.subr.mxu0 0.0
    %7196 = vmatpush1.msra.mxu0 0.0
    %7197 = vmatprep.subr.mxu0 0.0
    %7198 = vmatpush1.msra.mxu0 0.0
    %7199 = vmatprep.subr.mxu0 0.0
    %7200 = vmatpush1.msra.mxu0 0.0
    %7201 = vmatprep.subr.mxu0 0.0
    %7202 = vmatpush1.msra.mxu0 0.0
    %7203 = vmatprep.subr.mxu0 0.0
    %7204 = vmatpush1.msra.mxu0 0.0
    %7205 = vmatprep.subr.mxu0 0.0
    %7206 = vmatpush1.msra.mxu0 0.0
    %7207 = vmatprep.subr.mxu0 0.0
    %7208 = vmatpush1.msra.mxu0 0.0
    %7209 = vmatprep.subr.mxu0 0.0
    %7210 = vmatpush1.msra.mxu0 0.0
    %7211 = vmatprep.subr.mxu0 0.0
    %7212 = vmatpush1.msra.mxu0 0.0
    %7213 = vmatprep.subr.mxu0 0.0
    %7214 = vmatpush1.msra.mxu0 0.0
    %7215 = vmatprep.subr.mxu0 0.0
    %7216 = vmatpush1.msra.mxu0 0.0
    %7217 = vmatprep.subr.mxu0 0.0
    %7218 = vmatpush1.msra.mxu0 0.0
    %7219 = vmatprep.mubr.f32.mxu0 0.0
    %7220 = vmatmul.mubr.f32.gmra.mrb[0].mxu0 %v7025
    %v7221 = vpop.f32.mrb[0].mxu0
    %v7222 = vadd.f32 0.0, %v7221
    %v7223 = vpop.f32.mrb[0].mxu0
    %7224 = vmatprep.mubr.f32.mxu0 0.0
    %7225 = vmatmul.mubr.f32.gmra.mrb[0].mxu0 %v7028
    %v7226 = vpop.f32.mrb[0].mxu0
    %v7227 = vadd.f32 0.0, %v7226
    %v7228 = vpop.f32.mrb[0].mxu0
    %7229 = vmatprep.mubr.f32.mxu0 0.0
    %7230 = vmatmul.mubr.f32.gmra.mrb[0].mxu0 %v7031
    %v7231 = vpop.f32.mrb[0].mxu0
    %v7232 = vadd.f32 0.0, %v7231
    %v7233 = vpop.f32.mrb[0].mxu0
    %7234 = vmatprep.mubr.f32.mxu0 0.0
    %7235 = vmatmul.mubr.f32.gmra.mrb[0].mxu0 %v7034
    %v7236 = vpop.f32.mrb[0].mxu0
    %v7237 = vadd.f32 0.0, %v7236
    %v7238 = vpop.f32.mrb[0].mxu0
    %7239 = vmatprep.mubr.f32.mxu0 0.0
    %7240 = vmatmul.mubr.f32.gmra.mrb[0].mxu0 %v7037
    %v7241 = vpop.f32.mrb[0].mxu0
    %v7242 = vadd.f32 0.0, %v7241
    %v7243 = vpop.f32.mrb[0].mxu0
    %7244 = vmatprep.mubr.f32.mxu0 0.0
    %7245 = vmatmul.mubr.f32.gmra.mrb[0].mxu0 %v7040
    %v7246 = vpop.f32.mrb[0].mxu0
    %v7247 = vadd.f32 0.0, %v7246
    %v7248 = vpop.f32.mrb[0].mxu0
    %7249 = vmatprep.mubr.f32.mxu0 0.0
    %7250 = vmatmul.mubr.f32.gmra.mrb[0].mxu0 %v7043
    %v7251 = vpop.f32.mrb[0].mxu0
    %v7252 = vadd.f32 0.0, %v7251
    %v7253 = vpop.f32.mrb[0].mxu0
    %7254 = vdwg.mxu0
    %s7255 = scalar_lea.vmem %s12, 16
    %v7256 = vld [vmem:[%s7255] sm:$0xff]
    %v7257 = vld [vmem:[%s7255 + $0x8] sm:$0x3]
    %v7259 = vsel %vm7023, %v7256, 0
    %v7262 = vsel %vm7023, %v7257, 0
    %7264 = vmatprep.subr.mxu0 0.0
    %7265 = vmatpush1.msra.mxu0 %v7222
    %7266 = vmatprep.subr.mxu0 0.0
    %7267 = vmatpush1.msra.mxu0 %v7227
    %7268 = vmatprep.subr.mxu0 0.0
    %7269 = vmatpush1.msra.mxu0 %v7232
    %7270 = vmatprep.subr.mxu0 0.0
    %7271 = vmatpush1.msra.mxu0 %v7237
    %7272 = vmatprep.subr.mxu0 0.0
    %7273 = vmatpush1.msra.mxu0 %v7242
    %7274 = vmatprep.subr.mxu0 0.0
    %7275 = vmatpush1.msra.mxu0 %v7247
    %7276 = vmatprep.subr.mxu0 0.0
    %7277 = vmatpush1.msra.mxu0 %v7252
    %7278 = vmatprep.subr.mxu0 0.0
    %7279 = vmatpush1.msra.mxu0 0.0
    %7280 = vmatprep.subr.mxu0 0.0
    %7281 = vmatpush1.msra.mxu0 0.0
    %7282 = vmatprep.subr.mxu0 0.0
    %7283 = vmatpush1.msra.mxu0 0.0
    %7284 = vmatprep.subr.mxu0 0.0
    %7285 = vmatpush1.msra.mxu0 0.0
    %7286 = vmatprep.subr.mxu0 0.0
    %7287 = vmatpush1.msra.mxu0 0.0
    %7288 = vmatprep.subr.mxu0 0.0
    %7289 = vmatpush1.msra.mxu0 0.0
    %7290 = vmatprep.subr.mxu0 0.0
    %7291 = vmatpush1.msra.mxu0 0.0
    %7292 = vmatprep.subr.mxu0 0.0
    %7293 = vmatpush1.msra.mxu0 0.0
    %7294 = vmatprep.subr.mxu0 0.0
    %7295 = vmatpush1.msra.mxu0 0.0
    %7296 = vmatprep.subr.mxu0 0.0
    %7297 = vmatpush1.msra.mxu0 0.0
    %7298 = vmatprep.subr.mxu0 0.0
    %7299 = vmatpush1.msra.mxu0 0.0
    %7300 = vmatprep.subr.mxu0 0.0
    %7301 = vmatpush1.msra.mxu0 0.0
    %7302 = vmatprep.subr.mxu0 0.0
    %7303 = vmatpush1.msra.mxu0 0.0
    %7304 = vmatprep.subr.mxu0 0.0
    %7305 = vmatpush1.msra.mxu0 0.0
    %7306 = vmatprep.subr.mxu0 0.0
    %7307 = vmatpush1.msra.mxu0 0.0
    %7308 = vmatprep.subr.mxu0 0.0
    %7309 = vmatpush1.msra.mxu0 0.0
    %7310 = vmatprep.subr.mxu0 0.0
    %7311 = vmatpush1.msra.mxu0 0.0
    %7312 = vmatprep.subr.mxu0 0.0
    %7313 = vmatpush1.msra.mxu0 0.0
    %7314 = vmatprep.subr.mxu0 0.0
    %7315 = vmatpush1.msra.mxu0 0.0
    %7316 = vmatprep.subr.mxu0 0.0
    %7317 = vmatpush1.msra.mxu0 0.0
    %7318 = vmatprep.subr.mxu0 0.0
    %7319 = vmatpush1.msra.mxu0 0.0
    %7320 = vmatprep.subr.mxu0 0.0
    %7321 = vmatpush1.msra.mxu0 0.0
    %7322 = vmatprep.subr.mxu0 0.0
    %7323 = vmatpush1.msra.mxu0 0.0
    %7324 = vmatprep.subr.mxu0 0.0
    %7325 = vmatpush1.msra.mxu0 0.0
    %7326 = vmatprep.subr.mxu0 0.0
    %7327 = vmatpush1.msra.mxu0 0.0
    %7328 = vmatprep.mubr.f32.mxu0 0.0
    %7329 = vmatmul.mubr.f32.gmra.mrb[0].mxu0 %v7259
    %v7330 = vpop.f32.mrb[0].mxu0
    %v7331 = vadd.f32 0.0, %v7330
    %v7332 = vpop.f32.mrb[0].mxu0
    %7333 = vmatprep.mubr.f32.mxu0 0.0
    %7334 = vmatmul.mubr.f32.gmra.mrb[0].mxu0 %v7262
    %v7335 = vpop.f32.mrb[0].mxu0
    %v7336 = vadd.f32 0.0, %v7335
    %v7337 = vpop.f32.mrb[0].mxu0
    %7338 = vdwg.mxu0
    %v7340 = vsel %vm7023, %v7145, 0
    %v7343 = vsel %vm7023, %v7146, 0
    %7345 = vmatprep.subr.mxu0 0.0
    %7346 = vmatpush1.msra.mxu0 %v7112
    %7347 = vmatprep.subr.mxu0 0.0
    %7348 = vmatpush1.msra.mxu0 %v7117
    %7349 = vmatprep.subr.mxu0 0.0
    %7350 = vmatpush1.msra.mxu0 %v7122
    %7351 = vmatprep.subr.mxu0 0.0
    %7352 = vmatpush1.msra.mxu0 %v7127
    %7353 = vmatprep.subr.mxu0 0.0
    %7354 = vmatpush1.msra.mxu0 %v7132
    %7355 = vmatprep.subr.mxu0 0.0
    %7356 = vmatpush1.msra.mxu0 %v7137
    %7357 = vmatprep.subr.mxu0 0.0
    %7358 = vmatpush1.msra.mxu0 %v7142
    %7359 = vmatprep.subr.mxu0 0.0
    %7360 = vmatpush1.msra.mxu0 0.0
    %7361 = vmatprep.subr.mxu0 0.0
    %7362 = vmatpush1.msra.mxu0 0.0
    %7363 = vmatprep.subr.mxu0 0.0
    %7364 = vmatpush1.msra.mxu0 0.0
    %7365 = vmatprep.subr.mxu0 0.0
    %7366 = vmatpush1.msra.mxu0 0.0
    %7367 = vmatprep.subr.mxu0 0.0
    %7368 = vmatpush1.msra.mxu0 0.0
    %7369 = vmatprep.subr.mxu0 0.0
    %7370 = vmatpush1.msra.mxu0 0.0
    %7371 = vmatprep.subr.mxu0 0.0
    %7372 = vmatpush1.msra.mxu0 0.0
    %7373 = vmatprep.subr.mxu0 0.0
    %7374 = vmatpush1.msra.mxu0 0.0
    %7375 = vmatprep.subr.mxu0 0.0
    %7376 = vmatpush1.msra.mxu0 0.0
    %7377 = vmatprep.subr.mxu0 0.0
    %7378 = vmatpush1.msra.mxu0 0.0
    %7379 = vmatprep.subr.mxu0 0.0
    %7380 = vmatpush1.msra.mxu0 0.0
    %7381 = vmatprep.subr.mxu0 0.0
    %7382 = vmatpush1.msra.mxu0 0.0
    %7383 = vmatprep.subr.mxu0 0.0
    %7384 = vmatpush1.msra.mxu0 0.0
    %7385 = vmatprep.subr.mxu0 0.0
    %7386 = vmatpush1.msra.mxu0 0.0
    %7387 = vmatprep.subr.mxu0 0.0
    %7388 = vmatpush1.msra.mxu0 0.0
    %7389 = vmatprep.subr.mxu0 0.0
    %7390 = vmatpush1.msra.mxu0 0.0
    %7391 = vmatprep.subr.mxu0 0.0
    %7392 = vmatpush1.msra.mxu0 0.0
    %7393 = vmatprep.subr.mxu0 0.0
    %7394 = vmatpush1.msra.mxu0 0.0
    %7395 = vmatprep.subr.mxu0 0.0
    %7396 = vmatpush1.msra.mxu0 0.0
    %7397 = vmatprep.subr.mxu0 0.0
    %7398 = vmatpush1.msra.mxu0 0.0
    %7399 = vmatprep.subr.mxu0 0.0
    %7400 = vmatpush1.msra.mxu0 0.0
    %7401 = vmatprep.subr.mxu0 0.0
    %7402 = vmatpush1.msra.mxu0 0.0
    %7403 = vmatprep.subr.mxu0 0.0
    %7404 = vmatpush1.msra.mxu0 0.0
    %7405 = vmatprep.subr.mxu0 0.0
    %7406 = vmatpush1.msra.mxu0 0.0
    %7407 = vmatprep.subr.mxu0 0.0
    %7408 = vmatpush1.msra.mxu0 0.0
    %7409 = vmatprep.mubr.f32.mxu0 0.0
    %7410 = vmatmul.mubr.f32.gmra.mrb[0].mxu0 %v7340
    %v7411 = vpop.f32.mrb[0].mxu0
    %v7412 = vadd.f32 %v7331, %v7411
    %v7413 = vpop.f32.mrb[0].mxu0
    %7414 = vmatprep.mubr.f32.mxu0 0.0
    %7415 = vmatmul.mubr.f32.gmra.mrb[0].mxu0 %v7343
    %v7416 = vpop.f32.mrb[0].mxu0
    %v7417 = vadd.f32 %v7336, %v7416
    %v7418 = vpop.f32.mrb[0].mxu0
    %7419 = vdwg.mxu0
    %s7420 = scalar_lea.vmem %s11, 112
    %v7421 = vld [vmem:[%s7420] sm:$0xff]
    %v7422 = vld [vmem:[%s7420 + $0x8] sm:$0xff]
    %v7423 = vld [vmem:[%s7420 + $0x10] sm:$0xff]
    %v7424 = vld [vmem:[%s7420 + $0x18] sm:$0xff]
    %v7425 = vld [vmem:[%s7420 + $0x20] sm:$0xff]
    %v7426 = vld [vmem:[%s7420 + $0x28] sm:$0xff]
    %v7427 = vld [vmem:[%s7420 + $0x30] sm:$0xff]
    %7428 = vmatprep.subr.mxu0 0.0
    %7429 = vmatpush1.msra.mxu0 %v7421
    %7430 = vmatprep.subr.mxu0 0.0
    %7431 = vmatpush1.msra.mxu0 %v7422
    %7432 = vmatprep.subr.mxu0 0.0
    %7433 = vmatpush1.msra.mxu0 %v7423
    %7434 = vmatprep.subr.mxu0 0.0
    %7435 = vmatpush1.msra.mxu0 %v7424
    %7436 = vmatprep.subr.mxu0 0.0
    %7437 = vmatpush1.msra.mxu0 %v7425
    %7438 = vmatprep.subr.mxu0 0.0
    %7439 = vmatpush1.msra.mxu0 %v7426
    %7440 = vmatprep.subr.mxu0 0.0
    %7441 = vmatpush1.msra.mxu0 %v7427
    %7442 = vmatprep.subr.mxu0 0.0
    %7443 = vmatpush1.msra.mxu0 0.0
    %7444 = vmatprep.subr.mxu0 0.0
    %7445 = vmatpush1.msra.mxu0 0.0
    %7446 = vmatprep.subr.mxu0 0.0
    %7447 = vmatpush1.msra.mxu0 0.0
    %7448 = vmatprep.subr.mxu0 0.0
    %7449 = vmatpush1.msra.mxu0 0.0
    %7450 = vmatprep.subr.mxu0 0.0
    %7451 = vmatpush1.msra.mxu0 0.0
    %7452 = vmatprep.subr.mxu0 0.0
    %7453 = vmatpush1.msra.mxu0 0.0
    %7454 = vmatprep.subr.mxu0 0.0
    %7455 = vmatpush1.msra.mxu0 0.0
    %7456 = vmatprep.subr.mxu0 0.0
    %7457 = vmatpush1.msra.mxu0 0.0
    %7458 = vmatprep.subr.mxu0 0.0
    %7459 = vmatpush1.msra.mxu0 0.0
    %7460 = vmatprep.subr.mxu0 0.0
    %7461 = vmatpush1.msra.mxu0 0.0
    %7462 = vmatprep.subr.mxu0 0.0
    %7463 = vmatpush1.msra.mxu0 0.0
    %7464 = vmatprep.subr.mxu0 0.0
    %7465 = vmatpush1.msra.mxu0 0.0
    %7466 = vmatprep.subr.mxu0 0.0
    %7467 = vmatpush1.msra.mxu0 0.0
    %7468 = vmatprep.subr.mxu0 0.0
    %7469 = vmatpush1.msra.mxu0 0.0
    %7470 = vmatprep.subr.mxu0 0.0
    %7471 = vmatpush1.msra.mxu0 0.0
    %7472 = vmatprep.subr.mxu0 0.0
    %7473 = vmatpush1.msra.mxu0 0.0
    %7474 = vmatprep.subr.mxu0 0.0
    %7475 = vmatpush1.msra.mxu0 0.0
    %7476 = vmatprep.subr.mxu0 0.0
    %7477 = vmatpush1.msra.mxu0 0.0
    %7478 = vmatprep.subr.mxu0 0.0
    %7479 = vmatpush1.msra.mxu0 0.0
    %7480 = vmatprep.subr.mxu0 0.0
    %7481 = vmatpush1.msra.mxu0 0.0
    %7482 = vmatprep.subr.mxu0 0.0
    %7483 = vmatpush1.msra.mxu0 0.0
    %7484 = vmatprep.subr.mxu0 0.0
    %7485 = vmatpush1.msra.mxu0 0.0
    %7486 = vmatprep.subr.mxu0 0.0
    %7487 = vmatpush1.msra.mxu0 0.0
    %7488 = vmatprep.subr.mxu0 0.0
    %7489 = vmatpush1.msra.mxu0 0.0
    %7490 = vmatprep.subr.mxu0 0.0
    %7491 = vmatpush1.msra.mxu0 0.0
    %7492 = vmatprep.mubr.f32.mxu0 0.0
    %7493 = vmatmul.mubr.f32.gmra.mrb[0].mxu0 %v7025
    %v7494 = vpop.f32.mrb[0].mxu0
    %v7495 = vadd.f32 0.0, %v7494
    %v7496 = vpop.f32.mrb[0].mxu0
    %7497 = vmatprep.mubr.f32.mxu0 0.0
    %7498 = vmatmul.mubr.f32.gmra.mrb[0].mxu0 %v7028
    %v7499 = vpop.f32.mrb[0].mxu0
    %v7500 = vadd.f32 0.0, %v7499
    %v7501 = vpop.f32.mrb[0].mxu0
    %7502 = vmatprep.mubr.f32.mxu0 0.0
    %7503 = vmatmul.mubr.f32.gmra.mrb[0].mxu0 %v7031
    %v7504 = vpop.f32.mrb[0].mxu0
    %v7505 = vadd.f32 0.0, %v7504
    %v7506 = vpop.f32.mrb[0].mxu0
    %7507 = vmatprep.mubr.f32.mxu0 0.0
    %7508 = vmatmul.mubr.f32.gmra.mrb[0].mxu0 %v7034
    %v7509 = vpop.f32.mrb[0].mxu0
    %v7510 = vadd.f32 0.0, %v7509
    %v7511 = vpop.f32.mrb[0].mxu0
    %7512 = vmatprep.mubr.f32.mxu0 0.0
    %7513 = vmatmul.mubr.f32.gmra.mrb[0].mxu0 %v7037
    %v7514 = vpop.f32.mrb[0].mxu0
    %v7515 = vadd.f32 0.0, %v7514
    %v7516 = vpop.f32.mrb[0].mxu0
    %7517 = vmatprep.mubr.f32.mxu0 0.0
    %7518 = vmatmul.mubr.f32.gmra.mrb[0].mxu0 %v7040
    %v7519 = vpop.f32.mrb[0].mxu0
    %v7520 = vadd.f32 0.0, %v7519
    %v7521 = vpop.f32.mrb[0].mxu0
    %7522 = vmatprep.mubr.f32.mxu0 0.0
    %7523 = vmatmul.mubr.f32.gmra.mrb[0].mxu0 %v7043
    %v7524 = vpop.f32.mrb[0].mxu0
    %v7525 = vadd.f32 0.0, %v7524
    %v7526 = vpop.f32.mrb[0].mxu0
    %7527 = vdwg.mxu0
    %s7528 = scalar_lea.vmem %s12, 32
    %v7529 = vld [vmem:[%s7528] sm:$0xff]
    %v7530 = vld [vmem:[%s7528 + $0x8] sm:$0x3]
    %v7532 = vsel %vm7023, %v7529, 0
    %v7535 = vsel %vm7023, %v7530, 0
    %7537 = vmatprep.subr.mxu0 0.0
    %7538 = vmatpush1.msra.mxu0 %v7495
    %7539 = vmatprep.subr.mxu0 0.0
    %7540 = vmatpush1.msra.mxu0 %v7500
    %7541 = vmatprep.subr.mxu0 0.0
    %7542 = vmatpush1.msra.mxu0 %v7505
    %7543 = vmatprep.subr.mxu0 0.0
    %7544 = vmatpush1.msra.mxu0 %v7510
    %7545 = vmatprep.subr.mxu0 0.0
    %7546 = vmatpush1.msra.mxu0 %v7515
    %7547 = vmatprep.subr.mxu0 0.0
    %7548 = vmatpush1.msra.mxu0 %v7520
    %7549 = vmatprep.subr.mxu0 0.0
    %7550 = vmatpush1.msra.mxu0 %v7525
    %7551 = vmatprep.subr.mxu0 0.0
    %7552 = vmatpush1.msra.mxu0 0.0
    %7553 = vmatprep.subr.mxu0 0.0
    %7554 = vmatpush1.msra.mxu0 0.0
    %7555 = vmatprep.subr.mxu0 0.0
    %7556 = vmatpush1.msra.mxu0 0.0
    %7557 = vmatprep.subr.mxu0 0.0
    %7558 = vmatpush1.msra.mxu0 0.0
    %7559 = vmatprep.subr.mxu0 0.0
    %7560 = vmatpush1.msra.mxu0 0.0
    %7561 = vmatprep.subr.mxu0 0.0
    %7562 = vmatpush1.msra.mxu0 0.0
    %7563 = vmatprep.subr.mxu0 0.0
    %7564 = vmatpush1.msra.mxu0 0.0
    %7565 = vmatprep.subr.mxu0 0.0
    %7566 = vmatpush1.msra.mxu0 0.0
    %7567 = vmatprep.subr.mxu0 0.0
    %7568 = vmatpush1.msra.mxu0 0.0
    %7569 = vmatprep.subr.mxu0 0.0
    %7570 = vmatpush1.msra.mxu0 0.0
    %7571 = vmatprep.subr.mxu0 0.0
    %7572 = vmatpush1.msra.mxu0 0.0
    %7573 = vmatprep.subr.mxu0 0.0
    %7574 = vmatpush1.msra.mxu0 0.0
    %7575 = vmatprep.subr.mxu0 0.0
    %7576 = vmatpush1.msra.mxu0 0.0
    %7577 = vmatprep.subr.mxu0 0.0
    %7578 = vmatpush1.msra.mxu0 0.0
    %7579 = vmatprep.subr.mxu0 0.0
    %7580 = vmatpush1.msra.mxu0 0.0
    %7581 = vmatprep.subr.mxu0 0.0
    %7582 = vmatpush1.msra.mxu0 0.0
    %7583 = vmatprep.subr.mxu0 0.0
    %7584 = vmatpush1.msra.mxu0 0.0
    %7585 = vmatprep.subr.mxu0 0.0
    %7586 = vmatpush1.msra.mxu0 0.0
    %7587 = vmatprep.subr.mxu0 0.0
    %7588 = vmatpush1.msra.mxu0 0.0
    %7589 = vmatprep.subr.mxu0 0.0
    %7590 = vmatpush1.msra.mxu0 0.0
    %7591 = vmatprep.subr.mxu0 0.0
    %7592 = vmatpush1.msra.mxu0 0.0
    %7593 = vmatprep.subr.mxu0 0.0
    %7594 = vmatpush1.msra.mxu0 0.0
    %7595 = vmatprep.subr.mxu0 0.0
    %7596 = vmatpush1.msra.mxu0 0.0
    %7597 = vmatprep.subr.mxu0 0.0
    %7598 = vmatpush1.msra.mxu0 0.0
    %7599 = vmatprep.subr.mxu0 0.0
    %7600 = vmatpush1.msra.mxu0 0.0
    %7601 = vmatprep.mubr.f32.mxu0 0.0
    %7602 = vmatmul.mubr.f32.gmra.mrb[0].mxu0 %v7532
    %v7603 = vpop.f32.mrb[0].mxu0
    %v7604 = vadd.f32 0.0, %v7603
    %v7605 = vpop.f32.mrb[0].mxu0
    %7606 = vmatprep.mubr.f32.mxu0 0.0
    %7607 = vmatmul.mubr.f32.gmra.mrb[0].mxu0 %v7535
    %v7608 = vpop.f32.mrb[0].mxu0
    %v7609 = vadd.f32 0.0, %v7608
    %v7610 = vpop.f32.mrb[0].mxu0
    %7611 = vdwg.mxu0
    %v7612 = vadd.f32 %v7412, %v7604
    %v7613 = vadd.f32 %v7417, %v7609
    %s7614 = scalar_lea.vmem %s11, 168
    %v7615 = vld [vmem:[%s7614] sm:$0xff]
    %v7616 = vld [vmem:[%s7614 + $0x8] sm:$0xff]
    %v7617 = vld [vmem:[%s7614 + $0x10] sm:$0xff]
    %v7618 = vld [vmem:[%s7614 + $0x18] sm:$0xff]
    %v7619 = vld [vmem:[%s7614 + $0x20] sm:$0xff]
    %v7620 = vld [vmem:[%s7614 + $0x28] sm:$0xff]
    %v7621 = vld [vmem:[%s7614 + $0x30] sm:$0xff]
    %7622 = vmatprep.subr.mxu0 0.0
    %7623 = vmatpush1.msra.mxu0 %v7615
    %7624 = vmatprep.subr.mxu0 0.0
    %7625 = vmatpush1.msra.mxu0 %v7616
    %7626 = vmatprep.subr.mxu0 0.0
    %7627 = vmatpush1.msra.mxu0 %v7617
    %7628 = vmatprep.subr.mxu0 0.0
    %7629 = vmatpush1.msra.mxu0 %v7618
    %7630 = vmatprep.subr.mxu0 0.0
    %7631 = vmatpush1.msra.mxu0 %v7619
    %7632 = vmatprep.subr.mxu0 0.0
    %7633 = vmatpush1.msra.mxu0 %v7620
    %7634 = vmatprep.subr.mxu0 0.0
    %7635 = vmatpush1.msra.mxu0 %v7621
    %7636 = vmatprep.subr.mxu0 0.0
    %7637 = vmatpush1.msra.mxu0 0.0
    %7638 = vmatprep.subr.mxu0 0.0
    %7639 = vmatpush1.msra.mxu0 0.0
    %7640 = vmatprep.subr.mxu0 0.0
    %7641 = vmatpush1.msra.mxu0 0.0
    %7642 = vmatprep.subr.mxu0 0.0
    %7643 = vmatpush1.msra.mxu0 0.0
    %7644 = vmatprep.subr.mxu0 0.0
    %7645 = vmatpush1.msra.mxu0 0.0
    %7646 = vmatprep.subr.mxu0 0.0
    %7647 = vmatpush1.msra.mxu0 0.0
    %7648 = vmatprep.subr.mxu0 0.0
    %7649 = vmatpush1.msra.mxu0 0.0
    %7650 = vmatprep.subr.mxu0 0.0
    %7651 = vmatpush1.msra.mxu0 0.0
    %7652 = vmatprep.subr.mxu0 0.0
    %7653 = vmatpush1.msra.mxu0 0.0
    %7654 = vmatprep.subr.mxu0 0.0
    %7655 = vmatpush1.msra.mxu0 0.0
    %7656 = vmatprep.subr.mxu0 0.0
    %7657 = vmatpush1.msra.mxu0 0.0
    %7658 = vmatprep.subr.mxu0 0.0
    %7659 = vmatpush1.msra.mxu0 0.0
    %7660 = vmatprep.subr.mxu0 0.0
    %7661 = vmatpush1.msra.mxu0 0.0
    %7662 = vmatprep.subr.mxu0 0.0
    %7663 = vmatpush1.msra.mxu0 0.0
    %7664 = vmatprep.subr.mxu0 0.0
    %7665 = vmatpush1.msra.mxu0 0.0
    %7666 = vmatprep.subr.mxu0 0.0
    %7667 = vmatpush1.msra.mxu0 0.0
    %7668 = vmatprep.subr.mxu0 0.0
    %7669 = vmatpush1.msra.mxu0 0.0
    %7670 = vmatprep.subr.mxu0 0.0
    %7671 = vmatpush1.msra.mxu0 0.0
    %7672 = vmatprep.subr.mxu0 0.0
    %7673 = vmatpush1.msra.mxu0 0.0
    %7674 = vmatprep.subr.mxu0 0.0
    %7675 = vmatpush1.msra.mxu0 0.0
    %7676 = vmatprep.subr.mxu0 0.0
    %7677 = vmatpush1.msra.mxu0 0.0
    %7678 = vmatprep.subr.mxu0 0.0
    %7679 = vmatpush1.msra.mxu0 0.0
    %7680 = vmatprep.subr.mxu0 0.0
    %7681 = vmatpush1.msra.mxu0 0.0
    %7682 = vmatprep.subr.mxu0 0.0
    %7683 = vmatpush1.msra.mxu0 0.0
    %7684 = vmatprep.subr.mxu0 0.0
    %7685 = vmatpush1.msra.mxu0 0.0
    %7686 = vmatprep.mubr.f32.mxu0 0.0
    %7687 = vmatmul.mubr.f32.gmra.mrb[0].mxu0 %v7025
    %v7688 = vpop.f32.mrb[0].mxu0
    %v7689 = vadd.f32 0.0, %v7688
    %v7690 = vpop.f32.mrb[0].mxu0
    %7691 = vmatprep.mubr.f32.mxu0 0.0
    %7692 = vmatmul.mubr.f32.gmra.mrb[0].mxu0 %v7028
    %v7693 = vpop.f32.mrb[0].mxu0
    %v7694 = vadd.f32 0.0, %v7693
    %v7695 = vpop.f32.mrb[0].mxu0
    %7696 = vmatprep.mubr.f32.mxu0 0.0
    %7697 = vmatmul.mubr.f32.gmra.mrb[0].mxu0 %v7031
    %v7698 = vpop.f32.mrb[0].mxu0
    %v7699 = vadd.f32 0.0, %v7698
    %v7700 = vpop.f32.mrb[0].mxu0
    %7701 = vmatprep.mubr.f32.mxu0 0.0
    %7702 = vmatmul.mubr.f32.gmra.mrb[0].mxu0 %v7034
    %v7703 = vpop.f32.mrb[0].mxu0
    %v7704 = vadd.f32 0.0, %v7703
    %v7705 = vpop.f32.mrb[0].mxu0
    %7706 = vmatprep.mubr.f32.mxu0 0.0
    %7707 = vmatmul.mubr.f32.gmra.mrb[0].mxu0 %v7037
    %v7708 = vpop.f32.mrb[0].mxu0
    %v7709 = vadd.f32 0.0, %v7708
    %v7710 = vpop.f32.mrb[0].mxu0
    %7711 = vmatprep.mubr.f32.mxu0 0.0
    %7712 = vmatmul.mubr.f32.gmra.mrb[0].mxu0 %v7040
    %v7713 = vpop.f32.mrb[0].mxu0
    %v7714 = vadd.f32 0.0, %v7713
    %v7715 = vpop.f32.mrb[0].mxu0
    %7716 = vmatprep.mubr.f32.mxu0 0.0
    %7717 = vmatmul.mubr.f32.gmra.mrb[0].mxu0 %v7043
    %v7718 = vpop.f32.mrb[0].mxu0
    %v7719 = vadd.f32 0.0, %v7718
    %v7720 = vpop.f32.mrb[0].mxu0
    %7721 = vdwg.mxu0
    %s7722 = scalar_lea.vmem %s12, 48
    %v7723 = vld [vmem:[%s7722] sm:$0xff]
    %v7724 = vld [vmem:[%s7722 + $0x8] sm:$0x3]
    %v7726 = vsel %vm7023, %v7723, 0
    %v7729 = vsel %vm7023, %v7724, 0
    %7731 = vmatprep.subr.mxu0 0.0
    %7732 = vmatpush1.msra.mxu0 %v7689
    %7733 = vmatprep.subr.mxu0 0.0
    %7734 = vmatpush1.msra.mxu0 %v7694
    %7735 = vmatprep.subr.mxu0 0.0
    %7736 = vmatpush1.msra.mxu0 %v7699
    %7737 = vmatprep.subr.mxu0 0.0
    %7738 = vmatpush1.msra.mxu0 %v7704
    %7739 = vmatprep.subr.mxu0 0.0
    %7740 = vmatpush1.msra.mxu0 %v7709
    %7741 = vmatprep.subr.mxu0 0.0
    %7742 = vmatpush1.msra.mxu0 %v7714
    %7743 = vmatprep.subr.mxu0 0.0
    %7744 = vmatpush1.msra.mxu0 %v7719
    %7745 = vmatprep.subr.mxu0 0.0
    %7746 = vmatpush1.msra.mxu0 0.0
    %7747 = vmatprep.subr.mxu0 0.0
    %7748 = vmatpush1.msra.mxu0 0.0
    %7749 = vmatprep.subr.mxu0 0.0
    %7750 = vmatpush1.msra.mxu0 0.0
    %7751 = vmatprep.subr.mxu0 0.0
    %7752 = vmatpush1.msra.mxu0 0.0
    %7753 = vmatprep.subr.mxu0 0.0
    %7754 = vmatpush1.msra.mxu0 0.0
    %7755 = vmatprep.subr.mxu0 0.0
    %7756 = vmatpush1.msra.mxu0 0.0
    %7757 = vmatprep.subr.mxu0 0.0
    %7758 = vmatpush1.msra.mxu0 0.0
    %7759 = vmatprep.subr.mxu0 0.0
    %7760 = vmatpush1.msra.mxu0 0.0
    %7761 = vmatprep.subr.mxu0 0.0
    %7762 = vmatpush1.msra.mxu0 0.0
    %7763 = vmatprep.subr.mxu0 0.0
    %7764 = vmatpush1.msra.mxu0 0.0
    %7765 = vmatprep.subr.mxu0 0.0
    %7766 = vmatpush1.msra.mxu0 0.0
    %7767 = vmatprep.subr.mxu0 0.0
    %7768 = vmatpush1.msra.mxu0 0.0
    %7769 = vmatprep.subr.mxu0 0.0
    %7770 = vmatpush1.msra.mxu0 0.0
    %7771 = vmatprep.subr.mxu0 0.0
    %7772 = vmatpush1.msra.mxu0 0.0
    %7773 = vmatprep.subr.mxu0 0.0
    %7774 = vmatpush1.msra.mxu0 0.0
    %7775 = vmatprep.subr.mxu0 0.0
    %7776 = vmatpush1.msra.mxu0 0.0
    %7777 = vmatprep.subr.mxu0 0.0
    %7778 = vmatpush1.msra.mxu0 0.0
    %7779 = vmatprep.subr.mxu0 0.0
    %7780 = vmatpush1.msra.mxu0 0.0
    %7781 = vmatprep.subr.mxu0 0.0
    %7782 = vmatpush1.msra.mxu0 0.0
    %7783 = vmatprep.subr.mxu0 0.0
    %7784 = vmatpush1.msra.mxu0 0.0
    %7785 = vmatprep.subr.mxu0 0.0
    %7786 = vmatpush1.msra.mxu0 0.0
    %7787 = vmatprep.subr.mxu0 0.0
    %7788 = vmatpush1.msra.mxu0 0.0
    %7789 = vmatprep.subr.mxu0 0.0
    %7790 = vmatpush1.msra.mxu0 0.0
    %7791 = vmatprep.subr.mxu0 0.0
    %7792 = vmatpush1.msra.mxu0 0.0
    %7793 = vmatprep.subr.mxu0 0.0
    %7794 = vmatpush1.msra.mxu0 0.0
    %7795 = vmatprep.mubr.f32.mxu0 0.0
    %7796 = vmatmul.mubr.f32.gmra.mrb[0].mxu0 %v7726
    %v7797 = vpop.f32.mrb[0].mxu0
    %v7798 = vadd.f32 0.0, %v7797
    %v7799 = vpop.f32.mrb[0].mxu0
    %7800 = vmatprep.mubr.f32.mxu0 0.0
    %7801 = vmatmul.mubr.f32.gmra.mrb[0].mxu0 %v7729
    %v7802 = vpop.f32.mrb[0].mxu0
    %v7803 = vadd.f32 0.0, %v7802
    %v7804 = vpop.f32.mrb[0].mxu0
    %7805 = vdwg.mxu0
    %v7806 = vadd.f32 %v7612, %v7798
    %v7807 = vadd.f32 %v7613, %v7803
    %s7808 = scalar_lea.vmem %s11, 224
    %v7809 = vld [vmem:[%s7808] sm:$0xff]
    %v7810 = vld [vmem:[%s7808 + $0x8] sm:$0xff]
    %v7811 = vld [vmem:[%s7808 + $0x10] sm:$0xff]
    %v7812 = vld [vmem:[%s7808 + $0x18] sm:$0xff]
    %v7813 = vld [vmem:[%s7808 + $0x20] sm:$0xff]
    %v7814 = vld [vmem:[%s7808 + $0x28] sm:$0xff]
    %v7815 = vld [vmem:[%s7808 + $0x30] sm:$0xff]
    %7816 = vmatprep.subr.mxu0 0.0
    %7817 = vmatpush1.msra.mxu0 %v7809
    %7818 = vmatprep.subr.mxu0 0.0
    %7819 = vmatpush1.msra.mxu0 %v7810
    %7820 = vmatprep.subr.mxu0 0.0
    %7821 = vmatpush1.msra.mxu0 %v7811
    %7822 = vmatprep.subr.mxu0 0.0
    %7823 = vmatpush1.msra.mxu0 %v7812
    %7824 = vmatprep.subr.mxu0 0.0
    %7825 = vmatpush1.msra.mxu0 %v7813
    %7826 = vmatprep.subr.mxu0 0.0
    %7827 = vmatpush1.msra.mxu0 %v7814
    %7828 = vmatprep.subr.mxu0 0.0
    %7829 = vmatpush1.msra.mxu0 %v7815
    %7830 = vmatprep.subr.mxu0 0.0
    %7831 = vmatpush1.msra.mxu0 0.0
    %7832 = vmatprep.subr.mxu0 0.0
    %7833 = vmatpush1.msra.mxu0 0.0
    %7834 = vmatprep.subr.mxu0 0.0
    %7835 = vmatpush1.msra.mxu0 0.0
    %7836 = vmatprep.subr.mxu0 0.0
    %7837 = vmatpush1.msra.mxu0 0.0
    %7838 = vmatprep.subr.mxu0 0.0
    %7839 = vmatpush1.msra.mxu0 0.0
    %7840 = vmatprep.subr.mxu0 0.0
    %7841 = vmatpush1.msra.mxu0 0.0
    %7842 = vmatprep.subr.mxu0 0.0
    %7843 = vmatpush1.msra.mxu0 0.0
    %7844 = vmatprep.subr.mxu0 0.0
    %7845 = vmatpush1.msra.mxu0 0.0
    %7846 = vmatprep.subr.mxu0 0.0
    %7847 = vmatpush1.msra.mxu0 0.0
    %7848 = vmatprep.subr.mxu0 0.0
    %7849 = vmatpush1.msra.mxu0 0.0
    %7850 = vmatprep.subr.mxu0 0.0
    %7851 = vmatpush1.msra.mxu0 0.0
    %7852 = vmatprep.subr.mxu0 0.0
    %7853 = vmatpush1.msra.mxu0 0.0
    %7854 = vmatprep.subr.mxu0 0.0
    %7855 = vmatpush1.msra.mxu0 0.0
    %7856 = vmatprep.subr.mxu0 0.0
    %7857 = vmatpush1.msra.mxu0 0.0
    %7858 = vmatprep.subr.mxu0 0.0
    %7859 = vmatpush1.msra.mxu0 0.0
    %7860 = vmatprep.subr.mxu0 0.0
    %7861 = vmatpush1.msra.mxu0 0.0
    %7862 = vmatprep.subr.mxu0 0.0
    %7863 = vmatpush1.msra.mxu0 0.0
    %7864 = vmatprep.subr.mxu0 0.0
    %7865 = vmatpush1.msra.mxu0 0.0
    %7866 = vmatprep.subr.mxu0 0.0
    %7867 = vmatpush1.msra.mxu0 0.0
    %7868 = vmatprep.subr.mxu0 0.0
    %7869 = vmatpush1.msra.mxu0 0.0
    %7870 = vmatprep.subr.mxu0 0.0
    %7871 = vmatpush1.msra.mxu0 0.0
    %7872 = vmatprep.subr.mxu0 0.0
    %7873 = vmatpush1.msra.mxu0 0.0
    %7874 = vmatprep.subr.mxu0 0.0
    %7875 = vmatpush1.msra.mxu0 0.0
    %7876 = vmatprep.subr.mxu0 0.0
    %7877 = vmatpush1.msra.mxu0 0.0
    %7878 = vmatprep.subr.mxu0 0.0
    %7879 = vmatpush1.msra.mxu0 0.0
    %7880 = vmatprep.mubr.f32.mxu0 0.0
    %7881 = vmatmul.mubr.f32.gmra.mrb[0].mxu0 %v7025
    %v7882 = vpop.f32.mrb[0].mxu0
    %v7883 = vadd.f32 0.0, %v7882
    %v7884 = vpop.f32.mrb[0].mxu0
    %7885 = vmatprep.mubr.f32.mxu0 0.0
    %7886 = vmatmul.mubr.f32.gmra.mrb[0].mxu0 %v7028
    %v7887 = vpop.f32.mrb[0].mxu0
    %v7888 = vadd.f32 0.0, %v7887
    %v7889 = vpop.f32.mrb[0].mxu0
    %7890 = vmatprep.mubr.f32.mxu0 0.0
    %7891 = vmatmul.mubr.f32.gmra.mrb[0].mxu0 %v7031
    %v7892 = vpop.f32.mrb[0].mxu0
    %v7893 = vadd.f32 0.0, %v7892
    %v7894 = vpop.f32.mrb[0].mxu0
    %7895 = vmatprep.mubr.f32.mxu0 0.0
    %7896 = vmatmul.mubr.f32.gmra.mrb[0].mxu0 %v7034
    %v7897 = vpop.f32.mrb[0].mxu0
    %v7898 = vadd.f32 0.0, %v7897
    %v7899 = vpop.f32.mrb[0].mxu0
    %7900 = vmatprep.mubr.f32.mxu0 0.0
    %7901 = vmatmul.mubr.f32.gmra.mrb[0].mxu0 %v7037
    %v7902 = vpop.f32.mrb[0].mxu0
    %v7903 = vadd.f32 0.0, %v7902
    %v7904 = vpop.f32.mrb[0].mxu0
    %7905 = vmatprep.mubr.f32.mxu0 0.0
    %7906 = vmatmul.mubr.f32.gmra.mrb[0].mxu0 %v7040
    %v7907 = vpop.f32.mrb[0].mxu0
    %v7908 = vadd.f32 0.0, %v7907
    %v7909 = vpop.f32.mrb[0].mxu0
    %7910 = vmatprep.mubr.f32.mxu0 0.0
    %7911 = vmatmul.mubr.f32.gmra.mrb[0].mxu0 %v7043
    %v7912 = vpop.f32.mrb[0].mxu0
    %v7913 = vadd.f32 0.0, %v7912
    %v7914 = vpop.f32.mrb[0].mxu0
    %7915 = vdwg.mxu0
    %s7916 = scalar_lea.vmem %s12, 64
    %v7917 = vld [vmem:[%s7916] sm:$0xff]
    %v7918 = vld [vmem:[%s7916 + $0x8] sm:$0x3]
    %v7920 = vsel %vm7023, %v7917, 0
    %v7923 = vsel %vm7023, %v7918, 0
    %7925 = vmatprep.subr.mxu0 0.0
    %7926 = vmatpush1.msra.mxu0 %v7883
    %7927 = vmatprep.subr.mxu0 0.0
    %7928 = vmatpush1.msra.mxu0 %v7888
    %7929 = vmatprep.subr.mxu0 0.0
    %7930 = vmatpush1.msra.mxu0 %v7893
    %7931 = vmatprep.subr.mxu0 0.0
    %7932 = vmatpush1.msra.mxu0 %v7898
    %7933 = vmatprep.subr.mxu0 0.0
    %7934 = vmatpush1.msra.mxu0 %v7903
    %7935 = vmatprep.subr.mxu0 0.0
    %7936 = vmatpush1.msra.mxu0 %v7908
    %7937 = vmatprep.subr.mxu0 0.0
    %7938 = vmatpush1.msra.mxu0 %v7913
    %7939 = vmatprep.subr.mxu0 0.0
    %7940 = vmatpush1.msra.mxu0 0.0
    %7941 = vmatprep.subr.mxu0 0.0
    %7942 = vmatpush1.msra.mxu0 0.0
    %7943 = vmatprep.subr.mxu0 0.0
    %7944 = vmatpush1.msra.mxu0 0.0
    %7945 = vmatprep.subr.mxu0 0.0
    %7946 = vmatpush1.msra.mxu0 0.0
    %7947 = vmatprep.subr.mxu0 0.0
    %7948 = vmatpush1.msra.mxu0 0.0
    %7949 = vmatprep.subr.mxu0 0.0
    %7950 = vmatpush1.msra.mxu0 0.0
    %7951 = vmatprep.subr.mxu0 0.0
    %7952 = vmatpush1.msra.mxu0 0.0
    %7953 = vmatprep.subr.mxu0 0.0
    %7954 = vmatpush1.msra.mxu0 0.0
    %7955 = vmatprep.subr.mxu0 0.0
    %7956 = vmatpush1.msra.mxu0 0.0
    %7957 = vmatprep.subr.mxu0 0.0
    %7958 = vmatpush1.msra.mxu0 0.0
    %7959 = vmatprep.subr.mxu0 0.0
    %7960 = vmatpush1.msra.mxu0 0.0
    %7961 = vmatprep.subr.mxu0 0.0
    %7962 = vmatpush1.msra.mxu0 0.0
    %7963 = vmatprep.subr.mxu0 0.0
    %7964 = vmatpush1.msra.mxu0 0.0
    %7965 = vmatprep.subr.mxu0 0.0
    %7966 = vmatpush1.msra.mxu0 0.0
    %7967 = vmatprep.subr.mxu0 0.0
    %7968 = vmatpush1.msra.mxu0 0.0
    %7969 = vmatprep.subr.mxu0 0.0
    %7970 = vmatpush1.msra.mxu0 0.0
    %7971 = vmatprep.subr.mxu0 0.0
    %7972 = vmatpush1.msra.mxu0 0.0
    %7973 = vmatprep.subr.mxu0 0.0
    %7974 = vmatpush1.msra.mxu0 0.0
    %7975 = vmatprep.subr.mxu0 0.0
    %7976 = vmatpush1.msra.mxu0 0.0
    %7977 = vmatprep.subr.mxu0 0.0
    %7978 = vmatpush1.msra.mxu0 0.0
    %7979 = vmatprep.subr.mxu0 0.0
    %7980 = vmatpush1.msra.mxu0 0.0
    %7981 = vmatprep.subr.mxu0 0.0
    %7982 = vmatpush1.msra.mxu0 0.0
    %7983 = vmatprep.subr.mxu0 0.0
    %7984 = vmatpush1.msra.mxu0 0.0
    %7985 = vmatprep.subr.mxu0 0.0
    %7986 = vmatpush1.msra.mxu0 0.0
    %7987 = vmatprep.subr.mxu0 0.0
    %7988 = vmatpush1.msra.mxu0 0.0
    %7989 = vmatprep.mubr.f32.mxu0 0.0
    %7990 = vmatmul.mubr.f32.gmra.mrb[0].mxu0 %v7920
    %v7991 = vpop.f32.mrb[0].mxu0
    %v7992 = vadd.f32 0.0, %v7991
    %v7993 = vpop.f32.mrb[0].mxu0
    %7994 = vmatprep.mubr.f32.mxu0 0.0
    %7995 = vmatmul.mubr.f32.gmra.mrb[0].mxu0 %v7923
    %v7996 = vpop.f32.mrb[0].mxu0
    %v7997 = vadd.f32 0.0, %v7996
    %v7998 = vpop.f32.mrb[0].mxu0
    %7999 = vdwg.mxu0
    %v8000 = vadd.f32 %v7806, %v7992
    %v8001 = vadd.f32 %v7807, %v7997
    %s8002 = scalar_lea.vmem %s11, 280
    %v8003 = vld [vmem:[%s8002] sm:$0xff]
    %v8004 = vld [vmem:[%s8002 + $0x8] sm:$0xff]
    %v8005 = vld [vmem:[%s8002 + $0x10] sm:$0xff]
    %v8006 = vld [vmem:[%s8002 + $0x18] sm:$0xff]
    %v8007 = vld [vmem:[%s8002 + $0x20] sm:$0xff]
    %v8008 = vld [vmem:[%s8002 + $0x28] sm:$0xff]
    %v8009 = vld [vmem:[%s8002 + $0x30] sm:$0xff]
    %8010 = vmatprep.subr.mxu0 0.0
    %8011 = vmatpush1.msra.mxu0 %v8003
    %8012 = vmatprep.subr.mxu0 0.0
    %8013 = vmatpush1.msra.mxu0 %v8004
    %8014 = vmatprep.subr.mxu0 0.0
    %8015 = vmatpush1.msra.mxu0 %v8005
    %8016 = vmatprep.subr.mxu0 0.0
    %8017 = vmatpush1.msra.mxu0 %v8006
    %8018 = vmatprep.subr.mxu0 0.0
    %8019 = vmatpush1.msra.mxu0 %v8007
    %8020 = vmatprep.subr.mxu0 0.0
    %8021 = vmatpush1.msra.mxu0 %v8008
    %8022 = vmatprep.subr.mxu0 0.0
    %8023 = vmatpush1.msra.mxu0 %v8009
    %8024 = vmatprep.subr.mxu0 0.0
    %8025 = vmatpush1.msra.mxu0 0.0
    %8026 = vmatprep.subr.mxu0 0.0
    %8027 = vmatpush1.msra.mxu0 0.0
    %8028 = vmatprep.subr.mxu0 0.0
    %8029 = vmatpush1.msra.mxu0 0.0
    %8030 = vmatprep.subr.mxu0 0.0
    %8031 = vmatpush1.msra.mxu0 0.0
    %8032 = vmatprep.subr.mxu0 0.0
    %8033 = vmatpush1.msra.mxu0 0.0
    %8034 = vmatprep.subr.mxu0 0.0
    %8035 = vmatpush1.msra.mxu0 0.0
    %8036 = vmatprep.subr.mxu0 0.0
    %8037 = vmatpush1.msra.mxu0 0.0
    %8038 = vmatprep.subr.mxu0 0.0
    %8039 = vmatpush1.msra.mxu0 0.0
    %8040 = vmatprep.subr.mxu0 0.0
    %8041 = vmatpush1.msra.mxu0 0.0
    %8042 = vmatprep.subr.mxu0 0.0
    %8043 = vmatpush1.msra.mxu0 0.0
    %8044 = vmatprep.subr.mxu0 0.0
    %8045 = vmatpush1.msra.mxu0 0.0
    %8046 = vmatprep.subr.mxu0 0.0
    %8047 = vmatpush1.msra.mxu0 0.0
    %8048 = vmatprep.subr.mxu0 0.0
    %8049 = vmatpush1.msra.mxu0 0.0
    %8050 = vmatprep.subr.mxu0 0.0
    %8051 = vmatpush1.msra.mxu0 0.0
    %8052 = vmatprep.subr.mxu0 0.0
    %8053 = vmatpush1.msra.mxu0 0.0
    %8054 = vmatprep.subr.mxu0 0.0
    %8055 = vmatpush1.msra.mxu0 0.0
    %8056 = vmatprep.subr.mxu0 0.0
    %8057 = vmatpush1.msra.mxu0 0.0
    %8058 = vmatprep.subr.mxu0 0.0
    %8059 = vmatpush1.msra.mxu0 0.0
    %8060 = vmatprep.subr.mxu0 0.0
    %8061 = vmatpush1.msra.mxu0 0.0
    %8062 = vmatprep.subr.mxu0 0.0
    %8063 = vmatpush1.msra.mxu0 0.0
    %8064 = vmatprep.subr.mxu0 0.0
    %8065 = vmatpush1.msra.mxu0 0.0
    %8066 = vmatprep.subr.mxu0 0.0
    %8067 = vmatpush1.msra.mxu0 0.0
    %8068 = vmatprep.subr.mxu0 0.0
    %8069 = vmatpush1.msra.mxu0 0.0
    %8070 = vmatprep.subr.mxu0 0.0
    %8071 = vmatpush1.msra.mxu0 0.0
    %8072 = vmatprep.subr.mxu0 0.0
    %8073 = vmatpush1.msra.mxu0 0.0
    %8074 = vmatprep.mubr.f32.mxu0 0.0
    %8075 = vmatmul.mubr.f32.gmra.mrb[0].mxu0 %v7025
    %v8076 = vpop.f32.mrb[0].mxu0
    %v8077 = vadd.f32 0.0, %v8076
    %v8078 = vpop.f32.mrb[0].mxu0
    %8079 = vmatprep.mubr.f32.mxu0 0.0
    %8080 = vmatmul.mubr.f32.gmra.mrb[0].mxu0 %v7028
    %v8081 = vpop.f32.mrb[0].mxu0
    %v8082 = vadd.f32 0.0, %v8081
    %v8083 = vpop.f32.mrb[0].mxu0
    %8084 = vmatprep.mubr.f32.mxu0 0.0
    %8085 = vmatmul.mubr.f32.gmra.mrb[0].mxu0 %v7031
    %v8086 = vpop.f32.mrb[0].mxu0
    %v8087 = vadd.f32 0.0, %v8086
    %v8088 = vpop.f32.mrb[0].mxu0
    %8089 = vmatprep.mubr.f32.mxu0 0.0
    %8090 = vmatmul.mubr.f32.gmra.mrb[0].mxu0 %v7034
    %v8091 = vpop.f32.mrb[0].mxu0
    %v8092 = vadd.f32 0.0, %v8091
    %v8093 = vpop.f32.mrb[0].mxu0
    %8094 = vmatprep.mubr.f32.mxu0 0.0
    %8095 = vmatmul.mubr.f32.gmra.mrb[0].mxu0 %v7037
    %v8096 = vpop.f32.mrb[0].mxu0
    %v8097 = vadd.f32 0.0, %v8096
    %v8098 = vpop.f32.mrb[0].mxu0
    %8099 = vmatprep.mubr.f32.mxu0 0.0
    %8100 = vmatmul.mubr.f32.gmra.mrb[0].mxu0 %v7040
    %v8101 = vpop.f32.mrb[0].mxu0
    %v8102 = vadd.f32 0.0, %v8101
    %v8103 = vpop.f32.mrb[0].mxu0
    %8104 = vmatprep.mubr.f32.mxu0 0.0
    %8105 = vmatmul.mubr.f32.gmra.mrb[0].mxu0 %v7043
    %v8106 = vpop.f32.mrb[0].mxu0
    %v8107 = vadd.f32 0.0, %v8106
    %v8108 = vpop.f32.mrb[0].mxu0
    %8109 = vdwg.mxu0
    %s8110 = scalar_lea.vmem %s12, 80
    %v8111 = vld [vmem:[%s8110] sm:$0xff]
    %v8112 = vld [vmem:[%s8110 + $0x8] sm:$0x3]
    %v8114 = vsel %vm7023, %v8111, 0
    %v8117 = vsel %vm7023, %v8112, 0
    %8119 = vmatprep.subr.mxu0 0.0
    %8120 = vmatpush1.msra.mxu0 %v8077
    %8121 = vmatprep.subr.mxu0 0.0
    %8122 = vmatpush1.msra.mxu0 %v8082
    %8123 = vmatprep.subr.mxu0 0.0
    %8124 = vmatpush1.msra.mxu0 %v8087
    %8125 = vmatprep.subr.mxu0 0.0
    %8126 = vmatpush1.msra.mxu0 %v8092
    %8127 = vmatprep.subr.mxu0 0.0
    %8128 = vmatpush1.msra.mxu0 %v8097
    %8129 = vmatprep.subr.mxu0 0.0
    %8130 = vmatpush1.msra.mxu0 %v8102
    %8131 = vmatprep.subr.mxu0 0.0
    %8132 = vmatpush1.msra.mxu0 %v8107
    %8133 = vmatprep.subr.mxu0 0.0
    %8134 = vmatpush1.msra.mxu0 0.0
    %8135 = vmatprep.subr.mxu0 0.0
    %8136 = vmatpush1.msra.mxu0 0.0
    %8137 = vmatprep.subr.mxu0 0.0
    %8138 = vmatpush1.msra.mxu0 0.0
    %8139 = vmatprep.subr.mxu0 0.0
    %8140 = vmatpush1.msra.mxu0 0.0
    %8141 = vmatprep.subr.mxu0 0.0
    %8142 = vmatpush1.msra.mxu0 0.0
    %8143 = vmatprep.subr.mxu0 0.0
    %8144 = vmatpush1.msra.mxu0 0.0
    %8145 = vmatprep.subr.mxu0 0.0
    %8146 = vmatpush1.msra.mxu0 0.0
    %8147 = vmatprep.subr.mxu0 0.0
    %8148 = vmatpush1.msra.mxu0 0.0
    %8149 = vmatprep.subr.mxu0 0.0
    %8150 = vmatpush1.msra.mxu0 0.0
    %8151 = vmatprep.subr.mxu0 0.0
    %8152 = vmatpush1.msra.mxu0 0.0
    %8153 = vmatprep.subr.mxu0 0.0
    %8154 = vmatpush1.msra.mxu0 0.0
    %8155 = vmatprep.subr.mxu0 0.0
    %8156 = vmatpush1.msra.mxu0 0.0
    %8157 = vmatprep.subr.mxu0 0.0
    %8158 = vmatpush1.msra.mxu0 0.0
    %8159 = vmatprep.subr.mxu0 0.0
    %8160 = vmatpush1.msra.mxu0 0.0
    %8161 = vmatprep.subr.mxu0 0.0
    %8162 = vmatpush1.msra.mxu0 0.0
    %8163 = vmatprep.subr.mxu0 0.0
    %8164 = vmatpush1.msra.mxu0 0.0
    %8165 = vmatprep.subr.mxu0 0.0
    %8166 = vmatpush1.msra.mxu0 0.0
    %8167 = vmatprep.subr.mxu0 0.0
    %8168 = vmatpush1.msra.mxu0 0.0
    %8169 = vmatprep.subr.mxu0 0.0
    %8170 = vmatpush1.msra.mxu0 0.0
    %8171 = vmatprep.subr.mxu0 0.0
    %8172 = vmatpush1.msra.mxu0 0.0
    %8173 = vmatprep.subr.mxu0 0.0
    %8174 = vmatpush1.msra.mxu0 0.0
    %8175 = vmatprep.subr.mxu0 0.0
    %8176 = vmatpush1.msra.mxu0 0.0
    %8177 = vmatprep.subr.mxu0 0.0
    %8178 = vmatpush1.msra.mxu0 0.0
    %8179 = vmatprep.subr.mxu0 0.0
    %8180 = vmatpush1.msra.mxu0 0.0
    %8181 = vmatprep.subr.mxu0 0.0
    %8182 = vmatpush1.msra.mxu0 0.0
    %8183 = vmatprep.mubr.f32.mxu0 0.0
    %8184 = vmatmul.mubr.f32.gmra.mrb[0].mxu0 %v8114
    %v8185 = vpop.f32.mrb[0].mxu0
    %v8186 = vadd.f32 0.0, %v8185
    %v8187 = vpop.f32.mrb[0].mxu0
    %8188 = vmatprep.mubr.f32.mxu0 0.0
    %8189 = vmatmul.mubr.f32.gmra.mrb[0].mxu0 %v8117
    %v8190 = vpop.f32.mrb[0].mxu0
    %v8191 = vadd.f32 0.0, %v8190
    %v8192 = vpop.f32.mrb[0].mxu0
    %8193 = vdwg.mxu0
    %v8194 = vadd.f32 %v8000, %v8186
    %v8195 = vadd.f32 %v8001, %v8191
    %s8196 = scalar_lea.vmem %s11, 336
    %v8197 = vld [vmem:[%s8196] sm:$0xff]
    %v8198 = vld [vmem:[%s8196 + $0x8] sm:$0xff]
    %v8199 = vld [vmem:[%s8196 + $0x10] sm:$0xff]
    %v8200 = vld [vmem:[%s8196 + $0x18] sm:$0xff]
    %v8201 = vld [vmem:[%s8196 + $0x20] sm:$0xff]
    %v8202 = vld [vmem:[%s8196 + $0x28] sm:$0xff]
    %v8203 = vld [vmem:[%s8196 + $0x30] sm:$0xff]
    %8204 = vmatprep.subr.mxu0 0.0
    %8205 = vmatpush1.msra.mxu0 %v8197
    %8206 = vmatprep.subr.mxu0 0.0
    %8207 = vmatpush1.msra.mxu0 %v8198
    %8208 = vmatprep.subr.mxu0 0.0
    %8209 = vmatpush1.msra.mxu0 %v8199
    %8210 = vmatprep.subr.mxu0 0.0
    %8211 = vmatpush1.msra.mxu0 %v8200
    %8212 = vmatprep.subr.mxu0 0.0
    %8213 = vmatpush1.msra.mxu0 %v8201
    %8214 = vmatprep.subr.mxu0 0.0
    %8215 = vmatpush1.msra.mxu0 %v8202
    %8216 = vmatprep.subr.mxu0 0.0
    %8217 = vmatpush1.msra.mxu0 %v8203
    %8218 = vmatprep.subr.mxu0 0.0
    %8219 = vmatpush1.msra.mxu0 0.0
    %8220 = vmatprep.subr.mxu0 0.0
    %8221 = vmatpush1.msra.mxu0 0.0
    %8222 = vmatprep.subr.mxu0 0.0
    %8223 = vmatpush1.msra.mxu0 0.0
    %8224 = vmatprep.subr.mxu0 0.0
    %8225 = vmatpush1.msra.mxu0 0.0
    %8226 = vmatprep.subr.mxu0 0.0
    %8227 = vmatpush1.msra.mxu0 0.0
    %8228 = vmatprep.subr.mxu0 0.0
    %8229 = vmatpush1.msra.mxu0 0.0
    %8230 = vmatprep.subr.mxu0 0.0
    %8231 = vmatpush1.msra.mxu0 0.0
    %8232 = vmatprep.subr.mxu0 0.0
    %8233 = vmatpush1.msra.mxu0 0.0
    %8234 = vmatprep.subr.mxu0 0.0
    %8235 = vmatpush1.msra.mxu0 0.0
    %8236 = vmatprep.subr.mxu0 0.0
    %8237 = vmatpush1.msra.mxu0 0.0
    %8238 = vmatprep.subr.mxu0 0.0
    %8239 = vmatpush1.msra.mxu0 0.0
    %8240 = vmatprep.subr.mxu0 0.0
    %8241 = vmatpush1.msra.mxu0 0.0
    %8242 = vmatprep.subr.mxu0 0.0
    %8243 = vmatpush1.msra.mxu0 0.0
    %8244 = vmatprep.subr.mxu0 0.0
    %8245 = vmatpush1.msra.mxu0 0.0
    %8246 = vmatprep.subr.mxu0 0.0
    %8247 = vmatpush1.msra.mxu0 0.0
    %8248 = vmatprep.subr.mxu0 0.0
    %8249 = vmatpush1.msra.mxu0 0.0
    %8250 = vmatprep.subr.mxu0 0.0
    %8251 = vmatpush1.msra.mxu0 0.0
    %8252 = vmatprep.subr.mxu0 0.0
    %8253 = vmatpush1.msra.mxu0 0.0
    %8254 = vmatprep.subr.mxu0 0.0
    %8255 = vmatpush1.msra.mxu0 0.0
    %8256 = vmatprep.subr.mxu0 0.0
    %8257 = vmatpush1.msra.mxu0 0.0
    %8258 = vmatprep.subr.mxu0 0.0
    %8259 = vmatpush1.msra.mxu0 0.0
    %8260 = vmatprep.subr.mxu0 0.0
    %8261 = vmatpush1.msra.mxu0 0.0
    %8262 = vmatprep.subr.mxu0 0.0
    %8263 = vmatpush1.msra.mxu0 0.0
    %8264 = vmatprep.subr.mxu0 0.0
    %8265 = vmatpush1.msra.mxu0 0.0
    %8266 = vmatprep.subr.mxu0 0.0
    %8267 = vmatpush1.msra.mxu0 0.0
    %8268 = vmatprep.mubr.f32.mxu0 0.0
    %8269 = vmatmul.mubr.f32.gmra.mrb[0].mxu0 %v7025
    %v8270 = vpop.f32.mrb[0].mxu0
    %v8271 = vadd.f32 0.0, %v8270
    %v8272 = vpop.f32.mrb[0].mxu0
    %8273 = vmatprep.mubr.f32.mxu0 0.0
    %8274 = vmatmul.mubr.f32.gmra.mrb[0].mxu0 %v7028
    %v8275 = vpop.f32.mrb[0].mxu0
    %v8276 = vadd.f32 0.0, %v8275
    %v8277 = vpop.f32.mrb[0].mxu0
    %8278 = vmatprep.mubr.f32.mxu0 0.0
    %8279 = vmatmul.mubr.f32.gmra.mrb[0].mxu0 %v7031
    %v8280 = vpop.f32.mrb[0].mxu0
    %v8281 = vadd.f32 0.0, %v8280
    %v8282 = vpop.f32.mrb[0].mxu0
    %8283 = vmatprep.mubr.f32.mxu0 0.0
    %8284 = vmatmul.mubr.f32.gmra.mrb[0].mxu0 %v7034
    %v8285 = vpop.f32.mrb[0].mxu0
    %v8286 = vadd.f32 0.0, %v8285
    %v8287 = vpop.f32.mrb[0].mxu0
    %8288 = vmatprep.mubr.f32.mxu0 0.0
    %8289 = vmatmul.mubr.f32.gmra.mrb[0].mxu0 %v7037
    %v8290 = vpop.f32.mrb[0].mxu0
    %v8291 = vadd.f32 0.0, %v8290
    %v8292 = vpop.f32.mrb[0].mxu0
    %8293 = vmatprep.mubr.f32.mxu0 0.0
    %8294 = vmatmul.mubr.f32.gmra.mrb[0].mxu0 %v7040
    %v8295 = vpop.f32.mrb[0].mxu0
    %v8296 = vadd.f32 0.0, %v8295
    %v8297 = vpop.f32.mrb[0].mxu0
    %8298 = vmatprep.mubr.f32.mxu0 0.0
    %8299 = vmatmul.mubr.f32.gmra.mrb[0].mxu0 %v7043
    %v8300 = vpop.f32.mrb[0].mxu0
    %v8301 = vadd.f32 0.0, %v8300
    %v8302 = vpop.f32.mrb[0].mxu0
    %8303 = vdwg.mxu0
    %s8304 = scalar_lea.vmem %s12, 96
    %v8305 = vld [vmem:[%s8304] sm:$0xff]
    %v8306 = vld [vmem:[%s8304 + $0x8] sm:$0x3]
    %v8308 = vsel %vm7023, %v8305, 0
    %v8311 = vsel %vm7023, %v8306, 0
    %8313 = vmatprep.subr.mxu0 0.0
    %8314 = vmatpush1.msra.mxu0 %v8271
    %8315 = vmatprep.subr.mxu0 0.0
    %8316 = vmatpush1.msra.mxu0 %v8276
    %8317 = vmatprep.subr.mxu0 0.0
    %8318 = vmatpush1.msra.mxu0 %v8281
    %8319 = vmatprep.subr.mxu0 0.0
    %8320 = vmatpush1.msra.mxu0 %v8286
    %8321 = vmatprep.subr.mxu0 0.0
    %8322 = vmatpush1.msra.mxu0 %v8291
    %8323 = vmatprep.subr.mxu0 0.0
    %8324 = vmatpush1.msra.mxu0 %v8296
    %8325 = vmatprep.subr.mxu0 0.0
    %8326 = vmatpush1.msra.mxu0 %v8301
    %8327 = vmatprep.subr.mxu0 0.0
    %8328 = vmatpush1.msra.mxu0 0.0
    %8329 = vmatprep.subr.mxu0 0.0
    %8330 = vmatpush1.msra.mxu0 0.0
    %8331 = vmatprep.subr.mxu0 0.0
    %8332 = vmatpush1.msra.mxu0 0.0
    %8333 = vmatprep.subr.mxu0 0.0
    %8334 = vmatpush1.msra.mxu0 0.0
    %8335 = vmatprep.subr.mxu0 0.0
    %8336 = vmatpush1.msra.mxu0 0.0
    %8337 = vmatprep.subr.mxu0 0.0
    %8338 = vmatpush1.msra.mxu0 0.0
    %8339 = vmatprep.subr.mxu0 0.0
    %8340 = vmatpush1.msra.mxu0 0.0
    %8341 = vmatprep.subr.mxu0 0.0
    %8342 = vmatpush1.msra.mxu0 0.0
    %8343 = vmatprep.subr.mxu0 0.0
    %8344 = vmatpush1.msra.mxu0 0.0
    %8345 = vmatprep.subr.mxu0 0.0
    %8346 = vmatpush1.msra.mxu0 0.0
    %8347 = vmatprep.subr.mxu0 0.0
    %8348 = vmatpush1.msra.mxu0 0.0
    %8349 = vmatprep.subr.mxu0 0.0
    %8350 = vmatpush1.msra.mxu0 0.0
    %8351 = vmatprep.subr.mxu0 0.0
    %8352 = vmatpush1.msra.mxu0 0.0
    %8353 = vmatprep.subr.mxu0 0.0
    %8354 = vmatpush1.msra.mxu0 0.0
    %8355 = vmatprep.subr.mxu0 0.0
    %8356 = vmatpush1.msra.mxu0 0.0
    %8357 = vmatprep.subr.mxu0 0.0
    %8358 = vmatpush1.msra.mxu0 0.0
    %8359 = vmatprep.subr.mxu0 0.0
    %8360 = vmatpush1.msra.mxu0 0.0
    %8361 = vmatprep.subr.mxu0 0.0
    %8362 = vmatpush1.msra.mxu0 0.0
    %8363 = vmatprep.subr.mxu0 0.0
    %8364 = vmatpush1.msra.mxu0 0.0
    %8365 = vmatprep.subr.mxu0 0.0
    %8366 = vmatpush1.msra.mxu0 0.0
    %8367 = vmatprep.subr.mxu0 0.0
    %8368 = vmatpush1.msra.mxu0 0.0
    %8369 = vmatprep.subr.mxu0 0.0
    %8370 = vmatpush1.msra.mxu0 0.0
    %8371 = vmatprep.subr.mxu0 0.0
    %8372 = vmatpush1.msra.mxu0 0.0
    %8373 = vmatprep.subr.mxu0 0.0
    %8374 = vmatpush1.msra.mxu0 0.0
    %8375 = vmatprep.subr.mxu0 0.0
    %8376 = vmatpush1.msra.mxu0 0.0
    %8377 = vmatprep.mubr.f32.mxu0 0.0
    %8378 = vmatmul.mubr.f32.gmra.mrb[0].mxu0 %v8308
    %v8379 = vpop.f32.mrb[0].mxu0
    %v8380 = vadd.f32 0.0, %v8379
    %v8381 = vpop.f32.mrb[0].mxu0
    %8382 = vmatprep.mubr.f32.mxu0 0.0
    %8383 = vmatmul.mubr.f32.gmra.mrb[0].mxu0 %v8311
    %v8384 = vpop.f32.mrb[0].mxu0
    %v8385 = vadd.f32 0.0, %v8384
    %v8386 = vpop.f32.mrb[0].mxu0
    %8387 = vdwg.mxu0
    %v8388 = vadd.f32 %v8194, %v8380
    %v8389 = vadd.f32 %v8195, %v8385
    %v8390 = vld [vmem:[%s13] sm:$0xff]
    %v8391 = vld [vmem:[%s13 + $0x8] sm:$0x3]
    %8393 = vset.pattern.permute.xlu0 0
    %8394 = vperm.xlu0 %8393, %v8390
    %v8395 = vpop.permute.xlu0 %8394
    %8398 = vset.pattern.permute.xlu0 0
    %8399 = vperm.xlu0 %8398, %v8391
    %v8400 = vpop.permute.xlu0 %8399
    %v8402 = vadd.f32 %v8388, %v8395
    %v8403 = vadd.f32 %v8389, %v8400
    %vm8404 = vcmask 64512
    %8405 = vst.msk [vmem:[%s14] sm:$0xff] %vm8404, %v8402
    %vm8406 = vcmask 58368
    %8407 = vst.msk [vmem:[%s14 + $0x8] sm:$0x3] %vm8406, %v8403
    // Predicated region
    $region74: #{cnn_forward.1} parent=1 // pred_check
      _
    $region75: #{cnn_forward.1} parent=1 // pred_check_branch
      %8409 = sbr.rel (0) target = $region77
    $region76: #{cnn_forward.1} parent=1 // pred_region
      _
    $region77: #{cnn_forward.1} parent=1 // pred_fallthru
      _
    // Predicated region
    $region78: #{cnn_forward.1} parent=1 // pred_check
      _
    $region79: #{cnn_forward.1} parent=1 // pred_check_branch
      %8411 = sbr.rel (0) target = $region81
    $region80: #{cnn_forward.1} parent=1 // pred_region
      _
    $region81: #{cnn_forward.1} parent=1 // pred_fallthru
      _
    %8412 = vsyncpa [#allocation7], 1
    %8413 = vsyncpa [#allocation9], 1
    %8414 = vsyncpa [#allocation12], 1

</llo_original>
